<compile_context>
chip_gen: v6e
topology: v6e:2x2x1
jax: 0.10.0
libtpu: 0.0.40
codegen_flags: <defaults>
</compile_context>

<pallas_src>
import functools

import jax
import jax.numpy as jnp
from jax.experimental import pallas as pl
from jax.experimental.pallas import tpu as pltpu


def _moe_swiglu_kernel(x_ref, w1_ref, w2_ref, w3_ref, rw_ref, o_ref, acc_ref):
    # x_ref:  (tm, Dp)      bf16 token tile (re-used across e, h steps)
    # w1_ref: (1, Dp, th)   gate projection tile   (expert e, hidden tile h)
    # w2_ref: (1, Dp, th)   value projection tile
    # w3_ref: (1, th, Dp)   output projection tile
    # rw_ref: (1, tm, 1)    f32 per-token routing weight for expert e
    # o_ref:  (tm, Dp)      output tile (written once, on the last (e, h) step)
    # acc_ref:(tm, Dp)      f32 accumulator scratch
    e = pl.program_id(1)
    h = pl.program_id(2)

    @pl.when(jnp.logical_and(e == 0, h == 0))
    def _init():
        acc_ref[...] = jnp.zeros_like(acc_ref)

    x = x_ref[...]                                   # bf16, stays bf16 for the MXU
    gate = jnp.dot(x, w1_ref[0], preferred_element_type=jnp.float32)   # (tm, th) f32
    val = jnp.dot(x, w2_ref[0], preferred_element_type=jnp.float32)    # (tm, th) f32

    # Swish(g) = g * sigmoid(g), fused with the elementwise gating in f32.
    hidden = (gate * jax.nn.sigmoid(gate)) * val

    part = jnp.dot(hidden.astype(w3_ref.dtype), w3_ref[0],
                   preferred_element_type=jnp.float32)                 # (tm, Dp) f32
    acc_ref[...] += rw_ref[0].astype(jnp.float32) * part               # (tm,1) * (tm,Dp)

    @pl.when(jnp.logical_and(e == pl.num_programs(1) - 1,
                             h == pl.num_programs(2) - 1))
    def _finalize():
        o_ref[...] = acc_ref[...].astype(o_ref.dtype)


def fused_moe_swiglu(xf, w1_all, w2_all, w3_all, rw, *, tm=128, th=512):
    """xf: (M, D) bf16; w1_all/w2_all: (E, D, H); w3_all: (E, H, D); rw: (E, M) f32.

    Returns (M, D): sum_e rw[e, m] * SwiGLU_e(x[m])."""
    M, D = xf.shape
    E, _, H = w1_all.shape
    out_dtype = xf.dtype

    # Pad to hardware-friendly sizes: lane-dense D (mult of 128), sublane/token
    # tile aligned M (mult of tm), hidden tiled by th.  Zero padding is exact.
    Dp = D + (-D) % 128
    Mp = M + (-M) % tm
    Hp = H + (-H) % th

    xp = jnp.pad(xf, ((0, Mp - M), (0, Dp - D)))
    w1p = jnp.pad(w1_all, ((0, 0), (0, Dp - D), (0, Hp - H)))
    w2p = jnp.pad(w2_all, ((0, 0), (0, Dp - D), (0, Hp - H)))
    w3p = jnp.pad(w3_all, ((0, 0), (0, Hp - H), (0, Dp - D)))
    rwp = jnp.pad(rw.astype(jnp.float32), ((0, 0), (0, Mp - M)))[:, :, None]  # (E, Mp, 1)

    n_tok = Mp // tm
    n_hid = Hp // th

    wbytes = jnp.dtype(w1p.dtype).itemsize
    xbytes = jnp.dtype(xp.dtype).itemsize
    flops = 6 * Mp * Dp * Hp * E                      # 3 matmuls, 2 flops/MAC
    transcendentals = Mp * Hp * E                     # sigmoid
    bytes_accessed = (xp.size * xbytes
                      + n_tok * (w1p.size + w2p.size + w3p.size) * wbytes
                      + rwp.size * 4
                      + Mp * Dp * jnp.dtype(out_dtype).itemsize)

    out = pl.pallas_call(
        _moe_swiglu_kernel,
        out_shape=jax.ShapeDtypeStruct((Mp, Dp), out_dtype),
        grid_spec=pltpu.PrefetchScalarGridSpec(
            num_scalar_prefetch=0,
            grid=(n_tok, E, n_hid),
            in_specs=[
                pl.BlockSpec((tm, Dp), lambda i, e, h: (i, 0)),      # x tile
                pl.BlockSpec((1, Dp, th), lambda i, e, h: (e, 0, h)),  # W1^T tile
                pl.BlockSpec((1, Dp, th), lambda i, e, h: (e, 0, h)),  # W2^T tile
                pl.BlockSpec((1, th, Dp), lambda i, e, h: (e, h, 0)),  # W3^T tile
                pl.BlockSpec((1, tm, 1), lambda i, e, h: (e, i, 0)),   # routing weights
            ],
            out_specs=pl.BlockSpec((tm, Dp), lambda i, e, h: (i, 0)),
            scratch_shapes=[pltpu.VMEM((tm, Dp), jnp.float32)],
        ),
        compiler_params=pltpu.CompilerParams(
            dimension_semantics=("parallel", "arbitrary", "arbitrary")),
        cost_estimate=pl.CostEstimate(
            flops=int(flops),
            transcendentals=int(transcendentals),
            bytes_accessed=int(bytes_accessed)),
    )(xp, w1p, w2p, w3p, rwp)

    return out[:M, :D]


@functools.partial(jax.jit, static_argnames=("top_k", "tm", "th"))
def moe_layer_forward(x, gate_w, routing_bias, w1_stack, w2_stack, w3_stack,
                      shared_w1, shared_w2, shared_w3, *, top_k=1, tm=128, th=512):
    """Eval-mode forward of MoeLayer.

    x: (B, T, D).  gate_w: (E, D).  w*_stack: (E, out, in) per torch nn.Linear.
    shared_*: (out, in)."""
    B, T, D = x.shape
    E = gate_w.shape[0]
    M = B * T
    xf = x.reshape(M, D)

    # ---- Router (plain JAX: top-k + scatter + softmax; no clean Pallas win). ----
    gate_out = jnp.dot(xf.astype(jnp.float32), gate_w.astype(jnp.float32).T)
    gate_out = gate_out + routing_bias.astype(jnp.float32)[None, :]   # aux-free bias (zeros)
    top_v, top_i = jax.lax.top_k(gate_out, top_k)
    masked = jnp.full_like(gate_out, -jnp.inf)
    masked = masked.at[jnp.arange(M)[:, None], top_i].set(top_v)
    probs = jax.nn.softmax(masked, axis=-1)                           # (M, E)
    # TODO(synk): training-time aux-free routing_bias update and noisy_topk routing are
    # buffer/optimizer side effects outside the eval forward; not implemented here.

    # Shared expert rides along as one extra "expert" with weight 1 for every token.
    rw = jnp.concatenate([probs.T, jnp.ones((1, M), jnp.float32)], axis=0)   # (E+1, M)

    # torch nn.Linear stores (out, in); the kernel consumes (in, out).
    w1_all = jnp.concatenate([w1_stack, shared_w1[None]], axis=0).transpose(0, 2, 1)
    w2_all = jnp.concatenate([w2_stack, shared_w2[None]], axis=0).transpose(0, 2, 1)
    w3_all = jnp.concatenate([w3_stack, shared_w3[None]], axis=0).transpose(0, 2, 1)

    out = fused_moe_swiglu(xf, w1_all, w2_all, w3_all, rw, tm=tm, th=th)
    return out.reshape(B, T, D)


def reference_moe(x, gate_w, routing_bias, w1_stack, w2_stack, w3_stack,
                  shared_w1, shared_w2, shared_w3, *, top_k=1):
    """Pure-JAX f32 reference mirroring the PyTorch MoeLayer.forward (eval mode)."""
    B, T, D = x.shape
    E = gate_w.shape[0]
    M = B * T
    xf = x.reshape(M, D).astype(jnp.float32)

    gate_out = xf @ gate_w.astype(jnp.float32).T + routing_bias.astype(jnp.float32)[None, :]
    top_v, top_i = jax.lax.top_k(gate_out, top_k)
    masked = jnp.full_like(gate_out, -jnp.inf)
    masked = masked.at[jnp.arange(M)[:, None], top_i].set(top_v)
    probs = jax.nn.softmax(masked, axis=-1)

    def swiglu(w1, w2, w3):
        g = xf @ w1.astype(jnp.float32).T
        v = xf @ w2.astype(jnp.float32).T
        return ((g * jax.nn.sigmoid(g)) * v) @ w3.astype(jnp.float32).T

    out = swiglu(shared_w1, shared_w2, shared_w3)         # shared expert, weight 1
    for e_idx in range(E):
        out = out + probs[:, e_idx:e_idx + 1] * swiglu(
            w1_stack[e_idx], w2_stack[e_idx], w3_stack[e_idx])
    return out.reshape(B, T, D)


if __name__ == "__main__":
    # Scaled-down shapes consistent with the module: hidden = D * 2 * 4 // 3.
    D = 384                      # embeddings_dims (multiple of 128 -> lane-dense)
    H = D * 2 * 4 // 3           # 1024
    E = 4                        # number of routed experts (ModelArgs.experts scaled down)
    B, T = 4, 64                 # batch, block_size (scaled down); M = 256 -> 2 token tiles
    top_k = 1                    # ModelArgs.top_experts

    key = jax.random.PRNGKey(0)
    kx, kg, k1, k2, k3, ks1, ks2, ks3 = jax.random.split(key, 8)

    def linear_init(k, out_f, in_f):
        # Stand-in for torch nn.Linear default init: U(-1/sqrt(in), 1/sqrt(in)), (out, in).
        bound = 1.0 / (in_f ** 0.5)
        return jax.random.uniform(k, (out_f, in_f), jnp.float32, -bound, bound)

    def stacked_linear_init(k, n, out_f, in_f):
        bound = 1.0 / (in_f ** 0.5)
        return jax.random.uniform(k, (n, out_f, in_f), jnp.float32, -bound, bound)

    # bf16 activations/weights (MXU-native); router weights kept in f32.
    x = jax.random.normal(kx, (B, T, D), jnp.float32).astype(jnp.bfloat16)
    gate_w = linear_init(kg, E, D)
    routing_bias = jnp.zeros((E,), jnp.float32)          # aux-free load-balancing bias buffer

    w1 = stacked_linear_init(k1, E, H, D).astype(jnp.bfloat16)   # linear_layer1.weight per expert
    w2 = stacked_linear_init(k2, E, H, D).astype(jnp.bfloat16)   # linear_layer2.weight per expert
    w3 = stacked_linear_init(k3, E, D, H).astype(jnp.bfloat16)   # linear_layer3.weight per expert
    sw1 = linear_init(ks1, H, D).astype(jnp.bfloat16)            # shared expert weights
    sw2 = linear_init(ks2, H, D).astype(jnp.bfloat16)
    sw3 = linear_init(ks3, D, H).astype(jnp.bfloat16)

    out = moe_layer_forward(x, gate_w, routing_bias, w1, w2, w3, sw1, sw2, sw3,
                            top_k=top_k, tm=128, th=512)
    out = jax.block_until_ready(out)

    ref = reference_moe(x, gate_w, routing_bias, w1, w2, w3, sw1, sw2, sw3, top_k=top_k)

    assert out.shape == (B, T, D)
    out_f32 = out.astype(jnp.float32)
    assert bool(jnp.all(jnp.isfinite(out_f32)))
    max_err = float(jnp.max(jnp.abs(out_f32 - ref)))
    assert max_err < 2e-2, f"mismatch vs reference, max abs err = {max_err}"

    print("KERNEL_OK")
</pallas_src>

<mosaic_0001>
module attributes {stable_mosaic.version = 11 : i64} {
  func.func @_moe_swiglu_kernel(%arg0: i32, %arg1: i32, %arg2: i32, %arg3: memref<128x384xbf16, #tpu.memory_space<vmem>>, %arg4: memref<1x384x512xbf16, #tpu.memory_space<vmem>>, %arg5: memref<1x384x512xbf16, #tpu.memory_space<vmem>>, %arg6: memref<1x512x384xbf16, #tpu.memory_space<vmem>>, %arg7: memref<1x128x1xf32, #tpu.memory_space<vmem>>, %arg8: memref<128x384xbf16, #tpu.memory_space<vmem>>, %arg9: memref<128x384xf32, #tpu.memory_space<vmem>>) attributes {dimension_semantics = [#tpu.dimension_semantics<parallel>, #tpu.dimension_semantics<arbitrary>, #tpu.dimension_semantics<arbitrary>], iteration_bounds = array<i64: 2, 5, 2>, scalar_prefetch = 0 : i64, scratch_operands = 1 : i64, tpu.core_type = #tpu.core_type<tc>, window_params = [{transform_indices = @transform_0, window_bounds = array<i64: 128, 384>}, {transform_indices = @transform_1, window_bounds = array<i64: 1, 384, 512>}, {transform_indices = @transform_2, window_bounds = array<i64: 1, 384, 512>}, {transform_indices = @transform_3, window_bounds = array<i64: 1, 512, 384>}, {transform_indices = @transform_4, window_bounds = array<i64: 1, 128, 1>}, {transform_indices = @transform_5, window_bounds = array<i64: 128, 384>}]} {
    %c0_i32 = arith.constant 0 : i32
    %0 = arith.cmpi eq, %arg1, %c0_i32 : i32
    %c0_i32_0 = arith.constant 0 : i32
    %1 = arith.cmpi eq, %arg2, %c0_i32_0 : i32
    %2 = arith.andi %0, %1 : i1
    %3 = arith.extui %2 : i1 to i32
    %c0_i32_1 = arith.constant 0 : i32
    %4 = arith.cmpi ne, %3, %c0_i32_1 : i32
    scf.if %4 {
      %cst_23 = arith.constant 0.000000e+00 : f32
      %35 = vector.broadcast %cst_23 : f32 to vector<128x384xf32>
      %c0_24 = arith.constant 0 : index
      %c0_25 = arith.constant 0 : index
      %36 = vector.load %arg9[%c0_24, %c0_25] : memref<128x384xf32, #tpu.memory_space<vmem>>, vector<128x384xf32>
      tpu.vector_store %arg9[%c0_24, %c0_25], %35 {strides = array<i32>} : memref<128x384xf32, #tpu.memory_space<vmem>>, vector<128x384xf32>,
    } else {
    }
    %c0 = arith.constant 0 : index
    %c0_2 = arith.constant 0 : index
    %5 = vector.load %arg3[%c0, %c0_2] : memref<128x384xbf16, #tpu.memory_space<vmem>>, vector<128x384xbf16>
    %c0_3 = arith.constant 0 : index
    %c0_4 = arith.constant 0 : index
    %c0_5 = arith.constant 0 : index
    %6 = vector.load %arg4[%c0_3, %c0_4, %c0_5] : memref<1x384x512xbf16, #tpu.memory_space<vmem>>, vector<1x384x512xbf16>
    %7 = vector.shape_cast %6 : vector<1x384x512xbf16> to vector<384x512xbf16>
    %cst = arith.constant dense<0.000000e+00> : vector<128x512xf32>
    %8 = tpu.matmul %5, %7, %cst {dimension_numbers = #tpu.dot_dimension_numbers<[1], [0], [0], [1], [0, 0, 1, 1], [], []>} : vector<128x384xbf16>, vector<384x512xbf16>, vector<128x512xf32> -> vector<128x512xf32>
    %c0_6 = arith.constant 0 : index
    %c0_7 = arith.constant 0 : index
    %c0_8 = arith.constant 0 : index
    %9 = vector.load %arg5[%c0_6, %c0_7, %c0_8] : memref<1x384x512xbf16, #tpu.memory_space<vmem>>, vector<1x384x512xbf16>
    %10 = vector.shape_cast %9 : vector<1x384x512xbf16> to vector<384x512xbf16>
    %cst_9 = arith.constant dense<0.000000e+00> : vector<128x512xf32>
    %11 = tpu.matmul %5, %10, %cst_9 {dimension_numbers = #tpu.dot_dimension_numbers<[1], [0], [0], [1], [0, 0, 1, 1], [], []>} : vector<128x384xbf16>, vector<384x512xbf16>, vector<128x512xf32> -> vector<128x512xf32>
    %12 = arith.negf %8 : vector<128x512xf32>
    %13 = math.exp %12 : vector<128x512xf32>
    %cst_10 = arith.constant 1.000000e+00 : f32
    %14 = vector.broadcast %cst_10 : f32 to vector<128x512xf32>
    %15 = arith.addf %14, %13 : vector<128x512xf32>
    %16 = arith.divf %14, %15 : vector<128x512xf32>
    %17 = arith.mulf %8, %16 : vector<128x512xf32>
    %18 = arith.mulf %17, %11 : vector<128x512xf32>
    %19 = arith.truncf %18 : vector<128x512xf32> to vector<128x512xbf16>
    %c0_11 = arith.constant 0 : index
    %c0_12 = arith.constant 0 : index
    %c0_13 = arith.constant 0 : index
    %20 = vector.load %arg6[%c0_11, %c0_12, %c0_13] : memref<1x512x384xbf16, #tpu.memory_space<vmem>>, vector<1x512x384xbf16>
    %21 = vector.shape_cast %20 : vector<1x512x384xbf16> to vector<512x384xbf16>
    %cst_14 = arith.constant dense<0.000000e+00> : vector<128x384xf32>
    %22 = tpu.matmul %19, %21, %cst_14 {dimension_numbers = #tpu.dot_dimension_numbers<[1], [0], [0], [1], [0, 0, 1, 1], [], []>} : vector<128x512xbf16>, vector<512x384xbf16>, vector<128x384xf32> -> vector<128x384xf32>
    %c0_15 = arith.constant 0 : index
    %c0_16 = arith.constant 0 : index
    %23 = vector.load %arg9[%c0_15, %c0_16] : memref<128x384xf32, #tpu.memory_space<vmem>>, vector<128x384xf32>
    %c0_17 = arith.constant 0 : index
    %c0_18 = arith.constant 0 : index
    %c0_19 = arith.constant 0 : index
    %24 = vector.load %arg7[%c0_17, %c0_18, %c0_19] : memref<1x128x1xf32, #tpu.memory_space<vmem>>, vector<1x128x1xf32>
    %25 = vector.shape_cast %24 : vector<1x128x1xf32> to vector<128x1xf32>
    %26 = vector.broadcast %25 : vector<128x1xf32> to vector<128x384xf32>
    %27 = arith.mulf %26, %22 : vector<128x384xf32>
    %28 = arith.addf %23, %27 : vector<128x384xf32>
    %c0_20 = arith.constant 0 : index
    %c0_21 = arith.constant 0 : index
    %29 = vector.load %arg9[%c0_20, %c0_21] : memref<128x384xf32, #tpu.memory_space<vmem>>, vector<128x384xf32>
    tpu.vector_store %arg9[%c0_20, %c0_21], %28 {strides = array<i32>} : memref<128x384xf32, #tpu.memory_space<vmem>>, vector<128x384xf32>,
    %c4_i32 = arith.constant 4 : i32
    %30 = arith.cmpi eq, %arg1, %c4_i32 : i32
    %c1_i32 = arith.constant 1 : i32
    %31 = arith.cmpi eq, %arg2, %c1_i32 : i32
    %32 = arith.andi %30, %31 : i1
    %33 = arith.extui %32 : i1 to i32
    %c0_i32_22 = arith.constant 0 : i32
    %34 = arith.cmpi ne, %33, %c0_i32_22 : i32
    scf.if %34 {
      %c0_23 = arith.constant 0 : index
      %c0_24 = arith.constant 0 : index
      %35 = vector.load %arg9[%c0_23, %c0_24] : memref<128x384xf32, #tpu.memory_space<vmem>>, vector<128x384xf32>
      %36 = arith.truncf %35 : vector<128x384xf32> to vector<128x384xbf16>
      %c0_25 = arith.constant 0 : index
      %c0_26 = arith.constant 0 : index
      %37 = vector.load %arg8[%c0_25, %c0_26] : memref<128x384xbf16, #tpu.memory_space<vmem>>, vector<128x384xbf16>
      tpu.vector_store %arg8[%c0_25, %c0_26], %36 {strides = array<i32>} : memref<128x384xbf16, #tpu.memory_space<vmem>>, vector<128x384xbf16>,
    } else {
    }
    return
  }
  func.func @transform_0(%arg0: i32, %arg1: i32, %arg2: i32) -> (i32, i32) {
    %c0_i32 = arith.constant 0 : i32
    %c0_i32_0 = arith.constant 0 : i32
    return %arg0, %c0_i32 : i32, i32
  }
  func.func @transform_1(%arg0: i32, %arg1: i32, %arg2: i32) -> (i32, i32, i32) {
    %c0_i32 = arith.constant 0 : i32
    %c0_i32_0 = arith.constant 0 : i32
    return %arg1, %c0_i32, %arg2 : i32, i32, i32
  }
  func.func @transform_2(%arg0: i32, %arg1: i32, %arg2: i32) -> (i32, i32, i32) {
    %c0_i32 = arith.constant 0 : i32
    %c0_i32_0 = arith.constant 0 : i32
    return %arg1, %c0_i32, %arg2 : i32, i32, i32
  }
  func.func @transform_3(%arg0: i32, %arg1: i32, %arg2: i32) -> (i32, i32, i32) {
    %c0_i32 = arith.constant 0 : i32
    %c0_i32_0 = arith.constant 0 : i32
    return %arg1, %arg2, %c0_i32 : i32, i32, i32
  }
  func.func @transform_4(%arg0: i32, %arg1: i32, %arg2: i32) -> (i32, i32, i32) {
    %c0_i32 = arith.constant 0 : i32
    %c0_i32_0 = arith.constant 0 : i32
    return %arg1, %arg0, %c0_i32 : i32, i32, i32
  }
  func.func @transform_5(%arg0: i32, %arg1: i32, %arg2: i32) -> (i32, i32) {
    %c0_i32 = arith.constant 0 : i32
    %c0_i32_0 = arith.constant 0 : i32
    return %arg0, %c0_i32 : i32, i32
  }
}

</mosaic_0001>

<llo_original>
// kernel: custom-call
$region0: #{custom-call}
  #allocation0 [shape = 'u32[8,128]{1,0}', space=vmem, size = 0x1000, scoped, tag = 'scratch']
  #allocation1 [shape = 'u32[8,128]{1,0}', space=vmem, size = 0x1000, scoped, tag = 'scratch']
  #allocation2 [shape = 'u32[8,128]{1,0}', space=vmem, size = 0x1000, scoped, tag = 'scratch']
  #allocation3 [shape = 'u32[8,128]{1,0}', space=vmem, size = 0x1000, scoped, tag = 'scratch']
  #allocation4 [shape = 'u32[8,128]{1,0}', space=vmem, size = 0x1000, scoped, tag = 'scratch']
  #allocation5 [shape = 'u32[8,128]{1,0}', space=vmem, size = 0x1000, scoped, tag = 'scratch']
  #allocation6 [shape = 'u32[8,128]{1,0}', space=vmem, size = 0x1000, scoped, tag = 'scratch']
  %s0 = inlined_call_operand.vmem [shape: f32[256,4], index: 0, kind: input, shape index: {}]
  %s1 = inlined_call_operand.vmem [shape: f32[256,1], index: 1, kind: output, shape index: {0}]
  %s2 = inlined_call_operand.vmem [shape: s32[256,1], index: 2, kind: output, shape index: {1}]
  %3 = xla_tuple %s1, %s2
  %4 = xla_tuple 2147483648, 2147483647
  $region1: #{custom-call} parent=0
    #allocation7 [shape = 'u8[4096]{0}', space=vmem, size = 0x1000, scoped, tag = 'operand span for operand 1']
    #allocation8 [shape = 'u8[1024]{0}', space=vmem, size = 0x400, scoped, tag = 'packed  for operand 1']
    #allocation9 [shape = 'u8[4096]{0}', space=vmem, size = 0x1000, scoped, tag = 'operand span for operand 2']
    #allocation10 [shape = 'u8[1024]{0}', space=vmem, size = 0x400, scoped, tag = 'packed  for operand 2']
    loop: start=0, step=1, limit=3
    $region2: #{custom-call} parent=1 // loop_pre_header
      _
    $region3: #{custom-call} parent=1 // loop_header
      %s6 = sphi 0, %s10
      %p7 = scmp.ge.s32.totalorder %s6, 3
      %s12 = sphi 0, %s22
      %s13 = sphi 0, %s18
      %s14 = sphi 0, %s12
      %s15 = sphi 0, %s13
    $region4: #{custom-call} parent=1 // loop_header_branch
      %9 = sbr.rel (%p7) target = $region8
    $region5: #{custom-call} parent=1 // loop_body
      %s11 = ssub.s32 %s6, 1
      %s16 = sadd.s32 1, %s13
      %p17 = scmp.ge.s32.totalorder %s16, 2
      %s18 = scalar_select %p17, 0, %s16
      %s19 = sadd.s32 1, %s12
      %s20 = scalar_select %p17, %s19, %s12
      %p21 = scmp.ge.s32.totalorder %s20, 1
      %s22 = scalar_select %p21, 0, %s20
      %p23 = scmp.lt.s32.totalorder %s6, 2
      // Predicated region
      $region9: #{custom-call} parent=5 // pred_check
        %p24 = pneg %p23
      $region10: #{custom-call} parent=5 // pred_check_branch
        %26 = sbr.rel (%p24) target = $region12
      $region11: #{custom-call} parent=5 // pred_region
        #allocation11 [shape = 'f32[1,128]{1,0:T(8,128)}', space=vmem, size = 0x1000, scoped, tag = 'scoped memory for custom-call']
        #allocation12 [shape = 'f32[1,128]{1,0:T(8,128)}', space=vmem, size = 0x1000, scoped, tag = 'scoped memory for custom-call']
        #allocation13 [shape = 's32[1,128]{1,0:T(8,128)}', space=vmem, size = 0x1000, scoped, tag = 'scoped memory for custom-call']
        #allocation14 [shape = 's32[1,128]{1,0:T(8,128)}', space=vmem, size = 0x1000, scoped, tag = 'scoped memory for custom-call']
        %s27 = sand.u32 %s6, 1
        %s28 = sand.u32 %s6, 1
        %s29 = scalar_lea.vmem [#allocation8], %s28
        %s30 = sand.u32 %s6, 1
        %s31 = sand.u32 %s6, 1
        %s32 = scalar_lea.vmem [#allocation10], %s31
        %33 = xla_tuple [#allocation7], [#allocation9]
        %34 = vst [vmem:[#allocation11] sm:$0xff] 2147483648
        %35 = vst [vmem:[#allocation13] sm:$0xff] 2147483647
        %36 = xla_tuple [#allocation11], [#allocation13]
        %37 = xla_tuple [#allocation12], [#allocation14]
        $region13: #{custom-call} parent=11
          #allocation15 [shape = 'u8[4096]{0}', space=vmem, size = 0x1000, scoped, tag = 'operand span for operand 0']
          #allocation16 [shape = 's32[1024]{0}', space=vmem, size = 0x1000, scoped, tag = 'scoped memory for custom-call']
          // Predicated region
          $region14: #{custom-call} parent=13 // pred_check
            _
          $region15: #{custom-call} parent=13 // pred_check_branch
            %39 = sbr.rel (0) target = $region17
          $region16: #{custom-call} parent=13 // pred_region
            %s40 = smul.addr %s13, 4
            %s41 = scalar_lea.vmem %s0, %s40
            // Predicated region
            $region18: #{custom-call} parent=16 // pred_check
              _
            $region19: #{custom-call} parent=16 // pred_check_branch
              %43 = sbr.rel (0) target = $region21
            $region20: #{custom-call} parent=16 // pred_region
              // Predicated region
              $region22: #{custom-call} parent=20 // pred_check
                _
              $region23: #{custom-call} parent=20 // pred_check_branch
                %45 = sbr.rel target = $region25
              $region24: #{custom-call} parent=20 // pred_region
                // Predicated region
                $region37: #{custom-call} parent=24 // pred_check
                  _
                $region38: #{custom-call} parent=24 // pred_check_branch
                  %61 = sbr.rel (0) target = $region40
                $region39: #{custom-call} parent=24 // pred_region
                  %s63 = ssub.s32 16, 1
                  loop: start=0, step=1, limit=1
                  $region41: #{custom-call} parent=39 // loop_pre_header
                    _
                  $region42: #{custom-call} parent=39 // loop_header
                    %s65 = sphi 0, %s69
                    %p66 = scmp.ge.s32.totalorder %s65, 1
                    %s70 = sphi %s41, %s41
                    %s71 = sphi [#allocation15], [#allocation15]
                  $region43: #{custom-call} parent=39 // loop_header_branch
                    %68 = sbr.rel (%p66) target = $region47
                  $region44: #{custom-call} parent=39 // loop_body
                    %v72 = vld [vmem:[%s70] sm:%s63]
                    %73 = vst [vmem:[%s71] sm:%s63] %v72
                  $region45: #{custom-call} parent=39 // loop_footer
                    %s69 = sadd.s32 1, %s65
                  $region46: #{custom-call} parent=39 // loop_footer_branch
                    %64 = sbr.rel target = $region42
                  $region47: #{custom-call} parent=39 // loop_exit
                    _
                $region40: #{custom-call} parent=24 // pred_fallthru
                  _
              $region25: #{custom-call} parent=20 // pred_fallthru
                _
              // Predicated region
              $region26: #{custom-call} parent=20 // pred_check
                _
              $region27: #{custom-call} parent=20 // pred_check_branch
                %47 = sbr.rel (0) target = $region29
              $region28: #{custom-call} parent=20 // pred_region
                %s49 = ssub.s32 16, 1
                loop: start=0, step=1, limit=1
                $region30: #{custom-call} parent=28 // loop_pre_header
                  _
                $region31: #{custom-call} parent=28 // loop_header
                  %s51 = sphi 0, %s55
                  %p52 = scmp.ge.s32.totalorder %s51, 1
                  %s56 = sphi %s41, %s41
                  %s57 = sphi [#allocation15], [#allocation15]
                $region32: #{custom-call} parent=28 // loop_header_branch
                  %54 = sbr.rel (%p52) target = $region36
                $region33: #{custom-call} parent=28 // loop_body
                  %v58 = vld [vmem:[%s56] sm:%s49]
                  %59 = vst [vmem:[%s57] sm:%s49] %v58
                $region34: #{custom-call} parent=28 // loop_footer
                  %s55 = sadd.s32 1, %s51
                $region35: #{custom-call} parent=28 // loop_footer_branch
                  %50 = sbr.rel target = $region31
                $region36: #{custom-call} parent=28 // loop_exit
                  _
              $region29: #{custom-call} parent=20 // pred_fallthru
                _
            $region21: #{custom-call} parent=16 // pred_fallthru
              _
            %74 = vnop
          $region17: #{custom-call} parent=13 // pred_fallthru
            _
          // Predicated region
          $region48: #{custom-call} parent=13 // pred_check
            _
          $region49: #{custom-call} parent=13 // pred_check_branch
            %76 = sbr.rel (0) target = $region51
          $region50: #{custom-call} parent=13 // pred_region
            _
          $region51: #{custom-call} parent=13 // pred_fallthru
            _
          %v77 = vlaneseq
          %v78 = vshrl.u32 %v77, 7
          %v80 = vld [vmem:[#allocation15] sm:$0xff]
          %vm81 = vcmp.lt.s32.totalorder %v80, 0
          %v82 = vsub.s32 2147483647, %v80
          %v83 = vsel %vm81, %v82, %v80
          %vm85 = vcmp.lt.s32.totalorder %v78, 4
          %v86 = vsel %vm85, %v83, 2147483648
          %87 = vst [vmem:[#allocation15] sm:$0xff] %v86
          %v88 = vlaneseq
          %v89 = vshrl.u32 %v88, 7
          %92 = vst [vmem:[#allocation16] sm:$0xff] %v89
          %93 = xla_tuple [#allocation15], [#allocation16]
          %94 = vst [vmem:[#allocation12] sm:$0xff] 2147483648
          %95 = vst [vmem:[#allocation14] sm:$0xff] 2147483647
          %96 = xla_tuple [#allocation12], [#allocation14]
          loop: start=0, step=1, limit=1
          $region52: #{custom-call} parent=13 // loop_pre_header
            _
          $region53: #{custom-call} parent=13 // loop_header
            %s98 = sphi 0, %s102
            %p99 = scmp.ge.s32.totalorder %s98, 1
          $region54: #{custom-call} parent=13 // loop_header_branch
            %101 = sbr.rel (%p99) target = $region58
          $region55: #{custom-call} parent=13 // loop_body
            %v103 = vld [vmem:[#allocation15] sm:$0xff]
            %v104 = vld [vmem:[#allocation16] sm:$0xff]
            %105 = xla_tuple %v103, %v104
            %v106 = vrot.slane %v103, 1
            %v107 = vrot.slane %v104, 1
            %108 = xla_tuple %v106, %v107
            %vm109 = vcmp.gt.s32.totalorder %v106, %v103
            %vm110 = vcmp.eq.s32.totalorder %v106, %v103
            %vm111 = vcmp.lt.s32.totalorder %v107, %v104
            %vm112 = vmand %vm110, %vm111
            %vm113 = vmor %vm109, %vm112
            %v114 = vsel %vm113, %v106, %v103
            %v115 = vsel %vm113, %v107, %v104
            %116 = xla_tuple %v114, %v115
            %v117 = vrot.slane %v114, 1
            %v118 = vrot.slane %v115, 1
            %119 = xla_tuple %v117, %v118
            %vm120 = vcmp.gt.s32.totalorder %v117, %v114
            %vm121 = vcmp.eq.s32.totalorder %v117, %v114
            %vm122 = vcmp.lt.s32.totalorder %v118, %v115
            %vm123 = vmand %vm121, %vm122
            %vm124 = vmor %vm120, %vm123
            %v125 = vsel %vm124, %v117, %v114
            %v126 = vsel %vm124, %v118, %v115
            %127 = xla_tuple %v125, %v126
            %v128 = vrot.slane %v125, 1
            %v129 = vrot.slane %v126, 1
            %130 = xla_tuple %v128, %v129
            %vm131 = vcmp.gt.s32.totalorder %v128, %v125
            %vm132 = vcmp.eq.s32.totalorder %v128, %v125
            %vm133 = vcmp.lt.s32.totalorder %v129, %v126
            %vm134 = vmand %vm132, %vm133
            %vm135 = vmor %vm131, %vm134
            %v136 = vsel %vm135, %v128, %v125
            %v137 = vsel %vm135, %v129, %v126
            %138 = xla_tuple %v136, %v137
            %v139 = vrot.slane %v136, 1
            %v140 = vrot.slane %v137, 1
            %141 = xla_tuple %v139, %v140
            %vm142 = vcmp.gt.s32.totalorder %v139, %v136
            %vm143 = vcmp.eq.s32.totalorder %v139, %v136
            %vm144 = vcmp.lt.s32.totalorder %v140, %v137
            %vm145 = vmand %vm143, %vm144
            %vm146 = vmor %vm142, %vm145
            %v147 = vsel %vm146, %v139, %v136
            %v148 = vsel %vm146, %v140, %v137
            %149 = xla_tuple %v147, %v148
            %v150 = vrot.slane %v147, 1
            %v151 = vrot.slane %v148, 1
            %152 = xla_tuple %v150, %v151
            %vm153 = vcmp.gt.s32.totalorder %v150, %v147
            %vm154 = vcmp.eq.s32.totalorder %v150, %v147
            %vm155 = vcmp.lt.s32.totalorder %v151, %v148
            %vm156 = vmand %vm154, %vm155
            %vm157 = vmor %vm153, %vm156
            %v158 = vsel %vm157, %v150, %v147
            %v159 = vsel %vm157, %v151, %v148
            %160 = xla_tuple %v158, %v159
            %v161 = vrot.slane %v158, 1
            %v162 = vrot.slane %v159, 1
            %163 = xla_tuple %v161, %v162
            %vm164 = vcmp.gt.s32.totalorder %v161, %v158
            %vm165 = vcmp.eq.s32.totalorder %v161, %v158
            %vm166 = vcmp.lt.s32.totalorder %v162, %v159
            %vm167 = vmand %vm165, %vm166
            %vm168 = vmor %vm164, %vm167
            %v169 = vsel %vm168, %v161, %v158
            %v170 = vsel %vm168, %v162, %v159
            %171 = xla_tuple %v169, %v170
            %v172 = vrot.slane %v169, 1
            %v173 = vrot.slane %v170, 1
            %174 = xla_tuple %v172, %v173
            %vm175 = vcmp.gt.s32.totalorder %v172, %v169
            %vm176 = vcmp.eq.s32.totalorder %v172, %v169
            %vm177 = vcmp.lt.s32.totalorder %v173, %v170
            %vm178 = vmand %vm176, %vm177
            %vm179 = vmor %vm175, %vm178
            %v180 = vsel %vm179, %v172, %v169
            %v181 = vsel %vm179, %v173, %v170
            %182 = xla_tuple %v180, %v181
            %s183 = scalar_lea.vmem [#allocation12], %s98
            %184 = vst [vmem:[%s183] sm:$0x1] %v180
            %s185 = scalar_lea.vmem [#allocation14], %s98
            %186 = vst [vmem:[%s185] sm:$0x1] %v181
            %187 = xla_tuple %184, %186
            %188 = vxpose.xlu0.b32.start [1/16] %v181, 128
            %189 = vxpose.xlu0.b32.cont [2/16] 0.0, 128
            %190 = vxpose.xlu0.b32.cont [3/16] 0.0, 128
            %191 = vxpose.xlu0.b32.cont [4/16] 0.0, 128
            %192 = vxpose.xlu0.b32.cont [5/16] 0.0, 128
            %193 = vxpose.xlu0.b32.cont [6/16] 0.0, 128
            %194 = vxpose.xlu0.b32.cont [7/16] 0.0, 128
            %195 = vxpose.xlu0.b32.cont [8/16] 0.0, 128
            %196 = vxpose.xlu0.b32.cont [9/16] 0.0, 128
            %197 = vxpose.xlu0.b32.cont [10/16] 0.0, 128
            %198 = vxpose.xlu0.b32.cont [11/16] 0.0, 128
            %199 = vxpose.xlu0.b32.cont [12/16] 0.0, 128
            %200 = vxpose.xlu0.b32.cont [13/16] 0.0, 128
            %201 = vxpose.xlu0.b32.cont [14/16] 0.0, 128
            %202 = vxpose.xlu0.b32.cont [15/16] 0.0, 128
            %203 = vxpose.xlu0.b32.end [16/16] 0.0, 128
            %v204 = vpop.trf.xlu0
            %v205 = vpop.trf.xlu0
            %v206 = vpop.trf.xlu0
            %v207 = vpop.trf.xlu0
            %v208 = vpop.trf.xlu0
            %v209 = vpop.trf.xlu0
            %v210 = vpop.trf.xlu0
            %v211 = vpop.trf.xlu0
            %v212 = vpop.trf.xlu0
            %v213 = vpop.trf.xlu0
            %v214 = vpop.trf.xlu0
            %v215 = vpop.trf.xlu0
            %v216 = vpop.trf.xlu0
            %v217 = vpop.trf.xlu0
            %v218 = vpop.trf.xlu0
            %v219 = vpop.trf.xlu0
            %s220 = vtos %v204
            %s221 = sshrl.u32 %s220, 3
            %p222 = scmp.lt.s32.totalorder %s220, 0
            %s223 = ssub.s32 0, %s220
            %s224 = scalar_select %p222, %s223, %s220
            %s225 = sand.u32 %s224, 7
            %s226 = ssub.s32 0, %s225
            %s227 = scalar_select %p222, %s226, %s225
            %v228 = vlaneseq
            %s229 = smul.u32 %s227, 128
            %v230 = vstv %s229
            %vm232 = vcmp.eq.s32.totalorder %v228, %v230
            %s233 = smul.addr %s221, 8
            %s234 = scalar_lea.vmem [#allocation15], %s233
            %235 = vst.msk [vmem:[%s234] sm:$0xff] %vm232, 2147483648
            %s236 = smul.addr %s221, 8
            %s237 = scalar_lea.vmem [#allocation16], %s236
            %238 = vst.msk [vmem:[%s237] sm:$0xff] %vm232, 2147483647
            %239 = xla_tuple %235, %238
            %v240 = vrot.slane %v204, 1
            %s241 = vtos %v240
            %s242 = sshrl.u32 %s241, 3
            %p243 = scmp.lt.s32.totalorder %s241, 0
            %s244 = ssub.s32 0, %s241
            %s245 = scalar_select %p243, %s244, %s241
            %s246 = sand.u32 %s245, 7
            %s247 = ssub.s32 0, %s246
            %s248 = scalar_select %p243, %s247, %s246
            %v249 = vlaneseq
            %s250 = smul.u32 %s248, 128
            %v251 = vstv %s250
            %v252 = vadd.s32 %v251, 1
            %vm253 = vcmp.eq.s32.totalorder %v249, %v252
            %s254 = smul.addr %s242, 8
            %s255 = scalar_lea.vmem [#allocation15], %s254
            %256 = vst.msk [vmem:[%s255] sm:$0xff] %vm253, 2147483648
            %s257 = smul.addr %s242, 8
            %s258 = scalar_lea.vmem [#allocation16], %s257
            %259 = vst.msk [vmem:[%s258] sm:$0xff] %vm253, 2147483647
            %260 = xla_tuple %256, %259
            %v261 = vrot.slane %v240, 1
            %s262 = vtos %v261
            %s263 = sshrl.u32 %s262, 3
            %p264 = scmp.lt.s32.totalorder %s262, 0
            %s265 = ssub.s32 0, %s262
            %s266 = scalar_select %p264, %s265, %s262
            %s267 = sand.u32 %s266, 7
            %s268 = ssub.s32 0, %s267
            %s269 = scalar_select %p264, %s268, %s267
            %v270 = vlaneseq
            %s271 = smul.u32 %s269, 128
            %v272 = vstv %s271
            %v273 = vadd.s32 %v272, 2
            %vm274 = vcmp.eq.s32.totalorder %v270, %v273
            %s275 = smul.addr %s263, 8
            %s276 = scalar_lea.vmem [#allocation15], %s275
            %277 = vst.msk [vmem:[%s276] sm:$0xff] %vm274, 2147483648
            %s278 = smul.addr %s263, 8
            %s279 = scalar_lea.vmem [#allocation16], %s278
            %280 = vst.msk [vmem:[%s279] sm:$0xff] %vm274, 2147483647
            %281 = xla_tuple %277, %280
            %v282 = vrot.slane %v261, 1
            %s283 = vtos %v282
            %s284 = sshrl.u32 %s283, 3
            %p285 = scmp.lt.s32.totalorder %s283, 0
            %s286 = ssub.s32 0, %s283
            %s287 = scalar_select %p285, %s286, %s283
            %s288 = sand.u32 %s287, 7
            %s289 = ssub.s32 0, %s288
            %s290 = scalar_select %p285, %s289, %s288
            %v291 = vlaneseq
            %s292 = smul.u32 %s290, 128
            %v293 = vstv %s292
            %v294 = vadd.s32 %v293, 3
            %vm295 = vcmp.eq.s32.totalorder %v291, %v294
            %s296 = smul.addr %s284, 8
            %s297 = scalar_lea.vmem [#allocation15], %s296
            %298 = vst.msk [vmem:[%s297] sm:$0xff] %vm295, 2147483648
            %s299 = smul.addr %s284, 8
            %s300 = scalar_lea.vmem [#allocation16], %s299
            %301 = vst.msk [vmem:[%s300] sm:$0xff] %vm295, 2147483647
            %302 = xla_tuple %298, %301
            %v303 = vrot.slane %v282, 1
            %s304 = vtos %v303
            %s305 = sshrl.u32 %s304, 3
            %p306 = scmp.lt.s32.totalorder %s304, 0
            %s307 = ssub.s32 0, %s304
            %s308 = scalar_select %p306, %s307, %s304
            %s309 = sand.u32 %s308, 7
            %s310 = ssub.s32 0, %s309
            %s311 = scalar_select %p306, %s310, %s309
            %v312 = vlaneseq
            %s313 = smul.u32 %s311, 128
            %v314 = vstv %s313
            %v315 = vadd.s32 %v314, 4
            %vm316 = vcmp.eq.s32.totalorder %v312, %v315
            %s317 = smul.addr %s305, 8
            %s318 = scalar_lea.vmem [#allocation15], %s317
            %319 = vst.msk [vmem:[%s318] sm:$0xff] %vm316, 2147483648
            %s320 = smul.addr %s305, 8
            %s321 = scalar_lea.vmem [#allocation16], %s320
            %322 = vst.msk [vmem:[%s321] sm:$0xff] %vm316, 2147483647
            %323 = xla_tuple %319, %322
            %v324 = vrot.slane %v303, 1
            %s325 = vtos %v324
            %s326 = sshrl.u32 %s325, 3
            %p327 = scmp.lt.s32.totalorder %s325, 0
            %s328 = ssub.s32 0, %s325
            %s329 = scalar_select %p327, %s328, %s325
            %s330 = sand.u32 %s329, 7
            %s331 = ssub.s32 0, %s330
            %s332 = scalar_select %p327, %s331, %s330
            %v333 = vlaneseq
            %s334 = smul.u32 %s332, 128
            %v335 = vstv %s334
            %v336 = vadd.s32 %v335, 5
            %vm337 = vcmp.eq.s32.totalorder %v333, %v336
            %s338 = smul.addr %s326, 8
            %s339 = scalar_lea.vmem [#allocation15], %s338
            %340 = vst.msk [vmem:[%s339] sm:$0xff] %vm337, 2147483648
            %s341 = smul.addr %s326, 8
            %s342 = scalar_lea.vmem [#allocation16], %s341
            %343 = vst.msk [vmem:[%s342] sm:$0xff] %vm337, 2147483647
            %344 = xla_tuple %340, %343
            %v345 = vrot.slane %v324, 1
            %s346 = vtos %v345
            %s347 = sshrl.u32 %s346, 3
            %p348 = scmp.lt.s32.totalorder %s346, 0
            %s349 = ssub.s32 0, %s346
            %s350 = scalar_select %p348, %s349, %s346
            %s351 = sand.u32 %s350, 7
            %s352 = ssub.s32 0, %s351
            %s353 = scalar_select %p348, %s352, %s351
            %v354 = vlaneseq
            %s355 = smul.u32 %s353, 128
            %v356 = vstv %s355
            %v357 = vadd.s32 %v356, 6
            %vm358 = vcmp.eq.s32.totalorder %v354, %v357
            %s359 = smul.addr %s347, 8
            %s360 = scalar_lea.vmem [#allocation15], %s359
            %361 = vst.msk [vmem:[%s360] sm:$0xff] %vm358, 2147483648
            %s362 = smul.addr %s347, 8
            %s363 = scalar_lea.vmem [#allocation16], %s362
            %364 = vst.msk [vmem:[%s363] sm:$0xff] %vm358, 2147483647
            %365 = xla_tuple %361, %364
            %v366 = vrot.slane %v345, 1
            %s367 = vtos %v366
            %s368 = sshrl.u32 %s367, 3
            %p369 = scmp.lt.s32.totalorder %s367, 0
            %s370 = ssub.s32 0, %s367
            %s371 = scalar_select %p369, %s370, %s367
            %s372 = sand.u32 %s371, 7
            %s373 = ssub.s32 0, %s372
            %s374 = scalar_select %p369, %s373, %s372
            %v375 = vlaneseq
            %s376 = smul.u32 %s374, 128
            %v377 = vstv %s376
            %v378 = vadd.s32 %v377, 7
            %vm379 = vcmp.eq.s32.totalorder %v375, %v378
            %s380 = smul.addr %s368, 8
            %s381 = scalar_lea.vmem [#allocation15], %s380
            %382 = vst.msk [vmem:[%s381] sm:$0xff] %vm379, 2147483648
            %s383 = smul.addr %s368, 8
            %s384 = scalar_lea.vmem [#allocation16], %s383
            %385 = vst.msk [vmem:[%s384] sm:$0xff] %vm379, 2147483647
            %386 = xla_tuple %382, %385
            %v387 = vrot.slane %v366, 1
            %s388 = vtos %v205
            %s389 = sshrl.u32 %s388, 3
            %p390 = scmp.lt.s32.totalorder %s388, 0
            %s391 = ssub.s32 0, %s388
            %s392 = scalar_select %p390, %s391, %s388
            %s393 = sand.u32 %s392, 7
            %s394 = ssub.s32 0, %s393
            %s395 = scalar_select %p390, %s394, %s393
            %v396 = vlaneseq
            %s397 = smul.u32 %s395, 128
            %v398 = vstv %s397
            %v399 = vadd.s32 %v398, 8
            %vm400 = vcmp.eq.s32.totalorder %v396, %v399
            %s401 = smul.addr %s389, 8
            %s402 = scalar_lea.vmem [#allocation15], %s401
            %403 = vst.msk [vmem:[%s402] sm:$0xff] %vm400, 2147483648
            %s404 = smul.addr %s389, 8
            %s405 = scalar_lea.vmem [#allocation16], %s404
            %406 = vst.msk [vmem:[%s405] sm:$0xff] %vm400, 2147483647
            %407 = xla_tuple %403, %406
            %v408 = vrot.slane %v205, 1
            %s409 = vtos %v408
            %s410 = sshrl.u32 %s409, 3
            %p411 = scmp.lt.s32.totalorder %s409, 0
            %s412 = ssub.s32 0, %s409
            %s413 = scalar_select %p411, %s412, %s409
            %s414 = sand.u32 %s413, 7
            %s415 = ssub.s32 0, %s414
            %s416 = scalar_select %p411, %s415, %s414
            %v417 = vlaneseq
            %s418 = smul.u32 %s416, 128
            %v419 = vstv %s418
            %v420 = vadd.s32 %v419, 9
            %vm421 = vcmp.eq.s32.totalorder %v417, %v420
            %s422 = smul.addr %s410, 8
            %s423 = scalar_lea.vmem [#allocation15], %s422
            %424 = vst.msk [vmem:[%s423] sm:$0xff] %vm421, 2147483648
            %s425 = smul.addr %s410, 8
            %s426 = scalar_lea.vmem [#allocation16], %s425
            %427 = vst.msk [vmem:[%s426] sm:$0xff] %vm421, 2147483647
            %428 = xla_tuple %424, %427
            %v429 = vrot.slane %v408, 1
            %s430 = vtos %v429
            %s431 = sshrl.u32 %s430, 3
            %p432 = scmp.lt.s32.totalorder %s430, 0
            %s433 = ssub.s32 0, %s430
            %s434 = scalar_select %p432, %s433, %s430
            %s435 = sand.u32 %s434, 7
            %s436 = ssub.s32 0, %s435
            %s437 = scalar_select %p432, %s436, %s435
            %v438 = vlaneseq
            %s439 = smul.u32 %s437, 128
            %v440 = vstv %s439
            %v441 = vadd.s32 %v440, 10
            %vm442 = vcmp.eq.s32.totalorder %v438, %v441
            %s443 = smul.addr %s431, 8
            %s444 = scalar_lea.vmem [#allocation15], %s443
            %445 = vst.msk [vmem:[%s444] sm:$0xff] %vm442, 2147483648
            %s446 = smul.addr %s431, 8
            %s447 = scalar_lea.vmem [#allocation16], %s446
            %448 = vst.msk [vmem:[%s447] sm:$0xff] %vm442, 2147483647
            %449 = xla_tuple %445, %448
            %v450 = vrot.slane %v429, 1
            %s451 = vtos %v450
            %s452 = sshrl.u32 %s451, 3
            %p453 = scmp.lt.s32.totalorder %s451, 0
            %s454 = ssub.s32 0, %s451
            %s455 = scalar_select %p453, %s454, %s451
            %s456 = sand.u32 %s455, 7
            %s457 = ssub.s32 0, %s456
            %s458 = scalar_select %p453, %s457, %s456
            %v459 = vlaneseq
            %s460 = smul.u32 %s458, 128
            %v461 = vstv %s460
            %v462 = vadd.s32 %v461, 11
            %vm463 = vcmp.eq.s32.totalorder %v459, %v462
            %s464 = smul.addr %s452, 8
            %s465 = scalar_lea.vmem [#allocation15], %s464
            %466 = vst.msk [vmem:[%s465] sm:$0xff] %vm463, 2147483648
            %s467 = smul.addr %s452, 8
            %s468 = scalar_lea.vmem [#allocation16], %s467
            %469 = vst.msk [vmem:[%s468] sm:$0xff] %vm463, 2147483647
            %470 = xla_tuple %466, %469
            %v471 = vrot.slane %v450, 1
            %s472 = vtos %v471
            %s473 = sshrl.u32 %s472, 3
            %p474 = scmp.lt.s32.totalorder %s472, 0
            %s475 = ssub.s32 0, %s472
            %s476 = scalar_select %p474, %s475, %s472
            %s477 = sand.u32 %s476, 7
            %s478 = ssub.s32 0, %s477
            %s479 = scalar_select %p474, %s478, %s477
            %v480 = vlaneseq
            %s481 = smul.u32 %s479, 128
            %v482 = vstv %s481
            %v483 = vadd.s32 %v482, 12
            %vm484 = vcmp.eq.s32.totalorder %v480, %v483
            %s485 = smul.addr %s473, 8
            %s486 = scalar_lea.vmem [#allocation15], %s485
            %487 = vst.msk [vmem:[%s486] sm:$0xff] %vm484, 2147483648
            %s488 = smul.addr %s473, 8
            %s489 = scalar_lea.vmem [#allocation16], %s488
            %490 = vst.msk [vmem:[%s489] sm:$0xff] %vm484, 2147483647
            %491 = xla_tuple %487, %490
            %v492 = vrot.slane %v471, 1
            %s493 = vtos %v492
            %s494 = sshrl.u32 %s493, 3
            %p495 = scmp.lt.s32.totalorder %s493, 0
            %s496 = ssub.s32 0, %s493
            %s497 = scalar_select %p495, %s496, %s493
            %s498 = sand.u32 %s497, 7
            %s499 = ssub.s32 0, %s498
            %s500 = scalar_select %p495, %s499, %s498
            %v501 = vlaneseq
            %s502 = smul.u32 %s500, 128
            %v503 = vstv %s502
            %v504 = vadd.s32 %v503, 13
            %vm505 = vcmp.eq.s32.totalorder %v501, %v504
            %s506 = smul.addr %s494, 8
            %s507 = scalar_lea.vmem [#allocation15], %s506
            %508 = vst.msk [vmem:[%s507] sm:$0xff] %vm505, 2147483648
            %s509 = smul.addr %s494, 8
            %s510 = scalar_lea.vmem [#allocation16], %s509
            %511 = vst.msk [vmem:[%s510] sm:$0xff] %vm505, 2147483647
            %512 = xla_tuple %508, %511
            %v513 = vrot.slane %v492, 1
            %s514 = vtos %v513
            %s515 = sshrl.u32 %s514, 3
            %p516 = scmp.lt.s32.totalorder %s514, 0
            %s517 = ssub.s32 0, %s514
            %s518 = scalar_select %p516, %s517, %s514
            %s519 = sand.u32 %s518, 7
            %s520 = ssub.s32 0, %s519
            %s521 = scalar_select %p516, %s520, %s519
            %v522 = vlaneseq
            %s523 = smul.u32 %s521, 128
            %v524 = vstv %s523
            %v525 = vadd.s32 %v524, 14
            %vm526 = vcmp.eq.s32.totalorder %v522, %v525
            %s527 = smul.addr %s515, 8
            %s528 = scalar_lea.vmem [#allocation15], %s527
            %529 = vst.msk [vmem:[%s528] sm:$0xff] %vm526, 2147483648
            %s530 = smul.addr %s515, 8
            %s531 = scalar_lea.vmem [#allocation16], %s530
            %532 = vst.msk [vmem:[%s531] sm:$0xff] %vm526, 2147483647
            %533 = xla_tuple %529, %532
            %v534 = vrot.slane %v513, 1
            %s535 = vtos %v534
            %s536 = sshrl.u32 %s535, 3
            %p537 = scmp.lt.s32.totalorder %s535, 0
            %s538 = ssub.s32 0, %s535
            %s539 = scalar_select %p537, %s538, %s535
            %s540 = sand.u32 %s539, 7
            %s541 = ssub.s32 0, %s540
            %s542 = scalar_select %p537, %s541, %s540
            %v543 = vlaneseq
            %s544 = smul.u32 %s542, 128
            %v545 = vstv %s544
            %v546 = vadd.s32 %v545, 15
            %vm547 = vcmp.eq.s32.totalorder %v543, %v546
            %s548 = smul.addr %s536, 8
            %s549 = scalar_lea.vmem [#allocation15], %s548
            %550 = vst.msk [vmem:[%s549] sm:$0xff] %vm547, 2147483648
            %s551 = smul.addr %s536, 8
            %s552 = scalar_lea.vmem [#allocation16], %s551
            %553 = vst.msk [vmem:[%s552] sm:$0xff] %vm547, 2147483647
            %554 = xla_tuple %550, %553
            %v555 = vrot.slane %v534, 1
            %s556 = vtos %v206
            %s557 = sshrl.u32 %s556, 3
            %p558 = scmp.lt.s32.totalorder %s556, 0
            %s559 = ssub.s32 0, %s556
            %s560 = scalar_select %p558, %s559, %s556
            %s561 = sand.u32 %s560, 7
            %s562 = ssub.s32 0, %s561
            %s563 = scalar_select %p558, %s562, %s561
            %v564 = vlaneseq
            %s565 = smul.u32 %s563, 128
            %v566 = vstv %s565
            %v567 = vadd.s32 %v566, 16
            %vm568 = vcmp.eq.s32.totalorder %v564, %v567
            %s569 = smul.addr %s557, 8
            %s570 = scalar_lea.vmem [#allocation15], %s569
            %571 = vst.msk [vmem:[%s570] sm:$0xff] %vm568, 2147483648
            %s572 = smul.addr %s557, 8
            %s573 = scalar_lea.vmem [#allocation16], %s572
            %574 = vst.msk [vmem:[%s573] sm:$0xff] %vm568, 2147483647
            %575 = xla_tuple %571, %574
            %v576 = vrot.slane %v206, 1
            %s577 = vtos %v576
            %s578 = sshrl.u32 %s577, 3
            %p579 = scmp.lt.s32.totalorder %s577, 0
            %s580 = ssub.s32 0, %s577
            %s581 = scalar_select %p579, %s580, %s577
            %s582 = sand.u32 %s581, 7
            %s583 = ssub.s32 0, %s582
            %s584 = scalar_select %p579, %s583, %s582
            %v585 = vlaneseq
            %s586 = smul.u32 %s584, 128
            %v587 = vstv %s586
            %v588 = vadd.s32 %v587, 17
            %vm589 = vcmp.eq.s32.totalorder %v585, %v588
            %s590 = smul.addr %s578, 8
            %s591 = scalar_lea.vmem [#allocation15], %s590
            %592 = vst.msk [vmem:[%s591] sm:$0xff] %vm589, 2147483648
            %s593 = smul.addr %s578, 8
            %s594 = scalar_lea.vmem [#allocation16], %s593
            %595 = vst.msk [vmem:[%s594] sm:$0xff] %vm589, 2147483647
            %596 = xla_tuple %592, %595
            %v597 = vrot.slane %v576, 1
            %s598 = vtos %v597
            %s599 = sshrl.u32 %s598, 3
            %p600 = scmp.lt.s32.totalorder %s598, 0
            %s601 = ssub.s32 0, %s598
            %s602 = scalar_select %p600, %s601, %s598
            %s603 = sand.u32 %s602, 7
            %s604 = ssub.s32 0, %s603
            %s605 = scalar_select %p600, %s604, %s603
            %v606 = vlaneseq
            %s607 = smul.u32 %s605, 128
            %v608 = vstv %s607
            %v609 = vadd.s32 %v608, 18
            %vm610 = vcmp.eq.s32.totalorder %v606, %v609
            %s611 = smul.addr %s599, 8
            %s612 = scalar_lea.vmem [#allocation15], %s611
            %613 = vst.msk [vmem:[%s612] sm:$0xff] %vm610, 2147483648
            %s614 = smul.addr %s599, 8
            %s615 = scalar_lea.vmem [#allocation16], %s614
            %616 = vst.msk [vmem:[%s615] sm:$0xff] %vm610, 2147483647
            %617 = xla_tuple %613, %616
            %v618 = vrot.slane %v597, 1
            %s619 = vtos %v618
            %s620 = sshrl.u32 %s619, 3
            %p621 = scmp.lt.s32.totalorder %s619, 0
            %s622 = ssub.s32 0, %s619
            %s623 = scalar_select %p621, %s622, %s619
            %s624 = sand.u32 %s623, 7
            %s625 = ssub.s32 0, %s624
            %s626 = scalar_select %p621, %s625, %s624
            %v627 = vlaneseq
            %s628 = smul.u32 %s626, 128
            %v629 = vstv %s628
            %v630 = vadd.s32 %v629, 19
            %vm631 = vcmp.eq.s32.totalorder %v627, %v630
            %s632 = smul.addr %s620, 8
            %s633 = scalar_lea.vmem [#allocation15], %s632
            %634 = vst.msk [vmem:[%s633] sm:$0xff] %vm631, 2147483648
            %s635 = smul.addr %s620, 8
            %s636 = scalar_lea.vmem [#allocation16], %s635
            %637 = vst.msk [vmem:[%s636] sm:$0xff] %vm631, 2147483647
            %638 = xla_tuple %634, %637
            %v639 = vrot.slane %v618, 1
            %s640 = vtos %v639
            %s641 = sshrl.u32 %s640, 3
            %p642 = scmp.lt.s32.totalorder %s640, 0
            %s643 = ssub.s32 0, %s640
            %s644 = scalar_select %p642, %s643, %s640
            %s645 = sand.u32 %s644, 7
            %s646 = ssub.s32 0, %s645
            %s647 = scalar_select %p642, %s646, %s645
            %v648 = vlaneseq
            %s649 = smul.u32 %s647, 128
            %v650 = vstv %s649
            %v651 = vadd.s32 %v650, 20
            %vm652 = vcmp.eq.s32.totalorder %v648, %v651
            %s653 = smul.addr %s641, 8
            %s654 = scalar_lea.vmem [#allocation15], %s653
            %655 = vst.msk [vmem:[%s654] sm:$0xff] %vm652, 2147483648
            %s656 = smul.addr %s641, 8
            %s657 = scalar_lea.vmem [#allocation16], %s656
            %658 = vst.msk [vmem:[%s657] sm:$0xff] %vm652, 2147483647
            %659 = xla_tuple %655, %658
            %v660 = vrot.slane %v639, 1
            %s661 = vtos %v660
            %s662 = sshrl.u32 %s661, 3
            %p663 = scmp.lt.s32.totalorder %s661, 0
            %s664 = ssub.s32 0, %s661
            %s665 = scalar_select %p663, %s664, %s661
            %s666 = sand.u32 %s665, 7
            %s667 = ssub.s32 0, %s666
            %s668 = scalar_select %p663, %s667, %s666
            %v669 = vlaneseq
            %s670 = smul.u32 %s668, 128
            %v671 = vstv %s670
            %v672 = vadd.s32 %v671, 21
            %vm673 = vcmp.eq.s32.totalorder %v669, %v672
            %s674 = smul.addr %s662, 8
            %s675 = scalar_lea.vmem [#allocation15], %s674
            %676 = vst.msk [vmem:[%s675] sm:$0xff] %vm673, 2147483648
            %s677 = smul.addr %s662, 8
            %s678 = scalar_lea.vmem [#allocation16], %s677
            %679 = vst.msk [vmem:[%s678] sm:$0xff] %vm673, 2147483647
            %680 = xla_tuple %676, %679
            %v681 = vrot.slane %v660, 1
            %s682 = vtos %v681
            %s683 = sshrl.u32 %s682, 3
            %p684 = scmp.lt.s32.totalorder %s682, 0
            %s685 = ssub.s32 0, %s682
            %s686 = scalar_select %p684, %s685, %s682
            %s687 = sand.u32 %s686, 7
            %s688 = ssub.s32 0, %s687
            %s689 = scalar_select %p684, %s688, %s687
            %v690 = vlaneseq
            %s691 = smul.u32 %s689, 128
            %v692 = vstv %s691
            %v693 = vadd.s32 %v692, 22
            %vm694 = vcmp.eq.s32.totalorder %v690, %v693
            %s695 = smul.addr %s683, 8
            %s696 = scalar_lea.vmem [#allocation15], %s695
            %697 = vst.msk [vmem:[%s696] sm:$0xff] %vm694, 2147483648
            %s698 = smul.addr %s683, 8
            %s699 = scalar_lea.vmem [#allocation16], %s698
            %700 = vst.msk [vmem:[%s699] sm:$0xff] %vm694, 2147483647
            %701 = xla_tuple %697, %700
            %v702 = vrot.slane %v681, 1
            %s703 = vtos %v702
            %s704 = sshrl.u32 %s703, 3
            %p705 = scmp.lt.s32.totalorder %s703, 0
            %s706 = ssub.s32 0, %s703
            %s707 = scalar_select %p705, %s706, %s703
            %s708 = sand.u32 %s707, 7
            %s709 = ssub.s32 0, %s708
            %s710 = scalar_select %p705, %s709, %s708
            %v711 = vlaneseq
            %s712 = smul.u32 %s710, 128
            %v713 = vstv %s712
            %v714 = vadd.s32 %v713, 23
            %vm715 = vcmp.eq.s32.totalorder %v711, %v714
            %s716 = smul.addr %s704, 8
            %s717 = scalar_lea.vmem [#allocation15], %s716
            %718 = vst.msk [vmem:[%s717] sm:$0xff] %vm715, 2147483648
            %s719 = smul.addr %s704, 8
            %s720 = scalar_lea.vmem [#allocation16], %s719
            %721 = vst.msk [vmem:[%s720] sm:$0xff] %vm715, 2147483647
            %722 = xla_tuple %718, %721
            %v723 = vrot.slane %v702, 1
            %s724 = vtos %v207
            %s725 = sshrl.u32 %s724, 3
            %p726 = scmp.lt.s32.totalorder %s724, 0
            %s727 = ssub.s32 0, %s724
            %s728 = scalar_select %p726, %s727, %s724
            %s729 = sand.u32 %s728, 7
            %s730 = ssub.s32 0, %s729
            %s731 = scalar_select %p726, %s730, %s729
            %v732 = vlaneseq
            %s733 = smul.u32 %s731, 128
            %v734 = vstv %s733
            %v735 = vadd.s32 %v734, 24
            %vm736 = vcmp.eq.s32.totalorder %v732, %v735
            %s737 = smul.addr %s725, 8
            %s738 = scalar_lea.vmem [#allocation15], %s737
            %739 = vst.msk [vmem:[%s738] sm:$0xff] %vm736, 2147483648
            %s740 = smul.addr %s725, 8
            %s741 = scalar_lea.vmem [#allocation16], %s740
            %742 = vst.msk [vmem:[%s741] sm:$0xff] %vm736, 2147483647
            %743 = xla_tuple %739, %742
            %v744 = vrot.slane %v207, 1
            %s745 = vtos %v744
            %s746 = sshrl.u32 %s745, 3
            %p747 = scmp.lt.s32.totalorder %s745, 0
            %s748 = ssub.s32 0, %s745
            %s749 = scalar_select %p747, %s748, %s745
            %s750 = sand.u32 %s749, 7
            %s751 = ssub.s32 0, %s750
            %s752 = scalar_select %p747, %s751, %s750
            %v753 = vlaneseq
            %s754 = smul.u32 %s752, 128
            %v755 = vstv %s754
            %v756 = vadd.s32 %v755, 25
            %vm757 = vcmp.eq.s32.totalorder %v753, %v756
            %s758 = smul.addr %s746, 8
            %s759 = scalar_lea.vmem [#allocation15], %s758
            %760 = vst.msk [vmem:[%s759] sm:$0xff] %vm757, 2147483648
            %s761 = smul.addr %s746, 8
            %s762 = scalar_lea.vmem [#allocation16], %s761
            %763 = vst.msk [vmem:[%s762] sm:$0xff] %vm757, 2147483647
            %764 = xla_tuple %760, %763
            %v765 = vrot.slane %v744, 1
            %s766 = vtos %v765
            %s767 = sshrl.u32 %s766, 3
            %p768 = scmp.lt.s32.totalorder %s766, 0
            %s769 = ssub.s32 0, %s766
            %s770 = scalar_select %p768, %s769, %s766
            %s771 = sand.u32 %s770, 7
            %s772 = ssub.s32 0, %s771
            %s773 = scalar_select %p768, %s772, %s771
            %v774 = vlaneseq
            %s775 = smul.u32 %s773, 128
            %v776 = vstv %s775
            %v777 = vadd.s32 %v776, 26
            %vm778 = vcmp.eq.s32.totalorder %v774, %v777
            %s779 = smul.addr %s767, 8
            %s780 = scalar_lea.vmem [#allocation15], %s779
            %781 = vst.msk [vmem:[%s780] sm:$0xff] %vm778, 2147483648
            %s782 = smul.addr %s767, 8
            %s783 = scalar_lea.vmem [#allocation16], %s782
            %784 = vst.msk [vmem:[%s783] sm:$0xff] %vm778, 2147483647
            %785 = xla_tuple %781, %784
            %v786 = vrot.slane %v765, 1
            %s787 = vtos %v786
            %s788 = sshrl.u32 %s787, 3
            %p789 = scmp.lt.s32.totalorder %s787, 0
            %s790 = ssub.s32 0, %s787
            %s791 = scalar_select %p789, %s790, %s787
            %s792 = sand.u32 %s791, 7
            %s793 = ssub.s32 0, %s792
            %s794 = scalar_select %p789, %s793, %s792
            %v795 = vlaneseq
            %s796 = smul.u32 %s794, 128
            %v797 = vstv %s796
            %v798 = vadd.s32 %v797, 27
            %vm799 = vcmp.eq.s32.totalorder %v795, %v798
            %s800 = smul.addr %s788, 8
            %s801 = scalar_lea.vmem [#allocation15], %s800
            %802 = vst.msk [vmem:[%s801] sm:$0xff] %vm799, 2147483648
            %s803 = smul.addr %s788, 8
            %s804 = scalar_lea.vmem [#allocation16], %s803
            %805 = vst.msk [vmem:[%s804] sm:$0xff] %vm799, 2147483647
            %806 = xla_tuple %802, %805
            %v807 = vrot.slane %v786, 1
            %s808 = vtos %v807
            %s809 = sshrl.u32 %s808, 3
            %p810 = scmp.lt.s32.totalorder %s808, 0
            %s811 = ssub.s32 0, %s808
            %s812 = scalar_select %p810, %s811, %s808
            %s813 = sand.u32 %s812, 7
            %s814 = ssub.s32 0, %s813
            %s815 = scalar_select %p810, %s814, %s813
            %v816 = vlaneseq
            %s817 = smul.u32 %s815, 128
            %v818 = vstv %s817
            %v819 = vadd.s32 %v818, 28
            %vm820 = vcmp.eq.s32.totalorder %v816, %v819
            %s821 = smul.addr %s809, 8
            %s822 = scalar_lea.vmem [#allocation15], %s821
            %823 = vst.msk [vmem:[%s822] sm:$0xff] %vm820, 2147483648
            %s824 = smul.addr %s809, 8
            %s825 = scalar_lea.vmem [#allocation16], %s824
            %826 = vst.msk [vmem:[%s825] sm:$0xff] %vm820, 2147483647
            %827 = xla_tuple %823, %826
            %v828 = vrot.slane %v807, 1
            %s829 = vtos %v828
            %s830 = sshrl.u32 %s829, 3
            %p831 = scmp.lt.s32.totalorder %s829, 0
            %s832 = ssub.s32 0, %s829
            %s833 = scalar_select %p831, %s832, %s829
            %s834 = sand.u32 %s833, 7
            %s835 = ssub.s32 0, %s834
            %s836 = scalar_select %p831, %s835, %s834
            %v837 = vlaneseq
            %s838 = smul.u32 %s836, 128
            %v839 = vstv %s838
            %v840 = vadd.s32 %v839, 29
            %vm841 = vcmp.eq.s32.totalorder %v837, %v840
            %s842 = smul.addr %s830, 8
            %s843 = scalar_lea.vmem [#allocation15], %s842
            %844 = vst.msk [vmem:[%s843] sm:$0xff] %vm841, 2147483648
            %s845 = smul.addr %s830, 8
            %s846 = scalar_lea.vmem [#allocation16], %s845
            %847 = vst.msk [vmem:[%s846] sm:$0xff] %vm841, 2147483647
            %848 = xla_tuple %844, %847
            %v849 = vrot.slane %v828, 1
            %s850 = vtos %v849
            %s851 = sshrl.u32 %s850, 3
            %p852 = scmp.lt.s32.totalorder %s850, 0
            %s853 = ssub.s32 0, %s850
            %s854 = scalar_select %p852, %s853, %s850
            %s855 = sand.u32 %s854, 7
            %s856 = ssub.s32 0, %s855
            %s857 = scalar_select %p852, %s856, %s855
            %v858 = vlaneseq
            %s859 = smul.u32 %s857, 128
            %v860 = vstv %s859
            %v861 = vadd.s32 %v860, 30
            %vm862 = vcmp.eq.s32.totalorder %v858, %v861
            %s863 = smul.addr %s851, 8
            %s864 = scalar_lea.vmem [#allocation15], %s863
            %865 = vst.msk [vmem:[%s864] sm:$0xff] %vm862, 2147483648
            %s866 = smul.addr %s851, 8
            %s867 = scalar_lea.vmem [#allocation16], %s866
            %868 = vst.msk [vmem:[%s867] sm:$0xff] %vm862, 2147483647
            %869 = xla_tuple %865, %868
            %v870 = vrot.slane %v849, 1
            %s871 = vtos %v870
            %s872 = sshrl.u32 %s871, 3
            %p873 = scmp.lt.s32.totalorder %s871, 0
            %s874 = ssub.s32 0, %s871
            %s875 = scalar_select %p873, %s874, %s871
            %s876 = sand.u32 %s875, 7
            %s877 = ssub.s32 0, %s876
            %s878 = scalar_select %p873, %s877, %s876
            %v879 = vlaneseq
            %s880 = smul.u32 %s878, 128
            %v881 = vstv %s880
            %v882 = vadd.s32 %v881, 31
            %vm883 = vcmp.eq.s32.totalorder %v879, %v882
            %s884 = smul.addr %s872, 8
            %s885 = scalar_lea.vmem [#allocation15], %s884
            %886 = vst.msk [vmem:[%s885] sm:$0xff] %vm883, 2147483648
            %s887 = smul.addr %s872, 8
            %s888 = scalar_lea.vmem [#allocation16], %s887
            %889 = vst.msk [vmem:[%s888] sm:$0xff] %vm883, 2147483647
            %890 = xla_tuple %886, %889
            %v891 = vrot.slane %v870, 1
            %s892 = vtos %v208
            %s893 = sshrl.u32 %s892, 3
            %p894 = scmp.lt.s32.totalorder %s892, 0
            %s895 = ssub.s32 0, %s892
            %s896 = scalar_select %p894, %s895, %s892
            %s897 = sand.u32 %s896, 7
            %s898 = ssub.s32 0, %s897
            %s899 = scalar_select %p894, %s898, %s897
            %v900 = vlaneseq
            %s901 = smul.u32 %s899, 128
            %v902 = vstv %s901
            %v903 = vadd.s32 %v902, 32
            %vm904 = vcmp.eq.s32.totalorder %v900, %v903
            %s905 = smul.addr %s893, 8
            %s906 = scalar_lea.vmem [#allocation15], %s905
            %907 = vst.msk [vmem:[%s906] sm:$0xff] %vm904, 2147483648
            %s908 = smul.addr %s893, 8
            %s909 = scalar_lea.vmem [#allocation16], %s908
            %910 = vst.msk [vmem:[%s909] sm:$0xff] %vm904, 2147483647
            %911 = xla_tuple %907, %910
            %v912 = vrot.slane %v208, 1
            %s913 = vtos %v912
            %s914 = sshrl.u32 %s913, 3
            %p915 = scmp.lt.s32.totalorder %s913, 0
            %s916 = ssub.s32 0, %s913
            %s917 = scalar_select %p915, %s916, %s913
            %s918 = sand.u32 %s917, 7
            %s919 = ssub.s32 0, %s918
            %s920 = scalar_select %p915, %s919, %s918
            %v921 = vlaneseq
            %s922 = smul.u32 %s920, 128
            %v923 = vstv %s922
            %v924 = vadd.s32 %v923, 33
            %vm925 = vcmp.eq.s32.totalorder %v921, %v924
            %s926 = smul.addr %s914, 8
            %s927 = scalar_lea.vmem [#allocation15], %s926
            %928 = vst.msk [vmem:[%s927] sm:$0xff] %vm925, 2147483648
            %s929 = smul.addr %s914, 8
            %s930 = scalar_lea.vmem [#allocation16], %s929
            %931 = vst.msk [vmem:[%s930] sm:$0xff] %vm925, 2147483647
            %932 = xla_tuple %928, %931
            %v933 = vrot.slane %v912, 1
            %s934 = vtos %v933
            %s935 = sshrl.u32 %s934, 3
            %p936 = scmp.lt.s32.totalorder %s934, 0
            %s937 = ssub.s32 0, %s934
            %s938 = scalar_select %p936, %s937, %s934
            %s939 = sand.u32 %s938, 7
            %s940 = ssub.s32 0, %s939
            %s941 = scalar_select %p936, %s940, %s939
            %v942 = vlaneseq
            %s943 = smul.u32 %s941, 128
            %v944 = vstv %s943
            %v945 = vadd.s32 %v944, 34
            %vm946 = vcmp.eq.s32.totalorder %v942, %v945
            %s947 = smul.addr %s935, 8
            %s948 = scalar_lea.vmem [#allocation15], %s947
            %949 = vst.msk [vmem:[%s948] sm:$0xff] %vm946, 2147483648
            %s950 = smul.addr %s935, 8
            %s951 = scalar_lea.vmem [#allocation16], %s950
            %952 = vst.msk [vmem:[%s951] sm:$0xff] %vm946, 2147483647
            %953 = xla_tuple %949, %952
            %v954 = vrot.slane %v933, 1
            %s955 = vtos %v954
            %s956 = sshrl.u32 %s955, 3
            %p957 = scmp.lt.s32.totalorder %s955, 0
            %s958 = ssub.s32 0, %s955
            %s959 = scalar_select %p957, %s958, %s955
            %s960 = sand.u32 %s959, 7
            %s961 = ssub.s32 0, %s960
            %s962 = scalar_select %p957, %s961, %s960
            %v963 = vlaneseq
            %s964 = smul.u32 %s962, 128
            %v965 = vstv %s964
            %v966 = vadd.s32 %v965, 35
            %vm967 = vcmp.eq.s32.totalorder %v963, %v966
            %s968 = smul.addr %s956, 8
            %s969 = scalar_lea.vmem [#allocation15], %s968
            %970 = vst.msk [vmem:[%s969] sm:$0xff] %vm967, 2147483648
            %s971 = smul.addr %s956, 8
            %s972 = scalar_lea.vmem [#allocation16], %s971
            %973 = vst.msk [vmem:[%s972] sm:$0xff] %vm967, 2147483647
            %974 = xla_tuple %970, %973
            %v975 = vrot.slane %v954, 1
            %s976 = vtos %v975
            %s977 = sshrl.u32 %s976, 3
            %p978 = scmp.lt.s32.totalorder %s976, 0
            %s979 = ssub.s32 0, %s976
            %s980 = scalar_select %p978, %s979, %s976
            %s981 = sand.u32 %s980, 7
            %s982 = ssub.s32 0, %s981
            %s983 = scalar_select %p978, %s982, %s981
            %v984 = vlaneseq
            %s985 = smul.u32 %s983, 128
            %v986 = vstv %s985
            %v987 = vadd.s32 %v986, 36
            %vm988 = vcmp.eq.s32.totalorder %v984, %v987
            %s989 = smul.addr %s977, 8
            %s990 = scalar_lea.vmem [#allocation15], %s989
            %991 = vst.msk [vmem:[%s990] sm:$0xff] %vm988, 2147483648
            %s992 = smul.addr %s977, 8
            %s993 = scalar_lea.vmem [#allocation16], %s992
            %994 = vst.msk [vmem:[%s993] sm:$0xff] %vm988, 2147483647
            %995 = xla_tuple %991, %994
            %v996 = vrot.slane %v975, 1
            %s997 = vtos %v996
            %s998 = sshrl.u32 %s997, 3
            %p999 = scmp.lt.s32.totalorder %s997, 0
            %s1000 = ssub.s32 0, %s997
            %s1001 = scalar_select %p999, %s1000, %s997
            %s1002 = sand.u32 %s1001, 7
            %s1003 = ssub.s32 0, %s1002
            %s1004 = scalar_select %p999, %s1003, %s1002
            %v1005 = vlaneseq
            %s1006 = smul.u32 %s1004, 128
            %v1007 = vstv %s1006
            %v1008 = vadd.s32 %v1007, 37
            %vm1009 = vcmp.eq.s32.totalorder %v1005, %v1008
            %s1010 = smul.addr %s998, 8
            %s1011 = scalar_lea.vmem [#allocation15], %s1010
            %1012 = vst.msk [vmem:[%s1011] sm:$0xff] %vm1009, 2147483648
            %s1013 = smul.addr %s998, 8
            %s1014 = scalar_lea.vmem [#allocation16], %s1013
            %1015 = vst.msk [vmem:[%s1014] sm:$0xff] %vm1009, 2147483647
            %1016 = xla_tuple %1012, %1015
            %v1017 = vrot.slane %v996, 1
            %s1018 = vtos %v1017
            %s1019 = sshrl.u32 %s1018, 3
            %p1020 = scmp.lt.s32.totalorder %s1018, 0
            %s1021 = ssub.s32 0, %s1018
            %s1022 = scalar_select %p1020, %s1021, %s1018
            %s1023 = sand.u32 %s1022, 7
            %s1024 = ssub.s32 0, %s1023
            %s1025 = scalar_select %p1020, %s1024, %s1023
            %v1026 = vlaneseq
            %s1027 = smul.u32 %s1025, 128
            %v1028 = vstv %s1027
            %v1029 = vadd.s32 %v1028, 38
            %vm1030 = vcmp.eq.s32.totalorder %v1026, %v1029
            %s1031 = smul.addr %s1019, 8
            %s1032 = scalar_lea.vmem [#allocation15], %s1031
            %1033 = vst.msk [vmem:[%s1032] sm:$0xff] %vm1030, 2147483648
            %s1034 = smul.addr %s1019, 8
            %s1035 = scalar_lea.vmem [#allocation16], %s1034
            %1036 = vst.msk [vmem:[%s1035] sm:$0xff] %vm1030, 2147483647
            %1037 = xla_tuple %1033, %1036
            %v1038 = vrot.slane %v1017, 1
            %s1039 = vtos %v1038
            %s1040 = sshrl.u32 %s1039, 3
            %p1041 = scmp.lt.s32.totalorder %s1039, 0
            %s1042 = ssub.s32 0, %s1039
            %s1043 = scalar_select %p1041, %s1042, %s1039
            %s1044 = sand.u32 %s1043, 7
            %s1045 = ssub.s32 0, %s1044
            %s1046 = scalar_select %p1041, %s1045, %s1044
            %v1047 = vlaneseq
            %s1048 = smul.u32 %s1046, 128
            %v1049 = vstv %s1048
            %v1050 = vadd.s32 %v1049, 39
            %vm1051 = vcmp.eq.s32.totalorder %v1047, %v1050
            %s1052 = smul.addr %s1040, 8
            %s1053 = scalar_lea.vmem [#allocation15], %s1052
            %1054 = vst.msk [vmem:[%s1053] sm:$0xff] %vm1051, 2147483648
            %s1055 = smul.addr %s1040, 8
            %s1056 = scalar_lea.vmem [#allocation16], %s1055
            %1057 = vst.msk [vmem:[%s1056] sm:$0xff] %vm1051, 2147483647
            %1058 = xla_tuple %1054, %1057
            %v1059 = vrot.slane %v1038, 1
            %s1060 = vtos %v209
            %s1061 = sshrl.u32 %s1060, 3
            %p1062 = scmp.lt.s32.totalorder %s1060, 0
            %s1063 = ssub.s32 0, %s1060
            %s1064 = scalar_select %p1062, %s1063, %s1060
            %s1065 = sand.u32 %s1064, 7
            %s1066 = ssub.s32 0, %s1065
            %s1067 = scalar_select %p1062, %s1066, %s1065
            %v1068 = vlaneseq
            %s1069 = smul.u32 %s1067, 128
            %v1070 = vstv %s1069
            %v1071 = vadd.s32 %v1070, 40
            %vm1072 = vcmp.eq.s32.totalorder %v1068, %v1071
            %s1073 = smul.addr %s1061, 8
            %s1074 = scalar_lea.vmem [#allocation15], %s1073
            %1075 = vst.msk [vmem:[%s1074] sm:$0xff] %vm1072, 2147483648
            %s1076 = smul.addr %s1061, 8
            %s1077 = scalar_lea.vmem [#allocation16], %s1076
            %1078 = vst.msk [vmem:[%s1077] sm:$0xff] %vm1072, 2147483647
            %1079 = xla_tuple %1075, %1078
            %v1080 = vrot.slane %v209, 1
            %s1081 = vtos %v1080
            %s1082 = sshrl.u32 %s1081, 3
            %p1083 = scmp.lt.s32.totalorder %s1081, 0
            %s1084 = ssub.s32 0, %s1081
            %s1085 = scalar_select %p1083, %s1084, %s1081
            %s1086 = sand.u32 %s1085, 7
            %s1087 = ssub.s32 0, %s1086
            %s1088 = scalar_select %p1083, %s1087, %s1086
            %v1089 = vlaneseq
            %s1090 = smul.u32 %s1088, 128
            %v1091 = vstv %s1090
            %v1092 = vadd.s32 %v1091, 41
            %vm1093 = vcmp.eq.s32.totalorder %v1089, %v1092
            %s1094 = smul.addr %s1082, 8
            %s1095 = scalar_lea.vmem [#allocation15], %s1094
            %1096 = vst.msk [vmem:[%s1095] sm:$0xff] %vm1093, 2147483648
            %s1097 = smul.addr %s1082, 8
            %s1098 = scalar_lea.vmem [#allocation16], %s1097
            %1099 = vst.msk [vmem:[%s1098] sm:$0xff] %vm1093, 2147483647
            %1100 = xla_tuple %1096, %1099
            %v1101 = vrot.slane %v1080, 1
            %s1102 = vtos %v1101
            %s1103 = sshrl.u32 %s1102, 3
            %p1104 = scmp.lt.s32.totalorder %s1102, 0
            %s1105 = ssub.s32 0, %s1102
            %s1106 = scalar_select %p1104, %s1105, %s1102
            %s1107 = sand.u32 %s1106, 7
            %s1108 = ssub.s32 0, %s1107
            %s1109 = scalar_select %p1104, %s1108, %s1107
            %v1110 = vlaneseq
            %s1111 = smul.u32 %s1109, 128
            %v1112 = vstv %s1111
            %v1113 = vadd.s32 %v1112, 42
            %vm1114 = vcmp.eq.s32.totalorder %v1110, %v1113
            %s1115 = smul.addr %s1103, 8
            %s1116 = scalar_lea.vmem [#allocation15], %s1115
            %1117 = vst.msk [vmem:[%s1116] sm:$0xff] %vm1114, 2147483648
            %s1118 = smul.addr %s1103, 8
            %s1119 = scalar_lea.vmem [#allocation16], %s1118
            %1120 = vst.msk [vmem:[%s1119] sm:$0xff] %vm1114, 2147483647
            %1121 = xla_tuple %1117, %1120
            %v1122 = vrot.slane %v1101, 1
            %s1123 = vtos %v1122
            %s1124 = sshrl.u32 %s1123, 3
            %p1125 = scmp.lt.s32.totalorder %s1123, 0
            %s1126 = ssub.s32 0, %s1123
            %s1127 = scalar_select %p1125, %s1126, %s1123
            %s1128 = sand.u32 %s1127, 7
            %s1129 = ssub.s32 0, %s1128
            %s1130 = scalar_select %p1125, %s1129, %s1128
            %v1131 = vlaneseq
            %s1132 = smul.u32 %s1130, 128
            %v1133 = vstv %s1132
            %v1134 = vadd.s32 %v1133, 43
            %vm1135 = vcmp.eq.s32.totalorder %v1131, %v1134
            %s1136 = smul.addr %s1124, 8
            %s1137 = scalar_lea.vmem [#allocation15], %s1136
            %1138 = vst.msk [vmem:[%s1137] sm:$0xff] %vm1135, 2147483648
            %s1139 = smul.addr %s1124, 8
            %s1140 = scalar_lea.vmem [#allocation16], %s1139
            %1141 = vst.msk [vmem:[%s1140] sm:$0xff] %vm1135, 2147483647
            %1142 = xla_tuple %1138, %1141
            %v1143 = vrot.slane %v1122, 1
            %s1144 = vtos %v1143
            %s1145 = sshrl.u32 %s1144, 3
            %p1146 = scmp.lt.s32.totalorder %s1144, 0
            %s1147 = ssub.s32 0, %s1144
            %s1148 = scalar_select %p1146, %s1147, %s1144
            %s1149 = sand.u32 %s1148, 7
            %s1150 = ssub.s32 0, %s1149
            %s1151 = scalar_select %p1146, %s1150, %s1149
            %v1152 = vlaneseq
            %s1153 = smul.u32 %s1151, 128
            %v1154 = vstv %s1153
            %v1155 = vadd.s32 %v1154, 44
            %vm1156 = vcmp.eq.s32.totalorder %v1152, %v1155
            %s1157 = smul.addr %s1145, 8
            %s1158 = scalar_lea.vmem [#allocation15], %s1157
            %1159 = vst.msk [vmem:[%s1158] sm:$0xff] %vm1156, 2147483648
            %s1160 = smul.addr %s1145, 8
            %s1161 = scalar_lea.vmem [#allocation16], %s1160
            %1162 = vst.msk [vmem:[%s1161] sm:$0xff] %vm1156, 2147483647
            %1163 = xla_tuple %1159, %1162
            %v1164 = vrot.slane %v1143, 1
            %s1165 = vtos %v1164
            %s1166 = sshrl.u32 %s1165, 3
            %p1167 = scmp.lt.s32.totalorder %s1165, 0
            %s1168 = ssub.s32 0, %s1165
            %s1169 = scalar_select %p1167, %s1168, %s1165
            %s1170 = sand.u32 %s1169, 7
            %s1171 = ssub.s32 0, %s1170
            %s1172 = scalar_select %p1167, %s1171, %s1170
            %v1173 = vlaneseq
            %s1174 = smul.u32 %s1172, 128
            %v1175 = vstv %s1174
            %v1176 = vadd.s32 %v1175, 45
            %vm1177 = vcmp.eq.s32.totalorder %v1173, %v1176
            %s1178 = smul.addr %s1166, 8
            %s1179 = scalar_lea.vmem [#allocation15], %s1178
            %1180 = vst.msk [vmem:[%s1179] sm:$0xff] %vm1177, 2147483648
            %s1181 = smul.addr %s1166, 8
            %s1182 = scalar_lea.vmem [#allocation16], %s1181
            %1183 = vst.msk [vmem:[%s1182] sm:$0xff] %vm1177, 2147483647
            %1184 = xla_tuple %1180, %1183
            %v1185 = vrot.slane %v1164, 1
            %s1186 = vtos %v1185
            %s1187 = sshrl.u32 %s1186, 3
            %p1188 = scmp.lt.s32.totalorder %s1186, 0
            %s1189 = ssub.s32 0, %s1186
            %s1190 = scalar_select %p1188, %s1189, %s1186
            %s1191 = sand.u32 %s1190, 7
            %s1192 = ssub.s32 0, %s1191
            %s1193 = scalar_select %p1188, %s1192, %s1191
            %v1194 = vlaneseq
            %s1195 = smul.u32 %s1193, 128
            %v1196 = vstv %s1195
            %v1197 = vadd.s32 %v1196, 46
            %vm1198 = vcmp.eq.s32.totalorder %v1194, %v1197
            %s1199 = smul.addr %s1187, 8
            %s1200 = scalar_lea.vmem [#allocation15], %s1199
            %1201 = vst.msk [vmem:[%s1200] sm:$0xff] %vm1198, 2147483648
            %s1202 = smul.addr %s1187, 8
            %s1203 = scalar_lea.vmem [#allocation16], %s1202
            %1204 = vst.msk [vmem:[%s1203] sm:$0xff] %vm1198, 2147483647
            %1205 = xla_tuple %1201, %1204
            %v1206 = vrot.slane %v1185, 1
            %s1207 = vtos %v1206
            %s1208 = sshrl.u32 %s1207, 3
            %p1209 = scmp.lt.s32.totalorder %s1207, 0
            %s1210 = ssub.s32 0, %s1207
            %s1211 = scalar_select %p1209, %s1210, %s1207
            %s1212 = sand.u32 %s1211, 7
            %s1213 = ssub.s32 0, %s1212
            %s1214 = scalar_select %p1209, %s1213, %s1212
            %v1215 = vlaneseq
            %s1216 = smul.u32 %s1214, 128
            %v1217 = vstv %s1216
            %v1218 = vadd.s32 %v1217, 47
            %vm1219 = vcmp.eq.s32.totalorder %v1215, %v1218
            %s1220 = smul.addr %s1208, 8
            %s1221 = scalar_lea.vmem [#allocation15], %s1220
            %1222 = vst.msk [vmem:[%s1221] sm:$0xff] %vm1219, 2147483648
            %s1223 = smul.addr %s1208, 8
            %s1224 = scalar_lea.vmem [#allocation16], %s1223
            %1225 = vst.msk [vmem:[%s1224] sm:$0xff] %vm1219, 2147483647
            %1226 = xla_tuple %1222, %1225
            %v1227 = vrot.slane %v1206, 1
            %s1228 = vtos %v210
            %s1229 = sshrl.u32 %s1228, 3
            %p1230 = scmp.lt.s32.totalorder %s1228, 0
            %s1231 = ssub.s32 0, %s1228
            %s1232 = scalar_select %p1230, %s1231, %s1228
            %s1233 = sand.u32 %s1232, 7
            %s1234 = ssub.s32 0, %s1233
            %s1235 = scalar_select %p1230, %s1234, %s1233
            %v1236 = vlaneseq
            %s1237 = smul.u32 %s1235, 128
            %v1238 = vstv %s1237
            %v1239 = vadd.s32 %v1238, 48
            %vm1240 = vcmp.eq.s32.totalorder %v1236, %v1239
            %s1241 = smul.addr %s1229, 8
            %s1242 = scalar_lea.vmem [#allocation15], %s1241
            %1243 = vst.msk [vmem:[%s1242] sm:$0xff] %vm1240, 2147483648
            %s1244 = smul.addr %s1229, 8
            %s1245 = scalar_lea.vmem [#allocation16], %s1244
            %1246 = vst.msk [vmem:[%s1245] sm:$0xff] %vm1240, 2147483647
            %1247 = xla_tuple %1243, %1246
            %v1248 = vrot.slane %v210, 1
            %s1249 = vtos %v1248
            %s1250 = sshrl.u32 %s1249, 3
            %p1251 = scmp.lt.s32.totalorder %s1249, 0
            %s1252 = ssub.s32 0, %s1249
            %s1253 = scalar_select %p1251, %s1252, %s1249
            %s1254 = sand.u32 %s1253, 7
            %s1255 = ssub.s32 0, %s1254
            %s1256 = scalar_select %p1251, %s1255, %s1254
            %v1257 = vlaneseq
            %s1258 = smul.u32 %s1256, 128
            %v1259 = vstv %s1258
            %v1260 = vadd.s32 %v1259, 49
            %vm1261 = vcmp.eq.s32.totalorder %v1257, %v1260
            %s1262 = smul.addr %s1250, 8
            %s1263 = scalar_lea.vmem [#allocation15], %s1262
            %1264 = vst.msk [vmem:[%s1263] sm:$0xff] %vm1261, 2147483648
            %s1265 = smul.addr %s1250, 8
            %s1266 = scalar_lea.vmem [#allocation16], %s1265
            %1267 = vst.msk [vmem:[%s1266] sm:$0xff] %vm1261, 2147483647
            %1268 = xla_tuple %1264, %1267
            %v1269 = vrot.slane %v1248, 1
            %s1270 = vtos %v1269
            %s1271 = sshrl.u32 %s1270, 3
            %p1272 = scmp.lt.s32.totalorder %s1270, 0
            %s1273 = ssub.s32 0, %s1270
            %s1274 = scalar_select %p1272, %s1273, %s1270
            %s1275 = sand.u32 %s1274, 7
            %s1276 = ssub.s32 0, %s1275
            %s1277 = scalar_select %p1272, %s1276, %s1275
            %v1278 = vlaneseq
            %s1279 = smul.u32 %s1277, 128
            %v1280 = vstv %s1279
            %v1281 = vadd.s32 %v1280, 50
            %vm1282 = vcmp.eq.s32.totalorder %v1278, %v1281
            %s1283 = smul.addr %s1271, 8
            %s1284 = scalar_lea.vmem [#allocation15], %s1283
            %1285 = vst.msk [vmem:[%s1284] sm:$0xff] %vm1282, 2147483648
            %s1286 = smul.addr %s1271, 8
            %s1287 = scalar_lea.vmem [#allocation16], %s1286
            %1288 = vst.msk [vmem:[%s1287] sm:$0xff] %vm1282, 2147483647
            %1289 = xla_tuple %1285, %1288
            %v1290 = vrot.slane %v1269, 1
            %s1291 = vtos %v1290
            %s1292 = sshrl.u32 %s1291, 3
            %p1293 = scmp.lt.s32.totalorder %s1291, 0
            %s1294 = ssub.s32 0, %s1291
            %s1295 = scalar_select %p1293, %s1294, %s1291
            %s1296 = sand.u32 %s1295, 7
            %s1297 = ssub.s32 0, %s1296
            %s1298 = scalar_select %p1293, %s1297, %s1296
            %v1299 = vlaneseq
            %s1300 = smul.u32 %s1298, 128
            %v1301 = vstv %s1300
            %v1302 = vadd.s32 %v1301, 51
            %vm1303 = vcmp.eq.s32.totalorder %v1299, %v1302
            %s1304 = smul.addr %s1292, 8
            %s1305 = scalar_lea.vmem [#allocation15], %s1304
            %1306 = vst.msk [vmem:[%s1305] sm:$0xff] %vm1303, 2147483648
            %s1307 = smul.addr %s1292, 8
            %s1308 = scalar_lea.vmem [#allocation16], %s1307
            %1309 = vst.msk [vmem:[%s1308] sm:$0xff] %vm1303, 2147483647
            %1310 = xla_tuple %1306, %1309
            %v1311 = vrot.slane %v1290, 1
            %s1312 = vtos %v1311
            %s1313 = sshrl.u32 %s1312, 3
            %p1314 = scmp.lt.s32.totalorder %s1312, 0
            %s1315 = ssub.s32 0, %s1312
            %s1316 = scalar_select %p1314, %s1315, %s1312
            %s1317 = sand.u32 %s1316, 7
            %s1318 = ssub.s32 0, %s1317
            %s1319 = scalar_select %p1314, %s1318, %s1317
            %v1320 = vlaneseq
            %s1321 = smul.u32 %s1319, 128
            %v1322 = vstv %s1321
            %v1323 = vadd.s32 %v1322, 52
            %vm1324 = vcmp.eq.s32.totalorder %v1320, %v1323
            %s1325 = smul.addr %s1313, 8
            %s1326 = scalar_lea.vmem [#allocation15], %s1325
            %1327 = vst.msk [vmem:[%s1326] sm:$0xff] %vm1324, 2147483648
            %s1328 = smul.addr %s1313, 8
            %s1329 = scalar_lea.vmem [#allocation16], %s1328
            %1330 = vst.msk [vmem:[%s1329] sm:$0xff] %vm1324, 2147483647
            %1331 = xla_tuple %1327, %1330
            %v1332 = vrot.slane %v1311, 1
            %s1333 = vtos %v1332
            %s1334 = sshrl.u32 %s1333, 3
            %p1335 = scmp.lt.s32.totalorder %s1333, 0
            %s1336 = ssub.s32 0, %s1333
            %s1337 = scalar_select %p1335, %s1336, %s1333
            %s1338 = sand.u32 %s1337, 7
            %s1339 = ssub.s32 0, %s1338
            %s1340 = scalar_select %p1335, %s1339, %s1338
            %v1341 = vlaneseq
            %s1342 = smul.u32 %s1340, 128
            %v1343 = vstv %s1342
            %v1344 = vadd.s32 %v1343, 53
            %vm1345 = vcmp.eq.s32.totalorder %v1341, %v1344
            %s1346 = smul.addr %s1334, 8
            %s1347 = scalar_lea.vmem [#allocation15], %s1346
            %1348 = vst.msk [vmem:[%s1347] sm:$0xff] %vm1345, 2147483648
            %s1349 = smul.addr %s1334, 8
            %s1350 = scalar_lea.vmem [#allocation16], %s1349
            %1351 = vst.msk [vmem:[%s1350] sm:$0xff] %vm1345, 2147483647
            %1352 = xla_tuple %1348, %1351
            %v1353 = vrot.slane %v1332, 1
            %s1354 = vtos %v1353
            %s1355 = sshrl.u32 %s1354, 3
            %p1356 = scmp.lt.s32.totalorder %s1354, 0
            %s1357 = ssub.s32 0, %s1354
            %s1358 = scalar_select %p1356, %s1357, %s1354
            %s1359 = sand.u32 %s1358, 7
            %s1360 = ssub.s32 0, %s1359
            %s1361 = scalar_select %p1356, %s1360, %s1359
            %v1362 = vlaneseq
            %s1363 = smul.u32 %s1361, 128
            %v1364 = vstv %s1363
            %v1365 = vadd.s32 %v1364, 54
            %vm1366 = vcmp.eq.s32.totalorder %v1362, %v1365
            %s1367 = smul.addr %s1355, 8
            %s1368 = scalar_lea.vmem [#allocation15], %s1367
            %1369 = vst.msk [vmem:[%s1368] sm:$0xff] %vm1366, 2147483648
            %s1370 = smul.addr %s1355, 8
            %s1371 = scalar_lea.vmem [#allocation16], %s1370
            %1372 = vst.msk [vmem:[%s1371] sm:$0xff] %vm1366, 2147483647
            %1373 = xla_tuple %1369, %1372
            %v1374 = vrot.slane %v1353, 1
            %s1375 = vtos %v1374
            %s1376 = sshrl.u32 %s1375, 3
            %p1377 = scmp.lt.s32.totalorder %s1375, 0
            %s1378 = ssub.s32 0, %s1375
            %s1379 = scalar_select %p1377, %s1378, %s1375
            %s1380 = sand.u32 %s1379, 7
            %s1381 = ssub.s32 0, %s1380
            %s1382 = scalar_select %p1377, %s1381, %s1380
            %v1383 = vlaneseq
            %s1384 = smul.u32 %s1382, 128
            %v1385 = vstv %s1384
            %v1386 = vadd.s32 %v1385, 55
            %vm1387 = vcmp.eq.s32.totalorder %v1383, %v1386
            %s1388 = smul.addr %s1376, 8
            %s1389 = scalar_lea.vmem [#allocation15], %s1388
            %1390 = vst.msk [vmem:[%s1389] sm:$0xff] %vm1387, 2147483648
            %s1391 = smul.addr %s1376, 8
            %s1392 = scalar_lea.vmem [#allocation16], %s1391
            %1393 = vst.msk [vmem:[%s1392] sm:$0xff] %vm1387, 2147483647
            %1394 = xla_tuple %1390, %1393
            %v1395 = vrot.slane %v1374, 1
            %s1396 = vtos %v211
            %s1397 = sshrl.u32 %s1396, 3
            %p1398 = scmp.lt.s32.totalorder %s1396, 0
            %s1399 = ssub.s32 0, %s1396
            %s1400 = scalar_select %p1398, %s1399, %s1396
            %s1401 = sand.u32 %s1400, 7
            %s1402 = ssub.s32 0, %s1401
            %s1403 = scalar_select %p1398, %s1402, %s1401
            %v1404 = vlaneseq
            %s1405 = smul.u32 %s1403, 128
            %v1406 = vstv %s1405
            %v1407 = vadd.s32 %v1406, 56
            %vm1408 = vcmp.eq.s32.totalorder %v1404, %v1407
            %s1409 = smul.addr %s1397, 8
            %s1410 = scalar_lea.vmem [#allocation15], %s1409
            %1411 = vst.msk [vmem:[%s1410] sm:$0xff] %vm1408, 2147483648
            %s1412 = smul.addr %s1397, 8
            %s1413 = scalar_lea.vmem [#allocation16], %s1412
            %1414 = vst.msk [vmem:[%s1413] sm:$0xff] %vm1408, 2147483647
            %1415 = xla_tuple %1411, %1414
            %v1416 = vrot.slane %v211, 1
            %s1417 = vtos %v1416
            %s1418 = sshrl.u32 %s1417, 3
            %p1419 = scmp.lt.s32.totalorder %s1417, 0
            %s1420 = ssub.s32 0, %s1417
            %s1421 = scalar_select %p1419, %s1420, %s1417
            %s1422 = sand.u32 %s1421, 7
            %s1423 = ssub.s32 0, %s1422
            %s1424 = scalar_select %p1419, %s1423, %s1422
            %v1425 = vlaneseq
            %s1426 = smul.u32 %s1424, 128
            %v1427 = vstv %s1426
            %v1428 = vadd.s32 %v1427, 57
            %vm1429 = vcmp.eq.s32.totalorder %v1425, %v1428
            %s1430 = smul.addr %s1418, 8
            %s1431 = scalar_lea.vmem [#allocation15], %s1430
            %1432 = vst.msk [vmem:[%s1431] sm:$0xff] %vm1429, 2147483648
            %s1433 = smul.addr %s1418, 8
            %s1434 = scalar_lea.vmem [#allocation16], %s1433
            %1435 = vst.msk [vmem:[%s1434] sm:$0xff] %vm1429, 2147483647
            %1436 = xla_tuple %1432, %1435
            %v1437 = vrot.slane %v1416, 1
            %s1438 = vtos %v1437
            %s1439 = sshrl.u32 %s1438, 3
            %p1440 = scmp.lt.s32.totalorder %s1438, 0
            %s1441 = ssub.s32 0, %s1438
            %s1442 = scalar_select %p1440, %s1441, %s1438
            %s1443 = sand.u32 %s1442, 7
            %s1444 = ssub.s32 0, %s1443
            %s1445 = scalar_select %p1440, %s1444, %s1443
            %v1446 = vlaneseq
            %s1447 = smul.u32 %s1445, 128
            %v1448 = vstv %s1447
            %v1449 = vadd.s32 %v1448, 58
            %vm1450 = vcmp.eq.s32.totalorder %v1446, %v1449
            %s1451 = smul.addr %s1439, 8
            %s1452 = scalar_lea.vmem [#allocation15], %s1451
            %1453 = vst.msk [vmem:[%s1452] sm:$0xff] %vm1450, 2147483648
            %s1454 = smul.addr %s1439, 8
            %s1455 = scalar_lea.vmem [#allocation16], %s1454
            %1456 = vst.msk [vmem:[%s1455] sm:$0xff] %vm1450, 2147483647
            %1457 = xla_tuple %1453, %1456
            %v1458 = vrot.slane %v1437, 1
            %s1459 = vtos %v1458
            %s1460 = sshrl.u32 %s1459, 3
            %p1461 = scmp.lt.s32.totalorder %s1459, 0
            %s1462 = ssub.s32 0, %s1459
            %s1463 = scalar_select %p1461, %s1462, %s1459
            %s1464 = sand.u32 %s1463, 7
            %s1465 = ssub.s32 0, %s1464
            %s1466 = scalar_select %p1461, %s1465, %s1464
            %v1467 = vlaneseq
            %s1468 = smul.u32 %s1466, 128
            %v1469 = vstv %s1468
            %v1470 = vadd.s32 %v1469, 59
            %vm1471 = vcmp.eq.s32.totalorder %v1467, %v1470
            %s1472 = smul.addr %s1460, 8
            %s1473 = scalar_lea.vmem [#allocation15], %s1472
            %1474 = vst.msk [vmem:[%s1473] sm:$0xff] %vm1471, 2147483648
            %s1475 = smul.addr %s1460, 8
            %s1476 = scalar_lea.vmem [#allocation16], %s1475
            %1477 = vst.msk [vmem:[%s1476] sm:$0xff] %vm1471, 2147483647
            %1478 = xla_tuple %1474, %1477
            %v1479 = vrot.slane %v1458, 1
            %s1480 = vtos %v1479
            %s1481 = sshrl.u32 %s1480, 3
            %p1482 = scmp.lt.s32.totalorder %s1480, 0
            %s1483 = ssub.s32 0, %s1480
            %s1484 = scalar_select %p1482, %s1483, %s1480
            %s1485 = sand.u32 %s1484, 7
            %s1486 = ssub.s32 0, %s1485
            %s1487 = scalar_select %p1482, %s1486, %s1485
            %v1488 = vlaneseq
            %s1489 = smul.u32 %s1487, 128
            %v1490 = vstv %s1489
            %v1491 = vadd.s32 %v1490, 60
            %vm1492 = vcmp.eq.s32.totalorder %v1488, %v1491
            %s1493 = smul.addr %s1481, 8
            %s1494 = scalar_lea.vmem [#allocation15], %s1493
            %1495 = vst.msk [vmem:[%s1494] sm:$0xff] %vm1492, 2147483648
            %s1496 = smul.addr %s1481, 8
            %s1497 = scalar_lea.vmem [#allocation16], %s1496
            %1498 = vst.msk [vmem:[%s1497] sm:$0xff] %vm1492, 2147483647
            %1499 = xla_tuple %1495, %1498
            %v1500 = vrot.slane %v1479, 1
            %s1501 = vtos %v1500
            %s1502 = sshrl.u32 %s1501, 3
            %p1503 = scmp.lt.s32.totalorder %s1501, 0
            %s1504 = ssub.s32 0, %s1501
            %s1505 = scalar_select %p1503, %s1504, %s1501
            %s1506 = sand.u32 %s1505, 7
            %s1507 = ssub.s32 0, %s1506
            %s1508 = scalar_select %p1503, %s1507, %s1506
            %v1509 = vlaneseq
            %s1510 = smul.u32 %s1508, 128
            %v1511 = vstv %s1510
            %v1512 = vadd.s32 %v1511, 61
            %vm1513 = vcmp.eq.s32.totalorder %v1509, %v1512
            %s1514 = smul.addr %s1502, 8
            %s1515 = scalar_lea.vmem [#allocation15], %s1514
            %1516 = vst.msk [vmem:[%s1515] sm:$0xff] %vm1513, 2147483648
            %s1517 = smul.addr %s1502, 8
            %s1518 = scalar_lea.vmem [#allocation16], %s1517
            %1519 = vst.msk [vmem:[%s1518] sm:$0xff] %vm1513, 2147483647
            %1520 = xla_tuple %1516, %1519
            %v1521 = vrot.slane %v1500, 1
            %s1522 = vtos %v1521
            %s1523 = sshrl.u32 %s1522, 3
            %p1524 = scmp.lt.s32.totalorder %s1522, 0
            %s1525 = ssub.s32 0, %s1522
            %s1526 = scalar_select %p1524, %s1525, %s1522
            %s1527 = sand.u32 %s1526, 7
            %s1528 = ssub.s32 0, %s1527
            %s1529 = scalar_select %p1524, %s1528, %s1527
            %v1530 = vlaneseq
            %s1531 = smul.u32 %s1529, 128
            %v1532 = vstv %s1531
            %v1533 = vadd.s32 %v1532, 62
            %vm1534 = vcmp.eq.s32.totalorder %v1530, %v1533
            %s1535 = smul.addr %s1523, 8
            %s1536 = scalar_lea.vmem [#allocation15], %s1535
            %1537 = vst.msk [vmem:[%s1536] sm:$0xff] %vm1534, 2147483648
            %s1538 = smul.addr %s1523, 8
            %s1539 = scalar_lea.vmem [#allocation16], %s1538
            %1540 = vst.msk [vmem:[%s1539] sm:$0xff] %vm1534, 2147483647
            %1541 = xla_tuple %1537, %1540
            %v1542 = vrot.slane %v1521, 1
            %s1543 = vtos %v1542
            %s1544 = sshrl.u32 %s1543, 3
            %p1545 = scmp.lt.s32.totalorder %s1543, 0
            %s1546 = ssub.s32 0, %s1543
            %s1547 = scalar_select %p1545, %s1546, %s1543
            %s1548 = sand.u32 %s1547, 7
            %s1549 = ssub.s32 0, %s1548
            %s1550 = scalar_select %p1545, %s1549, %s1548
            %v1551 = vlaneseq
            %s1552 = smul.u32 %s1550, 128
            %v1553 = vstv %s1552
            %v1554 = vadd.s32 %v1553, 63
            %vm1555 = vcmp.eq.s32.totalorder %v1551, %v1554
            %s1556 = smul.addr %s1544, 8
            %s1557 = scalar_lea.vmem [#allocation15], %s1556
            %1558 = vst.msk [vmem:[%s1557] sm:$0xff] %vm1555, 2147483648
            %s1559 = smul.addr %s1544, 8
            %s1560 = scalar_lea.vmem [#allocation16], %s1559
            %1561 = vst.msk [vmem:[%s1560] sm:$0xff] %vm1555, 2147483647
            %1562 = xla_tuple %1558, %1561
            %v1563 = vrot.slane %v1542, 1
            %s1564 = vtos %v212
            %s1565 = sshrl.u32 %s1564, 3
            %p1566 = scmp.lt.s32.totalorder %s1564, 0
            %s1567 = ssub.s32 0, %s1564
            %s1568 = scalar_select %p1566, %s1567, %s1564
            %s1569 = sand.u32 %s1568, 7
            %s1570 = ssub.s32 0, %s1569
            %s1571 = scalar_select %p1566, %s1570, %s1569
            %v1572 = vlaneseq
            %s1573 = smul.u32 %s1571, 128
            %v1574 = vstv %s1573
            %v1575 = vadd.s32 %v1574, 64
            %vm1576 = vcmp.eq.s32.totalorder %v1572, %v1575
            %s1577 = smul.addr %s1565, 8
            %s1578 = scalar_lea.vmem [#allocation15], %s1577
            %1579 = vst.msk [vmem:[%s1578] sm:$0xff] %vm1576, 2147483648
            %s1580 = smul.addr %s1565, 8
            %s1581 = scalar_lea.vmem [#allocation16], %s1580
            %1582 = vst.msk [vmem:[%s1581] sm:$0xff] %vm1576, 2147483647
            %1583 = xla_tuple %1579, %1582
            %v1584 = vrot.slane %v212, 1
            %s1585 = vtos %v1584
            %s1586 = sshrl.u32 %s1585, 3
            %p1587 = scmp.lt.s32.totalorder %s1585, 0
            %s1588 = ssub.s32 0, %s1585
            %s1589 = scalar_select %p1587, %s1588, %s1585
            %s1590 = sand.u32 %s1589, 7
            %s1591 = ssub.s32 0, %s1590
            %s1592 = scalar_select %p1587, %s1591, %s1590
            %v1593 = vlaneseq
            %s1594 = smul.u32 %s1592, 128
            %v1595 = vstv %s1594
            %v1596 = vadd.s32 %v1595, 65
            %vm1597 = vcmp.eq.s32.totalorder %v1593, %v1596
            %s1598 = smul.addr %s1586, 8
            %s1599 = scalar_lea.vmem [#allocation15], %s1598
            %1600 = vst.msk [vmem:[%s1599] sm:$0xff] %vm1597, 2147483648
            %s1601 = smul.addr %s1586, 8
            %s1602 = scalar_lea.vmem [#allocation16], %s1601
            %1603 = vst.msk [vmem:[%s1602] sm:$0xff] %vm1597, 2147483647
            %1604 = xla_tuple %1600, %1603
            %v1605 = vrot.slane %v1584, 1
            %s1606 = vtos %v1605
            %s1607 = sshrl.u32 %s1606, 3
            %p1608 = scmp.lt.s32.totalorder %s1606, 0
            %s1609 = ssub.s32 0, %s1606
            %s1610 = scalar_select %p1608, %s1609, %s1606
            %s1611 = sand.u32 %s1610, 7
            %s1612 = ssub.s32 0, %s1611
            %s1613 = scalar_select %p1608, %s1612, %s1611
            %v1614 = vlaneseq
            %s1615 = smul.u32 %s1613, 128
            %v1616 = vstv %s1615
            %v1617 = vadd.s32 %v1616, 66
            %vm1618 = vcmp.eq.s32.totalorder %v1614, %v1617
            %s1619 = smul.addr %s1607, 8
            %s1620 = scalar_lea.vmem [#allocation15], %s1619
            %1621 = vst.msk [vmem:[%s1620] sm:$0xff] %vm1618, 2147483648
            %s1622 = smul.addr %s1607, 8
            %s1623 = scalar_lea.vmem [#allocation16], %s1622
            %1624 = vst.msk [vmem:[%s1623] sm:$0xff] %vm1618, 2147483647
            %1625 = xla_tuple %1621, %1624
            %v1626 = vrot.slane %v1605, 1
            %s1627 = vtos %v1626
            %s1628 = sshrl.u32 %s1627, 3
            %p1629 = scmp.lt.s32.totalorder %s1627, 0
            %s1630 = ssub.s32 0, %s1627
            %s1631 = scalar_select %p1629, %s1630, %s1627
            %s1632 = sand.u32 %s1631, 7
            %s1633 = ssub.s32 0, %s1632
            %s1634 = scalar_select %p1629, %s1633, %s1632
            %v1635 = vlaneseq
            %s1636 = smul.u32 %s1634, 128
            %v1637 = vstv %s1636
            %v1638 = vadd.s32 %v1637, 67
            %vm1639 = vcmp.eq.s32.totalorder %v1635, %v1638
            %s1640 = smul.addr %s1628, 8
            %s1641 = scalar_lea.vmem [#allocation15], %s1640
            %1642 = vst.msk [vmem:[%s1641] sm:$0xff] %vm1639, 2147483648
            %s1643 = smul.addr %s1628, 8
            %s1644 = scalar_lea.vmem [#allocation16], %s1643
            %1645 = vst.msk [vmem:[%s1644] sm:$0xff] %vm1639, 2147483647
            %1646 = xla_tuple %1642, %1645
            %v1647 = vrot.slane %v1626, 1
            %s1648 = vtos %v1647
            %s1649 = sshrl.u32 %s1648, 3
            %p1650 = scmp.lt.s32.totalorder %s1648, 0
            %s1651 = ssub.s32 0, %s1648
            %s1652 = scalar_select %p1650, %s1651, %s1648
            %s1653 = sand.u32 %s1652, 7
            %s1654 = ssub.s32 0, %s1653
            %s1655 = scalar_select %p1650, %s1654, %s1653
            %v1656 = vlaneseq
            %s1657 = smul.u32 %s1655, 128
            %v1658 = vstv %s1657
            %v1659 = vadd.s32 %v1658, 68
            %vm1660 = vcmp.eq.s32.totalorder %v1656, %v1659
            %s1661 = smul.addr %s1649, 8
            %s1662 = scalar_lea.vmem [#allocation15], %s1661
            %1663 = vst.msk [vmem:[%s1662] sm:$0xff] %vm1660, 2147483648
            %s1664 = smul.addr %s1649, 8
            %s1665 = scalar_lea.vmem [#allocation16], %s1664
            %1666 = vst.msk [vmem:[%s1665] sm:$0xff] %vm1660, 2147483647
            %1667 = xla_tuple %1663, %1666
            %v1668 = vrot.slane %v1647, 1
            %s1669 = vtos %v1668
            %s1670 = sshrl.u32 %s1669, 3
            %p1671 = scmp.lt.s32.totalorder %s1669, 0
            %s1672 = ssub.s32 0, %s1669
            %s1673 = scalar_select %p1671, %s1672, %s1669
            %s1674 = sand.u32 %s1673, 7
            %s1675 = ssub.s32 0, %s1674
            %s1676 = scalar_select %p1671, %s1675, %s1674
            %v1677 = vlaneseq
            %s1678 = smul.u32 %s1676, 128
            %v1679 = vstv %s1678
            %v1680 = vadd.s32 %v1679, 69
            %vm1681 = vcmp.eq.s32.totalorder %v1677, %v1680
            %s1682 = smul.addr %s1670, 8
            %s1683 = scalar_lea.vmem [#allocation15], %s1682
            %1684 = vst.msk [vmem:[%s1683] sm:$0xff] %vm1681, 2147483648
            %s1685 = smul.addr %s1670, 8
            %s1686 = scalar_lea.vmem [#allocation16], %s1685
            %1687 = vst.msk [vmem:[%s1686] sm:$0xff] %vm1681, 2147483647
            %1688 = xla_tuple %1684, %1687
            %v1689 = vrot.slane %v1668, 1
            %s1690 = vtos %v1689
            %s1691 = sshrl.u32 %s1690, 3
            %p1692 = scmp.lt.s32.totalorder %s1690, 0
            %s1693 = ssub.s32 0, %s1690
            %s1694 = scalar_select %p1692, %s1693, %s1690
            %s1695 = sand.u32 %s1694, 7
            %s1696 = ssub.s32 0, %s1695
            %s1697 = scalar_select %p1692, %s1696, %s1695
            %v1698 = vlaneseq
            %s1699 = smul.u32 %s1697, 128
            %v1700 = vstv %s1699
            %v1701 = vadd.s32 %v1700, 70
            %vm1702 = vcmp.eq.s32.totalorder %v1698, %v1701
            %s1703 = smul.addr %s1691, 8
            %s1704 = scalar_lea.vmem [#allocation15], %s1703
            %1705 = vst.msk [vmem:[%s1704] sm:$0xff] %vm1702, 2147483648
            %s1706 = smul.addr %s1691, 8
            %s1707 = scalar_lea.vmem [#allocation16], %s1706
            %1708 = vst.msk [vmem:[%s1707] sm:$0xff] %vm1702, 2147483647
            %1709 = xla_tuple %1705, %1708
            %v1710 = vrot.slane %v1689, 1
            %s1711 = vtos %v1710
            %s1712 = sshrl.u32 %s1711, 3
            %p1713 = scmp.lt.s32.totalorder %s1711, 0
            %s1714 = ssub.s32 0, %s1711
            %s1715 = scalar_select %p1713, %s1714, %s1711
            %s1716 = sand.u32 %s1715, 7
            %s1717 = ssub.s32 0, %s1716
            %s1718 = scalar_select %p1713, %s1717, %s1716
            %v1719 = vlaneseq
            %s1720 = smul.u32 %s1718, 128
            %v1721 = vstv %s1720
            %v1722 = vadd.s32 %v1721, 71
            %vm1723 = vcmp.eq.s32.totalorder %v1719, %v1722
            %s1724 = smul.addr %s1712, 8
            %s1725 = scalar_lea.vmem [#allocation15], %s1724
            %1726 = vst.msk [vmem:[%s1725] sm:$0xff] %vm1723, 2147483648
            %s1727 = smul.addr %s1712, 8
            %s1728 = scalar_lea.vmem [#allocation16], %s1727
            %1729 = vst.msk [vmem:[%s1728] sm:$0xff] %vm1723, 2147483647
            %1730 = xla_tuple %1726, %1729
            %v1731 = vrot.slane %v1710, 1
            %s1732 = vtos %v213
            %s1733 = sshrl.u32 %s1732, 3
            %p1734 = scmp.lt.s32.totalorder %s1732, 0
            %s1735 = ssub.s32 0, %s1732
            %s1736 = scalar_select %p1734, %s1735, %s1732
            %s1737 = sand.u32 %s1736, 7
            %s1738 = ssub.s32 0, %s1737
            %s1739 = scalar_select %p1734, %s1738, %s1737
            %v1740 = vlaneseq
            %s1741 = smul.u32 %s1739, 128
            %v1742 = vstv %s1741
            %v1743 = vadd.s32 %v1742, 72
            %vm1744 = vcmp.eq.s32.totalorder %v1740, %v1743
            %s1745 = smul.addr %s1733, 8
            %s1746 = scalar_lea.vmem [#allocation15], %s1745
            %1747 = vst.msk [vmem:[%s1746] sm:$0xff] %vm1744, 2147483648
            %s1748 = smul.addr %s1733, 8
            %s1749 = scalar_lea.vmem [#allocation16], %s1748
            %1750 = vst.msk [vmem:[%s1749] sm:$0xff] %vm1744, 2147483647
            %1751 = xla_tuple %1747, %1750
            %v1752 = vrot.slane %v213, 1
            %s1753 = vtos %v1752
            %s1754 = sshrl.u32 %s1753, 3
            %p1755 = scmp.lt.s32.totalorder %s1753, 0
            %s1756 = ssub.s32 0, %s1753
            %s1757 = scalar_select %p1755, %s1756, %s1753
            %s1758 = sand.u32 %s1757, 7
            %s1759 = ssub.s32 0, %s1758
            %s1760 = scalar_select %p1755, %s1759, %s1758
            %v1761 = vlaneseq
            %s1762 = smul.u32 %s1760, 128
            %v1763 = vstv %s1762
            %v1764 = vadd.s32 %v1763, 73
            %vm1765 = vcmp.eq.s32.totalorder %v1761, %v1764
            %s1766 = smul.addr %s1754, 8
            %s1767 = scalar_lea.vmem [#allocation15], %s1766
            %1768 = vst.msk [vmem:[%s1767] sm:$0xff] %vm1765, 2147483648
            %s1769 = smul.addr %s1754, 8
            %s1770 = scalar_lea.vmem [#allocation16], %s1769
            %1771 = vst.msk [vmem:[%s1770] sm:$0xff] %vm1765, 2147483647
            %1772 = xla_tuple %1768, %1771
            %v1773 = vrot.slane %v1752, 1
            %s1774 = vtos %v1773
            %s1775 = sshrl.u32 %s1774, 3
            %p1776 = scmp.lt.s32.totalorder %s1774, 0
            %s1777 = ssub.s32 0, %s1774
            %s1778 = scalar_select %p1776, %s1777, %s1774
            %s1779 = sand.u32 %s1778, 7
            %s1780 = ssub.s32 0, %s1779
            %s1781 = scalar_select %p1776, %s1780, %s1779
            %v1782 = vlaneseq
            %s1783 = smul.u32 %s1781, 128
            %v1784 = vstv %s1783
            %v1785 = vadd.s32 %v1784, 74
            %vm1786 = vcmp.eq.s32.totalorder %v1782, %v1785
            %s1787 = smul.addr %s1775, 8
            %s1788 = scalar_lea.vmem [#allocation15], %s1787
            %1789 = vst.msk [vmem:[%s1788] sm:$0xff] %vm1786, 2147483648
            %s1790 = smul.addr %s1775, 8
            %s1791 = scalar_lea.vmem [#allocation16], %s1790
            %1792 = vst.msk [vmem:[%s1791] sm:$0xff] %vm1786, 2147483647
            %1793 = xla_tuple %1789, %1792
            %v1794 = vrot.slane %v1773, 1
            %s1795 = vtos %v1794
            %s1796 = sshrl.u32 %s1795, 3
            %p1797 = scmp.lt.s32.totalorder %s1795, 0
            %s1798 = ssub.s32 0, %s1795
            %s1799 = scalar_select %p1797, %s1798, %s1795
            %s1800 = sand.u32 %s1799, 7
            %s1801 = ssub.s32 0, %s1800
            %s1802 = scalar_select %p1797, %s1801, %s1800
            %v1803 = vlaneseq
            %s1804 = smul.u32 %s1802, 128
            %v1805 = vstv %s1804
            %v1806 = vadd.s32 %v1805, 75
            %vm1807 = vcmp.eq.s32.totalorder %v1803, %v1806
            %s1808 = smul.addr %s1796, 8
            %s1809 = scalar_lea.vmem [#allocation15], %s1808
            %1810 = vst.msk [vmem:[%s1809] sm:$0xff] %vm1807, 2147483648
            %s1811 = smul.addr %s1796, 8
            %s1812 = scalar_lea.vmem [#allocation16], %s1811
            %1813 = vst.msk [vmem:[%s1812] sm:$0xff] %vm1807, 2147483647
            %1814 = xla_tuple %1810, %1813
            %v1815 = vrot.slane %v1794, 1
            %s1816 = vtos %v1815
            %s1817 = sshrl.u32 %s1816, 3
            %p1818 = scmp.lt.s32.totalorder %s1816, 0
            %s1819 = ssub.s32 0, %s1816
            %s1820 = scalar_select %p1818, %s1819, %s1816
            %s1821 = sand.u32 %s1820, 7
            %s1822 = ssub.s32 0, %s1821
            %s1823 = scalar_select %p1818, %s1822, %s1821
            %v1824 = vlaneseq
            %s1825 = smul.u32 %s1823, 128
            %v1826 = vstv %s1825
            %v1827 = vadd.s32 %v1826, 76
            %vm1828 = vcmp.eq.s32.totalorder %v1824, %v1827
            %s1829 = smul.addr %s1817, 8
            %s1830 = scalar_lea.vmem [#allocation15], %s1829
            %1831 = vst.msk [vmem:[%s1830] sm:$0xff] %vm1828, 2147483648
            %s1832 = smul.addr %s1817, 8
            %s1833 = scalar_lea.vmem [#allocation16], %s1832
            %1834 = vst.msk [vmem:[%s1833] sm:$0xff] %vm1828, 2147483647
            %1835 = xla_tuple %1831, %1834
            %v1836 = vrot.slane %v1815, 1
            %s1837 = vtos %v1836
            %s1838 = sshrl.u32 %s1837, 3
            %p1839 = scmp.lt.s32.totalorder %s1837, 0
            %s1840 = ssub.s32 0, %s1837
            %s1841 = scalar_select %p1839, %s1840, %s1837
            %s1842 = sand.u32 %s1841, 7
            %s1843 = ssub.s32 0, %s1842
            %s1844 = scalar_select %p1839, %s1843, %s1842
            %v1845 = vlaneseq
            %s1846 = smul.u32 %s1844, 128
            %v1847 = vstv %s1846
            %v1848 = vadd.s32 %v1847, 77
            %vm1849 = vcmp.eq.s32.totalorder %v1845, %v1848
            %s1850 = smul.addr %s1838, 8
            %s1851 = scalar_lea.vmem [#allocation15], %s1850
            %1852 = vst.msk [vmem:[%s1851] sm:$0xff] %vm1849, 2147483648
            %s1853 = smul.addr %s1838, 8
            %s1854 = scalar_lea.vmem [#allocation16], %s1853
            %1855 = vst.msk [vmem:[%s1854] sm:$0xff] %vm1849, 2147483647
            %1856 = xla_tuple %1852, %1855
            %v1857 = vrot.slane %v1836, 1
            %s1858 = vtos %v1857
            %s1859 = sshrl.u32 %s1858, 3
            %p1860 = scmp.lt.s32.totalorder %s1858, 0
            %s1861 = ssub.s32 0, %s1858
            %s1862 = scalar_select %p1860, %s1861, %s1858
            %s1863 = sand.u32 %s1862, 7
            %s1864 = ssub.s32 0, %s1863
            %s1865 = scalar_select %p1860, %s1864, %s1863
            %v1866 = vlaneseq
            %s1867 = smul.u32 %s1865, 128
            %v1868 = vstv %s1867
            %v1869 = vadd.s32 %v1868, 78
            %vm1870 = vcmp.eq.s32.totalorder %v1866, %v1869
            %s1871 = smul.addr %s1859, 8
            %s1872 = scalar_lea.vmem [#allocation15], %s1871
            %1873 = vst.msk [vmem:[%s1872] sm:$0xff] %vm1870, 2147483648
            %s1874 = smul.addr %s1859, 8
            %s1875 = scalar_lea.vmem [#allocation16], %s1874
            %1876 = vst.msk [vmem:[%s1875] sm:$0xff] %vm1870, 2147483647
            %1877 = xla_tuple %1873, %1876
            %v1878 = vrot.slane %v1857, 1
            %s1879 = vtos %v1878
            %s1880 = sshrl.u32 %s1879, 3
            %p1881 = scmp.lt.s32.totalorder %s1879, 0
            %s1882 = ssub.s32 0, %s1879
            %s1883 = scalar_select %p1881, %s1882, %s1879
            %s1884 = sand.u32 %s1883, 7
            %s1885 = ssub.s32 0, %s1884
            %s1886 = scalar_select %p1881, %s1885, %s1884
            %v1887 = vlaneseq
            %s1888 = smul.u32 %s1886, 128
            %v1889 = vstv %s1888
            %v1890 = vadd.s32 %v1889, 79
            %vm1891 = vcmp.eq.s32.totalorder %v1887, %v1890
            %s1892 = smul.addr %s1880, 8
            %s1893 = scalar_lea.vmem [#allocation15], %s1892
            %1894 = vst.msk [vmem:[%s1893] sm:$0xff] %vm1891, 2147483648
            %s1895 = smul.addr %s1880, 8
            %s1896 = scalar_lea.vmem [#allocation16], %s1895
            %1897 = vst.msk [vmem:[%s1896] sm:$0xff] %vm1891, 2147483647
            %1898 = xla_tuple %1894, %1897
            %v1899 = vrot.slane %v1878, 1
            %s1900 = vtos %v214
            %s1901 = sshrl.u32 %s1900, 3
            %p1902 = scmp.lt.s32.totalorder %s1900, 0
            %s1903 = ssub.s32 0, %s1900
            %s1904 = scalar_select %p1902, %s1903, %s1900
            %s1905 = sand.u32 %s1904, 7
            %s1906 = ssub.s32 0, %s1905
            %s1907 = scalar_select %p1902, %s1906, %s1905
            %v1908 = vlaneseq
            %s1909 = smul.u32 %s1907, 128
            %v1910 = vstv %s1909
            %v1911 = vadd.s32 %v1910, 80
            %vm1912 = vcmp.eq.s32.totalorder %v1908, %v1911
            %s1913 = smul.addr %s1901, 8
            %s1914 = scalar_lea.vmem [#allocation15], %s1913
            %1915 = vst.msk [vmem:[%s1914] sm:$0xff] %vm1912, 2147483648
            %s1916 = smul.addr %s1901, 8
            %s1917 = scalar_lea.vmem [#allocation16], %s1916
            %1918 = vst.msk [vmem:[%s1917] sm:$0xff] %vm1912, 2147483647
            %1919 = xla_tuple %1915, %1918
            %v1920 = vrot.slane %v214, 1
            %s1921 = vtos %v1920
            %s1922 = sshrl.u32 %s1921, 3
            %p1923 = scmp.lt.s32.totalorder %s1921, 0
            %s1924 = ssub.s32 0, %s1921
            %s1925 = scalar_select %p1923, %s1924, %s1921
            %s1926 = sand.u32 %s1925, 7
            %s1927 = ssub.s32 0, %s1926
            %s1928 = scalar_select %p1923, %s1927, %s1926
            %v1929 = vlaneseq
            %s1930 = smul.u32 %s1928, 128
            %v1931 = vstv %s1930
            %v1932 = vadd.s32 %v1931, 81
            %vm1933 = vcmp.eq.s32.totalorder %v1929, %v1932
            %s1934 = smul.addr %s1922, 8
            %s1935 = scalar_lea.vmem [#allocation15], %s1934
            %1936 = vst.msk [vmem:[%s1935] sm:$0xff] %vm1933, 2147483648
            %s1937 = smul.addr %s1922, 8
            %s1938 = scalar_lea.vmem [#allocation16], %s1937
            %1939 = vst.msk [vmem:[%s1938] sm:$0xff] %vm1933, 2147483647
            %1940 = xla_tuple %1936, %1939
            %v1941 = vrot.slane %v1920, 1
            %s1942 = vtos %v1941
            %s1943 = sshrl.u32 %s1942, 3
            %p1944 = scmp.lt.s32.totalorder %s1942, 0
            %s1945 = ssub.s32 0, %s1942
            %s1946 = scalar_select %p1944, %s1945, %s1942
            %s1947 = sand.u32 %s1946, 7
            %s1948 = ssub.s32 0, %s1947
            %s1949 = scalar_select %p1944, %s1948, %s1947
            %v1950 = vlaneseq
            %s1951 = smul.u32 %s1949, 128
            %v1952 = vstv %s1951
            %v1953 = vadd.s32 %v1952, 82
            %vm1954 = vcmp.eq.s32.totalorder %v1950, %v1953
            %s1955 = smul.addr %s1943, 8
            %s1956 = scalar_lea.vmem [#allocation15], %s1955
            %1957 = vst.msk [vmem:[%s1956] sm:$0xff] %vm1954, 2147483648
            %s1958 = smul.addr %s1943, 8
            %s1959 = scalar_lea.vmem [#allocation16], %s1958
            %1960 = vst.msk [vmem:[%s1959] sm:$0xff] %vm1954, 2147483647
            %1961 = xla_tuple %1957, %1960
            %v1962 = vrot.slane %v1941, 1
            %s1963 = vtos %v1962
            %s1964 = sshrl.u32 %s1963, 3
            %p1965 = scmp.lt.s32.totalorder %s1963, 0
            %s1966 = ssub.s32 0, %s1963
            %s1967 = scalar_select %p1965, %s1966, %s1963
            %s1968 = sand.u32 %s1967, 7
            %s1969 = ssub.s32 0, %s1968
            %s1970 = scalar_select %p1965, %s1969, %s1968
            %v1971 = vlaneseq
            %s1972 = smul.u32 %s1970, 128
            %v1973 = vstv %s1972
            %v1974 = vadd.s32 %v1973, 83
            %vm1975 = vcmp.eq.s32.totalorder %v1971, %v1974
            %s1976 = smul.addr %s1964, 8
            %s1977 = scalar_lea.vmem [#allocation15], %s1976
            %1978 = vst.msk [vmem:[%s1977] sm:$0xff] %vm1975, 2147483648
            %s1979 = smul.addr %s1964, 8
            %s1980 = scalar_lea.vmem [#allocation16], %s1979
            %1981 = vst.msk [vmem:[%s1980] sm:$0xff] %vm1975, 2147483647
            %1982 = xla_tuple %1978, %1981
            %v1983 = vrot.slane %v1962, 1
            %s1984 = vtos %v1983
            %s1985 = sshrl.u32 %s1984, 3
            %p1986 = scmp.lt.s32.totalorder %s1984, 0
            %s1987 = ssub.s32 0, %s1984
            %s1988 = scalar_select %p1986, %s1987, %s1984
            %s1989 = sand.u32 %s1988, 7
            %s1990 = ssub.s32 0, %s1989
            %s1991 = scalar_select %p1986, %s1990, %s1989
            %v1992 = vlaneseq
            %s1993 = smul.u32 %s1991, 128
            %v1994 = vstv %s1993
            %v1995 = vadd.s32 %v1994, 84
            %vm1996 = vcmp.eq.s32.totalorder %v1992, %v1995
            %s1997 = smul.addr %s1985, 8
            %s1998 = scalar_lea.vmem [#allocation15], %s1997
            %1999 = vst.msk [vmem:[%s1998] sm:$0xff] %vm1996, 2147483648
            %s2000 = smul.addr %s1985, 8
            %s2001 = scalar_lea.vmem [#allocation16], %s2000
            %2002 = vst.msk [vmem:[%s2001] sm:$0xff] %vm1996, 2147483647
            %2003 = xla_tuple %1999, %2002
            %v2004 = vrot.slane %v1983, 1
            %s2005 = vtos %v2004
            %s2006 = sshrl.u32 %s2005, 3
            %p2007 = scmp.lt.s32.totalorder %s2005, 0
            %s2008 = ssub.s32 0, %s2005
            %s2009 = scalar_select %p2007, %s2008, %s2005
            %s2010 = sand.u32 %s2009, 7
            %s2011 = ssub.s32 0, %s2010
            %s2012 = scalar_select %p2007, %s2011, %s2010
            %v2013 = vlaneseq
            %s2014 = smul.u32 %s2012, 128
            %v2015 = vstv %s2014
            %v2016 = vadd.s32 %v2015, 85
            %vm2017 = vcmp.eq.s32.totalorder %v2013, %v2016
            %s2018 = smul.addr %s2006, 8
            %s2019 = scalar_lea.vmem [#allocation15], %s2018
            %2020 = vst.msk [vmem:[%s2019] sm:$0xff] %vm2017, 2147483648
            %s2021 = smul.addr %s2006, 8
            %s2022 = scalar_lea.vmem [#allocation16], %s2021
            %2023 = vst.msk [vmem:[%s2022] sm:$0xff] %vm2017, 2147483647
            %2024 = xla_tuple %2020, %2023
            %v2025 = vrot.slane %v2004, 1
            %s2026 = vtos %v2025
            %s2027 = sshrl.u32 %s2026, 3
            %p2028 = scmp.lt.s32.totalorder %s2026, 0
            %s2029 = ssub.s32 0, %s2026
            %s2030 = scalar_select %p2028, %s2029, %s2026
            %s2031 = sand.u32 %s2030, 7
            %s2032 = ssub.s32 0, %s2031
            %s2033 = scalar_select %p2028, %s2032, %s2031
            %v2034 = vlaneseq
            %s2035 = smul.u32 %s2033, 128
            %v2036 = vstv %s2035
            %v2037 = vadd.s32 %v2036, 86
            %vm2038 = vcmp.eq.s32.totalorder %v2034, %v2037
            %s2039 = smul.addr %s2027, 8
            %s2040 = scalar_lea.vmem [#allocation15], %s2039
            %2041 = vst.msk [vmem:[%s2040] sm:$0xff] %vm2038, 2147483648
            %s2042 = smul.addr %s2027, 8
            %s2043 = scalar_lea.vmem [#allocation16], %s2042
            %2044 = vst.msk [vmem:[%s2043] sm:$0xff] %vm2038, 2147483647
            %2045 = xla_tuple %2041, %2044
            %v2046 = vrot.slane %v2025, 1
            %s2047 = vtos %v2046
            %s2048 = sshrl.u32 %s2047, 3
            %p2049 = scmp.lt.s32.totalorder %s2047, 0
            %s2050 = ssub.s32 0, %s2047
            %s2051 = scalar_select %p2049, %s2050, %s2047
            %s2052 = sand.u32 %s2051, 7
            %s2053 = ssub.s32 0, %s2052
            %s2054 = scalar_select %p2049, %s2053, %s2052
            %v2055 = vlaneseq
            %s2056 = smul.u32 %s2054, 128
            %v2057 = vstv %s2056
            %v2058 = vadd.s32 %v2057, 87
            %vm2059 = vcmp.eq.s32.totalorder %v2055, %v2058
            %s2060 = smul.addr %s2048, 8
            %s2061 = scalar_lea.vmem [#allocation15], %s2060
            %2062 = vst.msk [vmem:[%s2061] sm:$0xff] %vm2059, 2147483648
            %s2063 = smul.addr %s2048, 8
            %s2064 = scalar_lea.vmem [#allocation16], %s2063
            %2065 = vst.msk [vmem:[%s2064] sm:$0xff] %vm2059, 2147483647
            %2066 = xla_tuple %2062, %2065
            %v2067 = vrot.slane %v2046, 1
            %s2068 = vtos %v215
            %s2069 = sshrl.u32 %s2068, 3
            %p2070 = scmp.lt.s32.totalorder %s2068, 0
            %s2071 = ssub.s32 0, %s2068
            %s2072 = scalar_select %p2070, %s2071, %s2068
            %s2073 = sand.u32 %s2072, 7
            %s2074 = ssub.s32 0, %s2073
            %s2075 = scalar_select %p2070, %s2074, %s2073
            %v2076 = vlaneseq
            %s2077 = smul.u32 %s2075, 128
            %v2078 = vstv %s2077
            %v2079 = vadd.s32 %v2078, 88
            %vm2080 = vcmp.eq.s32.totalorder %v2076, %v2079
            %s2081 = smul.addr %s2069, 8
            %s2082 = scalar_lea.vmem [#allocation15], %s2081
            %2083 = vst.msk [vmem:[%s2082] sm:$0xff] %vm2080, 2147483648
            %s2084 = smul.addr %s2069, 8
            %s2085 = scalar_lea.vmem [#allocation16], %s2084
            %2086 = vst.msk [vmem:[%s2085] sm:$0xff] %vm2080, 2147483647
            %2087 = xla_tuple %2083, %2086
            %v2088 = vrot.slane %v215, 1
            %s2089 = vtos %v2088
            %s2090 = sshrl.u32 %s2089, 3
            %p2091 = scmp.lt.s32.totalorder %s2089, 0
            %s2092 = ssub.s32 0, %s2089
            %s2093 = scalar_select %p2091, %s2092, %s2089
            %s2094 = sand.u32 %s2093, 7
            %s2095 = ssub.s32 0, %s2094
            %s2096 = scalar_select %p2091, %s2095, %s2094
            %v2097 = vlaneseq
            %s2098 = smul.u32 %s2096, 128
            %v2099 = vstv %s2098
            %v2100 = vadd.s32 %v2099, 89
            %vm2101 = vcmp.eq.s32.totalorder %v2097, %v2100
            %s2102 = smul.addr %s2090, 8
            %s2103 = scalar_lea.vmem [#allocation15], %s2102
            %2104 = vst.msk [vmem:[%s2103] sm:$0xff] %vm2101, 2147483648
            %s2105 = smul.addr %s2090, 8
            %s2106 = scalar_lea.vmem [#allocation16], %s2105
            %2107 = vst.msk [vmem:[%s2106] sm:$0xff] %vm2101, 2147483647
            %2108 = xla_tuple %2104, %2107
            %v2109 = vrot.slane %v2088, 1
            %s2110 = vtos %v2109
            %s2111 = sshrl.u32 %s2110, 3
            %p2112 = scmp.lt.s32.totalorder %s2110, 0
            %s2113 = ssub.s32 0, %s2110
            %s2114 = scalar_select %p2112, %s2113, %s2110
            %s2115 = sand.u32 %s2114, 7
            %s2116 = ssub.s32 0, %s2115
            %s2117 = scalar_select %p2112, %s2116, %s2115
            %v2118 = vlaneseq
            %s2119 = smul.u32 %s2117, 128
            %v2120 = vstv %s2119
            %v2121 = vadd.s32 %v2120, 90
            %vm2122 = vcmp.eq.s32.totalorder %v2118, %v2121
            %s2123 = smul.addr %s2111, 8
            %s2124 = scalar_lea.vmem [#allocation15], %s2123
            %2125 = vst.msk [vmem:[%s2124] sm:$0xff] %vm2122, 2147483648
            %s2126 = smul.addr %s2111, 8
            %s2127 = scalar_lea.vmem [#allocation16], %s2126
            %2128 = vst.msk [vmem:[%s2127] sm:$0xff] %vm2122, 2147483647
            %2129 = xla_tuple %2125, %2128
            %v2130 = vrot.slane %v2109, 1
            %s2131 = vtos %v2130
            %s2132 = sshrl.u32 %s2131, 3
            %p2133 = scmp.lt.s32.totalorder %s2131, 0
            %s2134 = ssub.s32 0, %s2131
            %s2135 = scalar_select %p2133, %s2134, %s2131
            %s2136 = sand.u32 %s2135, 7
            %s2137 = ssub.s32 0, %s2136
            %s2138 = scalar_select %p2133, %s2137, %s2136
            %v2139 = vlaneseq
            %s2140 = smul.u32 %s2138, 128
            %v2141 = vstv %s2140
            %v2142 = vadd.s32 %v2141, 91
            %vm2143 = vcmp.eq.s32.totalorder %v2139, %v2142
            %s2144 = smul.addr %s2132, 8
            %s2145 = scalar_lea.vmem [#allocation15], %s2144
            %2146 = vst.msk [vmem:[%s2145] sm:$0xff] %vm2143, 2147483648
            %s2147 = smul.addr %s2132, 8
            %s2148 = scalar_lea.vmem [#allocation16], %s2147
            %2149 = vst.msk [vmem:[%s2148] sm:$0xff] %vm2143, 2147483647
            %2150 = xla_tuple %2146, %2149
            %v2151 = vrot.slane %v2130, 1
            %s2152 = vtos %v2151
            %s2153 = sshrl.u32 %s2152, 3
            %p2154 = scmp.lt.s32.totalorder %s2152, 0
            %s2155 = ssub.s32 0, %s2152
            %s2156 = scalar_select %p2154, %s2155, %s2152
            %s2157 = sand.u32 %s2156, 7
            %s2158 = ssub.s32 0, %s2157
            %s2159 = scalar_select %p2154, %s2158, %s2157
            %v2160 = vlaneseq
            %s2161 = smul.u32 %s2159, 128
            %v2162 = vstv %s2161
            %v2163 = vadd.s32 %v2162, 92
            %vm2164 = vcmp.eq.s32.totalorder %v2160, %v2163
            %s2165 = smul.addr %s2153, 8
            %s2166 = scalar_lea.vmem [#allocation15], %s2165
            %2167 = vst.msk [vmem:[%s2166] sm:$0xff] %vm2164, 2147483648
            %s2168 = smul.addr %s2153, 8
            %s2169 = scalar_lea.vmem [#allocation16], %s2168
            %2170 = vst.msk [vmem:[%s2169] sm:$0xff] %vm2164, 2147483647
            %2171 = xla_tuple %2167, %2170
            %v2172 = vrot.slane %v2151, 1
            %s2173 = vtos %v2172
            %s2174 = sshrl.u32 %s2173, 3
            %p2175 = scmp.lt.s32.totalorder %s2173, 0
            %s2176 = ssub.s32 0, %s2173
            %s2177 = scalar_select %p2175, %s2176, %s2173
            %s2178 = sand.u32 %s2177, 7
            %s2179 = ssub.s32 0, %s2178
            %s2180 = scalar_select %p2175, %s2179, %s2178
            %v2181 = vlaneseq
            %s2182 = smul.u32 %s2180, 128
            %v2183 = vstv %s2182
            %v2184 = vadd.s32 %v2183, 93
            %vm2185 = vcmp.eq.s32.totalorder %v2181, %v2184
            %s2186 = smul.addr %s2174, 8
            %s2187 = scalar_lea.vmem [#allocation15], %s2186
            %2188 = vst.msk [vmem:[%s2187] sm:$0xff] %vm2185, 2147483648
            %s2189 = smul.addr %s2174, 8
            %s2190 = scalar_lea.vmem [#allocation16], %s2189
            %2191 = vst.msk [vmem:[%s2190] sm:$0xff] %vm2185, 2147483647
            %2192 = xla_tuple %2188, %2191
            %v2193 = vrot.slane %v2172, 1
            %s2194 = vtos %v2193
            %s2195 = sshrl.u32 %s2194, 3
            %p2196 = scmp.lt.s32.totalorder %s2194, 0
            %s2197 = ssub.s32 0, %s2194
            %s2198 = scalar_select %p2196, %s2197, %s2194
            %s2199 = sand.u32 %s2198, 7
            %s2200 = ssub.s32 0, %s2199
            %s2201 = scalar_select %p2196, %s2200, %s2199
            %v2202 = vlaneseq
            %s2203 = smul.u32 %s2201, 128
            %v2204 = vstv %s2203
            %v2205 = vadd.s32 %v2204, 94
            %vm2206 = vcmp.eq.s32.totalorder %v2202, %v2205
            %s2207 = smul.addr %s2195, 8
            %s2208 = scalar_lea.vmem [#allocation15], %s2207
            %2209 = vst.msk [vmem:[%s2208] sm:$0xff] %vm2206, 2147483648
            %s2210 = smul.addr %s2195, 8
            %s2211 = scalar_lea.vmem [#allocation16], %s2210
            %2212 = vst.msk [vmem:[%s2211] sm:$0xff] %vm2206, 2147483647
            %2213 = xla_tuple %2209, %2212
            %v2214 = vrot.slane %v2193, 1
            %s2215 = vtos %v2214
            %s2216 = sshrl.u32 %s2215, 3
            %p2217 = scmp.lt.s32.totalorder %s2215, 0
            %s2218 = ssub.s32 0, %s2215
            %s2219 = scalar_select %p2217, %s2218, %s2215
            %s2220 = sand.u32 %s2219, 7
            %s2221 = ssub.s32 0, %s2220
            %s2222 = scalar_select %p2217, %s2221, %s2220
            %v2223 = vlaneseq
            %s2224 = smul.u32 %s2222, 128
            %v2225 = vstv %s2224
            %v2226 = vadd.s32 %v2225, 95
            %vm2227 = vcmp.eq.s32.totalorder %v2223, %v2226
            %s2228 = smul.addr %s2216, 8
            %s2229 = scalar_lea.vmem [#allocation15], %s2228
            %2230 = vst.msk [vmem:[%s2229] sm:$0xff] %vm2227, 2147483648
            %s2231 = smul.addr %s2216, 8
            %s2232 = scalar_lea.vmem [#allocation16], %s2231
            %2233 = vst.msk [vmem:[%s2232] sm:$0xff] %vm2227, 2147483647
            %2234 = xla_tuple %2230, %2233
            %v2235 = vrot.slane %v2214, 1
            %s2236 = vtos %v216
            %s2237 = sshrl.u32 %s2236, 3
            %p2238 = scmp.lt.s32.totalorder %s2236, 0
            %s2239 = ssub.s32 0, %s2236
            %s2240 = scalar_select %p2238, %s2239, %s2236
            %s2241 = sand.u32 %s2240, 7
            %s2242 = ssub.s32 0, %s2241
            %s2243 = scalar_select %p2238, %s2242, %s2241
            %v2244 = vlaneseq
            %s2245 = smul.u32 %s2243, 128
            %v2246 = vstv %s2245
            %v2247 = vadd.s32 %v2246, 96
            %vm2248 = vcmp.eq.s32.totalorder %v2244, %v2247
            %s2249 = smul.addr %s2237, 8
            %s2250 = scalar_lea.vmem [#allocation15], %s2249
            %2251 = vst.msk [vmem:[%s2250] sm:$0xff] %vm2248, 2147483648
            %s2252 = smul.addr %s2237, 8
            %s2253 = scalar_lea.vmem [#allocation16], %s2252
            %2254 = vst.msk [vmem:[%s2253] sm:$0xff] %vm2248, 2147483647
            %2255 = xla_tuple %2251, %2254
            %v2256 = vrot.slane %v216, 1
            %s2257 = vtos %v2256
            %s2258 = sshrl.u32 %s2257, 3
            %p2259 = scmp.lt.s32.totalorder %s2257, 0
            %s2260 = ssub.s32 0, %s2257
            %s2261 = scalar_select %p2259, %s2260, %s2257
            %s2262 = sand.u32 %s2261, 7
            %s2263 = ssub.s32 0, %s2262
            %s2264 = scalar_select %p2259, %s2263, %s2262
            %v2265 = vlaneseq
            %s2266 = smul.u32 %s2264, 128
            %v2267 = vstv %s2266
            %v2268 = vadd.s32 %v2267, 97
            %vm2269 = vcmp.eq.s32.totalorder %v2265, %v2268
            %s2270 = smul.addr %s2258, 8
            %s2271 = scalar_lea.vmem [#allocation15], %s2270
            %2272 = vst.msk [vmem:[%s2271] sm:$0xff] %vm2269, 2147483648
            %s2273 = smul.addr %s2258, 8
            %s2274 = scalar_lea.vmem [#allocation16], %s2273
            %2275 = vst.msk [vmem:[%s2274] sm:$0xff] %vm2269, 2147483647
            %2276 = xla_tuple %2272, %2275
            %v2277 = vrot.slane %v2256, 1
            %s2278 = vtos %v2277
            %s2279 = sshrl.u32 %s2278, 3
            %p2280 = scmp.lt.s32.totalorder %s2278, 0
            %s2281 = ssub.s32 0, %s2278
            %s2282 = scalar_select %p2280, %s2281, %s2278
            %s2283 = sand.u32 %s2282, 7
            %s2284 = ssub.s32 0, %s2283
            %s2285 = scalar_select %p2280, %s2284, %s2283
            %v2286 = vlaneseq
            %s2287 = smul.u32 %s2285, 128
            %v2288 = vstv %s2287
            %v2289 = vadd.s32 %v2288, 98
            %vm2290 = vcmp.eq.s32.totalorder %v2286, %v2289
            %s2291 = smul.addr %s2279, 8
            %s2292 = scalar_lea.vmem [#allocation15], %s2291
            %2293 = vst.msk [vmem:[%s2292] sm:$0xff] %vm2290, 2147483648
            %s2294 = smul.addr %s2279, 8
            %s2295 = scalar_lea.vmem [#allocation16], %s2294
            %2296 = vst.msk [vmem:[%s2295] sm:$0xff] %vm2290, 2147483647
            %2297 = xla_tuple %2293, %2296
            %v2298 = vrot.slane %v2277, 1
            %s2299 = vtos %v2298
            %s2300 = sshrl.u32 %s2299, 3
            %p2301 = scmp.lt.s32.totalorder %s2299, 0
            %s2302 = ssub.s32 0, %s2299
            %s2303 = scalar_select %p2301, %s2302, %s2299
            %s2304 = sand.u32 %s2303, 7
            %s2305 = ssub.s32 0, %s2304
            %s2306 = scalar_select %p2301, %s2305, %s2304
            %v2307 = vlaneseq
            %s2308 = smul.u32 %s2306, 128
            %v2309 = vstv %s2308
            %v2310 = vadd.s32 %v2309, 99
            %vm2311 = vcmp.eq.s32.totalorder %v2307, %v2310
            %s2312 = smul.addr %s2300, 8
            %s2313 = scalar_lea.vmem [#allocation15], %s2312
            %2314 = vst.msk [vmem:[%s2313] sm:$0xff] %vm2311, 2147483648
            %s2315 = smul.addr %s2300, 8
            %s2316 = scalar_lea.vmem [#allocation16], %s2315
            %2317 = vst.msk [vmem:[%s2316] sm:$0xff] %vm2311, 2147483647
            %2318 = xla_tuple %2314, %2317
            %v2319 = vrot.slane %v2298, 1
            %s2320 = vtos %v2319
            %s2321 = sshrl.u32 %s2320, 3
            %p2322 = scmp.lt.s32.totalorder %s2320, 0
            %s2323 = ssub.s32 0, %s2320
            %s2324 = scalar_select %p2322, %s2323, %s2320
            %s2325 = sand.u32 %s2324, 7
            %s2326 = ssub.s32 0, %s2325
            %s2327 = scalar_select %p2322, %s2326, %s2325
            %v2328 = vlaneseq
            %s2329 = smul.u32 %s2327, 128
            %v2330 = vstv %s2329
            %v2331 = vadd.s32 %v2330, 100
            %vm2332 = vcmp.eq.s32.totalorder %v2328, %v2331
            %s2333 = smul.addr %s2321, 8
            %s2334 = scalar_lea.vmem [#allocation15], %s2333
            %2335 = vst.msk [vmem:[%s2334] sm:$0xff] %vm2332, 2147483648
            %s2336 = smul.addr %s2321, 8
            %s2337 = scalar_lea.vmem [#allocation16], %s2336
            %2338 = vst.msk [vmem:[%s2337] sm:$0xff] %vm2332, 2147483647
            %2339 = xla_tuple %2335, %2338
            %v2340 = vrot.slane %v2319, 1
            %s2341 = vtos %v2340
            %s2342 = sshrl.u32 %s2341, 3
            %p2343 = scmp.lt.s32.totalorder %s2341, 0
            %s2344 = ssub.s32 0, %s2341
            %s2345 = scalar_select %p2343, %s2344, %s2341
            %s2346 = sand.u32 %s2345, 7
            %s2347 = ssub.s32 0, %s2346
            %s2348 = scalar_select %p2343, %s2347, %s2346
            %v2349 = vlaneseq
            %s2350 = smul.u32 %s2348, 128
            %v2351 = vstv %s2350
            %v2352 = vadd.s32 %v2351, 101
            %vm2353 = vcmp.eq.s32.totalorder %v2349, %v2352
            %s2354 = smul.addr %s2342, 8
            %s2355 = scalar_lea.vmem [#allocation15], %s2354
            %2356 = vst.msk [vmem:[%s2355] sm:$0xff] %vm2353, 2147483648
            %s2357 = smul.addr %s2342, 8
            %s2358 = scalar_lea.vmem [#allocation16], %s2357
            %2359 = vst.msk [vmem:[%s2358] sm:$0xff] %vm2353, 2147483647
            %2360 = xla_tuple %2356, %2359
            %v2361 = vrot.slane %v2340, 1
            %s2362 = vtos %v2361
            %s2363 = sshrl.u32 %s2362, 3
            %p2364 = scmp.lt.s32.totalorder %s2362, 0
            %s2365 = ssub.s32 0, %s2362
            %s2366 = scalar_select %p2364, %s2365, %s2362
            %s2367 = sand.u32 %s2366, 7
            %s2368 = ssub.s32 0, %s2367
            %s2369 = scalar_select %p2364, %s2368, %s2367
            %v2370 = vlaneseq
            %s2371 = smul.u32 %s2369, 128
            %v2372 = vstv %s2371
            %v2373 = vadd.s32 %v2372, 102
            %vm2374 = vcmp.eq.s32.totalorder %v2370, %v2373
            %s2375 = smul.addr %s2363, 8
            %s2376 = scalar_lea.vmem [#allocation15], %s2375
            %2377 = vst.msk [vmem:[%s2376] sm:$0xff] %vm2374, 2147483648
            %s2378 = smul.addr %s2363, 8
            %s2379 = scalar_lea.vmem [#allocation16], %s2378
            %2380 = vst.msk [vmem:[%s2379] sm:$0xff] %vm2374, 2147483647
            %2381 = xla_tuple %2377, %2380
            %v2382 = vrot.slane %v2361, 1
            %s2383 = vtos %v2382
            %s2384 = sshrl.u32 %s2383, 3
            %p2385 = scmp.lt.s32.totalorder %s2383, 0
            %s2386 = ssub.s32 0, %s2383
            %s2387 = scalar_select %p2385, %s2386, %s2383
            %s2388 = sand.u32 %s2387, 7
            %s2389 = ssub.s32 0, %s2388
            %s2390 = scalar_select %p2385, %s2389, %s2388
            %v2391 = vlaneseq
            %s2392 = smul.u32 %s2390, 128
            %v2393 = vstv %s2392
            %v2394 = vadd.s32 %v2393, 103
            %vm2395 = vcmp.eq.s32.totalorder %v2391, %v2394
            %s2396 = smul.addr %s2384, 8
            %s2397 = scalar_lea.vmem [#allocation15], %s2396
            %2398 = vst.msk [vmem:[%s2397] sm:$0xff] %vm2395, 2147483648
            %s2399 = smul.addr %s2384, 8
            %s2400 = scalar_lea.vmem [#allocation16], %s2399
            %2401 = vst.msk [vmem:[%s2400] sm:$0xff] %vm2395, 2147483647
            %2402 = xla_tuple %2398, %2401
            %v2403 = vrot.slane %v2382, 1
            %s2404 = vtos %v217
            %s2405 = sshrl.u32 %s2404, 3
            %p2406 = scmp.lt.s32.totalorder %s2404, 0
            %s2407 = ssub.s32 0, %s2404
            %s2408 = scalar_select %p2406, %s2407, %s2404
            %s2409 = sand.u32 %s2408, 7
            %s2410 = ssub.s32 0, %s2409
            %s2411 = scalar_select %p2406, %s2410, %s2409
            %v2412 = vlaneseq
            %s2413 = smul.u32 %s2411, 128
            %v2414 = vstv %s2413
            %v2415 = vadd.s32 %v2414, 104
            %vm2416 = vcmp.eq.s32.totalorder %v2412, %v2415
            %s2417 = smul.addr %s2405, 8
            %s2418 = scalar_lea.vmem [#allocation15], %s2417
            %2419 = vst.msk [vmem:[%s2418] sm:$0xff] %vm2416, 2147483648
            %s2420 = smul.addr %s2405, 8
            %s2421 = scalar_lea.vmem [#allocation16], %s2420
            %2422 = vst.msk [vmem:[%s2421] sm:$0xff] %vm2416, 2147483647
            %2423 = xla_tuple %2419, %2422
            %v2424 = vrot.slane %v217, 1
            %s2425 = vtos %v2424
            %s2426 = sshrl.u32 %s2425, 3
            %p2427 = scmp.lt.s32.totalorder %s2425, 0
            %s2428 = ssub.s32 0, %s2425
            %s2429 = scalar_select %p2427, %s2428, %s2425
            %s2430 = sand.u32 %s2429, 7
            %s2431 = ssub.s32 0, %s2430
            %s2432 = scalar_select %p2427, %s2431, %s2430
            %v2433 = vlaneseq
            %s2434 = smul.u32 %s2432, 128
            %v2435 = vstv %s2434
            %v2436 = vadd.s32 %v2435, 105
            %vm2437 = vcmp.eq.s32.totalorder %v2433, %v2436
            %s2438 = smul.addr %s2426, 8
            %s2439 = scalar_lea.vmem [#allocation15], %s2438
            %2440 = vst.msk [vmem:[%s2439] sm:$0xff] %vm2437, 2147483648
            %s2441 = smul.addr %s2426, 8
            %s2442 = scalar_lea.vmem [#allocation16], %s2441
            %2443 = vst.msk [vmem:[%s2442] sm:$0xff] %vm2437, 2147483647
            %2444 = xla_tuple %2440, %2443
            %v2445 = vrot.slane %v2424, 1
            %s2446 = vtos %v2445
            %s2447 = sshrl.u32 %s2446, 3
            %p2448 = scmp.lt.s32.totalorder %s2446, 0
            %s2449 = ssub.s32 0, %s2446
            %s2450 = scalar_select %p2448, %s2449, %s2446
            %s2451 = sand.u32 %s2450, 7
            %s2452 = ssub.s32 0, %s2451
            %s2453 = scalar_select %p2448, %s2452, %s2451
            %v2454 = vlaneseq
            %s2455 = smul.u32 %s2453, 128
            %v2456 = vstv %s2455
            %v2457 = vadd.s32 %v2456, 106
            %vm2458 = vcmp.eq.s32.totalorder %v2454, %v2457
            %s2459 = smul.addr %s2447, 8
            %s2460 = scalar_lea.vmem [#allocation15], %s2459
            %2461 = vst.msk [vmem:[%s2460] sm:$0xff] %vm2458, 2147483648
            %s2462 = smul.addr %s2447, 8
            %s2463 = scalar_lea.vmem [#allocation16], %s2462
            %2464 = vst.msk [vmem:[%s2463] sm:$0xff] %vm2458, 2147483647
            %2465 = xla_tuple %2461, %2464
            %v2466 = vrot.slane %v2445, 1
            %s2467 = vtos %v2466
            %s2468 = sshrl.u32 %s2467, 3
            %p2469 = scmp.lt.s32.totalorder %s2467, 0
            %s2470 = ssub.s32 0, %s2467
            %s2471 = scalar_select %p2469, %s2470, %s2467
            %s2472 = sand.u32 %s2471, 7
            %s2473 = ssub.s32 0, %s2472
            %s2474 = scalar_select %p2469, %s2473, %s2472
            %v2475 = vlaneseq
            %s2476 = smul.u32 %s2474, 128
            %v2477 = vstv %s2476
            %v2478 = vadd.s32 %v2477, 107
            %vm2479 = vcmp.eq.s32.totalorder %v2475, %v2478
            %s2480 = smul.addr %s2468, 8
            %s2481 = scalar_lea.vmem [#allocation15], %s2480
            %2482 = vst.msk [vmem:[%s2481] sm:$0xff] %vm2479, 2147483648
            %s2483 = smul.addr %s2468, 8
            %s2484 = scalar_lea.vmem [#allocation16], %s2483
            %2485 = vst.msk [vmem:[%s2484] sm:$0xff] %vm2479, 2147483647
            %2486 = xla_tuple %2482, %2485
            %v2487 = vrot.slane %v2466, 1
            %s2488 = vtos %v2487
            %s2489 = sshrl.u32 %s2488, 3
            %p2490 = scmp.lt.s32.totalorder %s2488, 0
            %s2491 = ssub.s32 0, %s2488
            %s2492 = scalar_select %p2490, %s2491, %s2488
            %s2493 = sand.u32 %s2492, 7
            %s2494 = ssub.s32 0, %s2493
            %s2495 = scalar_select %p2490, %s2494, %s2493
            %v2496 = vlaneseq
            %s2497 = smul.u32 %s2495, 128
            %v2498 = vstv %s2497
            %v2499 = vadd.s32 %v2498, 108
            %vm2500 = vcmp.eq.s32.totalorder %v2496, %v2499
            %s2501 = smul.addr %s2489, 8
            %s2502 = scalar_lea.vmem [#allocation15], %s2501
            %2503 = vst.msk [vmem:[%s2502] sm:$0xff] %vm2500, 2147483648
            %s2504 = smul.addr %s2489, 8
            %s2505 = scalar_lea.vmem [#allocation16], %s2504
            %2506 = vst.msk [vmem:[%s2505] sm:$0xff] %vm2500, 2147483647
            %2507 = xla_tuple %2503, %2506
            %v2508 = vrot.slane %v2487, 1
            %s2509 = vtos %v2508
            %s2510 = sshrl.u32 %s2509, 3
            %p2511 = scmp.lt.s32.totalorder %s2509, 0
            %s2512 = ssub.s32 0, %s2509
            %s2513 = scalar_select %p2511, %s2512, %s2509
            %s2514 = sand.u32 %s2513, 7
            %s2515 = ssub.s32 0, %s2514
            %s2516 = scalar_select %p2511, %s2515, %s2514
            %v2517 = vlaneseq
            %s2518 = smul.u32 %s2516, 128
            %v2519 = vstv %s2518
            %v2520 = vadd.s32 %v2519, 109
            %vm2521 = vcmp.eq.s32.totalorder %v2517, %v2520
            %s2522 = smul.addr %s2510, 8
            %s2523 = scalar_lea.vmem [#allocation15], %s2522
            %2524 = vst.msk [vmem:[%s2523] sm:$0xff] %vm2521, 2147483648
            %s2525 = smul.addr %s2510, 8
            %s2526 = scalar_lea.vmem [#allocation16], %s2525
            %2527 = vst.msk [vmem:[%s2526] sm:$0xff] %vm2521, 2147483647
            %2528 = xla_tuple %2524, %2527
            %v2529 = vrot.slane %v2508, 1
            %s2530 = vtos %v2529
            %s2531 = sshrl.u32 %s2530, 3
            %p2532 = scmp.lt.s32.totalorder %s2530, 0
            %s2533 = ssub.s32 0, %s2530
            %s2534 = scalar_select %p2532, %s2533, %s2530
            %s2535 = sand.u32 %s2534, 7
            %s2536 = ssub.s32 0, %s2535
            %s2537 = scalar_select %p2532, %s2536, %s2535
            %v2538 = vlaneseq
            %s2539 = smul.u32 %s2537, 128
            %v2540 = vstv %s2539
            %v2541 = vadd.s32 %v2540, 110
            %vm2542 = vcmp.eq.s32.totalorder %v2538, %v2541
            %s2543 = smul.addr %s2531, 8
            %s2544 = scalar_lea.vmem [#allocation15], %s2543
            %2545 = vst.msk [vmem:[%s2544] sm:$0xff] %vm2542, 2147483648
            %s2546 = smul.addr %s2531, 8
            %s2547 = scalar_lea.vmem [#allocation16], %s2546
            %2548 = vst.msk [vmem:[%s2547] sm:$0xff] %vm2542, 2147483647
            %2549 = xla_tuple %2545, %2548
            %v2550 = vrot.slane %v2529, 1
            %s2551 = vtos %v2550
            %s2552 = sshrl.u32 %s2551, 3
            %p2553 = scmp.lt.s32.totalorder %s2551, 0
            %s2554 = ssub.s32 0, %s2551
            %s2555 = scalar_select %p2553, %s2554, %s2551
            %s2556 = sand.u32 %s2555, 7
            %s2557 = ssub.s32 0, %s2556
            %s2558 = scalar_select %p2553, %s2557, %s2556
            %v2559 = vlaneseq
            %s2560 = smul.u32 %s2558, 128
            %v2561 = vstv %s2560
            %v2562 = vadd.s32 %v2561, 111
            %vm2563 = vcmp.eq.s32.totalorder %v2559, %v2562
            %s2564 = smul.addr %s2552, 8
            %s2565 = scalar_lea.vmem [#allocation15], %s2564
            %2566 = vst.msk [vmem:[%s2565] sm:$0xff] %vm2563, 2147483648
            %s2567 = smul.addr %s2552, 8
            %s2568 = scalar_lea.vmem [#allocation16], %s2567
            %2569 = vst.msk [vmem:[%s2568] sm:$0xff] %vm2563, 2147483647
            %2570 = xla_tuple %2566, %2569
            %v2571 = vrot.slane %v2550, 1
            %s2572 = vtos %v218
            %s2573 = sshrl.u32 %s2572, 3
            %p2574 = scmp.lt.s32.totalorder %s2572, 0
            %s2575 = ssub.s32 0, %s2572
            %s2576 = scalar_select %p2574, %s2575, %s2572
            %s2577 = sand.u32 %s2576, 7
            %s2578 = ssub.s32 0, %s2577
            %s2579 = scalar_select %p2574, %s2578, %s2577
            %v2580 = vlaneseq
            %s2581 = smul.u32 %s2579, 128
            %v2582 = vstv %s2581
            %v2583 = vadd.s32 %v2582, 112
            %vm2584 = vcmp.eq.s32.totalorder %v2580, %v2583
            %s2585 = smul.addr %s2573, 8
            %s2586 = scalar_lea.vmem [#allocation15], %s2585
            %2587 = vst.msk [vmem:[%s2586] sm:$0xff] %vm2584, 2147483648
            %s2588 = smul.addr %s2573, 8
            %s2589 = scalar_lea.vmem [#allocation16], %s2588
            %2590 = vst.msk [vmem:[%s2589] sm:$0xff] %vm2584, 2147483647
            %2591 = xla_tuple %2587, %2590
            %v2592 = vrot.slane %v218, 1
            %s2593 = vtos %v2592
            %s2594 = sshrl.u32 %s2593, 3
            %p2595 = scmp.lt.s32.totalorder %s2593, 0
            %s2596 = ssub.s32 0, %s2593
            %s2597 = scalar_select %p2595, %s2596, %s2593
            %s2598 = sand.u32 %s2597, 7
            %s2599 = ssub.s32 0, %s2598
            %s2600 = scalar_select %p2595, %s2599, %s2598
            %v2601 = vlaneseq
            %s2602 = smul.u32 %s2600, 128
            %v2603 = vstv %s2602
            %v2604 = vadd.s32 %v2603, 113
            %vm2605 = vcmp.eq.s32.totalorder %v2601, %v2604
            %s2606 = smul.addr %s2594, 8
            %s2607 = scalar_lea.vmem [#allocation15], %s2606
            %2608 = vst.msk [vmem:[%s2607] sm:$0xff] %vm2605, 2147483648
            %s2609 = smul.addr %s2594, 8
            %s2610 = scalar_lea.vmem [#allocation16], %s2609
            %2611 = vst.msk [vmem:[%s2610] sm:$0xff] %vm2605, 2147483647
            %2612 = xla_tuple %2608, %2611
            %v2613 = vrot.slane %v2592, 1
            %s2614 = vtos %v2613
            %s2615 = sshrl.u32 %s2614, 3
            %p2616 = scmp.lt.s32.totalorder %s2614, 0
            %s2617 = ssub.s32 0, %s2614
            %s2618 = scalar_select %p2616, %s2617, %s2614
            %s2619 = sand.u32 %s2618, 7
            %s2620 = ssub.s32 0, %s2619
            %s2621 = scalar_select %p2616, %s2620, %s2619
            %v2622 = vlaneseq
            %s2623 = smul.u32 %s2621, 128
            %v2624 = vstv %s2623
            %v2625 = vadd.s32 %v2624, 114
            %vm2626 = vcmp.eq.s32.totalorder %v2622, %v2625
            %s2627 = smul.addr %s2615, 8
            %s2628 = scalar_lea.vmem [#allocation15], %s2627
            %2629 = vst.msk [vmem:[%s2628] sm:$0xff] %vm2626, 2147483648
            %s2630 = smul.addr %s2615, 8
            %s2631 = scalar_lea.vmem [#allocation16], %s2630
            %2632 = vst.msk [vmem:[%s2631] sm:$0xff] %vm2626, 2147483647
            %2633 = xla_tuple %2629, %2632
            %v2634 = vrot.slane %v2613, 1
            %s2635 = vtos %v2634
            %s2636 = sshrl.u32 %s2635, 3
            %p2637 = scmp.lt.s32.totalorder %s2635, 0
            %s2638 = ssub.s32 0, %s2635
            %s2639 = scalar_select %p2637, %s2638, %s2635
            %s2640 = sand.u32 %s2639, 7
            %s2641 = ssub.s32 0, %s2640
            %s2642 = scalar_select %p2637, %s2641, %s2640
            %v2643 = vlaneseq
            %s2644 = smul.u32 %s2642, 128
            %v2645 = vstv %s2644
            %v2646 = vadd.s32 %v2645, 115
            %vm2647 = vcmp.eq.s32.totalorder %v2643, %v2646
            %s2648 = smul.addr %s2636, 8
            %s2649 = scalar_lea.vmem [#allocation15], %s2648
            %2650 = vst.msk [vmem:[%s2649] sm:$0xff] %vm2647, 2147483648
            %s2651 = smul.addr %s2636, 8
            %s2652 = scalar_lea.vmem [#allocation16], %s2651
            %2653 = vst.msk [vmem:[%s2652] sm:$0xff] %vm2647, 2147483647
            %2654 = xla_tuple %2650, %2653
            %v2655 = vrot.slane %v2634, 1
            %s2656 = vtos %v2655
            %s2657 = sshrl.u32 %s2656, 3
            %p2658 = scmp.lt.s32.totalorder %s2656, 0
            %s2659 = ssub.s32 0, %s2656
            %s2660 = scalar_select %p2658, %s2659, %s2656
            %s2661 = sand.u32 %s2660, 7
            %s2662 = ssub.s32 0, %s2661
            %s2663 = scalar_select %p2658, %s2662, %s2661
            %v2664 = vlaneseq
            %s2665 = smul.u32 %s2663, 128
            %v2666 = vstv %s2665
            %v2667 = vadd.s32 %v2666, 116
            %vm2668 = vcmp.eq.s32.totalorder %v2664, %v2667
            %s2669 = smul.addr %s2657, 8
            %s2670 = scalar_lea.vmem [#allocation15], %s2669
            %2671 = vst.msk [vmem:[%s2670] sm:$0xff] %vm2668, 2147483648
            %s2672 = smul.addr %s2657, 8
            %s2673 = scalar_lea.vmem [#allocation16], %s2672
            %2674 = vst.msk [vmem:[%s2673] sm:$0xff] %vm2668, 2147483647
            %2675 = xla_tuple %2671, %2674
            %v2676 = vrot.slane %v2655, 1
            %s2677 = vtos %v2676
            %s2678 = sshrl.u32 %s2677, 3
            %p2679 = scmp.lt.s32.totalorder %s2677, 0
            %s2680 = ssub.s32 0, %s2677
            %s2681 = scalar_select %p2679, %s2680, %s2677
            %s2682 = sand.u32 %s2681, 7
            %s2683 = ssub.s32 0, %s2682
            %s2684 = scalar_select %p2679, %s2683, %s2682
            %v2685 = vlaneseq
            %s2686 = smul.u32 %s2684, 128
            %v2687 = vstv %s2686
            %v2688 = vadd.s32 %v2687, 117
            %vm2689 = vcmp.eq.s32.totalorder %v2685, %v2688
            %s2690 = smul.addr %s2678, 8
            %s2691 = scalar_lea.vmem [#allocation15], %s2690
            %2692 = vst.msk [vmem:[%s2691] sm:$0xff] %vm2689, 2147483648
            %s2693 = smul.addr %s2678, 8
            %s2694 = scalar_lea.vmem [#allocation16], %s2693
            %2695 = vst.msk [vmem:[%s2694] sm:$0xff] %vm2689, 2147483647
            %2696 = xla_tuple %2692, %2695
            %v2697 = vrot.slane %v2676, 1
            %s2698 = vtos %v2697
            %s2699 = sshrl.u32 %s2698, 3
            %p2700 = scmp.lt.s32.totalorder %s2698, 0
            %s2701 = ssub.s32 0, %s2698
            %s2702 = scalar_select %p2700, %s2701, %s2698
            %s2703 = sand.u32 %s2702, 7
            %s2704 = ssub.s32 0, %s2703
            %s2705 = scalar_select %p2700, %s2704, %s2703
            %v2706 = vlaneseq
            %s2707 = smul.u32 %s2705, 128
            %v2708 = vstv %s2707
            %v2709 = vadd.s32 %v2708, 118
            %vm2710 = vcmp.eq.s32.totalorder %v2706, %v2709
            %s2711 = smul.addr %s2699, 8
            %s2712 = scalar_lea.vmem [#allocation15], %s2711
            %2713 = vst.msk [vmem:[%s2712] sm:$0xff] %vm2710, 2147483648
            %s2714 = smul.addr %s2699, 8
            %s2715 = scalar_lea.vmem [#allocation16], %s2714
            %2716 = vst.msk [vmem:[%s2715] sm:$0xff] %vm2710, 2147483647
            %2717 = xla_tuple %2713, %2716
            %v2718 = vrot.slane %v2697, 1
            %s2719 = vtos %v2718
            %s2720 = sshrl.u32 %s2719, 3
            %p2721 = scmp.lt.s32.totalorder %s2719, 0
            %s2722 = ssub.s32 0, %s2719
            %s2723 = scalar_select %p2721, %s2722, %s2719
            %s2724 = sand.u32 %s2723, 7
            %s2725 = ssub.s32 0, %s2724
            %s2726 = scalar_select %p2721, %s2725, %s2724
            %v2727 = vlaneseq
            %s2728 = smul.u32 %s2726, 128
            %v2729 = vstv %s2728
            %v2730 = vadd.s32 %v2729, 119
            %vm2731 = vcmp.eq.s32.totalorder %v2727, %v2730
            %s2732 = smul.addr %s2720, 8
            %s2733 = scalar_lea.vmem [#allocation15], %s2732
            %2734 = vst.msk [vmem:[%s2733] sm:$0xff] %vm2731, 2147483648
            %s2735 = smul.addr %s2720, 8
            %s2736 = scalar_lea.vmem [#allocation16], %s2735
            %2737 = vst.msk [vmem:[%s2736] sm:$0xff] %vm2731, 2147483647
            %2738 = xla_tuple %2734, %2737
            %v2739 = vrot.slane %v2718, 1
            %s2740 = vtos %v219
            %s2741 = sshrl.u32 %s2740, 3
            %p2742 = scmp.lt.s32.totalorder %s2740, 0
            %s2743 = ssub.s32 0, %s2740
            %s2744 = scalar_select %p2742, %s2743, %s2740
            %s2745 = sand.u32 %s2744, 7
            %s2746 = ssub.s32 0, %s2745
            %s2747 = scalar_select %p2742, %s2746, %s2745
            %v2748 = vlaneseq
            %s2749 = smul.u32 %s2747, 128
            %v2750 = vstv %s2749
            %v2751 = vadd.s32 %v2750, 120
            %vm2752 = vcmp.eq.s32.totalorder %v2748, %v2751
            %s2753 = smul.addr %s2741, 8
            %s2754 = scalar_lea.vmem [#allocation15], %s2753
            %2755 = vst.msk [vmem:[%s2754] sm:$0xff] %vm2752, 2147483648
            %s2756 = smul.addr %s2741, 8
            %s2757 = scalar_lea.vmem [#allocation16], %s2756
            %2758 = vst.msk [vmem:[%s2757] sm:$0xff] %vm2752, 2147483647
            %2759 = xla_tuple %2755, %2758
            %v2760 = vrot.slane %v219, 1
            %s2761 = vtos %v2760
            %s2762 = sshrl.u32 %s2761, 3
            %p2763 = scmp.lt.s32.totalorder %s2761, 0
            %s2764 = ssub.s32 0, %s2761
            %s2765 = scalar_select %p2763, %s2764, %s2761
            %s2766 = sand.u32 %s2765, 7
            %s2767 = ssub.s32 0, %s2766
            %s2768 = scalar_select %p2763, %s2767, %s2766
            %v2769 = vlaneseq
            %s2770 = smul.u32 %s2768, 128
            %v2771 = vstv %s2770
            %v2772 = vadd.s32 %v2771, 121
            %vm2773 = vcmp.eq.s32.totalorder %v2769, %v2772
            %s2774 = smul.addr %s2762, 8
            %s2775 = scalar_lea.vmem [#allocation15], %s2774
            %2776 = vst.msk [vmem:[%s2775] sm:$0xff] %vm2773, 2147483648
            %s2777 = smul.addr %s2762, 8
            %s2778 = scalar_lea.vmem [#allocation16], %s2777
            %2779 = vst.msk [vmem:[%s2778] sm:$0xff] %vm2773, 2147483647
            %2780 = xla_tuple %2776, %2779
            %v2781 = vrot.slane %v2760, 1
            %s2782 = vtos %v2781
            %s2783 = sshrl.u32 %s2782, 3
            %p2784 = scmp.lt.s32.totalorder %s2782, 0
            %s2785 = ssub.s32 0, %s2782
            %s2786 = scalar_select %p2784, %s2785, %s2782
            %s2787 = sand.u32 %s2786, 7
            %s2788 = ssub.s32 0, %s2787
            %s2789 = scalar_select %p2784, %s2788, %s2787
            %v2790 = vlaneseq
            %s2791 = smul.u32 %s2789, 128
            %v2792 = vstv %s2791
            %v2793 = vadd.s32 %v2792, 122
            %vm2794 = vcmp.eq.s32.totalorder %v2790, %v2793
            %s2795 = smul.addr %s2783, 8
            %s2796 = scalar_lea.vmem [#allocation15], %s2795
            %2797 = vst.msk [vmem:[%s2796] sm:$0xff] %vm2794, 2147483648
            %s2798 = smul.addr %s2783, 8
            %s2799 = scalar_lea.vmem [#allocation16], %s2798
            %2800 = vst.msk [vmem:[%s2799] sm:$0xff] %vm2794, 2147483647
            %2801 = xla_tuple %2797, %2800
            %v2802 = vrot.slane %v2781, 1
            %s2803 = vtos %v2802
            %s2804 = sshrl.u32 %s2803, 3
            %p2805 = scmp.lt.s32.totalorder %s2803, 0
            %s2806 = ssub.s32 0, %s2803
            %s2807 = scalar_select %p2805, %s2806, %s2803
            %s2808 = sand.u32 %s2807, 7
            %s2809 = ssub.s32 0, %s2808
            %s2810 = scalar_select %p2805, %s2809, %s2808
            %v2811 = vlaneseq
            %s2812 = smul.u32 %s2810, 128
            %v2813 = vstv %s2812
            %v2814 = vadd.s32 %v2813, 123
            %vm2815 = vcmp.eq.s32.totalorder %v2811, %v2814
            %s2816 = smul.addr %s2804, 8
            %s2817 = scalar_lea.vmem [#allocation15], %s2816
            %2818 = vst.msk [vmem:[%s2817] sm:$0xff] %vm2815, 2147483648
            %s2819 = smul.addr %s2804, 8
            %s2820 = scalar_lea.vmem [#allocation16], %s2819
            %2821 = vst.msk [vmem:[%s2820] sm:$0xff] %vm2815, 2147483647
            %2822 = xla_tuple %2818, %2821
            %v2823 = vrot.slane %v2802, 1
            %s2824 = vtos %v2823
            %s2825 = sshrl.u32 %s2824, 3
            %p2826 = scmp.lt.s32.totalorder %s2824, 0
            %s2827 = ssub.s32 0, %s2824
            %s2828 = scalar_select %p2826, %s2827, %s2824
            %s2829 = sand.u32 %s2828, 7
            %s2830 = ssub.s32 0, %s2829
            %s2831 = scalar_select %p2826, %s2830, %s2829
            %v2832 = vlaneseq
            %s2833 = smul.u32 %s2831, 128
            %v2834 = vstv %s2833
            %v2835 = vadd.s32 %v2834, 124
            %vm2836 = vcmp.eq.s32.totalorder %v2832, %v2835
            %s2837 = smul.addr %s2825, 8
            %s2838 = scalar_lea.vmem [#allocation15], %s2837
            %2839 = vst.msk [vmem:[%s2838] sm:$0xff] %vm2836, 2147483648
            %s2840 = smul.addr %s2825, 8
            %s2841 = scalar_lea.vmem [#allocation16], %s2840
            %2842 = vst.msk [vmem:[%s2841] sm:$0xff] %vm2836, 2147483647
            %2843 = xla_tuple %2839, %2842
            %v2844 = vrot.slane %v2823, 1
            %s2845 = vtos %v2844
            %s2846 = sshrl.u32 %s2845, 3
            %p2847 = scmp.lt.s32.totalorder %s2845, 0
            %s2848 = ssub.s32 0, %s2845
            %s2849 = scalar_select %p2847, %s2848, %s2845
            %s2850 = sand.u32 %s2849, 7
            %s2851 = ssub.s32 0, %s2850
            %s2852 = scalar_select %p2847, %s2851, %s2850
            %v2853 = vlaneseq
            %s2854 = smul.u32 %s2852, 128
            %v2855 = vstv %s2854
            %v2856 = vadd.s32 %v2855, 125
            %vm2857 = vcmp.eq.s32.totalorder %v2853, %v2856
            %s2858 = smul.addr %s2846, 8
            %s2859 = scalar_lea.vmem [#allocation15], %s2858
            %2860 = vst.msk [vmem:[%s2859] sm:$0xff] %vm2857, 2147483648
            %s2861 = smul.addr %s2846, 8
            %s2862 = scalar_lea.vmem [#allocation16], %s2861
            %2863 = vst.msk [vmem:[%s2862] sm:$0xff] %vm2857, 2147483647
            %2864 = xla_tuple %2860, %2863
            %v2865 = vrot.slane %v2844, 1
            %s2866 = vtos %v2865
            %s2867 = sshrl.u32 %s2866, 3
            %p2868 = scmp.lt.s32.totalorder %s2866, 0
            %s2869 = ssub.s32 0, %s2866
            %s2870 = scalar_select %p2868, %s2869, %s2866
            %s2871 = sand.u32 %s2870, 7
            %s2872 = ssub.s32 0, %s2871
            %s2873 = scalar_select %p2868, %s2872, %s2871
            %v2874 = vlaneseq
            %s2875 = smul.u32 %s2873, 128
            %v2876 = vstv %s2875
            %v2877 = vadd.s32 %v2876, 126
            %vm2878 = vcmp.eq.s32.totalorder %v2874, %v2877
            %s2879 = smul.addr %s2867, 8
            %s2880 = scalar_lea.vmem [#allocation15], %s2879
            %2881 = vst.msk [vmem:[%s2880] sm:$0xff] %vm2878, 2147483648
            %s2882 = smul.addr %s2867, 8
            %s2883 = scalar_lea.vmem [#allocation16], %s2882
            %2884 = vst.msk [vmem:[%s2883] sm:$0xff] %vm2878, 2147483647
            %2885 = xla_tuple %2881, %2884
            %v2886 = vrot.slane %v2865, 1
            %s2887 = vtos %v2886
            %s2888 = sshrl.u32 %s2887, 3
            %p2889 = scmp.lt.s32.totalorder %s2887, 0
            %s2890 = ssub.s32 0, %s2887
            %s2891 = scalar_select %p2889, %s2890, %s2887
            %s2892 = sand.u32 %s2891, 7
            %s2893 = ssub.s32 0, %s2892
            %s2894 = scalar_select %p2889, %s2893, %s2892
            %v2895 = vlaneseq
            %s2896 = smul.u32 %s2894, 128
            %v2897 = vstv %s2896
            %v2898 = vadd.s32 %v2897, 127
            %vm2899 = vcmp.eq.s32.totalorder %v2895, %v2898
            %s2900 = smul.addr %s2888, 8
            %s2901 = scalar_lea.vmem [#allocation15], %s2900
            %2902 = vst.msk [vmem:[%s2901] sm:$0xff] %vm2899, 2147483648
            %s2903 = smul.addr %s2888, 8
            %s2904 = scalar_lea.vmem [#allocation16], %s2903
            %2905 = vst.msk [vmem:[%s2904] sm:$0xff] %vm2899, 2147483647
            %2906 = xla_tuple %2902, %2905
            %v2907 = vrot.slane %v2886, 1
          $region56: #{custom-call} parent=13 // loop_footer
            %s102 = sadd.s32 1, %s98
          $region57: #{custom-call} parent=13 // loop_footer_branch
            %97 = sbr.rel target = $region53
          $region58: #{custom-call} parent=13 // loop_exit
            _
          %s2908 = scalar_lea.vmem [#allocation12], 7
          %v2909 = vld [vmem:[%s2908] ss:$-1 sm:$0xff]
          %s2910 = scalar_lea.vmem [#allocation12], 7
          %v2911 = vld [vmem:[%s2910] ss:$-1 sm:$0xff]
          %2912 = vst [vmem:[#allocation12] sm:$0xff] %v2911
          %2913 = vst [vmem:[#allocation12] sm:$0xff] %v2909
          %s2914 = scalar_lea.vmem [#allocation14], 7
          %v2915 = vld [vmem:[%s2914] ss:$-1 sm:$0xff]
          %s2916 = scalar_lea.vmem [#allocation14], 7
          %v2917 = vld [vmem:[%s2916] ss:$-1 sm:$0xff]
          %2918 = vst [vmem:[#allocation14] sm:$0xff] %v2917
          %2919 = vst [vmem:[#allocation14] sm:$0xff] %v2915
          %2920 = xla_tuple %2913, %2919
          %v2921 = vld [vmem:[#allocation11] sm:$0xff]
          %v2922 = vld [vmem:[#allocation13] sm:$0xff]
          %2923 = xla_tuple %v2921, %v2922
          %v2924 = vld [vmem:[#allocation12] sm:$0xff]
          %v2925 = vld [vmem:[#allocation14] sm:$0xff]
          %2926 = xla_tuple %v2924, %v2925
          %vm2927 = vcmp.gt.s32.totalorder %v2921, %v2924
          %vm2928 = vcmp.eq.s32.totalorder %v2921, %v2924
          %vm2929 = vcmp.lt.s32.totalorder %v2922, %v2925
          %vm2930 = vmand %vm2928, %vm2929
          %vm2931 = vmor %vm2927, %vm2930
          %v2932 = vsel %vm2931, %v2921, %v2924
          %2933 = vst [vmem:[#allocation11] sm:$0xff] %v2932
          %v2934 = vsel %vm2931, %v2924, %v2921
          %2935 = vst [vmem:[#allocation12] sm:$0xff] %v2934
          %v2936 = vsel %vm2931, %v2922, %v2925
          %2937 = vst [vmem:[#allocation13] sm:$0xff] %v2936
          %v2938 = vsel %vm2931, %v2925, %v2922
          %2939 = vst [vmem:[#allocation14] sm:$0xff] %v2938
          %2940 = xla_tuple %2935, %2939
          %2941 = xla_tuple [#allocation11], [#allocation13]
          %v2942 = vld [vmem:[#allocation11] sm:$0xff]
          %v2943 = vld [vmem:[#allocation13] sm:$0xff]
          %2944 = xla_tuple %v2942, %v2943
          %v2946 = vunpack.c.l.s4 839939668
          %v2947 = vunpack.c.0.s8 %v2946
          %v2948 = vlaneseq
          %v2949 = vshrl.u32 %v2948, 7
          %v2950 = vsub.s32 %v2947, %v2949
          %v2951 = vrot.slane %v2942, %v2950
          %v2953 = vunpack.c.l.s4 839939668
          %v2954 = vunpack.c.0.s8 %v2953
          %v2955 = vlaneseq
          %v2956 = vshrl.u32 %v2955, 7
          %v2957 = vsub.s32 %v2954, %v2956
          %v2958 = vrot.slane %v2943, %v2957
          %2959 = xla_tuple %v2951, %v2958
          %vm2960 = vcmp.gt.s32.totalorder %v2942, %v2951
          %vm2961 = vcmp.eq.s32.totalorder %v2942, %v2951
          %vm2962 = vcmp.lt.s32.totalorder %v2943, %v2958
          %vm2963 = vmand %vm2961, %vm2962
          %vm2964 = vmor %vm2960, %vm2963
          %v2965 = vlaneseq
          %v2966 = vshrl.u32 %v2965, 7
          %v2967 = vand.u32 %v2966, 4
          %vm2968 = vcmp.ne.s32.totalorder %v2967, 0
          %vm2969 = vmxor %vm2964, %vm2968
          %v2970 = vsel %vm2969, %v2942, %v2951
          %v2971 = vsel %vm2969, %v2943, %v2958
          %2972 = xla_tuple %v2970, %v2971
          %v2974 = vunpack.c.l.s4 1417023538
          %v2975 = vunpack.c.0.s8 %v2974
          %v2976 = vlaneseq
          %v2977 = vshrl.u32 %v2976, 7
          %v2978 = vsub.s32 %v2975, %v2977
          %v2979 = vrot.slane %v2970, %v2978
          %v2981 = vunpack.c.l.s4 1417023538
          %v2982 = vunpack.c.0.s8 %v2981
          %v2983 = vlaneseq
          %v2984 = vshrl.u32 %v2983, 7
          %v2985 = vsub.s32 %v2982, %v2984
          %v2986 = vrot.slane %v2971, %v2985
          %2987 = xla_tuple %v2979, %v2986
          %vm2988 = vcmp.gt.s32.totalorder %v2970, %v2979
          %vm2989 = vcmp.eq.s32.totalorder %v2970, %v2979
          %vm2990 = vcmp.lt.s32.totalorder %v2971, %v2986
          %vm2991 = vmand %vm2989, %vm2990
          %vm2992 = vmor %vm2988, %vm2991
          %v2993 = vlaneseq
          %v2994 = vshrl.u32 %v2993, 7
          %v2995 = vand.u32 %v2994, 2
          %vm2996 = vcmp.ne.s32.totalorder %v2995, 0
          %vm2997 = vmxor %vm2992, %vm2996
          %v2998 = vsel %vm2997, %v2970, %v2979
          %v2999 = vsel %vm2997, %v2971, %v2986
          %3000 = xla_tuple %v2998, %v2999
          %v3002 = vunpack.c.l.s4 1732584193
          %v3003 = vunpack.c.0.s8 %v3002
          %v3004 = vlaneseq
          %v3005 = vshrl.u32 %v3004, 7
          %v3006 = vsub.s32 %v3003, %v3005
          %v3007 = vrot.slane %v2998, %v3006
          %v3009 = vunpack.c.l.s4 1732584193
          %v3010 = vunpack.c.0.s8 %v3009
          %v3011 = vlaneseq
          %v3012 = vshrl.u32 %v3011, 7
          %v3013 = vsub.s32 %v3010, %v3012
          %v3014 = vrot.slane %v2999, %v3013
          %3015 = xla_tuple %v3007, %v3014
          %vm3016 = vcmp.gt.s32.totalorder %v2998, %v3007
          %vm3017 = vcmp.eq.s32.totalorder %v2998, %v3007
          %vm3018 = vcmp.lt.s32.totalorder %v2999, %v3014
          %vm3019 = vmand %vm3017, %vm3018
          %vm3020 = vmor %vm3016, %vm3019
          %v3021 = vlaneseq
          %v3022 = vshrl.u32 %v3021, 7
          %v3023 = vand.u32 %v3022, 1
          %vm3024 = vcmp.ne.s32.totalorder %v3023, 0
          %vm3025 = vmxor %vm3020, %vm3024
          %v3026 = vsel %vm3025, %v2998, %v3007
          %v3027 = vsel %vm3025, %v2999, %v3014
          %3028 = xla_tuple %v3026, %v3027
          %3029 = vst [vmem:[#allocation11] sm:$0xff] %v3026
          %3030 = vst [vmem:[#allocation13] sm:$0xff] %v3027
          %3031 = xla_tuple %3029, %3030
          %v3032 = vld [vmem:[#allocation11] sm:$0xff]
          %v3033 = vld [vmem:[#allocation13] sm:$0xff]
          %3034 = xla_tuple %v3032, %v3033
          %v3036 = vunpack.c.l.s4 839939668
          %v3037 = vunpack.c.0.s8 %v3036
          %v3038 = vlaneseq
          %v3039 = vshrl.u32 %v3038, 7
          %v3040 = vsub.s32 %v3037, %v3039
          %v3041 = vrot.slane %v3032, %v3040
          %v3043 = vunpack.c.l.s4 839939668
          %v3044 = vunpack.c.0.s8 %v3043
          %v3045 = vlaneseq
          %v3046 = vshrl.u32 %v3045, 7
          %v3047 = vsub.s32 %v3044, %v3046
          %v3048 = vrot.slane %v3033, %v3047
          %3049 = xla_tuple %v3041, %v3048
          %vm3050 = vcmp.gt.s32.totalorder %v3032, %v3041
          %vm3051 = vcmp.eq.s32.totalorder %v3032, %v3041
          %vm3052 = vcmp.lt.s32.totalorder %v3033, %v3048
          %vm3053 = vmand %vm3051, %vm3052
          %vm3054 = vmor %vm3050, %vm3053
          %v3055 = vlaneseq
          %v3056 = vshrl.u32 %v3055, 7
          %v3057 = vand.u32 %v3056, 4
          %vm3058 = vcmp.ne.s32.totalorder %v3057, 0
          %vm3059 = vmxor %vm3054, %vm3058
          %v3060 = vsel %vm3059, %v3032, %v3041
          %v3061 = vsel %vm3059, %v3033, %v3048
          %3062 = xla_tuple %v3060, %v3061
          %v3064 = vunpack.c.l.s4 1417023538
          %v3065 = vunpack.c.0.s8 %v3064
          %v3066 = vlaneseq
          %v3067 = vshrl.u32 %v3066, 7
          %v3068 = vsub.s32 %v3065, %v3067
          %v3069 = vrot.slane %v3060, %v3068
          %v3071 = vunpack.c.l.s4 1417023538
          %v3072 = vunpack.c.0.s8 %v3071
          %v3073 = vlaneseq
          %v3074 = vshrl.u32 %v3073, 7
          %v3075 = vsub.s32 %v3072, %v3074
          %v3076 = vrot.slane %v3061, %v3075
          %3077 = xla_tuple %v3069, %v3076
          %vm3078 = vcmp.gt.s32.totalorder %v3060, %v3069
          %vm3079 = vcmp.eq.s32.totalorder %v3060, %v3069
          %vm3080 = vcmp.lt.s32.totalorder %v3061, %v3076
          %vm3081 = vmand %vm3079, %vm3080
          %vm3082 = vmor %vm3078, %vm3081
          %v3083 = vlaneseq
          %v3084 = vshrl.u32 %v3083, 7
          %v3085 = vand.u32 %v3084, 2
          %vm3086 = vcmp.ne.s32.totalorder %v3085, 0
          %vm3087 = vmxor %vm3082, %vm3086
          %v3088 = vsel %vm3087, %v3060, %v3069
          %v3089 = vsel %vm3087, %v3061, %v3076
          %3090 = xla_tuple %v3088, %v3089
          %v3092 = vunpack.c.l.s4 1732584193
          %v3093 = vunpack.c.0.s8 %v3092
          %v3094 = vlaneseq
          %v3095 = vshrl.u32 %v3094, 7
          %v3096 = vsub.s32 %v3093, %v3095
          %v3097 = vrot.slane %v3088, %v3096
          %v3099 = vunpack.c.l.s4 1732584193
          %v3100 = vunpack.c.0.s8 %v3099
          %v3101 = vlaneseq
          %v3102 = vshrl.u32 %v3101, 7
          %v3103 = vsub.s32 %v3100, %v3102
          %v3104 = vrot.slane %v3089, %v3103
          %3105 = xla_tuple %v3097, %v3104
          %vm3106 = vcmp.gt.s32.totalorder %v3088, %v3097
          %vm3107 = vcmp.eq.s32.totalorder %v3088, %v3097
          %vm3108 = vcmp.lt.s32.totalorder %v3089, %v3104
          %vm3109 = vmand %vm3107, %vm3108
          %vm3110 = vmor %vm3106, %vm3109
          %v3111 = vlaneseq
          %v3112 = vshrl.u32 %v3111, 7
          %v3113 = vand.u32 %v3112, 1
          %vm3114 = vcmp.ne.s32.totalorder %v3113, 0
          %vm3115 = vmxor %vm3110, %vm3114
          %v3116 = vsel %vm3115, %v3088, %v3097
          %v3117 = vsel %vm3115, %v3089, %v3104
          %3118 = xla_tuple %v3116, %v3117
          %3119 = vst [vmem:[#allocation11] sm:$0xff] %v3116
          %3120 = vst [vmem:[#allocation13] sm:$0xff] %v3117
          %3121 = xla_tuple %3119, %3120
          %3122 = xla_tuple [#allocation12], [#allocation14]
          %v3123 = vld [vmem:[#allocation12] sm:$0xff]
          %v3124 = vld [vmem:[#allocation14] sm:$0xff]
          %3125 = xla_tuple %v3123, %v3124
          %v3127 = vunpack.c.l.s4 839939668
          %v3128 = vunpack.c.0.s8 %v3127
          %v3129 = vlaneseq
          %v3130 = vshrl.u32 %v3129, 7
          %v3131 = vsub.s32 %v3128, %v3130
          %v3132 = vrot.slane %v3123, %v3131
          %v3134 = vunpack.c.l.s4 839939668
          %v3135 = vunpack.c.0.s8 %v3134
          %v3136 = vlaneseq
          %v3137 = vshrl.u32 %v3136, 7
          %v3138 = vsub.s32 %v3135, %v3137
          %v3139 = vrot.slane %v3124, %v3138
          %3140 = xla_tuple %v3132, %v3139
          %vm3141 = vcmp.gt.s32.totalorder %v3123, %v3132
          %vm3142 = vcmp.eq.s32.totalorder %v3123, %v3132
          %vm3143 = vcmp.lt.s32.totalorder %v3124, %v3139
          %vm3144 = vmand %vm3142, %vm3143
          %vm3145 = vmor %vm3141, %vm3144
          %v3146 = vlaneseq
          %v3147 = vshrl.u32 %v3146, 7
          %v3148 = vand.u32 %v3147, 4
          %vm3149 = vcmp.ne.s32.totalorder %v3148, 0
          %vm3150 = vmxor %vm3145, %vm3149
          %v3151 = vsel %vm3150, %v3123, %v3132
          %v3152 = vsel %vm3150, %v3124, %v3139
          %3153 = xla_tuple %v3151, %v3152
          %v3155 = vunpack.c.l.s4 1417023538
          %v3156 = vunpack.c.0.s8 %v3155
          %v3157 = vlaneseq
          %v3158 = vshrl.u32 %v3157, 7
          %v3159 = vsub.s32 %v3156, %v3158
          %v3160 = vrot.slane %v3151, %v3159
          %v3162 = vunpack.c.l.s4 1417023538
          %v3163 = vunpack.c.0.s8 %v3162
          %v3164 = vlaneseq
          %v3165 = vshrl.u32 %v3164, 7
          %v3166 = vsub.s32 %v3163, %v3165
          %v3167 = vrot.slane %v3152, %v3166
          %3168 = xla_tuple %v3160, %v3167
          %vm3169 = vcmp.gt.s32.totalorder %v3151, %v3160
          %vm3170 = vcmp.eq.s32.totalorder %v3151, %v3160
          %vm3171 = vcmp.lt.s32.totalorder %v3152, %v3167
          %vm3172 = vmand %vm3170, %vm3171
          %vm3173 = vmor %vm3169, %vm3172
          %v3174 = vlaneseq
          %v3175 = vshrl.u32 %v3174, 7
          %v3176 = vand.u32 %v3175, 2
          %vm3177 = vcmp.ne.s32.totalorder %v3176, 0
          %vm3178 = vmxor %vm3173, %vm3177
          %v3179 = vsel %vm3178, %v3151, %v3160
          %v3180 = vsel %vm3178, %v3152, %v3167
          %3181 = xla_tuple %v3179, %v3180
          %v3183 = vunpack.c.l.s4 1732584193
          %v3184 = vunpack.c.0.s8 %v3183
          %v3185 = vlaneseq
          %v3186 = vshrl.u32 %v3185, 7
          %v3187 = vsub.s32 %v3184, %v3186
          %v3188 = vrot.slane %v3179, %v3187
          %v3190 = vunpack.c.l.s4 1732584193
          %v3191 = vunpack.c.0.s8 %v3190
          %v3192 = vlaneseq
          %v3193 = vshrl.u32 %v3192, 7
          %v3194 = vsub.s32 %v3191, %v3193
          %v3195 = vrot.slane %v3180, %v3194
          %3196 = xla_tuple %v3188, %v3195
          %vm3197 = vcmp.gt.s32.totalorder %v3179, %v3188
          %vm3198 = vcmp.eq.s32.totalorder %v3179, %v3188
          %vm3199 = vcmp.lt.s32.totalorder %v3180, %v3195
          %vm3200 = vmand %vm3198, %vm3199
          %vm3201 = vmor %vm3197, %vm3200
          %v3202 = vlaneseq
          %v3203 = vshrl.u32 %v3202, 7
          %v3204 = vand.u32 %v3203, 1
          %vm3205 = vcmp.ne.s32.totalorder %v3204, 0
          %vm3206 = vmxor %vm3201, %vm3205
          %v3207 = vsel %vm3206, %v3179, %v3188
          %v3208 = vsel %vm3206, %v3180, %v3195
          %3209 = xla_tuple %v3207, %v3208
          %3210 = vst [vmem:[#allocation12] sm:$0xff] %v3207
          %3211 = vst [vmem:[#allocation14] sm:$0xff] %v3208
          %3212 = xla_tuple %3210, %3211
          %v3213 = vld [vmem:[#allocation12] sm:$0xff]
          %v3214 = vld [vmem:[#allocation14] sm:$0xff]
          %3215 = xla_tuple %v3213, %v3214
          %v3217 = vunpack.c.l.s4 839939668
          %v3218 = vunpack.c.0.s8 %v3217
          %v3219 = vlaneseq
          %v3220 = vshrl.u32 %v3219, 7
          %v3221 = vsub.s32 %v3218, %v3220
          %v3222 = vrot.slane %v3213, %v3221
          %v3224 = vunpack.c.l.s4 839939668
          %v3225 = vunpack.c.0.s8 %v3224
          %v3226 = vlaneseq
          %v3227 = vshrl.u32 %v3226, 7
          %v3228 = vsub.s32 %v3225, %v3227
          %v3229 = vrot.slane %v3214, %v3228
          %3230 = xla_tuple %v3222, %v3229
          %vm3231 = vcmp.gt.s32.totalorder %v3213, %v3222
          %vm3232 = vcmp.eq.s32.totalorder %v3213, %v3222
          %vm3233 = vcmp.lt.s32.totalorder %v3214, %v3229
          %vm3234 = vmand %vm3232, %vm3233
          %vm3235 = vmor %vm3231, %vm3234
          %v3236 = vlaneseq
          %v3237 = vshrl.u32 %v3236, 7
          %v3238 = vand.u32 %v3237, 4
          %vm3239 = vcmp.ne.s32.totalorder %v3238, 0
          %vm3240 = vmxor %vm3235, %vm3239
          %v3241 = vsel %vm3240, %v3213, %v3222
          %v3242 = vsel %vm3240, %v3214, %v3229
          %3243 = xla_tuple %v3241, %v3242
          %v3245 = vunpack.c.l.s4 1417023538
          %v3246 = vunpack.c.0.s8 %v3245
          %v3247 = vlaneseq
          %v3248 = vshrl.u32 %v3247, 7
          %v3249 = vsub.s32 %v3246, %v3248
          %v3250 = vrot.slane %v3241, %v3249
          %v3252 = vunpack.c.l.s4 1417023538
          %v3253 = vunpack.c.0.s8 %v3252
          %v3254 = vlaneseq
          %v3255 = vshrl.u32 %v3254, 7
          %v3256 = vsub.s32 %v3253, %v3255
          %v3257 = vrot.slane %v3242, %v3256
          %3258 = xla_tuple %v3250, %v3257
          %vm3259 = vcmp.gt.s32.totalorder %v3241, %v3250
          %vm3260 = vcmp.eq.s32.totalorder %v3241, %v3250
          %vm3261 = vcmp.lt.s32.totalorder %v3242, %v3257
          %vm3262 = vmand %vm3260, %vm3261
          %vm3263 = vmor %vm3259, %vm3262
          %v3264 = vlaneseq
          %v3265 = vshrl.u32 %v3264, 7
          %v3266 = vand.u32 %v3265, 2
          %vm3267 = vcmp.ne.s32.totalorder %v3266, 0
          %vm3268 = vmxor %vm3263, %vm3267
          %v3269 = vsel %vm3268, %v3241, %v3250
          %v3270 = vsel %vm3268, %v3242, %v3257
          %3271 = xla_tuple %v3269, %v3270
          %v3273 = vunpack.c.l.s4 1732584193
          %v3274 = vunpack.c.0.s8 %v3273
          %v3275 = vlaneseq
          %v3276 = vshrl.u32 %v3275, 7
          %v3277 = vsub.s32 %v3274, %v3276
          %v3278 = vrot.slane %v3269, %v3277
          %v3280 = vunpack.c.l.s4 1732584193
          %v3281 = vunpack.c.0.s8 %v3280
          %v3282 = vlaneseq
          %v3283 = vshrl.u32 %v3282, 7
          %v3284 = vsub.s32 %v3281, %v3283
          %v3285 = vrot.slane %v3270, %v3284
          %3286 = xla_tuple %v3278, %v3285
          %vm3287 = vcmp.gt.s32.totalorder %v3269, %v3278
          %vm3288 = vcmp.eq.s32.totalorder %v3269, %v3278
          %vm3289 = vcmp.lt.s32.totalorder %v3270, %v3285
          %vm3290 = vmand %vm3288, %vm3289
          %vm3291 = vmor %vm3287, %vm3290
          %v3292 = vlaneseq
          %v3293 = vshrl.u32 %v3292, 7
          %v3294 = vand.u32 %v3293, 1
          %vm3295 = vcmp.ne.s32.totalorder %v3294, 0
          %vm3296 = vmxor %vm3291, %vm3295
          %v3297 = vsel %vm3296, %v3269, %v3278
          %v3298 = vsel %vm3296, %v3270, %v3285
          %3299 = xla_tuple %v3297, %v3298
          %3300 = vst [vmem:[#allocation12] sm:$0xff] %v3297
          %3301 = vst [vmem:[#allocation14] sm:$0xff] %v3298
          %3302 = xla_tuple %3300, %3301
        %v3303 = vld [vmem:[#allocation11] sm:$0xff]
        %vm3304 = vcmp.lt.s32.totalorder %v3303, 0
        %v3305 = vsub.s32 2147483647, %v3303
        %v3306 = vsel %vm3304, %v3305, %v3303
        %3307 = vst [vmem:[#allocation11] sm:$0xff] %v3306
        %v3308 = vld [vmem:[#allocation11] sm:$0xff]
        %3309 = vst [vmem:[#allocation7] sm:$0xff] %v3308
        %v3310 = vld [vmem:[#allocation13] sm:$0xff]
        %3311 = vst [vmem:[#allocation9] sm:$0xff] %v3310
        %s3313 = sshll.u32 1, 1
        %s3314 = ssub.s32 %s3313, 1
        %v3316 = vld [vmem:[#allocation7] sm:%s3314]
        %s3317 = sshll.u32 1, 1
        %s3318 = ssub.s32 %s3317, 1
        %3319 = vst [vmem:[%s29] sm:%s3318] %v3316
        %s3321 = sshll.u32 1, 1
        %s3322 = ssub.s32 %s3321, 1
        %v3324 = vld [vmem:[#allocation9] sm:%s3322]
        %s3325 = sshll.u32 1, 1
        %s3326 = ssub.s32 %s3325, 1
        %3327 = vst [vmem:[%s32] sm:%s3326] %v3324
        %s3328 = sand.u32 %s6, 1
        %s3329 = sand.u32 %s6, 1
        %s3330 = scalar_lea.vmem [#allocation8], %s3329
        %s3331 = sand.u32 %s6, 1
        %s3332 = sand.u32 %s6, 1
        %s3333 = scalar_lea.vmem [#allocation10], %s3332
        %s3334 = smul.addr %s12, 2
        %s3335 = sadd.s32 %s13, %s3334
        %s3336 = scalar_lea.vmem %s1, %s3335
        // Predicated region
        $region59: #{custom-call} parent=11 // pred_check
          _
        $region60: #{custom-call} parent=11 // pred_check_branch
          %3338 = sbr.rel (0) target = $region62
        $region61: #{custom-call} parent=11 // pred_region
          // Predicated region
          $region63: #{custom-call} parent=61 // pred_check
            _
          $region64: #{custom-call} parent=61 // pred_check_branch
            %3340 = sbr.rel target = $region66
          $region65: #{custom-call} parent=61 // pred_region
            // Predicated region
            $region78: #{custom-call} parent=65 // pred_check
              _
            $region79: #{custom-call} parent=65 // pred_check_branch
              %3356 = sbr.rel (0) target = $region81
            $region80: #{custom-call} parent=65 // pred_region
              %s3358 = ssub.s32 2, 1
              loop: start=0, step=1, limit=1
              $region82: #{custom-call} parent=80 // loop_pre_header
                _
              $region83: #{custom-call} parent=80 // loop_header
                %s3360 = sphi 0, %s3364
                %p3361 = scmp.ge.s32.totalorder %s3360, 1
                %s3365 = sphi %s3330, %s3330
                %s3366 = sphi %s3336, %s3336
              $region84: #{custom-call} parent=80 // loop_header_branch
                %3363 = sbr.rel (%p3361) target = $region88
              $region85: #{custom-call} parent=80 // loop_body
                %v3367 = vld [vmem:[%s3365] sm:%s3358]
                %3368 = vst [vmem:[%s3366] sm:%s3358] %v3367
              $region86: #{custom-call} parent=80 // loop_footer
                %s3364 = sadd.s32 1, %s3360
              $region87: #{custom-call} parent=80 // loop_footer_branch
                %3359 = sbr.rel target = $region83
              $region88: #{custom-call} parent=80 // loop_exit
                _
            $region81: #{custom-call} parent=65 // pred_fallthru
              _
          $region66: #{custom-call} parent=61 // pred_fallthru
            _
          // Predicated region
          $region67: #{custom-call} parent=61 // pred_check
            _
          $region68: #{custom-call} parent=61 // pred_check_branch
            %3342 = sbr.rel (0) target = $region70
          $region69: #{custom-call} parent=61 // pred_region
            %s3344 = ssub.s32 2, 1
            loop: start=0, step=1, limit=1
            $region71: #{custom-call} parent=69 // loop_pre_header
              _
            $region72: #{custom-call} parent=69 // loop_header
              %s3346 = sphi 0, %s3350
              %p3347 = scmp.ge.s32.totalorder %s3346, 1
              %s3351 = sphi %s3330, %s3330
              %s3352 = sphi %s3336, %s3336
            $region73: #{custom-call} parent=69 // loop_header_branch
              %3349 = sbr.rel (%p3347) target = $region77
            $region74: #{custom-call} parent=69 // loop_body
              %v3353 = vld [vmem:[%s3351] sm:%s3344]
              %3354 = vst [vmem:[%s3352] sm:%s3344] %v3353
            $region75: #{custom-call} parent=69 // loop_footer
              %s3350 = sadd.s32 1, %s3346
            $region76: #{custom-call} parent=69 // loop_footer_branch
              %3345 = sbr.rel target = $region72
            $region77: #{custom-call} parent=69 // loop_exit
              _
          $region70: #{custom-call} parent=61 // pred_fallthru
            _
        $region62: #{custom-call} parent=11 // pred_fallthru
          _
        %3369 = vnop
        %s3370 = smul.addr %s12, 2
        %s3371 = sadd.s32 %s13, %s3370
        %s3372 = scalar_lea.vmem %s2, %s3371
        // Predicated region
        $region89: #{custom-call} parent=11 // pred_check
          _
        $region90: #{custom-call} parent=11 // pred_check_branch
          %3374 = sbr.rel (0) target = $region92
        $region91: #{custom-call} parent=11 // pred_region
          // Predicated region
          $region93: #{custom-call} parent=91 // pred_check
            _
          $region94: #{custom-call} parent=91 // pred_check_branch
            %3376 = sbr.rel target = $region96
          $region95: #{custom-call} parent=91 // pred_region
            // Predicated region
            $region108: #{custom-call} parent=95 // pred_check
              _
            $region109: #{custom-call} parent=95 // pred_check_branch
              %3392 = sbr.rel (0) target = $region111
            $region110: #{custom-call} parent=95 // pred_region
              %s3394 = ssub.s32 2, 1
              loop: start=0, step=1, limit=1
              $region112: #{custom-call} parent=110 // loop_pre_header
                _
              $region113: #{custom-call} parent=110 // loop_header
                %s3396 = sphi 0, %s3400
                %p3397 = scmp.ge.s32.totalorder %s3396, 1
                %s3401 = sphi %s3333, %s3333
                %s3402 = sphi %s3372, %s3372
              $region114: #{custom-call} parent=110 // loop_header_branch
                %3399 = sbr.rel (%p3397) target = $region118
              $region115: #{custom-call} parent=110 // loop_body
                %v3403 = vld [vmem:[%s3401] sm:%s3394]
                %3404 = vst [vmem:[%s3402] sm:%s3394] %v3403
              $region116: #{custom-call} parent=110 // loop_footer
                %s3400 = sadd.s32 1, %s3396
              $region117: #{custom-call} parent=110 // loop_footer_branch
                %3395 = sbr.rel target = $region113
              $region118: #{custom-call} parent=110 // loop_exit
                _
            $region111: #{custom-call} parent=95 // pred_fallthru
              _
          $region96: #{custom-call} parent=91 // pred_fallthru
            _
          // Predicated region
          $region97: #{custom-call} parent=91 // pred_check
            _
          $region98: #{custom-call} parent=91 // pred_check_branch
            %3378 = sbr.rel (0) target = $region100
          $region99: #{custom-call} parent=91 // pred_region
            %s3380 = ssub.s32 2, 1
            loop: start=0, step=1, limit=1
            $region101: #{custom-call} parent=99 // loop_pre_header
              _
            $region102: #{custom-call} parent=99 // loop_header
              %s3382 = sphi 0, %s3386
              %p3383 = scmp.ge.s32.totalorder %s3382, 1
              %s3387 = sphi %s3333, %s3333
              %s3388 = sphi %s3372, %s3372
            $region103: #{custom-call} parent=99 // loop_header_branch
              %3385 = sbr.rel (%p3383) target = $region107
            $region104: #{custom-call} parent=99 // loop_body
              %v3389 = vld [vmem:[%s3387] sm:%s3380]
              %3390 = vst [vmem:[%s3388] sm:%s3380] %v3389
            $region105: #{custom-call} parent=99 // loop_footer
              %s3386 = sadd.s32 1, %s3382
            $region106: #{custom-call} parent=99 // loop_footer_branch
              %3381 = sbr.rel target = $region102
            $region107: #{custom-call} parent=99 // loop_exit
              _
          $region100: #{custom-call} parent=91 // pred_fallthru
            _
        $region92: #{custom-call} parent=11 // pred_fallthru
          _
        %3405 = vnop
      $region12: #{custom-call} parent=5 // pred_fallthru
        _
      %p3406 = scmp.le.s32.totalorder 1, %s6
      // Predicated region
      $region119: #{custom-call} parent=5 // pred_check
        %p3407 = pneg %p3406
      $region120: #{custom-call} parent=5 // pred_check_branch
        %3409 = sbr.rel (%p3407) target = $region122
      $region121: #{custom-call} parent=5 // pred_region
        %s3410 = ssub.s32 %s6, 1
        %s3411 = sand.u32 %s11, 1
        %s3412 = sand.u32 %s11, 1
        %s3413 = scalar_lea.vmem [#allocation8], %s3412
        %s3414 = sand.u32 %s11, 1
        %s3415 = sand.u32 %s11, 1
        %s3416 = scalar_lea.vmem [#allocation10], %s3415
      $region122: #{custom-call} parent=5 // pred_fallthru
        _
    $region6: #{custom-call} parent=1 // loop_footer
      %s10 = sadd.s32 1, %s6
    $region7: #{custom-call} parent=1 // loop_footer_branch
      %5 = sbr.rel target = $region3
    $region8: #{custom-call} parent=1 // loop_exit
      _

// kernel: moe_layer_forward.1
$region0: #{moe_layer_forward.1}
  #allocation0 [shape = 'u32[]', space=smem, size = 0x4, offset = 0x4, fixed_abs, tag = 'smem constant byte address 0x4 - core index']
  #allocation1 [shape = 'u32[144,128]{1,0:T(1,128)}', space=vmem, size = 0x12000, scoped, tag = 'internal scratch']
  #allocation2 [shape = 'f32[128,384]{1,0:T(8,128)}', space=vmem, size = 0x30000, scoped, tag = 'scratch operand']
  %s0 = inlined_call_operand.vmem [shape: bf16[256,384], index: 0, kind: input, shape index: {}]
  %s1 = inlined_call_operand.vmem [shape: bf16[5,384,1024], index: 1, kind: input, shape index: {}]
  %s2 = inlined_call_operand.vmem [shape: bf16[5,384,1024], index: 2, kind: input, shape index: {}]
  %s3 = inlined_call_operand.vmem [shape: bf16[5,1024,384], index: 3, kind: input, shape index: {}]
  %s4 = inlined_call_operand.vmem [shape: f32[5,256,1], index: 4, kind: input, shape index: {}]
  %s5 = inlined_call_operand.hbm [shape: bf16[256,384], index: 5, kind: output, shape index: {}]
  %s6 = sld [smem:[#allocation0]]
  $region107: #{moe_layer_forward.1} parent=0
    _
  %s8 = ssub.s32 1, %s6
  %s9 = scalar_select 0, %s8, %s6
  $region1: #{moe_layer_forward.1} parent=0
    #allocation3 [shape = 'u8[786432]{0}', space=vmem, size = 0xc0000, scoped, tag = 'input window, operand 1']
    #allocation4 [shape = 'u8[786432]{0}', space=vmem, size = 0xc0000, scoped, tag = 'input window, operand 2']
    #allocation5 [shape = 'u8[196608]{0}', space=vmem, size = 0x30000, scoped, tag = 'output window, operand 0']
    #allocation6 [shape = 's32[2]{0}', space=sflag, size = 0x8, scoped, tag = 'scoped memory for moe_layer_forward.1']
    %10 = vsyncpa [#allocation6], 0
    %s11 = scalar_lea.sflag [#allocation6], 1
    %12 = vsyncpa %s11, 0
    loop: start=0, step=1, limit=22
    $region2: #{moe_layer_forward.1} parent=1 // loop_pre_header
      _
    $region3: #{moe_layer_forward.1} parent=1 // loop_header
      %s14 = sphi 0, %s18
      %p15 = scmp.ge.s32.totalorder %s14, 22
      %s21 = sphi 0, %s40
      %s22 = sphi 0, %s36
      %s23 = sphi 0, %s32
      %s24 = sphi 0, %s21
      %s25 = sphi 0, %s22
      %s26 = sphi 0, %s23
      %s27 = sphi 0, %s24
      %s28 = sphi 0, %s25
      %s29 = sphi 0, %s26
      %s43 = sphi 0, %s45
      %s46 = sphi 0, %s43
      %s47 = sphi 0, %s46
      %s63 = sphi 0, %s47
      %s71 = sphi 0, %s73
      %s74 = sphi 0, %s71
      %s75 = sphi 0, %s74
      %s91 = sphi 0, %s75
      %s99 = sphi 0, %s101
      %s102 = sphi 0, %s99
      %s103 = sphi 0, %s102
      %s119 = sphi 0, %s103
      %s127 = sphi 0, %s129
      %s130 = sphi 0, %s127
      %s131 = sphi 0, %s130
      %s147 = sphi 0, %s131
      %s155 = sphi 0, %s157
      %s158 = sphi 0, %s155
      %s159 = sphi 0, %s158
      %s175 = sphi 0, %s159
      %s181 = sphi 0, %s183
      %s184 = sphi 0, %s181
      %s185 = sphi 0, %s184
      %s201 = sphi 0, %s185
    $region4: #{moe_layer_forward.1} parent=1 // loop_header_branch
      %17 = sbr.rel (%p15) target = $region8
    $region5: #{moe_layer_forward.1} parent=1 // loop_body
      %s19 = ssub.s32 %s14, 1
      %s20 = ssub.s32 %s14, 2
      %s30 = sadd.s32 1, %s23
      %p31 = scmp.ge.s32.totalorder %s30, 2
      %s32 = scalar_select %p31, 0, %s30
      %s33 = sadd.s32 1, %s22
      %s34 = scalar_select %p31, %s33, %s22
      %p35 = scmp.ge.s32.totalorder %s34, 5
      %s36 = scalar_select %p35, 0, %s34
      %s37 = sadd.s32 1, %s21
      %s38 = scalar_select %p35, %s37, %s21
      %p39 = scmp.ge.s32.totalorder %s38, 2
      %s40 = scalar_select %p39, 0, %s38
      %s41 = ssub.s32 %s21, %s40
      %p42 = scmp.eq.s32.totalorder %s41, 0
      %s44 = sadd.s32 %s43, 1
      %s45 = scalar_select %p42, %s43, %s44
      %p48 = pneg %p42
      %p49 = scmp.eq.s32.totalorder %s14, 19
      %p50 = por %p48, %p49
      %p51 = scmp.ne.s32.totalorder %s43, %s46
      %p52 = scmp.eq.s32.totalorder %s14, 0
      %p53 = por %p51, %p52
      %p54 = scmp.ne.s32.totalorder %s43, %s46
      %p55 = scmp.eq.s32.totalorder %s19, 19
      %p56 = por %p54, %p55
      %p57 = scmp.ne.s32.totalorder %s46, %s47
      %p58 = scmp.eq.s32.totalorder %s19, 0
      %p59 = por %p57, %p58
      %p60 = scmp.ne.s32.totalorder %s46, %s47
      %p61 = scmp.eq.s32.totalorder %s20, 19
      %p62 = por %p60, %p61
      %p64 = scmp.ne.s32.totalorder %s47, %s63
      %p65 = scmp.eq.s32.totalorder %s20, 0
      %p66 = por %p64, %p65
      %s67 = ssub.s32 %s22, %s36
      %s68 = ssub.s32 %s23, %s32
      %s69 = sor.u32 %s67, %s68
      %p70 = scmp.eq.s32.totalorder %s69, 0
      %s72 = sadd.s32 %s71, 1
      %s73 = scalar_select %p70, %s71, %s72
      %p76 = pneg %p70
      %p77 = scmp.eq.s32.totalorder %s14, 19
      %p78 = por %p76, %p77
      %p79 = scmp.ne.s32.totalorder %s71, %s74
      %p80 = scmp.eq.s32.totalorder %s14, 0
      %p81 = por %p79, %p80
      %p82 = scmp.ne.s32.totalorder %s71, %s74
      %p83 = scmp.eq.s32.totalorder %s19, 19
      %p84 = por %p82, %p83
      %p85 = scmp.ne.s32.totalorder %s74, %s75
      %p86 = scmp.eq.s32.totalorder %s19, 0
      %p87 = por %p85, %p86
      %p88 = scmp.ne.s32.totalorder %s74, %s75
      %p89 = scmp.eq.s32.totalorder %s20, 19
      %p90 = por %p88, %p89
      %p92 = scmp.ne.s32.totalorder %s75, %s91
      %p93 = scmp.eq.s32.totalorder %s20, 0
      %p94 = por %p92, %p93
      %s95 = ssub.s32 %s22, %s36
      %s96 = ssub.s32 %s23, %s32
      %s97 = sor.u32 %s95, %s96
      %p98 = scmp.eq.s32.totalorder %s97, 0
      %s100 = sadd.s32 %s99, 1
      %s101 = scalar_select %p98, %s99, %s100
      %p104 = pneg %p98
      %p105 = scmp.eq.s32.totalorder %s14, 19
      %p106 = por %p104, %p105
      %p107 = scmp.ne.s32.totalorder %s99, %s102
      %p108 = scmp.eq.s32.totalorder %s14, 0
      %p109 = por %p107, %p108
      %p110 = scmp.ne.s32.totalorder %s99, %s102
      %p111 = scmp.eq.s32.totalorder %s19, 19
      %p112 = por %p110, %p111
      %p113 = scmp.ne.s32.totalorder %s102, %s103
      %p114 = scmp.eq.s32.totalorder %s19, 0
      %p115 = por %p113, %p114
      %p116 = scmp.ne.s32.totalorder %s102, %s103
      %p117 = scmp.eq.s32.totalorder %s20, 19
      %p118 = por %p116, %p117
      %p120 = scmp.ne.s32.totalorder %s103, %s119
      %p121 = scmp.eq.s32.totalorder %s20, 0
      %p122 = por %p120, %p121
      %s123 = ssub.s32 %s22, %s36
      %s124 = ssub.s32 %s23, %s32
      %s125 = sor.u32 %s123, %s124
      %p126 = scmp.eq.s32.totalorder %s125, 0
      %s128 = sadd.s32 %s127, 1
      %s129 = scalar_select %p126, %s127, %s128
      %p132 = pneg %p126
      %p133 = scmp.eq.s32.totalorder %s14, 19
      %p134 = por %p132, %p133
      %p135 = scmp.ne.s32.totalorder %s127, %s130
      %p136 = scmp.eq.s32.totalorder %s14, 0
      %p137 = por %p135, %p136
      %p138 = scmp.ne.s32.totalorder %s127, %s130
      %p139 = scmp.eq.s32.totalorder %s19, 19
      %p140 = por %p138, %p139
      %p141 = scmp.ne.s32.totalorder %s130, %s131
      %p142 = scmp.eq.s32.totalorder %s19, 0
      %p143 = por %p141, %p142
      %p144 = scmp.ne.s32.totalorder %s130, %s131
      %p145 = scmp.eq.s32.totalorder %s20, 19
      %p146 = por %p144, %p145
      %p148 = scmp.ne.s32.totalorder %s131, %s147
      %p149 = scmp.eq.s32.totalorder %s20, 0
      %p150 = por %p148, %p149
      %s151 = ssub.s32 %s22, %s36
      %s152 = ssub.s32 %s21, %s40
      %s153 = sor.u32 %s151, %s152
      %p154 = scmp.eq.s32.totalorder %s153, 0
      %s156 = sadd.s32 %s155, 1
      %s157 = scalar_select %p154, %s155, %s156
      %p160 = pneg %p154
      %p161 = scmp.eq.s32.totalorder %s14, 19
      %p162 = por %p160, %p161
      %p163 = scmp.ne.s32.totalorder %s155, %s158
      %p164 = scmp.eq.s32.totalorder %s14, 0
      %p165 = por %p163, %p164
      %p166 = scmp.ne.s32.totalorder %s155, %s158
      %p167 = scmp.eq.s32.totalorder %s19, 19
      %p168 = por %p166, %p167
      %p169 = scmp.ne.s32.totalorder %s158, %s159
      %p170 = scmp.eq.s32.totalorder %s19, 0
      %p171 = por %p169, %p170
      %p172 = scmp.ne.s32.totalorder %s158, %s159
      %p173 = scmp.eq.s32.totalorder %s20, 19
      %p174 = por %p172, %p173
      %p176 = scmp.ne.s32.totalorder %s159, %s175
      %p177 = scmp.eq.s32.totalorder %s20, 0
      %p178 = por %p176, %p177
      %s179 = ssub.s32 %s21, %s40
      %p180 = scmp.eq.s32.totalorder %s179, 0
      %s182 = sadd.s32 %s181, 1
      %s183 = scalar_select %p180, %s181, %s182
      %p186 = pneg %p180
      %p187 = scmp.eq.s32.totalorder %s14, 19
      %p188 = por %p186, %p187
      %p189 = scmp.ne.s32.totalorder %s181, %s184
      %p190 = scmp.eq.s32.totalorder %s14, 0
      %p191 = por %p189, %p190
      %p192 = scmp.ne.s32.totalorder %s181, %s184
      %p193 = scmp.eq.s32.totalorder %s19, 19
      %p194 = por %p192, %p193
      %p195 = scmp.ne.s32.totalorder %s184, %s185
      %p196 = scmp.eq.s32.totalorder %s19, 0
      %p197 = por %p195, %p196
      %p198 = scmp.ne.s32.totalorder %s184, %s185
      %p199 = scmp.eq.s32.totalorder %s20, 19
      %p200 = por %p198, %p199
      %p202 = scmp.ne.s32.totalorder %s185, %s201
      %p203 = scmp.eq.s32.totalorder %s20, 0
      %p204 = por %p202, %p203
      %p205 = scmp.le.s32.totalorder 1, %s14
      %p206 = scmp.lt.s32.totalorder %s14, 21
      %p207 = pnand %p205, %p206
      %p208 = pneg %p207
      // Predicated region
      $region9: #{moe_layer_forward.1} parent=5 // pred_check
        _
      $region10: #{moe_layer_forward.1} parent=5 // pred_check_branch
        %210 = sbr.rel (%p207) target = $region12
      $region11: #{moe_layer_forward.1} parent=5 // pred_region
        %s211 = ssub.s32 %s14, 1
      $region12: #{moe_layer_forward.1} parent=5 // pred_fallthru
        _
      %p212 = scmp.lt.s32.totalorder %s14, 20
      // Predicated region
      $region13: #{moe_layer_forward.1} parent=5 // pred_check
        %p213 = pneg %p212
      $region14: #{moe_layer_forward.1} parent=5 // pred_check_branch
        %215 = sbr.rel (%p213) target = $region16
      $region15: #{moe_layer_forward.1} parent=5 // pred_region
        // Predicated region
        $region17: #{moe_layer_forward.1} parent=15 // pred_check
          %p216 = pneg %p53
        $region18: #{moe_layer_forward.1} parent=15 // pred_check_branch
          %218 = sbr.rel (%p216) target = $region20
        $region19: #{moe_layer_forward.1} parent=15 // pred_region
          %s219 = smul.u32 16, %s21
          %p220 = scmp.lt.s32.totalorder %s219, 31
          %s221 = scalar_select %p220, %s219, 31
          %s222 = smul.addr %s221, 3
          %s223 = smul.addr %s222, 4
          %s224 = scalar_lea.vmem %s0, %s223
          %s225 = smul.u32 16, %s21
        $region20: #{moe_layer_forward.1} parent=15 // pred_fallthru
          _
        // Predicated region
        $region21: #{moe_layer_forward.1} parent=15 // pred_check
          %p226 = pneg %p81
        $region22: #{moe_layer_forward.1} parent=15 // pred_check_branch
          %228 = sbr.rel (%p226) target = $region24
        $region23: #{moe_layer_forward.1} parent=15 // pred_region
          %s229 = sand.u32 %s71, 1
          %s230 = sand.u32 %s71, 1
          %s231 = smul.addr %s230, 768
          %s232 = scalar_lea.vmem [#allocation3], %s231
          %s233 = smul.u32 4, %s23
          %s234 = smul.addr %s22, 384
          %s235 = sadd.s32 %s233, %s234
          %s236 = smul.addr %s235, 4
          %s237 = scalar_lea.vmem %s1, %s236
          // Predicated region
          $region25: #{moe_layer_forward.1} parent=23 // pred_check
            _
          $region26: #{moe_layer_forward.1} parent=23 // pred_check_branch
            %239 = sbr.rel (0) target = $region28
          $region27: #{moe_layer_forward.1} parent=23 // pred_region
            // Predicated region
            $region29: #{moe_layer_forward.1} parent=27 // pred_check
              _
            $region30: #{moe_layer_forward.1} parent=27 // pred_check_branch
              %241 = sbr.rel (0) target = $region32
            $region31: #{moe_layer_forward.1} parent=27 // pred_region
              loop: start=0, step=1, limit=1
              $region33: #{moe_layer_forward.1} parent=31 // loop_pre_header
                _
              $region34: #{moe_layer_forward.1} parent=31 // loop_header
                %s243 = sphi 0, %s247
                %p244 = scmp.ge.s32.totalorder %s243, 1
                %s248 = sphi %s237, %s237
                %s249 = sphi %s232, %s232
              $region35: #{moe_layer_forward.1} parent=31 // loop_header_branch
                %246 = sbr.rel (%p244) target = $region39
              $region36: #{moe_layer_forward.1} parent=31 // loop_body
                %v250 = vld [vmem:[%s248] sm:$0xff]
                %251 = vst [vmem:[%s249] sm:$0xff] %v250
                %v252 = vld [vmem:[%s248 + $0x8] sm:$0xff]
                %253 = vst [vmem:[%s249 + $0x8] sm:$0xff] %v252
                %v254 = vld [vmem:[%s248 + $0x20] sm:$0xff]
                %255 = vst [vmem:[%s249 + $0x10] sm:$0xff] %v254
                %v256 = vld [vmem:[%s248 + $0x28] sm:$0xff]
                %257 = vst [vmem:[%s249 + $0x18] sm:$0xff] %v256
                %v258 = vld [vmem:[%s248 + $0x40] sm:$0xff]
                %259 = vst [vmem:[%s249 + $0x20] sm:$0xff] %v258
                %v260 = vld [vmem:[%s248 + $0x48] sm:$0xff]
                %261 = vst [vmem:[%s249 + $0x28] sm:$0xff] %v260
                %v262 = vld [vmem:[%s248 + $0x60] sm:$0xff]
                %263 = vst [vmem:[%s249 + $0x30] sm:$0xff] %v262
                %v264 = vld [vmem:[%s248 + $0x68] sm:$0xff]
                %265 = vst [vmem:[%s249 + $0x38] sm:$0xff] %v264
                %v266 = vld [vmem:[%s248 + $0x80] sm:$0xff]
                %267 = vst [vmem:[%s249 + $0x40] sm:$0xff] %v266
                %v268 = vld [vmem:[%s248 + $0x88] sm:$0xff]
                %269 = vst [vmem:[%s249 + $0x48] sm:$0xff] %v268
                %v270 = vld [vmem:[%s248 + $0xa0] sm:$0xff]
                %271 = vst [vmem:[%s249 + $0x50] sm:$0xff] %v270
                %v272 = vld [vmem:[%s248 + $0xa8] sm:$0xff]
                %273 = vst [vmem:[%s249 + $0x58] sm:$0xff] %v272
                %v274 = vld [vmem:[%s248 + $0xc0] sm:$0xff]
                %275 = vst [vmem:[%s249 + $0x60] sm:$0xff] %v274
                %v276 = vld [vmem:[%s248 + $0xc8] sm:$0xff]
                %277 = vst [vmem:[%s249 + $0x68] sm:$0xff] %v276
                %v278 = vld [vmem:[%s248 + $0xe0] sm:$0xff]
                %279 = vst [vmem:[%s249 + $0x70] sm:$0xff] %v278
                %v280 = vld [vmem:[%s248 + $0xe8] sm:$0xff]
                %281 = vst [vmem:[%s249 + $0x78] sm:$0xff] %v280
                %v282 = vld [vmem:[%s248 + $0x100] sm:$0xff]
                %283 = vst [vmem:[%s249 + $0x80] sm:$0xff] %v282
                %v284 = vld [vmem:[%s248 + $0x108] sm:$0xff]
                %285 = vst [vmem:[%s249 + $0x88] sm:$0xff] %v284
                %v286 = vld [vmem:[%s248 + $0x120] sm:$0xff]
                %287 = vst [vmem:[%s249 + $0x90] sm:$0xff] %v286
                %v288 = vld [vmem:[%s248 + $0x128] sm:$0xff]
                %289 = vst [vmem:[%s249 + $0x98] sm:$0xff] %v288
                %v290 = vld [vmem:[%s248 + $0x140] sm:$0xff]
                %291 = vst [vmem:[%s249 + $0xa0] sm:$0xff] %v290
                %v292 = vld [vmem:[%s248 + $0x148] sm:$0xff]
                %293 = vst [vmem:[%s249 + $0xa8] sm:$0xff] %v292
                %v294 = vld [vmem:[%s248 + $0x160] sm:$0xff]
                %295 = vst [vmem:[%s249 + $0xb0] sm:$0xff] %v294
                %v296 = vld [vmem:[%s248 + $0x168] sm:$0xff]
                %297 = vst [vmem:[%s249 + $0xb8] sm:$0xff] %v296
                %v298 = vld [vmem:[%s248 + $0x180] sm:$0xff]
                %299 = vst [vmem:[%s249 + $0xc0] sm:$0xff] %v298
                %v300 = vld [vmem:[%s248 + $0x188] sm:$0xff]
                %301 = vst [vmem:[%s249 + $0xc8] sm:$0xff] %v300
                %v302 = vld [vmem:[%s248 + $0x1a0] sm:$0xff]
                %303 = vst [vmem:[%s249 + $0xd0] sm:$0xff] %v302
                %v304 = vld [vmem:[%s248 + $0x1a8] sm:$0xff]
                %305 = vst [vmem:[%s249 + $0xd8] sm:$0xff] %v304
                %v306 = vld [vmem:[%s248 + $0x1c0] sm:$0xff]
                %307 = vst [vmem:[%s249 + $0xe0] sm:$0xff] %v306
                %v308 = vld [vmem:[%s248 + $0x1c8] sm:$0xff]
                %309 = vst [vmem:[%s249 + $0xe8] sm:$0xff] %v308
                %v310 = vld [vmem:[%s248 + $0x1e0] sm:$0xff]
                %311 = vst [vmem:[%s249 + $0xf0] sm:$0xff] %v310
                %v312 = vld [vmem:[%s248 + $0x1e8] sm:$0xff]
                %313 = vst [vmem:[%s249 + $0xf8] sm:$0xff] %v312
                %v314 = vld [vmem:[%s248 + $0x200] sm:$0xff]
                %315 = vst [vmem:[%s249 + $0x100] sm:$0xff] %v314
                %v316 = vld [vmem:[%s248 + $0x208] sm:$0xff]
                %317 = vst [vmem:[%s249 + $0x108] sm:$0xff] %v316
                %v318 = vld [vmem:[%s248 + $0x220] sm:$0xff]
                %319 = vst [vmem:[%s249 + $0x110] sm:$0xff] %v318
                %v320 = vld [vmem:[%s248 + $0x228] sm:$0xff]
                %321 = vst [vmem:[%s249 + $0x118] sm:$0xff] %v320
                %v322 = vld [vmem:[%s248 + $0x240] sm:$0xff]
                %323 = vst [vmem:[%s249 + $0x120] sm:$0xff] %v322
                %v324 = vld [vmem:[%s248 + $0x248] sm:$0xff]
                %325 = vst [vmem:[%s249 + $0x128] sm:$0xff] %v324
                %v326 = vld [vmem:[%s248 + $0x260] sm:$0xff]
                %327 = vst [vmem:[%s249 + $0x130] sm:$0xff] %v326
                %v328 = vld [vmem:[%s248 + $0x268] sm:$0xff]
                %329 = vst [vmem:[%s249 + $0x138] sm:$0xff] %v328
                %v330 = vld [vmem:[%s248 + $0x280] sm:$0xff]
                %331 = vst [vmem:[%s249 + $0x140] sm:$0xff] %v330
                %v332 = vld [vmem:[%s248 + $0x288] sm:$0xff]
                %333 = vst [vmem:[%s249 + $0x148] sm:$0xff] %v332
                %v334 = vld [vmem:[%s248 + $0x2a0] sm:$0xff]
                %335 = vst [vmem:[%s249 + $0x150] sm:$0xff] %v334
                %v336 = vld [vmem:[%s248 + $0x2a8] sm:$0xff]
                %337 = vst [vmem:[%s249 + $0x158] sm:$0xff] %v336
                %v338 = vld [vmem:[%s248 + $0x2c0] sm:$0xff]
                %339 = vst [vmem:[%s249 + $0x160] sm:$0xff] %v338
                %v340 = vld [vmem:[%s248 + $0x2c8] sm:$0xff]
                %341 = vst [vmem:[%s249 + $0x168] sm:$0xff] %v340
                %v342 = vld [vmem:[%s248 + $0x2e0] sm:$0xff]
                %343 = vst [vmem:[%s249 + $0x170] sm:$0xff] %v342
                %v344 = vld [vmem:[%s248 + $0x2e8] sm:$0xff]
                %345 = vst [vmem:[%s249 + $0x178] sm:$0xff] %v344
                %v346 = vld [vmem:[%s248 + $0x300] sm:$0xff]
                %347 = vst [vmem:[%s249 + $0x180] sm:$0xff] %v346
                %v348 = vld [vmem:[%s248 + $0x308] sm:$0xff]
                %349 = vst [vmem:[%s249 + $0x188] sm:$0xff] %v348
                %v350 = vld [vmem:[%s248 + $0x320] sm:$0xff]
                %351 = vst [vmem:[%s249 + $0x190] sm:$0xff] %v350
                %v352 = vld [vmem:[%s248 + $0x328] sm:$0xff]
                %353 = vst [vmem:[%s249 + $0x198] sm:$0xff] %v352
                %v354 = vld [vmem:[%s248 + $0x340] sm:$0xff]
                %355 = vst [vmem:[%s249 + $0x1a0] sm:$0xff] %v354
                %v356 = vld [vmem:[%s248 + $0x348] sm:$0xff]
                %357 = vst [vmem:[%s249 + $0x1a8] sm:$0xff] %v356
                %v358 = vld [vmem:[%s248 + $0x360] sm:$0xff]
                %359 = vst [vmem:[%s249 + $0x1b0] sm:$0xff] %v358
                %v360 = vld [vmem:[%s248 + $0x368] sm:$0xff]
                %361 = vst [vmem:[%s249 + $0x1b8] sm:$0xff] %v360
                %v362 = vld [vmem:[%s248 + $0x380] sm:$0xff]
                %363 = vst [vmem:[%s249 + $0x1c0] sm:$0xff] %v362
                %v364 = vld [vmem:[%s248 + $0x388] sm:$0xff]
                %365 = vst [vmem:[%s249 + $0x1c8] sm:$0xff] %v364
                %v366 = vld [vmem:[%s248 + $0x3a0] sm:$0xff]
                %367 = vst [vmem:[%s249 + $0x1d0] sm:$0xff] %v366
                %v368 = vld [vmem:[%s248 + $0x3a8] sm:$0xff]
                %369 = vst [vmem:[%s249 + $0x1d8] sm:$0xff] %v368
                %v370 = vld [vmem:[%s248 + $0x3c0] sm:$0xff]
                %371 = vst [vmem:[%s249 + $0x1e0] sm:$0xff] %v370
                %v372 = vld [vmem:[%s248 + $0x3c8] sm:$0xff]
                %373 = vst [vmem:[%s249 + $0x1e8] sm:$0xff] %v372
                %v374 = vld [vmem:[%s248 + $0x3e0] sm:$0xff]
                %375 = vst [vmem:[%s249 + $0x1f0] sm:$0xff] %v374
                %v376 = vld [vmem:[%s248 + $0x3e8] sm:$0xff]
                %377 = vst [vmem:[%s249 + $0x1f8] sm:$0xff] %v376
                %v378 = vld [vmem:[%s248 + $0x400] sm:$0xff]
                %379 = vst [vmem:[%s249 + $0x200] sm:$0xff] %v378
                %v380 = vld [vmem:[%s248 + $0x408] sm:$0xff]
                %381 = vst [vmem:[%s249 + $0x208] sm:$0xff] %v380
                %v382 = vld [vmem:[%s248 + $0x420] sm:$0xff]
                %383 = vst [vmem:[%s249 + $0x210] sm:$0xff] %v382
                %v384 = vld [vmem:[%s248 + $0x428] sm:$0xff]
                %385 = vst [vmem:[%s249 + $0x218] sm:$0xff] %v384
                %v386 = vld [vmem:[%s248 + $0x440] sm:$0xff]
                %387 = vst [vmem:[%s249 + $0x220] sm:$0xff] %v386
                %v388 = vld [vmem:[%s248 + $0x448] sm:$0xff]
                %389 = vst [vmem:[%s249 + $0x228] sm:$0xff] %v388
                %v390 = vld [vmem:[%s248 + $0x460] sm:$0xff]
                %391 = vst [vmem:[%s249 + $0x230] sm:$0xff] %v390
                %v392 = vld [vmem:[%s248 + $0x468] sm:$0xff]
                %393 = vst [vmem:[%s249 + $0x238] sm:$0xff] %v392
                %v394 = vld [vmem:[%s248 + $0x480] sm:$0xff]
                %395 = vst [vmem:[%s249 + $0x240] sm:$0xff] %v394
                %v396 = vld [vmem:[%s248 + $0x488] sm:$0xff]
                %397 = vst [vmem:[%s249 + $0x248] sm:$0xff] %v396
                %v398 = vld [vmem:[%s248 + $0x4a0] sm:$0xff]
                %399 = vst [vmem:[%s249 + $0x250] sm:$0xff] %v398
                %v400 = vld [vmem:[%s248 + $0x4a8] sm:$0xff]
                %401 = vst [vmem:[%s249 + $0x258] sm:$0xff] %v400
                %v402 = vld [vmem:[%s248 + $0x4c0] sm:$0xff]
                %403 = vst [vmem:[%s249 + $0x260] sm:$0xff] %v402
                %v404 = vld [vmem:[%s248 + $0x4c8] sm:$0xff]
                %405 = vst [vmem:[%s249 + $0x268] sm:$0xff] %v404
                %v406 = vld [vmem:[%s248 + $0x4e0] sm:$0xff]
                %407 = vst [vmem:[%s249 + $0x270] sm:$0xff] %v406
                %v408 = vld [vmem:[%s248 + $0x4e8] sm:$0xff]
                %409 = vst [vmem:[%s249 + $0x278] sm:$0xff] %v408
                %v410 = vld [vmem:[%s248 + $0x500] sm:$0xff]
                %411 = vst [vmem:[%s249 + $0x280] sm:$0xff] %v410
                %v412 = vld [vmem:[%s248 + $0x508] sm:$0xff]
                %413 = vst [vmem:[%s249 + $0x288] sm:$0xff] %v412
                %v414 = vld [vmem:[%s248 + $0x520] sm:$0xff]
                %415 = vst [vmem:[%s249 + $0x290] sm:$0xff] %v414
                %v416 = vld [vmem:[%s248 + $0x528] sm:$0xff]
                %417 = vst [vmem:[%s249 + $0x298] sm:$0xff] %v416
                %v418 = vld [vmem:[%s248 + $0x540] sm:$0xff]
                %419 = vst [vmem:[%s249 + $0x2a0] sm:$0xff] %v418
                %v420 = vld [vmem:[%s248 + $0x548] sm:$0xff]
                %421 = vst [vmem:[%s249 + $0x2a8] sm:$0xff] %v420
                %v422 = vld [vmem:[%s248 + $0x560] sm:$0xff]
                %423 = vst [vmem:[%s249 + $0x2b0] sm:$0xff] %v422
                %v424 = vld [vmem:[%s248 + $0x568] sm:$0xff]
                %425 = vst [vmem:[%s249 + $0x2b8] sm:$0xff] %v424
                %v426 = vld [vmem:[%s248 + $0x580] sm:$0xff]
                %427 = vst [vmem:[%s249 + $0x2c0] sm:$0xff] %v426
                %v428 = vld [vmem:[%s248 + $0x588] sm:$0xff]
                %429 = vst [vmem:[%s249 + $0x2c8] sm:$0xff] %v428
                %v430 = vld [vmem:[%s248 + $0x5a0] sm:$0xff]
                %431 = vst [vmem:[%s249 + $0x2d0] sm:$0xff] %v430
                %v432 = vld [vmem:[%s248 + $0x5a8] sm:$0xff]
                %433 = vst [vmem:[%s249 + $0x2d8] sm:$0xff] %v432
                %v434 = vld [vmem:[%s248 + $0x5c0] sm:$0xff]
                %435 = vst [vmem:[%s249 + $0x2e0] sm:$0xff] %v434
                %v436 = vld [vmem:[%s248 + $0x5c8] sm:$0xff]
                %437 = vst [vmem:[%s249 + $0x2e8] sm:$0xff] %v436
                %v438 = vld [vmem:[%s248 + $0x5e0] sm:$0xff]
                %439 = vst [vmem:[%s249 + $0x2f0] sm:$0xff] %v438
                %v440 = vld [vmem:[%s248 + $0x5e8] sm:$0xff]
                %441 = vst [vmem:[%s249 + $0x2f8] sm:$0xff] %v440
              $region37: #{moe_layer_forward.1} parent=31 // loop_footer
                %s247 = sadd.s32 1, %s243
              $region38: #{moe_layer_forward.1} parent=31 // loop_footer_branch
                %242 = sbr.rel target = $region34
              $region39: #{moe_layer_forward.1} parent=31 // loop_exit
                _
            $region32: #{moe_layer_forward.1} parent=27 // pred_fallthru
              _
            // Predicated region
            $region40: #{moe_layer_forward.1} parent=27 // pred_check
              _
            $region41: #{moe_layer_forward.1} parent=27 // pred_check_branch
              %443 = sbr.rel target = $region43
            $region42: #{moe_layer_forward.1} parent=27 // pred_region
              _
            $region43: #{moe_layer_forward.1} parent=27 // pred_fallthru
              _
          $region28: #{moe_layer_forward.1} parent=23 // pred_fallthru
            _
          %444 = vnop
        $region24: #{moe_layer_forward.1} parent=15 // pred_fallthru
          _
        // Predicated region
        $region44: #{moe_layer_forward.1} parent=15 // pred_check
          %p445 = pneg %p109
        $region45: #{moe_layer_forward.1} parent=15 // pred_check_branch
          %447 = sbr.rel (%p445) target = $region47
        $region46: #{moe_layer_forward.1} parent=15 // pred_region
          %s448 = sand.u32 %s99, 1
          %s449 = sand.u32 %s99, 1
          %s450 = smul.addr %s449, 768
          %s451 = scalar_lea.vmem [#allocation4], %s450
          %s452 = smul.u32 4, %s23
          %s453 = smul.addr %s22, 384
          %s454 = sadd.s32 %s452, %s453
          %s455 = smul.addr %s454, 4
          %s456 = scalar_lea.vmem %s2, %s455
          // Predicated region
          $region48: #{moe_layer_forward.1} parent=46 // pred_check
            _
          $region49: #{moe_layer_forward.1} parent=46 // pred_check_branch
            %458 = sbr.rel (0) target = $region51
          $region50: #{moe_layer_forward.1} parent=46 // pred_region
            // Predicated region
            $region52: #{moe_layer_forward.1} parent=50 // pred_check
              _
            $region53: #{moe_layer_forward.1} parent=50 // pred_check_branch
              %460 = sbr.rel (0) target = $region55
            $region54: #{moe_layer_forward.1} parent=50 // pred_region
              loop: start=0, step=1, limit=1
              $region56: #{moe_layer_forward.1} parent=54 // loop_pre_header
                _
              $region57: #{moe_layer_forward.1} parent=54 // loop_header
                %s462 = sphi 0, %s466
                %p463 = scmp.ge.s32.totalorder %s462, 1
                %s467 = sphi %s456, %s456
                %s468 = sphi %s451, %s451
              $region58: #{moe_layer_forward.1} parent=54 // loop_header_branch
                %465 = sbr.rel (%p463) target = $region62
              $region59: #{moe_layer_forward.1} parent=54 // loop_body
                %v469 = vld [vmem:[%s467] sm:$0xff]
                %470 = vst [vmem:[%s468] sm:$0xff] %v469
                %v471 = vld [vmem:[%s467 + $0x8] sm:$0xff]
                %472 = vst [vmem:[%s468 + $0x8] sm:$0xff] %v471
                %v473 = vld [vmem:[%s467 + $0x20] sm:$0xff]
                %474 = vst [vmem:[%s468 + $0x10] sm:$0xff] %v473
                %v475 = vld [vmem:[%s467 + $0x28] sm:$0xff]
                %476 = vst [vmem:[%s468 + $0x18] sm:$0xff] %v475
                %v477 = vld [vmem:[%s467 + $0x40] sm:$0xff]
                %478 = vst [vmem:[%s468 + $0x20] sm:$0xff] %v477
                %v479 = vld [vmem:[%s467 + $0x48] sm:$0xff]
                %480 = vst [vmem:[%s468 + $0x28] sm:$0xff] %v479
                %v481 = vld [vmem:[%s467 + $0x60] sm:$0xff]
                %482 = vst [vmem:[%s468 + $0x30] sm:$0xff] %v481
                %v483 = vld [vmem:[%s467 + $0x68] sm:$0xff]
                %484 = vst [vmem:[%s468 + $0x38] sm:$0xff] %v483
                %v485 = vld [vmem:[%s467 + $0x80] sm:$0xff]
                %486 = vst [vmem:[%s468 + $0x40] sm:$0xff] %v485
                %v487 = vld [vmem:[%s467 + $0x88] sm:$0xff]
                %488 = vst [vmem:[%s468 + $0x48] sm:$0xff] %v487
                %v489 = vld [vmem:[%s467 + $0xa0] sm:$0xff]
                %490 = vst [vmem:[%s468 + $0x50] sm:$0xff] %v489
                %v491 = vld [vmem:[%s467 + $0xa8] sm:$0xff]
                %492 = vst [vmem:[%s468 + $0x58] sm:$0xff] %v491
                %v493 = vld [vmem:[%s467 + $0xc0] sm:$0xff]
                %494 = vst [vmem:[%s468 + $0x60] sm:$0xff] %v493
                %v495 = vld [vmem:[%s467 + $0xc8] sm:$0xff]
                %496 = vst [vmem:[%s468 + $0x68] sm:$0xff] %v495
                %v497 = vld [vmem:[%s467 + $0xe0] sm:$0xff]
                %498 = vst [vmem:[%s468 + $0x70] sm:$0xff] %v497
                %v499 = vld [vmem:[%s467 + $0xe8] sm:$0xff]
                %500 = vst [vmem:[%s468 + $0x78] sm:$0xff] %v499
                %v501 = vld [vmem:[%s467 + $0x100] sm:$0xff]
                %502 = vst [vmem:[%s468 + $0x80] sm:$0xff] %v501
                %v503 = vld [vmem:[%s467 + $0x108] sm:$0xff]
                %504 = vst [vmem:[%s468 + $0x88] sm:$0xff] %v503
                %v505 = vld [vmem:[%s467 + $0x120] sm:$0xff]
                %506 = vst [vmem:[%s468 + $0x90] sm:$0xff] %v505
                %v507 = vld [vmem:[%s467 + $0x128] sm:$0xff]
                %508 = vst [vmem:[%s468 + $0x98] sm:$0xff] %v507
                %v509 = vld [vmem:[%s467 + $0x140] sm:$0xff]
                %510 = vst [vmem:[%s468 + $0xa0] sm:$0xff] %v509
                %v511 = vld [vmem:[%s467 + $0x148] sm:$0xff]
                %512 = vst [vmem:[%s468 + $0xa8] sm:$0xff] %v511
                %v513 = vld [vmem:[%s467 + $0x160] sm:$0xff]
                %514 = vst [vmem:[%s468 + $0xb0] sm:$0xff] %v513
                %v515 = vld [vmem:[%s467 + $0x168] sm:$0xff]
                %516 = vst [vmem:[%s468 + $0xb8] sm:$0xff] %v515
                %v517 = vld [vmem:[%s467 + $0x180] sm:$0xff]
                %518 = vst [vmem:[%s468 + $0xc0] sm:$0xff] %v517
                %v519 = vld [vmem:[%s467 + $0x188] sm:$0xff]
                %520 = vst [vmem:[%s468 + $0xc8] sm:$0xff] %v519
                %v521 = vld [vmem:[%s467 + $0x1a0] sm:$0xff]
                %522 = vst [vmem:[%s468 + $0xd0] sm:$0xff] %v521
                %v523 = vld [vmem:[%s467 + $0x1a8] sm:$0xff]
                %524 = vst [vmem:[%s468 + $0xd8] sm:$0xff] %v523
                %v525 = vld [vmem:[%s467 + $0x1c0] sm:$0xff]
                %526 = vst [vmem:[%s468 + $0xe0] sm:$0xff] %v525
                %v527 = vld [vmem:[%s467 + $0x1c8] sm:$0xff]
                %528 = vst [vmem:[%s468 + $0xe8] sm:$0xff] %v527
                %v529 = vld [vmem:[%s467 + $0x1e0] sm:$0xff]
                %530 = vst [vmem:[%s468 + $0xf0] sm:$0xff] %v529
                %v531 = vld [vmem:[%s467 + $0x1e8] sm:$0xff]
                %532 = vst [vmem:[%s468 + $0xf8] sm:$0xff] %v531
                %v533 = vld [vmem:[%s467 + $0x200] sm:$0xff]
                %534 = vst [vmem:[%s468 + $0x100] sm:$0xff] %v533
                %v535 = vld [vmem:[%s467 + $0x208] sm:$0xff]
                %536 = vst [vmem:[%s468 + $0x108] sm:$0xff] %v535
                %v537 = vld [vmem:[%s467 + $0x220] sm:$0xff]
                %538 = vst [vmem:[%s468 + $0x110] sm:$0xff] %v537
                %v539 = vld [vmem:[%s467 + $0x228] sm:$0xff]
                %540 = vst [vmem:[%s468 + $0x118] sm:$0xff] %v539
                %v541 = vld [vmem:[%s467 + $0x240] sm:$0xff]
                %542 = vst [vmem:[%s468 + $0x120] sm:$0xff] %v541
                %v543 = vld [vmem:[%s467 + $0x248] sm:$0xff]
                %544 = vst [vmem:[%s468 + $0x128] sm:$0xff] %v543
                %v545 = vld [vmem:[%s467 + $0x260] sm:$0xff]
                %546 = vst [vmem:[%s468 + $0x130] sm:$0xff] %v545
                %v547 = vld [vmem:[%s467 + $0x268] sm:$0xff]
                %548 = vst [vmem:[%s468 + $0x138] sm:$0xff] %v547
                %v549 = vld [vmem:[%s467 + $0x280] sm:$0xff]
                %550 = vst [vmem:[%s468 + $0x140] sm:$0xff] %v549
                %v551 = vld [vmem:[%s467 + $0x288] sm:$0xff]
                %552 = vst [vmem:[%s468 + $0x148] sm:$0xff] %v551
                %v553 = vld [vmem:[%s467 + $0x2a0] sm:$0xff]
                %554 = vst [vmem:[%s468 + $0x150] sm:$0xff] %v553
                %v555 = vld [vmem:[%s467 + $0x2a8] sm:$0xff]
                %556 = vst [vmem:[%s468 + $0x158] sm:$0xff] %v555
                %v557 = vld [vmem:[%s467 + $0x2c0] sm:$0xff]
                %558 = vst [vmem:[%s468 + $0x160] sm:$0xff] %v557
                %v559 = vld [vmem:[%s467 + $0x2c8] sm:$0xff]
                %560 = vst [vmem:[%s468 + $0x168] sm:$0xff] %v559
                %v561 = vld [vmem:[%s467 + $0x2e0] sm:$0xff]
                %562 = vst [vmem:[%s468 + $0x170] sm:$0xff] %v561
                %v563 = vld [vmem:[%s467 + $0x2e8] sm:$0xff]
                %564 = vst [vmem:[%s468 + $0x178] sm:$0xff] %v563
                %v565 = vld [vmem:[%s467 + $0x300] sm:$0xff]
                %566 = vst [vmem:[%s468 + $0x180] sm:$0xff] %v565
                %v567 = vld [vmem:[%s467 + $0x308] sm:$0xff]
                %568 = vst [vmem:[%s468 + $0x188] sm:$0xff] %v567
                %v569 = vld [vmem:[%s467 + $0x320] sm:$0xff]
                %570 = vst [vmem:[%s468 + $0x190] sm:$0xff] %v569
                %v571 = vld [vmem:[%s467 + $0x328] sm:$0xff]
                %572 = vst [vmem:[%s468 + $0x198] sm:$0xff] %v571
                %v573 = vld [vmem:[%s467 + $0x340] sm:$0xff]
                %574 = vst [vmem:[%s468 + $0x1a0] sm:$0xff] %v573
                %v575 = vld [vmem:[%s467 + $0x348] sm:$0xff]
                %576 = vst [vmem:[%s468 + $0x1a8] sm:$0xff] %v575
                %v577 = vld [vmem:[%s467 + $0x360] sm:$0xff]
                %578 = vst [vmem:[%s468 + $0x1b0] sm:$0xff] %v577
                %v579 = vld [vmem:[%s467 + $0x368] sm:$0xff]
                %580 = vst [vmem:[%s468 + $0x1b8] sm:$0xff] %v579
                %v581 = vld [vmem:[%s467 + $0x380] sm:$0xff]
                %582 = vst [vmem:[%s468 + $0x1c0] sm:$0xff] %v581
                %v583 = vld [vmem:[%s467 + $0x388] sm:$0xff]
                %584 = vst [vmem:[%s468 + $0x1c8] sm:$0xff] %v583
                %v585 = vld [vmem:[%s467 + $0x3a0] sm:$0xff]
                %586 = vst [vmem:[%s468 + $0x1d0] sm:$0xff] %v585
                %v587 = vld [vmem:[%s467 + $0x3a8] sm:$0xff]
                %588 = vst [vmem:[%s468 + $0x1d8] sm:$0xff] %v587
                %v589 = vld [vmem:[%s467 + $0x3c0] sm:$0xff]
                %590 = vst [vmem:[%s468 + $0x1e0] sm:$0xff] %v589
                %v591 = vld [vmem:[%s467 + $0x3c8] sm:$0xff]
                %592 = vst [vmem:[%s468 + $0x1e8] sm:$0xff] %v591
                %v593 = vld [vmem:[%s467 + $0x3e0] sm:$0xff]
                %594 = vst [vmem:[%s468 + $0x1f0] sm:$0xff] %v593
                %v595 = vld [vmem:[%s467 + $0x3e8] sm:$0xff]
                %596 = vst [vmem:[%s468 + $0x1f8] sm:$0xff] %v595
                %v597 = vld [vmem:[%s467 + $0x400] sm:$0xff]
                %598 = vst [vmem:[%s468 + $0x200] sm:$0xff] %v597
                %v599 = vld [vmem:[%s467 + $0x408] sm:$0xff]
                %600 = vst [vmem:[%s468 + $0x208] sm:$0xff] %v599
                %v601 = vld [vmem:[%s467 + $0x420] sm:$0xff]
                %602 = vst [vmem:[%s468 + $0x210] sm:$0xff] %v601
                %v603 = vld [vmem:[%s467 + $0x428] sm:$0xff]
                %604 = vst [vmem:[%s468 + $0x218] sm:$0xff] %v603
                %v605 = vld [vmem:[%s467 + $0x440] sm:$0xff]
                %606 = vst [vmem:[%s468 + $0x220] sm:$0xff] %v605
                %v607 = vld [vmem:[%s467 + $0x448] sm:$0xff]
                %608 = vst [vmem:[%s468 + $0x228] sm:$0xff] %v607
                %v609 = vld [vmem:[%s467 + $0x460] sm:$0xff]
                %610 = vst [vmem:[%s468 + $0x230] sm:$0xff] %v609
                %v611 = vld [vmem:[%s467 + $0x468] sm:$0xff]
                %612 = vst [vmem:[%s468 + $0x238] sm:$0xff] %v611
                %v613 = vld [vmem:[%s467 + $0x480] sm:$0xff]
                %614 = vst [vmem:[%s468 + $0x240] sm:$0xff] %v613
                %v615 = vld [vmem:[%s467 + $0x488] sm:$0xff]
                %616 = vst [vmem:[%s468 + $0x248] sm:$0xff] %v615
                %v617 = vld [vmem:[%s467 + $0x4a0] sm:$0xff]
                %618 = vst [vmem:[%s468 + $0x250] sm:$0xff] %v617
                %v619 = vld [vmem:[%s467 + $0x4a8] sm:$0xff]
                %620 = vst [vmem:[%s468 + $0x258] sm:$0xff] %v619
                %v621 = vld [vmem:[%s467 + $0x4c0] sm:$0xff]
                %622 = vst [vmem:[%s468 + $0x260] sm:$0xff] %v621
                %v623 = vld [vmem:[%s467 + $0x4c8] sm:$0xff]
                %624 = vst [vmem:[%s468 + $0x268] sm:$0xff] %v623
                %v625 = vld [vmem:[%s467 + $0x4e0] sm:$0xff]
                %626 = vst [vmem:[%s468 + $0x270] sm:$0xff] %v625
                %v627 = vld [vmem:[%s467 + $0x4e8] sm:$0xff]
                %628 = vst [vmem:[%s468 + $0x278] sm:$0xff] %v627
                %v629 = vld [vmem:[%s467 + $0x500] sm:$0xff]
                %630 = vst [vmem:[%s468 + $0x280] sm:$0xff] %v629
                %v631 = vld [vmem:[%s467 + $0x508] sm:$0xff]
                %632 = vst [vmem:[%s468 + $0x288] sm:$0xff] %v631
                %v633 = vld [vmem:[%s467 + $0x520] sm:$0xff]
                %634 = vst [vmem:[%s468 + $0x290] sm:$0xff] %v633
                %v635 = vld [vmem:[%s467 + $0x528] sm:$0xff]
                %636 = vst [vmem:[%s468 + $0x298] sm:$0xff] %v635
                %v637 = vld [vmem:[%s467 + $0x540] sm:$0xff]
                %638 = vst [vmem:[%s468 + $0x2a0] sm:$0xff] %v637
                %v639 = vld [vmem:[%s467 + $0x548] sm:$0xff]
                %640 = vst [vmem:[%s468 + $0x2a8] sm:$0xff] %v639
                %v641 = vld [vmem:[%s467 + $0x560] sm:$0xff]
                %642 = vst [vmem:[%s468 + $0x2b0] sm:$0xff] %v641
                %v643 = vld [vmem:[%s467 + $0x568] sm:$0xff]
                %644 = vst [vmem:[%s468 + $0x2b8] sm:$0xff] %v643
                %v645 = vld [vmem:[%s467 + $0x580] sm:$0xff]
                %646 = vst [vmem:[%s468 + $0x2c0] sm:$0xff] %v645
                %v647 = vld [vmem:[%s467 + $0x588] sm:$0xff]
                %648 = vst [vmem:[%s468 + $0x2c8] sm:$0xff] %v647
                %v649 = vld [vmem:[%s467 + $0x5a0] sm:$0xff]
                %650 = vst [vmem:[%s468 + $0x2d0] sm:$0xff] %v649
                %v651 = vld [vmem:[%s467 + $0x5a8] sm:$0xff]
                %652 = vst [vmem:[%s468 + $0x2d8] sm:$0xff] %v651
                %v653 = vld [vmem:[%s467 + $0x5c0] sm:$0xff]
                %654 = vst [vmem:[%s468 + $0x2e0] sm:$0xff] %v653
                %v655 = vld [vmem:[%s467 + $0x5c8] sm:$0xff]
                %656 = vst [vmem:[%s468 + $0x2e8] sm:$0xff] %v655
                %v657 = vld [vmem:[%s467 + $0x5e0] sm:$0xff]
                %658 = vst [vmem:[%s468 + $0x2f0] sm:$0xff] %v657
                %v659 = vld [vmem:[%s467 + $0x5e8] sm:$0xff]
                %660 = vst [vmem:[%s468 + $0x2f8] sm:$0xff] %v659
              $region60: #{moe_layer_forward.1} parent=54 // loop_footer
                %s466 = sadd.s32 1, %s462
              $region61: #{moe_layer_forward.1} parent=54 // loop_footer_branch
                %461 = sbr.rel target = $region57
              $region62: #{moe_layer_forward.1} parent=54 // loop_exit
                _
            $region55: #{moe_layer_forward.1} parent=50 // pred_fallthru
              _
            // Predicated region
            $region63: #{moe_layer_forward.1} parent=50 // pred_check
              _
            $region64: #{moe_layer_forward.1} parent=50 // pred_check_branch
              %662 = sbr.rel target = $region66
            $region65: #{moe_layer_forward.1} parent=50 // pred_region
              _
            $region66: #{moe_layer_forward.1} parent=50 // pred_fallthru
              _
          $region51: #{moe_layer_forward.1} parent=46 // pred_fallthru
            _
          %663 = vnop
        $region47: #{moe_layer_forward.1} parent=15 // pred_fallthru
          _
        // Predicated region
        $region67: #{moe_layer_forward.1} parent=15 // pred_check
          %p664 = pneg %p137
        $region68: #{moe_layer_forward.1} parent=15 // pred_check_branch
          %666 = sbr.rel (%p664) target = $region70
        $region69: #{moe_layer_forward.1} parent=15 // pred_region
          %s667 = smul.u32 64, %s23
          %p668 = scmp.lt.s32.totalorder %s22, 4
          %s669 = scalar_select %p668, %s22, 4
          %p670 = scmp.lt.s32.totalorder %s667, 127
          %s671 = scalar_select %p670, %s667, 127
          %s672 = smul.addr %s671, 3
          %s673 = smul.addr %s669, 384
          %s674 = sadd.s32 %s672, %s673
          %s675 = smul.addr %s674, 4
          %s676 = scalar_lea.vmem %s3, %s675
          %s677 = smul.u32 64, %s23
        $region70: #{moe_layer_forward.1} parent=15 // pred_fallthru
          _
        // Predicated region
        $region71: #{moe_layer_forward.1} parent=15 // pred_check
          %p678 = pneg %p165
        $region72: #{moe_layer_forward.1} parent=15 // pred_check_branch
          %680 = sbr.rel (%p678) target = $region74
        $region73: #{moe_layer_forward.1} parent=15 // pred_region
          %s681 = smul.u32 16, %s21
          %p682 = scmp.lt.s32.totalorder %s22, 4
          %s683 = scalar_select %p682, %s22, 4
          %p684 = scmp.lt.s32.totalorder %s681, 31
          %s685 = scalar_select %p684, %s681, 31
          %s686 = smul.addr %s683, 32
          %s687 = sadd.s32 %s685, %s686
          %s688 = smul.addr %s687, 8
          %s689 = scalar_lea.vmem %s4, %s688
          %s690 = smul.u32 16, %s21
        $region74: #{moe_layer_forward.1} parent=15 // pred_fallthru
          _
      $region16: #{moe_layer_forward.1} parent=5 // pred_fallthru
        _
      %p691 = scmp.le.s32.totalorder 1, %s14
      %p692 = scmp.lt.s32.totalorder %s14, 21
      %p693 = pnand %p691, %p692
      %p694 = pneg %p693
      // Predicated region
      $region75: #{moe_layer_forward.1} parent=5 // pred_check
        _
      $region76: #{moe_layer_forward.1} parent=5 // pred_check_branch
        %696 = sbr.rel (%p693) target = $region78
      $region77: #{moe_layer_forward.1} parent=5 // pred_region
        %s697 = ssub.s32 %s14, 1
        %s698 = sand.u32 %s74, 1
        %s699 = sand.u32 %s74, 1
        %s700 = smul.addr %s699, 768
        %s701 = scalar_lea.vmem [#allocation3], %s700
        // Predicated region
        $region79: #{moe_layer_forward.1} parent=77 // pred_check
          %p702 = pneg %p87
        $region80: #{moe_layer_forward.1} parent=77 // pred_check_branch
          %704 = sbr.rel (%p702) target = $region82
        $region81: #{moe_layer_forward.1} parent=77 // pred_region
          _
        $region82: #{moe_layer_forward.1} parent=77 // pred_fallthru
          _
        %s705 = sand.u32 %s102, 1
        %s706 = sand.u32 %s102, 1
        %s707 = smul.addr %s706, 768
        %s708 = scalar_lea.vmem [#allocation4], %s707
        // Predicated region
        $region83: #{moe_layer_forward.1} parent=77 // pred_check
          %p709 = pneg %p115
        $region84: #{moe_layer_forward.1} parent=77 // pred_check_branch
          %711 = sbr.rel (%p709) target = $region86
        $region85: #{moe_layer_forward.1} parent=77 // pred_region
          _
        $region86: #{moe_layer_forward.1} parent=77 // pred_fallthru
          _
        %s712 = smul.u32 16, %s24
        %p713 = scmp.lt.s32.totalorder %s712, 31
        %s714 = scalar_select %p713, %s712, 31
        %s715 = smul.addr %s714, 3
        %s716 = smul.addr %s715, 4
        %s717 = scalar_lea.vmem %s0, %s716
        %p718 = pneg %p59
        %p719 = pneg %p56
        %s720 = sand.u32 %s74, 1
        %s721 = sand.u32 %s74, 1
        %s722 = smul.addr %s721, 768
        %s723 = scalar_lea.vmem [#allocation3], %s722
        %p724 = pneg %p87
        %p725 = pneg %p84
        %s726 = sand.u32 %s102, 1
        %s727 = sand.u32 %s102, 1
        %s728 = smul.addr %s727, 768
        %s729 = scalar_lea.vmem [#allocation4], %s728
        %p730 = pneg %p115
        %p731 = pneg %p112
        %s732 = smul.u32 64, %s26
        %p733 = scmp.lt.s32.totalorder %s25, 4
        %s734 = scalar_select %p733, %s25, 4
        %p735 = scmp.lt.s32.totalorder %s732, 127
        %s736 = scalar_select %p735, %s732, 127
        %s737 = smul.addr %s736, 3
        %s738 = smul.addr %s734, 384
        %s739 = sadd.s32 %s737, %s738
        %s740 = smul.addr %s739, 4
        %s741 = scalar_lea.vmem %s3, %s740
        %p742 = pneg %p143
        %p743 = pneg %p140
        %s744 = smul.u32 16, %s24
        %p745 = scmp.lt.s32.totalorder %s25, 4
        %s746 = scalar_select %p745, %s25, 4
        %p747 = scmp.lt.s32.totalorder %s744, 31
        %s748 = scalar_select %p747, %s744, 31
        %s749 = smul.addr %s746, 32
        %s750 = sadd.s32 %s748, %s749
        %s751 = smul.addr %s750, 8
        %s752 = scalar_lea.vmem %s4, %s751
        %p753 = pneg %p171
        %p754 = pneg %p168
        %p755 = pneg %p197
        %p756 = pneg %p194
        %s757 = sand.u32 %s184, 1
        %s758 = scalar_lea.sflag [#allocation6], %s757
        %s759 = sand.u32 %s184, 1
        %s760 = smul.addr %s759, 192
        %s761 = scalar_lea.vmem [#allocation5], %s760
        %s762 = smul.u32 16, %s24
        %p763 = scmp.lt.s32.totalorder %s762, 31
        %s764 = scalar_select %p763, %s762, 31
        %s765 = smul.addr %s764, 3
        %s766 = smul.addr %s765, 4
        %s767 = scalar_lea.vmem %s0, %s766
        %s768 = smul.u32 16, %s24
        %s769 = smul.u32 4, %s26
        %s770 = smul.u32 4, %s26
        %s771 = smul.u32 64, %s26
        %p772 = scmp.lt.s32.totalorder %s25, 4
        %s773 = scalar_select %p772, %s25, 4
        %p774 = scmp.lt.s32.totalorder %s771, 127
        %s775 = scalar_select %p774, %s771, 127
        %s776 = smul.addr %s775, 3
        %s777 = smul.addr %s773, 384
        %s778 = sadd.s32 %s776, %s777
        %s779 = smul.addr %s778, 4
        %s780 = scalar_lea.vmem %s3, %s779
        %s781 = smul.u32 64, %s26
        %s782 = smul.u32 16, %s24
        %p783 = scmp.lt.s32.totalorder %s25, 4
        %s784 = scalar_select %p783, %s25, 4
        %p785 = scmp.lt.s32.totalorder %s782, 31
        %s786 = scalar_select %p785, %s782, 31
        %s787 = smul.addr %s784, 32
        %s788 = sadd.s32 %s786, %s787
        %s789 = smul.addr %s788, 8
        %s790 = scalar_lea.vmem %s4, %s789
        %s791 = smul.u32 16, %s24
        %s792 = smul.u32 16, %s24
        %p794 = scmp.eq.s32.totalorder %s25, 0
        %p795 = scmp.eq.s32.totalorder %s26, 0
        %p796 = pnand %p794, %p795
        %p797 = pneg %p796
        // Predicated region
        $region87: #{moe_layer_forward.1} parent=77 // pred_check
          _
        $region88: #{moe_layer_forward.1} parent=77 // pred_check_branch
          %799 = sbr.rel (%p796) target = $region90
        $region89: #{moe_layer_forward.1} parent=77 // pred_region
          %800 = vst [vmem:[#allocation2] sm:$0xff] 0.0
          %801 = vst [vmem:[#allocation2 + $0x8] sm:$0xff] 0.0
          %802 = vst [vmem:[#allocation2 + $0x10] sm:$0xff] 0.0
          %803 = vst [vmem:[#allocation2 + $0x18] sm:$0xff] 0.0
          %804 = vst [vmem:[#allocation2 + $0x20] sm:$0xff] 0.0
          %805 = vst [vmem:[#allocation2 + $0x28] sm:$0xff] 0.0
          %806 = vst [vmem:[#allocation2 + $0x30] sm:$0xff] 0.0
          %807 = vst [vmem:[#allocation2 + $0x38] sm:$0xff] 0.0
          %808 = vst [vmem:[#allocation2 + $0x40] sm:$0xff] 0.0
          %809 = vst [vmem:[#allocation2 + $0x48] sm:$0xff] 0.0
          %810 = vst [vmem:[#allocation2 + $0x50] sm:$0xff] 0.0
          %811 = vst [vmem:[#allocation2 + $0x58] sm:$0xff] 0.0
          %812 = vst [vmem:[#allocation2 + $0x60] sm:$0xff] 0.0
          %813 = vst [vmem:[#allocation2 + $0x68] sm:$0xff] 0.0
          %814 = vst [vmem:[#allocation2 + $0x70] sm:$0xff] 0.0
          %815 = vst [vmem:[#allocation2 + $0x78] sm:$0xff] 0.0
          %816 = vst [vmem:[#allocation2 + $0x80] sm:$0xff] 0.0
          %817 = vst [vmem:[#allocation2 + $0x88] sm:$0xff] 0.0
          %818 = vst [vmem:[#allocation2 + $0x90] sm:$0xff] 0.0
          %819 = vst [vmem:[#allocation2 + $0x98] sm:$0xff] 0.0
          %820 = vst [vmem:[#allocation2 + $0xa0] sm:$0xff] 0.0
          %821 = vst [vmem:[#allocation2 + $0xa8] sm:$0xff] 0.0
          %822 = vst [vmem:[#allocation2 + $0xb0] sm:$0xff] 0.0
          %823 = vst [vmem:[#allocation2 + $0xb8] sm:$0xff] 0.0
          %824 = vst [vmem:[#allocation2 + $0xc0] sm:$0xff] 0.0
          %825 = vst [vmem:[#allocation2 + $0xc8] sm:$0xff] 0.0
          %826 = vst [vmem:[#allocation2 + $0xd0] sm:$0xff] 0.0
          %827 = vst [vmem:[#allocation2 + $0xd8] sm:$0xff] 0.0
          %828 = vst [vmem:[#allocation2 + $0xe0] sm:$0xff] 0.0
          %829 = vst [vmem:[#allocation2 + $0xe8] sm:$0xff] 0.0
          %830 = vst [vmem:[#allocation2 + $0xf0] sm:$0xff] 0.0
          %831 = vst [vmem:[#allocation2 + $0xf8] sm:$0xff] 0.0
          %832 = vst [vmem:[#allocation2 + $0x100] sm:$0xff] 0.0
          %833 = vst [vmem:[#allocation2 + $0x108] sm:$0xff] 0.0
          %834 = vst [vmem:[#allocation2 + $0x110] sm:$0xff] 0.0
          %835 = vst [vmem:[#allocation2 + $0x118] sm:$0xff] 0.0
          %836 = vst [vmem:[#allocation2 + $0x120] sm:$0xff] 0.0
          %837 = vst [vmem:[#allocation2 + $0x128] sm:$0xff] 0.0
          %838 = vst [vmem:[#allocation2 + $0x130] sm:$0xff] 0.0
          %839 = vst [vmem:[#allocation2 + $0x138] sm:$0xff] 0.0
          %840 = vst [vmem:[#allocation2 + $0x140] sm:$0xff] 0.0
          %841 = vst [vmem:[#allocation2 + $0x148] sm:$0xff] 0.0
          %842 = vst [vmem:[#allocation2 + $0x150] sm:$0xff] 0.0
          %843 = vst [vmem:[#allocation2 + $0x158] sm:$0xff] 0.0
          %844 = vst [vmem:[#allocation2 + $0x160] sm:$0xff] 0.0
          %845 = vst [vmem:[#allocation2 + $0x168] sm:$0xff] 0.0
          %846 = vst [vmem:[#allocation2 + $0x170] sm:$0xff] 0.0
          %847 = vst [vmem:[#allocation2 + $0x178] sm:$0xff] 0.0
        $region90: #{moe_layer_forward.1} parent=77 // pred_fallthru
          _
        %v848 = vld [vmem:[%s767] sm:$0xff]
        %v849 = vld [vmem:[%s767 + $0x8] sm:$0xf]
        %v850 = vld [vmem:[%s767 + $0xc] sm:$0xff]
        %v851 = vld [vmem:[%s767 + $0x14] sm:$0xf]
        %v852 = vld [vmem:[%s767 + $0x18] sm:$0xff]
        %v853 = vld [vmem:[%s767 + $0x20] sm:$0xf]
        %v854 = vld [vmem:[%s767 + $0x24] sm:$0xff]
        %v855 = vld [vmem:[%s767 + $0x2c] sm:$0xf]
        %v856 = vld [vmem:[%s767 + $0x30] sm:$0xff]
        %v857 = vld [vmem:[%s767 + $0x38] sm:$0xf]
        %v858 = vld [vmem:[%s767 + $0x3c] sm:$0xff]
        %v859 = vld [vmem:[%s767 + $0x44] sm:$0xf]
        %v860 = vld [vmem:[%s767 + $0x48] sm:$0xff]
        %v861 = vld [vmem:[%s767 + $0x50] sm:$0xf]
        %v862 = vld [vmem:[%s767 + $0x54] sm:$0xff]
        %v863 = vld [vmem:[%s767 + $0x5c] sm:$0xf]
        %v864 = vld [vmem:[%s767 + $0x60] sm:$0xff]
        %v865 = vld [vmem:[%s767 + $0x68] sm:$0xf]
        %v866 = vld [vmem:[%s767 + $0x6c] sm:$0xff]
        %v867 = vld [vmem:[%s767 + $0x74] sm:$0xf]
        %v868 = vld [vmem:[%s767 + $0x78] sm:$0xff]
        %v869 = vld [vmem:[%s767 + $0x80] sm:$0xf]
        %v870 = vld [vmem:[%s767 + $0x84] sm:$0xff]
        %v871 = vld [vmem:[%s767 + $0x8c] sm:$0xf]
        %v872 = vld [vmem:[%s767 + $0x90] sm:$0xff]
        %v873 = vld [vmem:[%s767 + $0x98] sm:$0xf]
        %v874 = vld [vmem:[%s767 + $0x9c] sm:$0xff]
        %v875 = vld [vmem:[%s767 + $0xa4] sm:$0xf]
        %v876 = vld [vmem:[%s767 + $0xa8] sm:$0xff]
        %v877 = vld [vmem:[%s767 + $0xb0] sm:$0xf]
        %v878 = vld [vmem:[%s767 + $0xb4] sm:$0xff]
        %v879 = vld [vmem:[%s767 + $0xbc] sm:$0xf]
        %v880 = vld [vmem:[%s701] sm:$0xff]
        %v881 = vld [vmem:[%s701 + $0x8] sm:$0xff]
        %v882 = vld [vmem:[%s701 + $0x10] sm:$0xff]
        %v883 = vld [vmem:[%s701 + $0x18] sm:$0xff]
        %v884 = vld [vmem:[%s701 + $0x20] sm:$0xff]
        %v885 = vld [vmem:[%s701 + $0x28] sm:$0xff]
        %v886 = vld [vmem:[%s701 + $0x30] sm:$0xff]
        %v887 = vld [vmem:[%s701 + $0x38] sm:$0xff]
        %v888 = vld [vmem:[%s701 + $0x40] sm:$0xff]
        %v889 = vld [vmem:[%s701 + $0x48] sm:$0xff]
        %v890 = vld [vmem:[%s701 + $0x50] sm:$0xff]
        %v891 = vld [vmem:[%s701 + $0x58] sm:$0xff]
        %v892 = vld [vmem:[%s701 + $0x60] sm:$0xff]
        %v893 = vld [vmem:[%s701 + $0x68] sm:$0xff]
        %v894 = vld [vmem:[%s701 + $0x70] sm:$0xff]
        %v895 = vld [vmem:[%s701 + $0x78] sm:$0xff]
        %v896 = vld [vmem:[%s701 + $0x80] sm:$0xff]
        %v897 = vld [vmem:[%s701 + $0x88] sm:$0xff]
        %v898 = vld [vmem:[%s701 + $0x90] sm:$0xff]
        %v899 = vld [vmem:[%s701 + $0x98] sm:$0xff]
        %v900 = vld [vmem:[%s701 + $0xa0] sm:$0xff]
        %v901 = vld [vmem:[%s701 + $0xa8] sm:$0xff]
        %v902 = vld [vmem:[%s701 + $0xb0] sm:$0xff]
        %v903 = vld [vmem:[%s701 + $0xb8] sm:$0xff]
        %v904 = vld [vmem:[%s701 + $0xc0] sm:$0xff]
        %v905 = vld [vmem:[%s701 + $0xc8] sm:$0xff]
        %v906 = vld [vmem:[%s701 + $0xd0] sm:$0xff]
        %v907 = vld [vmem:[%s701 + $0xd8] sm:$0xff]
        %v908 = vld [vmem:[%s701 + $0xe0] sm:$0xff]
        %v909 = vld [vmem:[%s701 + $0xe8] sm:$0xff]
        %v910 = vld [vmem:[%s701 + $0xf0] sm:$0xff]
        %v911 = vld [vmem:[%s701 + $0xf8] sm:$0xff]
        %v912 = vld [vmem:[%s701 + $0x100] sm:$0xff]
        %v913 = vld [vmem:[%s701 + $0x108] sm:$0xff]
        %v914 = vld [vmem:[%s701 + $0x110] sm:$0xff]
        %v915 = vld [vmem:[%s701 + $0x118] sm:$0xff]
        %v916 = vld [vmem:[%s701 + $0x120] sm:$0xff]
        %v917 = vld [vmem:[%s701 + $0x128] sm:$0xff]
        %v918 = vld [vmem:[%s701 + $0x130] sm:$0xff]
        %v919 = vld [vmem:[%s701 + $0x138] sm:$0xff]
        %v920 = vld [vmem:[%s701 + $0x140] sm:$0xff]
        %v921 = vld [vmem:[%s701 + $0x148] sm:$0xff]
        %v922 = vld [vmem:[%s701 + $0x150] sm:$0xff]
        %v923 = vld [vmem:[%s701 + $0x158] sm:$0xff]
        %v924 = vld [vmem:[%s701 + $0x160] sm:$0xff]
        %v925 = vld [vmem:[%s701 + $0x168] sm:$0xff]
        %v926 = vld [vmem:[%s701 + $0x170] sm:$0xff]
        %v927 = vld [vmem:[%s701 + $0x178] sm:$0xff]
        %v928 = vld [vmem:[%s701 + $0x180] sm:$0xff]
        %v929 = vld [vmem:[%s701 + $0x188] sm:$0xff]
        %v930 = vld [vmem:[%s701 + $0x190] sm:$0xff]
        %v931 = vld [vmem:[%s701 + $0x198] sm:$0xff]
        %v932 = vld [vmem:[%s701 + $0x1a0] sm:$0xff]
        %v933 = vld [vmem:[%s701 + $0x1a8] sm:$0xff]
        %v934 = vld [vmem:[%s701 + $0x1b0] sm:$0xff]
        %v935 = vld [vmem:[%s701 + $0x1b8] sm:$0xff]
        %v936 = vld [vmem:[%s701 + $0x1c0] sm:$0xff]
        %v937 = vld [vmem:[%s701 + $0x1c8] sm:$0xff]
        %v938 = vld [vmem:[%s701 + $0x1d0] sm:$0xff]
        %v939 = vld [vmem:[%s701 + $0x1d8] sm:$0xff]
        %v940 = vld [vmem:[%s701 + $0x1e0] sm:$0xff]
        %v941 = vld [vmem:[%s701 + $0x1e8] sm:$0xff]
        %v942 = vld [vmem:[%s701 + $0x1f0] sm:$0xff]
        %v943 = vld [vmem:[%s701 + $0x1f8] sm:$0xff]
        %v944 = vld [vmem:[%s701 + $0x200] sm:$0xff]
        %v945 = vld [vmem:[%s701 + $0x208] sm:$0xff]
        %v946 = vld [vmem:[%s701 + $0x210] sm:$0xff]
        %v947 = vld [vmem:[%s701 + $0x218] sm:$0xff]
        %v948 = vld [vmem:[%s701 + $0x220] sm:$0xff]
        %v949 = vld [vmem:[%s701 + $0x228] sm:$0xff]
        %v950 = vld [vmem:[%s701 + $0x230] sm:$0xff]
        %v951 = vld [vmem:[%s701 + $0x238] sm:$0xff]
        %v952 = vld [vmem:[%s701 + $0x240] sm:$0xff]
        %v953 = vld [vmem:[%s701 + $0x248] sm:$0xff]
        %v954 = vld [vmem:[%s701 + $0x250] sm:$0xff]
        %v955 = vld [vmem:[%s701 + $0x258] sm:$0xff]
        %v956 = vld [vmem:[%s701 + $0x260] sm:$0xff]
        %v957 = vld [vmem:[%s701 + $0x268] sm:$0xff]
        %v958 = vld [vmem:[%s701 + $0x270] sm:$0xff]
        %v959 = vld [vmem:[%s701 + $0x278] sm:$0xff]
        %v960 = vld [vmem:[%s701 + $0x280] sm:$0xff]
        %v961 = vld [vmem:[%s701 + $0x288] sm:$0xff]
        %v962 = vld [vmem:[%s701 + $0x290] sm:$0xff]
        %v963 = vld [vmem:[%s701 + $0x298] sm:$0xff]
        %v964 = vld [vmem:[%s701 + $0x2a0] sm:$0xff]
        %v965 = vld [vmem:[%s701 + $0x2a8] sm:$0xff]
        %v966 = vld [vmem:[%s701 + $0x2b0] sm:$0xff]
        %v967 = vld [vmem:[%s701 + $0x2b8] sm:$0xff]
        %v968 = vld [vmem:[%s701 + $0x2c0] sm:$0xff]
        %v969 = vld [vmem:[%s701 + $0x2c8] sm:$0xff]
        %v970 = vld [vmem:[%s701 + $0x2d0] sm:$0xff]
        %v971 = vld [vmem:[%s701 + $0x2d8] sm:$0xff]
        %v972 = vld [vmem:[%s701 + $0x2e0] sm:$0xff]
        %v973 = vld [vmem:[%s701 + $0x2e8] sm:$0xff]
        %v974 = vld [vmem:[%s701 + $0x2f0] sm:$0xff]
        %v975 = vld [vmem:[%s701 + $0x2f8] sm:$0xff]
        %v1008 = vunpack.c.l.b16 %v848
        %v1009 = vunpack.c.h.b16 %v848
        %v1010 = vunpack.c.l.b16 %v849
        %v1011 = vunpack.c.l.b16 %v850
        %v1012 = vunpack.c.h.b16 %v850
        %v1013 = vunpack.c.l.b16 %v851
        %v1014 = vunpack.c.l.b16 %v852
        %v1015 = vunpack.c.h.b16 %v852
        %v1016 = vunpack.c.l.b16 %v853
        %v1017 = vunpack.c.l.b16 %v854
        %v1018 = vunpack.c.h.b16 %v854
        %v1019 = vunpack.c.l.b16 %v855
        %v1020 = vunpack.c.l.b16 %v856
        %v1021 = vunpack.c.h.b16 %v856
        %v1022 = vunpack.c.l.b16 %v857
        %v1023 = vunpack.c.l.b16 %v858
        %v1024 = vunpack.c.h.b16 %v858
        %v1025 = vunpack.c.l.b16 %v859
        %v1026 = vunpack.c.l.b16 %v860
        %v1027 = vunpack.c.h.b16 %v860
        %v1028 = vunpack.c.l.b16 %v861
        %v1029 = vunpack.c.l.b16 %v862
        %v1030 = vunpack.c.h.b16 %v862
        %v1031 = vunpack.c.l.b16 %v863
        %v1032 = vunpack.c.l.b16 %v864
        %v1033 = vunpack.c.h.b16 %v864
        %v1034 = vunpack.c.l.b16 %v865
        %v1035 = vunpack.c.l.b16 %v866
        %v1036 = vunpack.c.h.b16 %v866
        %v1037 = vunpack.c.l.b16 %v867
        %v1038 = vunpack.c.l.b16 %v868
        %v1039 = vunpack.c.h.b16 %v868
        %v1040 = vunpack.c.l.b16 %v869
        %v1041 = vunpack.c.l.b16 %v870
        %v1042 = vunpack.c.h.b16 %v870
        %v1043 = vunpack.c.l.b16 %v871
        %v1044 = vunpack.c.l.b16 %v872
        %v1045 = vunpack.c.h.b16 %v872
        %v1046 = vunpack.c.l.b16 %v873
        %v1047 = vunpack.c.l.b16 %v874
        %v1048 = vunpack.c.h.b16 %v874
        %v1049 = vunpack.c.l.b16 %v875
        %v1050 = vunpack.c.l.b16 %v876
        %v1051 = vunpack.c.h.b16 %v876
        %v1052 = vunpack.c.l.b16 %v877
        %v1053 = vunpack.c.l.b16 %v878
        %v1054 = vunpack.c.h.b16 %v878
        %v1055 = vunpack.c.l.b16 %v879
        %v1056 = vpack.c.b16 %v1011, %v1008
        %v1057 = vpack.c.b16 %v1012, %v1009
        %v1058 = vpack.c.b16 %v1013, %v1010
        %v1059 = vpack.c.b16 %v1017, %v1014
        %v1060 = vpack.c.b16 %v1018, %v1015
        %v1061 = vpack.c.b16 %v1019, %v1016
        %v1062 = vpack.c.b16 %v1023, %v1020
        %v1063 = vpack.c.b16 %v1024, %v1021
        %v1064 = vpack.c.b16 %v1025, %v1022
        %v1065 = vpack.c.b16 %v1029, %v1026
        %v1066 = vpack.c.b16 %v1030, %v1027
        %v1067 = vpack.c.b16 %v1031, %v1028
        %v1068 = vpack.c.b16 %v1035, %v1032
        %v1069 = vpack.c.b16 %v1036, %v1033
        %v1070 = vpack.c.b16 %v1037, %v1034
        %v1071 = vpack.c.b16 %v1041, %v1038
        %v1072 = vpack.c.b16 %v1042, %v1039
        %v1073 = vpack.c.b16 %v1043, %v1040
        %v1074 = vpack.c.b16 %v1047, %v1044
        %v1075 = vpack.c.b16 %v1048, %v1045
        %v1076 = vpack.c.b16 %v1049, %v1046
        %v1077 = vpack.c.b16 %v1053, %v1050
        %v1078 = vpack.c.b16 %v1054, %v1051
        %v1079 = vpack.c.b16 %v1055, %v1052
        %v1200 = vunpack.c.l.b16 %v880
        %v1201 = vunpack.c.h.b16 %v880
        %v1202 = vunpack.c.l.b16 %v881
        %v1203 = vunpack.c.h.b16 %v881
        %v1204 = vunpack.c.l.b16 %v882
        %v1205 = vunpack.c.h.b16 %v882
        %v1206 = vunpack.c.l.b16 %v883
        %v1207 = vunpack.c.h.b16 %v883
        %v1208 = vunpack.c.l.b16 %v884
        %v1209 = vunpack.c.h.b16 %v884
        %v1210 = vunpack.c.l.b16 %v885
        %v1211 = vunpack.c.h.b16 %v885
        %v1212 = vunpack.c.l.b16 %v886
        %v1213 = vunpack.c.h.b16 %v886
        %v1214 = vunpack.c.l.b16 %v887
        %v1215 = vunpack.c.h.b16 %v887
        %v1216 = vunpack.c.l.b16 %v888
        %v1217 = vunpack.c.h.b16 %v888
        %v1218 = vunpack.c.l.b16 %v889
        %v1219 = vunpack.c.h.b16 %v889
        %v1220 = vunpack.c.l.b16 %v890
        %v1221 = vunpack.c.h.b16 %v890
        %v1222 = vunpack.c.l.b16 %v891
        %v1223 = vunpack.c.h.b16 %v891
        %v1224 = vunpack.c.l.b16 %v892
        %v1225 = vunpack.c.h.b16 %v892
        %v1226 = vunpack.c.l.b16 %v893
        %v1227 = vunpack.c.h.b16 %v893
        %v1228 = vunpack.c.l.b16 %v894
        %v1229 = vunpack.c.h.b16 %v894
        %v1230 = vunpack.c.l.b16 %v895
        %v1231 = vunpack.c.h.b16 %v895
        %v1232 = vunpack.c.l.b16 %v896
        %v1233 = vunpack.c.h.b16 %v896
        %v1234 = vunpack.c.l.b16 %v897
        %v1235 = vunpack.c.h.b16 %v897
        %v1236 = vunpack.c.l.b16 %v898
        %v1237 = vunpack.c.h.b16 %v898
        %v1238 = vunpack.c.l.b16 %v899
        %v1239 = vunpack.c.h.b16 %v899
        %v1240 = vunpack.c.l.b16 %v900
        %v1241 = vunpack.c.h.b16 %v900
        %v1242 = vunpack.c.l.b16 %v901
        %v1243 = vunpack.c.h.b16 %v901
        %v1244 = vunpack.c.l.b16 %v902
        %v1245 = vunpack.c.h.b16 %v902
        %v1246 = vunpack.c.l.b16 %v903
        %v1247 = vunpack.c.h.b16 %v903
        %v1248 = vunpack.c.l.b16 %v904
        %v1249 = vunpack.c.h.b16 %v904
        %v1250 = vunpack.c.l.b16 %v905
        %v1251 = vunpack.c.h.b16 %v905
        %v1252 = vunpack.c.l.b16 %v906
        %v1253 = vunpack.c.h.b16 %v906
        %v1254 = vunpack.c.l.b16 %v907
        %v1255 = vunpack.c.h.b16 %v907
        %v1256 = vunpack.c.l.b16 %v908
        %v1257 = vunpack.c.h.b16 %v908
        %v1258 = vunpack.c.l.b16 %v909
        %v1259 = vunpack.c.h.b16 %v909
        %v1260 = vunpack.c.l.b16 %v910
        %v1261 = vunpack.c.h.b16 %v910
        %v1262 = vunpack.c.l.b16 %v911
        %v1263 = vunpack.c.h.b16 %v911
        %v1264 = vunpack.c.l.b16 %v912
        %v1265 = vunpack.c.h.b16 %v912
        %v1266 = vunpack.c.l.b16 %v913
        %v1267 = vunpack.c.h.b16 %v913
        %v1268 = vunpack.c.l.b16 %v914
        %v1269 = vunpack.c.h.b16 %v914
        %v1270 = vunpack.c.l.b16 %v915
        %v1271 = vunpack.c.h.b16 %v915
        %v1272 = vunpack.c.l.b16 %v916
        %v1273 = vunpack.c.h.b16 %v916
        %v1274 = vunpack.c.l.b16 %v917
        %v1275 = vunpack.c.h.b16 %v917
        %v1276 = vunpack.c.l.b16 %v918
        %v1277 = vunpack.c.h.b16 %v918
        %v1278 = vunpack.c.l.b16 %v919
        %v1279 = vunpack.c.h.b16 %v919
        %v1280 = vunpack.c.l.b16 %v920
        %v1281 = vunpack.c.h.b16 %v920
        %v1282 = vunpack.c.l.b16 %v921
        %v1283 = vunpack.c.h.b16 %v921
        %v1284 = vunpack.c.l.b16 %v922
        %v1285 = vunpack.c.h.b16 %v922
        %v1286 = vunpack.c.l.b16 %v923
        %v1287 = vunpack.c.h.b16 %v923
        %v1288 = vunpack.c.l.b16 %v924
        %v1289 = vunpack.c.h.b16 %v924
        %v1290 = vunpack.c.l.b16 %v925
        %v1291 = vunpack.c.h.b16 %v925
        %v1292 = vunpack.c.l.b16 %v926
        %v1293 = vunpack.c.h.b16 %v926
        %v1294 = vunpack.c.l.b16 %v927
        %v1295 = vunpack.c.h.b16 %v927
        %v1296 = vunpack.c.l.b16 %v928
        %v1297 = vunpack.c.h.b16 %v928
        %v1298 = vunpack.c.l.b16 %v929
        %v1299 = vunpack.c.h.b16 %v929
        %v1300 = vunpack.c.l.b16 %v930
        %v1301 = vunpack.c.h.b16 %v930
        %v1302 = vunpack.c.l.b16 %v931
        %v1303 = vunpack.c.h.b16 %v931
        %v1304 = vunpack.c.l.b16 %v932
        %v1305 = vunpack.c.h.b16 %v932
        %v1306 = vunpack.c.l.b16 %v933
        %v1307 = vunpack.c.h.b16 %v933
        %v1308 = vunpack.c.l.b16 %v934
        %v1309 = vunpack.c.h.b16 %v934
        %v1310 = vunpack.c.l.b16 %v935
        %v1311 = vunpack.c.h.b16 %v935
        %v1312 = vunpack.c.l.b16 %v936
        %v1313 = vunpack.c.h.b16 %v936
        %v1314 = vunpack.c.l.b16 %v937
        %v1315 = vunpack.c.h.b16 %v937
        %v1316 = vunpack.c.l.b16 %v938
        %v1317 = vunpack.c.h.b16 %v938
        %v1318 = vunpack.c.l.b16 %v939
        %v1319 = vunpack.c.h.b16 %v939
        %v1320 = vunpack.c.l.b16 %v940
        %v1321 = vunpack.c.h.b16 %v940
        %v1322 = vunpack.c.l.b16 %v941
        %v1323 = vunpack.c.h.b16 %v941
        %v1324 = vunpack.c.l.b16 %v942
        %v1325 = vunpack.c.h.b16 %v942
        %v1326 = vunpack.c.l.b16 %v943
        %v1327 = vunpack.c.h.b16 %v943
        %v1328 = vunpack.c.l.b16 %v944
        %v1329 = vunpack.c.h.b16 %v944
        %v1330 = vunpack.c.l.b16 %v945
        %v1331 = vunpack.c.h.b16 %v945
        %v1332 = vunpack.c.l.b16 %v946
        %v1333 = vunpack.c.h.b16 %v946
        %v1334 = vunpack.c.l.b16 %v947
        %v1335 = vunpack.c.h.b16 %v947
        %v1336 = vunpack.c.l.b16 %v948
        %v1337 = vunpack.c.h.b16 %v948
        %v1338 = vunpack.c.l.b16 %v949
        %v1339 = vunpack.c.h.b16 %v949
        %v1340 = vunpack.c.l.b16 %v950
        %v1341 = vunpack.c.h.b16 %v950
        %v1342 = vunpack.c.l.b16 %v951
        %v1343 = vunpack.c.h.b16 %v951
        %v1344 = vunpack.c.l.b16 %v952
        %v1345 = vunpack.c.h.b16 %v952
        %v1346 = vunpack.c.l.b16 %v953
        %v1347 = vunpack.c.h.b16 %v953
        %v1348 = vunpack.c.l.b16 %v954
        %v1349 = vunpack.c.h.b16 %v954
        %v1350 = vunpack.c.l.b16 %v955
        %v1351 = vunpack.c.h.b16 %v955
        %v1352 = vunpack.c.l.b16 %v956
        %v1353 = vunpack.c.h.b16 %v956
        %v1354 = vunpack.c.l.b16 %v957
        %v1355 = vunpack.c.h.b16 %v957
        %v1356 = vunpack.c.l.b16 %v958
        %v1357 = vunpack.c.h.b16 %v958
        %v1358 = vunpack.c.l.b16 %v959
        %v1359 = vunpack.c.h.b16 %v959
        %v1360 = vunpack.c.l.b16 %v960
        %v1361 = vunpack.c.h.b16 %v960
        %v1362 = vunpack.c.l.b16 %v961
        %v1363 = vunpack.c.h.b16 %v961
        %v1364 = vunpack.c.l.b16 %v962
        %v1365 = vunpack.c.h.b16 %v962
        %v1366 = vunpack.c.l.b16 %v963
        %v1367 = vunpack.c.h.b16 %v963
        %v1368 = vunpack.c.l.b16 %v964
        %v1369 = vunpack.c.h.b16 %v964
        %v1370 = vunpack.c.l.b16 %v965
        %v1371 = vunpack.c.h.b16 %v965
        %v1372 = vunpack.c.l.b16 %v966
        %v1373 = vunpack.c.h.b16 %v966
        %v1374 = vunpack.c.l.b16 %v967
        %v1375 = vunpack.c.h.b16 %v967
        %v1376 = vunpack.c.l.b16 %v968
        %v1377 = vunpack.c.h.b16 %v968
        %v1378 = vunpack.c.l.b16 %v969
        %v1379 = vunpack.c.h.b16 %v969
        %v1380 = vunpack.c.l.b16 %v970
        %v1381 = vunpack.c.h.b16 %v970
        %v1382 = vunpack.c.l.b16 %v971
        %v1383 = vunpack.c.h.b16 %v971
        %v1384 = vunpack.c.l.b16 %v972
        %v1385 = vunpack.c.h.b16 %v972
        %v1386 = vunpack.c.l.b16 %v973
        %v1387 = vunpack.c.h.b16 %v973
        %v1388 = vunpack.c.l.b16 %v974
        %v1389 = vunpack.c.h.b16 %v974
        %v1390 = vunpack.c.l.b16 %v975
        %v1391 = vunpack.c.h.b16 %v975
        %v1392 = vpack.c.b16 %v1204, %v1200
        %v1393 = vpack.c.b16 %v1205, %v1201
        %v1394 = vpack.c.b16 %v1206, %v1202
        %v1395 = vpack.c.b16 %v1207, %v1203
        %v1396 = vpack.c.b16 %v1212, %v1208
        %v1397 = vpack.c.b16 %v1213, %v1209
        %v1398 = vpack.c.b16 %v1214, %v1210
        %v1399 = vpack.c.b16 %v1215, %v1211
        %v1400 = vpack.c.b16 %v1220, %v1216
        %v1401 = vpack.c.b16 %v1221, %v1217
        %v1402 = vpack.c.b16 %v1222, %v1218
        %v1403 = vpack.c.b16 %v1223, %v1219
        %v1404 = vpack.c.b16 %v1228, %v1224
        %v1405 = vpack.c.b16 %v1229, %v1225
        %v1406 = vpack.c.b16 %v1230, %v1226
        %v1407 = vpack.c.b16 %v1231, %v1227
        %v1408 = vpack.c.b16 %v1236, %v1232
        %v1409 = vpack.c.b16 %v1237, %v1233
        %v1410 = vpack.c.b16 %v1238, %v1234
        %v1411 = vpack.c.b16 %v1239, %v1235
        %v1412 = vpack.c.b16 %v1244, %v1240
        %v1413 = vpack.c.b16 %v1245, %v1241
        %v1414 = vpack.c.b16 %v1246, %v1242
        %v1415 = vpack.c.b16 %v1247, %v1243
        %v1416 = vpack.c.b16 %v1252, %v1248
        %v1417 = vpack.c.b16 %v1253, %v1249
        %v1418 = vpack.c.b16 %v1254, %v1250
        %v1419 = vpack.c.b16 %v1255, %v1251
        %v1420 = vpack.c.b16 %v1260, %v1256
        %v1421 = vpack.c.b16 %v1261, %v1257
        %v1422 = vpack.c.b16 %v1262, %v1258
        %v1423 = vpack.c.b16 %v1263, %v1259
        %v1424 = vpack.c.b16 %v1268, %v1264
        %v1425 = vpack.c.b16 %v1269, %v1265
        %v1426 = vpack.c.b16 %v1270, %v1266
        %v1427 = vpack.c.b16 %v1271, %v1267
        %v1428 = vpack.c.b16 %v1276, %v1272
        %v1429 = vpack.c.b16 %v1277, %v1273
        %v1430 = vpack.c.b16 %v1278, %v1274
        %v1431 = vpack.c.b16 %v1279, %v1275
        %v1432 = vpack.c.b16 %v1284, %v1280
        %v1433 = vpack.c.b16 %v1285, %v1281
        %v1434 = vpack.c.b16 %v1286, %v1282
        %v1435 = vpack.c.b16 %v1287, %v1283
        %v1436 = vpack.c.b16 %v1292, %v1288
        %v1437 = vpack.c.b16 %v1293, %v1289
        %v1438 = vpack.c.b16 %v1294, %v1290
        %v1439 = vpack.c.b16 %v1295, %v1291
        %v1440 = vpack.c.b16 %v1300, %v1296
        %v1441 = vpack.c.b16 %v1301, %v1297
        %v1442 = vpack.c.b16 %v1302, %v1298
        %v1443 = vpack.c.b16 %v1303, %v1299
        %v1444 = vpack.c.b16 %v1308, %v1304
        %v1445 = vpack.c.b16 %v1309, %v1305
        %v1446 = vpack.c.b16 %v1310, %v1306
        %v1447 = vpack.c.b16 %v1311, %v1307
        %v1448 = vpack.c.b16 %v1316, %v1312
        %v1449 = vpack.c.b16 %v1317, %v1313
        %v1450 = vpack.c.b16 %v1318, %v1314
        %v1451 = vpack.c.b16 %v1319, %v1315
        %v1452 = vpack.c.b16 %v1324, %v1320
        %v1453 = vpack.c.b16 %v1325, %v1321
        %v1454 = vpack.c.b16 %v1326, %v1322
        %v1455 = vpack.c.b16 %v1327, %v1323
        %v1456 = vpack.c.b16 %v1332, %v1328
        %v1457 = vpack.c.b16 %v1333, %v1329
        %v1458 = vpack.c.b16 %v1334, %v1330
        %v1459 = vpack.c.b16 %v1335, %v1331
        %v1460 = vpack.c.b16 %v1340, %v1336
        %v1461 = vpack.c.b16 %v1341, %v1337
        %v1462 = vpack.c.b16 %v1342, %v1338
        %v1463 = vpack.c.b16 %v1343, %v1339
        %v1464 = vpack.c.b16 %v1348, %v1344
        %v1465 = vpack.c.b16 %v1349, %v1345
        %v1466 = vpack.c.b16 %v1350, %v1346
        %v1467 = vpack.c.b16 %v1351, %v1347
        %v1468 = vpack.c.b16 %v1356, %v1352
        %v1469 = vpack.c.b16 %v1357, %v1353
        %v1470 = vpack.c.b16 %v1358, %v1354
        %v1471 = vpack.c.b16 %v1359, %v1355
        %v1472 = vpack.c.b16 %v1364, %v1360
        %v1473 = vpack.c.b16 %v1365, %v1361
        %v1474 = vpack.c.b16 %v1366, %v1362
        %v1475 = vpack.c.b16 %v1367, %v1363
        %v1476 = vpack.c.b16 %v1372, %v1368
        %v1477 = vpack.c.b16 %v1373, %v1369
        %v1478 = vpack.c.b16 %v1374, %v1370
        %v1479 = vpack.c.b16 %v1375, %v1371
        %v1480 = vpack.c.b16 %v1380, %v1376
        %v1481 = vpack.c.b16 %v1381, %v1377
        %v1482 = vpack.c.b16 %v1382, %v1378
        %v1483 = vpack.c.b16 %v1383, %v1379
        %v1484 = vpack.c.b16 %v1388, %v1384
        %v1485 = vpack.c.b16 %v1389, %v1385
        %v1486 = vpack.c.b16 %v1390, %v1386
        %v1487 = vpack.c.b16 %v1391, %v1387
        %1584 = vmatprep.subr.bf16.mxu0 %v1421
        %1585 = vmatpush1.bf16.msra.mxu0 %v1420
        %1586 = vmatprep.subr.bf16.mxu0 %v1417
        %1587 = vmatpush1.bf16.msra.mxu0 %v1416
        %1588 = vmatprep.subr.bf16.mxu0 %v1413
        %1589 = vmatpush1.bf16.msra.mxu0 %v1412
        %1590 = vmatprep.subr.bf16.mxu0 %v1409
        %1591 = vmatpush1.bf16.msra.mxu0 %v1408
        %1592 = vmatprep.subr.bf16.mxu0 %v1405
        %1593 = vmatpush1.bf16.msra.mxu0 %v1404
        %1594 = vmatprep.subr.bf16.mxu0 %v1401
        %1595 = vmatpush1.bf16.msra.mxu0 %v1400
        %1596 = vmatprep.subr.bf16.mxu0 %v1397
        %1597 = vmatpush1.bf16.msra.mxu0 %v1396
        %1598 = vmatprep.subr.bf16.mxu0 %v1393
        %1599 = vmatpush1.bf16.msra.mxu0 %v1392
        %1600 = vmatprep.subr.bf16.mxu0 %v1453
        %1601 = vmatpush2.bf16.msra.mxu0 %v1452
        %1602 = vmatprep.subr.bf16.mxu0 %v1449
        %1603 = vmatpush2.bf16.msra.mxu0 %v1448
        %1604 = vmatprep.subr.bf16.mxu0 %v1445
        %1605 = vmatpush2.bf16.msra.mxu0 %v1444
        %1606 = vmatprep.subr.bf16.mxu0 %v1441
        %1607 = vmatpush2.bf16.msra.mxu0 %v1440
        %1608 = vmatprep.subr.bf16.mxu0 %v1437
        %1609 = vmatpush2.bf16.msra.mxu0 %v1436
        %1610 = vmatprep.subr.bf16.mxu0 %v1433
        %1611 = vmatpush2.bf16.msra.mxu0 %v1432
        %1612 = vmatprep.subr.bf16.mxu0 %v1429
        %1613 = vmatpush2.bf16.msra.mxu0 %v1428
        %1614 = vmatprep.subr.bf16.mxu0 %v1425
        %1615 = vmatpush2.bf16.msra.mxu0 %v1424
        %1616 = vmatprep.mubr.bf16.mxu0 %v1057
        %1617 = vmatmul.mubr.bf16.gmra.mxu0 %v1056
        %v1618 = vpop.f32.mrf.mxu0
        %v1619 = vadd.f32 0.0, %v1618
        %v1620 = vpop.f32.mrf.mxu0
        %v1621 = vadd.f32 0.0, %v1620
        %v1622 = vpop.f32.mrf.mxu0
        %v1623 = vadd.f32 0.0, %v1622
        %v1624 = vpop.f32.mrf.mxu0
        %v1625 = vadd.f32 0.0, %v1624
        %1626 = vmatprep.mubr.bf16.mxu0 %v1060
        %1627 = vmatmul.mubr.bf16.gmra.mxu0 %v1059
        %v1628 = vpop.f32.mrf.mxu0
        %v1629 = vadd.f32 0.0, %v1628
        %v1630 = vpop.f32.mrf.mxu0
        %v1631 = vadd.f32 0.0, %v1630
        %v1632 = vpop.f32.mrf.mxu0
        %v1633 = vadd.f32 0.0, %v1632
        %v1634 = vpop.f32.mrf.mxu0
        %v1635 = vadd.f32 0.0, %v1634
        %1636 = vmatprep.mubr.bf16.mxu0 %v1063
        %1637 = vmatmul.mubr.bf16.gmra.mxu0 %v1062
        %v1638 = vpop.f32.mrf.mxu0
        %v1639 = vadd.f32 0.0, %v1638
        %v1640 = vpop.f32.mrf.mxu0
        %v1641 = vadd.f32 0.0, %v1640
        %v1642 = vpop.f32.mrf.mxu0
        %v1643 = vadd.f32 0.0, %v1642
        %v1644 = vpop.f32.mrf.mxu0
        %v1645 = vadd.f32 0.0, %v1644
        %1646 = vmatprep.mubr.bf16.mxu0 %v1066
        %1647 = vmatmul.mubr.bf16.gmra.mxu0 %v1065
        %v1648 = vpop.f32.mrf.mxu0
        %v1649 = vadd.f32 0.0, %v1648
        %v1650 = vpop.f32.mrf.mxu0
        %v1651 = vadd.f32 0.0, %v1650
        %v1652 = vpop.f32.mrf.mxu0
        %v1653 = vadd.f32 0.0, %v1652
        %v1654 = vpop.f32.mrf.mxu0
        %v1655 = vadd.f32 0.0, %v1654
        %1656 = vmatprep.mubr.bf16.mxu0 %v1069
        %1657 = vmatmul.mubr.bf16.gmra.mxu0 %v1068
        %v1658 = vpop.f32.mrf.mxu0
        %v1659 = vadd.f32 0.0, %v1658
        %v1660 = vpop.f32.mrf.mxu0
        %v1661 = vadd.f32 0.0, %v1660
        %v1662 = vpop.f32.mrf.mxu0
        %v1663 = vadd.f32 0.0, %v1662
        %v1664 = vpop.f32.mrf.mxu0
        %v1665 = vadd.f32 0.0, %v1664
        %1666 = vmatprep.mubr.bf16.mxu0 %v1072
        %1667 = vmatmul.mubr.bf16.gmra.mxu0 %v1071
        %v1668 = vpop.f32.mrf.mxu0
        %v1669 = vadd.f32 0.0, %v1668
        %v1670 = vpop.f32.mrf.mxu0
        %v1671 = vadd.f32 0.0, %v1670
        %v1672 = vpop.f32.mrf.mxu0
        %v1673 = vadd.f32 0.0, %v1672
        %v1674 = vpop.f32.mrf.mxu0
        %v1675 = vadd.f32 0.0, %v1674
        %1676 = vmatprep.mubr.bf16.mxu0 %v1075
        %1677 = vmatmul.mubr.bf16.gmra.mxu0 %v1074
        %v1678 = vpop.f32.mrf.mxu0
        %v1679 = vadd.f32 0.0, %v1678
        %v1680 = vpop.f32.mrf.mxu0
        %v1681 = vadd.f32 0.0, %v1680
        %v1682 = vpop.f32.mrf.mxu0
        %v1683 = vadd.f32 0.0, %v1682
        %v1684 = vpop.f32.mrf.mxu0
        %v1685 = vadd.f32 0.0, %v1684
        %1686 = vmatprep.mubr.bf16.mxu0 %v1078
        %1687 = vmatmul.mubr.bf16.gmra.mxu0 %v1077
        %v1688 = vpop.f32.mrf.mxu0
        %v1689 = vadd.f32 0.0, %v1688
        %v1690 = vpop.f32.mrf.mxu0
        %v1691 = vadd.f32 0.0, %v1690
        %v1692 = vpop.f32.mrf.mxu0
        %v1693 = vadd.f32 0.0, %v1692
        %v1694 = vpop.f32.mrf.mxu0
        %v1695 = vadd.f32 0.0, %v1694
        %1696 = vdwg.mxu0
        %1697 = vmatprep.subr.bf16.mxu0 %v1485
        %1698 = vmatpush1.bf16.msra.mxu0 %v1484
        %1699 = vmatprep.subr.bf16.mxu0 %v1481
        %1700 = vmatpush1.bf16.msra.mxu0 %v1480
        %1701 = vmatprep.subr.bf16.mxu0 %v1477
        %1702 = vmatpush1.bf16.msra.mxu0 %v1476
        %1703 = vmatprep.subr.bf16.mxu0 %v1473
        %1704 = vmatpush1.bf16.msra.mxu0 %v1472
        %1705 = vmatprep.subr.bf16.mxu0 %v1469
        %1706 = vmatpush1.bf16.msra.mxu0 %v1468
        %1707 = vmatprep.subr.bf16.mxu0 %v1465
        %1708 = vmatpush1.bf16.msra.mxu0 %v1464
        %1709 = vmatprep.subr.bf16.mxu0 %v1461
        %1710 = vmatpush1.bf16.msra.mxu0 %v1460
        %1711 = vmatprep.subr.bf16.mxu0 %v1457
        %1712 = vmatpush1.bf16.msra.mxu0 %v1456
        %1713 = vmatprep.subr.bf16.mxu0 0
        %1714 = vmatpush2.bf16.msra.mxu0 0
        %1715 = vmatprep.subr.bf16.mxu0 0
        %1716 = vmatpush2.bf16.msra.mxu0 0
        %1717 = vmatprep.subr.bf16.mxu0 0
        %1718 = vmatpush2.bf16.msra.mxu0 0
        %1719 = vmatprep.subr.bf16.mxu0 0
        %1720 = vmatpush2.bf16.msra.mxu0 0
        %1721 = vmatprep.subr.bf16.mxu0 0
        %1722 = vmatpush2.bf16.msra.mxu0 0
        %1723 = vmatprep.subr.bf16.mxu0 0
        %1724 = vmatpush2.bf16.msra.mxu0 0
        %1725 = vmatprep.subr.bf16.mxu0 0
        %1726 = vmatpush2.bf16.msra.mxu0 0
        %1727 = vmatprep.subr.bf16.mxu0 0
        %1728 = vmatpush2.bf16.msra.mxu0 0
        %1729 = vmatprep.mubr.bf16.mxu0 0
        %1730 = vmatmul.mubr.bf16.gmra.mxu0 %v1058
        %v1731 = vpop.f32.mrf.mxu0
        %v1732 = vadd.f32 %v1619, %v1731
        %v1733 = vpop.f32.mrf.mxu0
        %v1734 = vadd.f32 %v1621, %v1733
        %v1735 = vpop.f32.mrf.mxu0
        %v1736 = vadd.f32 %v1623, %v1735
        %v1737 = vpop.f32.mrf.mxu0
        %v1738 = vadd.f32 %v1625, %v1737
        %1739 = vmatprep.mubr.bf16.mxu0 0
        %1740 = vmatmul.mubr.bf16.gmra.mxu0 %v1061
        %v1741 = vpop.f32.mrf.mxu0
        %v1742 = vadd.f32 %v1629, %v1741
        %v1743 = vpop.f32.mrf.mxu0
        %v1744 = vadd.f32 %v1631, %v1743
        %v1745 = vpop.f32.mrf.mxu0
        %v1746 = vadd.f32 %v1633, %v1745
        %v1747 = vpop.f32.mrf.mxu0
        %v1748 = vadd.f32 %v1635, %v1747
        %1749 = vmatprep.mubr.bf16.mxu0 0
        %1750 = vmatmul.mubr.bf16.gmra.mxu0 %v1064
        %v1751 = vpop.f32.mrf.mxu0
        %v1752 = vadd.f32 %v1639, %v1751
        %v1753 = vpop.f32.mrf.mxu0
        %v1754 = vadd.f32 %v1641, %v1753
        %v1755 = vpop.f32.mrf.mxu0
        %v1756 = vadd.f32 %v1643, %v1755
        %v1757 = vpop.f32.mrf.mxu0
        %v1758 = vadd.f32 %v1645, %v1757
        %1759 = vmatprep.mubr.bf16.mxu0 0
        %1760 = vmatmul.mubr.bf16.gmra.mxu0 %v1067
        %v1761 = vpop.f32.mrf.mxu0
        %v1762 = vadd.f32 %v1649, %v1761
        %v1763 = vpop.f32.mrf.mxu0
        %v1764 = vadd.f32 %v1651, %v1763
        %v1765 = vpop.f32.mrf.mxu0
        %v1766 = vadd.f32 %v1653, %v1765
        %v1767 = vpop.f32.mrf.mxu0
        %v1768 = vadd.f32 %v1655, %v1767
        %1769 = vmatprep.mubr.bf16.mxu0 0
        %1770 = vmatmul.mubr.bf16.gmra.mxu0 %v1070
        %v1771 = vpop.f32.mrf.mxu0
        %v1772 = vadd.f32 %v1659, %v1771
        %v1773 = vpop.f32.mrf.mxu0
        %v1774 = vadd.f32 %v1661, %v1773
        %v1775 = vpop.f32.mrf.mxu0
        %v1776 = vadd.f32 %v1663, %v1775
        %v1777 = vpop.f32.mrf.mxu0
        %v1778 = vadd.f32 %v1665, %v1777
        %1779 = vmatprep.mubr.bf16.mxu0 0
        %1780 = vmatmul.mubr.bf16.gmra.mxu0 %v1073
        %v1781 = vpop.f32.mrf.mxu0
        %v1782 = vadd.f32 %v1669, %v1781
        %v1783 = vpop.f32.mrf.mxu0
        %v1784 = vadd.f32 %v1671, %v1783
        %v1785 = vpop.f32.mrf.mxu0
        %v1786 = vadd.f32 %v1673, %v1785
        %v1787 = vpop.f32.mrf.mxu0
        %v1788 = vadd.f32 %v1675, %v1787
        %1789 = vmatprep.mubr.bf16.mxu0 0
        %1790 = vmatmul.mubr.bf16.gmra.mxu0 %v1076
        %v1791 = vpop.f32.mrf.mxu0
        %v1792 = vadd.f32 %v1679, %v1791
        %v1793 = vpop.f32.mrf.mxu0
        %v1794 = vadd.f32 %v1681, %v1793
        %v1795 = vpop.f32.mrf.mxu0
        %v1796 = vadd.f32 %v1683, %v1795
        %v1797 = vpop.f32.mrf.mxu0
        %v1798 = vadd.f32 %v1685, %v1797
        %1799 = vmatprep.mubr.bf16.mxu0 0
        %1800 = vmatmul.mubr.bf16.gmra.mxu0 %v1079
        %v1801 = vpop.f32.mrf.mxu0
        %v1802 = vadd.f32 %v1689, %v1801
        %v1803 = vpop.f32.mrf.mxu0
        %v1804 = vadd.f32 %v1691, %v1803
        %v1805 = vpop.f32.mrf.mxu0
        %v1806 = vadd.f32 %v1693, %v1805
        %v1807 = vpop.f32.mrf.mxu0
        %v1808 = vadd.f32 %v1695, %v1807
        %1809 = vdwg.mxu0
        %1810 = vmatprep.subr.bf16.mxu0 %v1423
        %1811 = vmatpush1.bf16.msra.mxu0 %v1422
        %1812 = vmatprep.subr.bf16.mxu0 %v1419
        %1813 = vmatpush1.bf16.msra.mxu0 %v1418
        %1814 = vmatprep.subr.bf16.mxu0 %v1415
        %1815 = vmatpush1.bf16.msra.mxu0 %v1414
        %1816 = vmatprep.subr.bf16.mxu0 %v1411
        %1817 = vmatpush1.bf16.msra.mxu0 %v1410
        %1818 = vmatprep.subr.bf16.mxu0 %v1407
        %1819 = vmatpush1.bf16.msra.mxu0 %v1406
        %1820 = vmatprep.subr.bf16.mxu0 %v1403
        %1821 = vmatpush1.bf16.msra.mxu0 %v1402
        %1822 = vmatprep.subr.bf16.mxu0 %v1399
        %1823 = vmatpush1.bf16.msra.mxu0 %v1398
        %1824 = vmatprep.subr.bf16.mxu0 %v1395
        %1825 = vmatpush1.bf16.msra.mxu0 %v1394
        %1826 = vmatprep.subr.bf16.mxu0 %v1455
        %1827 = vmatpush2.bf16.msra.mxu0 %v1454
        %1828 = vmatprep.subr.bf16.mxu0 %v1451
        %1829 = vmatpush2.bf16.msra.mxu0 %v1450
        %1830 = vmatprep.subr.bf16.mxu0 %v1447
        %1831 = vmatpush2.bf16.msra.mxu0 %v1446
        %1832 = vmatprep.subr.bf16.mxu0 %v1443
        %1833 = vmatpush2.bf16.msra.mxu0 %v1442
        %1834 = vmatprep.subr.bf16.mxu0 %v1439
        %1835 = vmatpush2.bf16.msra.mxu0 %v1438
        %1836 = vmatprep.subr.bf16.mxu0 %v1435
        %1837 = vmatpush2.bf16.msra.mxu0 %v1434
        %1838 = vmatprep.subr.bf16.mxu0 %v1431
        %1839 = vmatpush2.bf16.msra.mxu0 %v1430
        %1840 = vmatprep.subr.bf16.mxu0 %v1427
        %1841 = vmatpush2.bf16.msra.mxu0 %v1426
        %1842 = vmatprep.mubr.bf16.mxu0 %v1057
        %1843 = vmatmul.mubr.bf16.gmra.mxu0 %v1056
        %v1844 = vpop.f32.mrf.mxu0
        %v1845 = vadd.f32 0.0, %v1844
        %v1846 = vpop.f32.mrf.mxu0
        %v1847 = vadd.f32 0.0, %v1846
        %v1848 = vpop.f32.mrf.mxu0
        %v1849 = vadd.f32 0.0, %v1848
        %v1850 = vpop.f32.mrf.mxu0
        %v1851 = vadd.f32 0.0, %v1850
        %1852 = vmatprep.mubr.bf16.mxu0 %v1060
        %1853 = vmatmul.mubr.bf16.gmra.mxu0 %v1059
        %v1854 = vpop.f32.mrf.mxu0
        %v1855 = vadd.f32 0.0, %v1854
        %v1856 = vpop.f32.mrf.mxu0
        %v1857 = vadd.f32 0.0, %v1856
        %v1858 = vpop.f32.mrf.mxu0
        %v1859 = vadd.f32 0.0, %v1858
        %v1860 = vpop.f32.mrf.mxu0
        %v1861 = vadd.f32 0.0, %v1860
        %1862 = vmatprep.mubr.bf16.mxu0 %v1063
        %1863 = vmatmul.mubr.bf16.gmra.mxu0 %v1062
        %v1864 = vpop.f32.mrf.mxu0
        %v1865 = vadd.f32 0.0, %v1864
        %v1866 = vpop.f32.mrf.mxu0
        %v1867 = vadd.f32 0.0, %v1866
        %v1868 = vpop.f32.mrf.mxu0
        %v1869 = vadd.f32 0.0, %v1868
        %v1870 = vpop.f32.mrf.mxu0
        %v1871 = vadd.f32 0.0, %v1870
        %1872 = vmatprep.mubr.bf16.mxu0 %v1066
        %1873 = vmatmul.mubr.bf16.gmra.mxu0 %v1065
        %v1874 = vpop.f32.mrf.mxu0
        %v1875 = vadd.f32 0.0, %v1874
        %v1876 = vpop.f32.mrf.mxu0
        %v1877 = vadd.f32 0.0, %v1876
        %v1878 = vpop.f32.mrf.mxu0
        %v1879 = vadd.f32 0.0, %v1878
        %v1880 = vpop.f32.mrf.mxu0
        %v1881 = vadd.f32 0.0, %v1880
        %1882 = vmatprep.mubr.bf16.mxu0 %v1069
        %1883 = vmatmul.mubr.bf16.gmra.mxu0 %v1068
        %v1884 = vpop.f32.mrf.mxu0
        %v1885 = vadd.f32 0.0, %v1884
        %v1886 = vpop.f32.mrf.mxu0
        %v1887 = vadd.f32 0.0, %v1886
        %v1888 = vpop.f32.mrf.mxu0
        %v1889 = vadd.f32 0.0, %v1888
        %v1890 = vpop.f32.mrf.mxu0
        %v1891 = vadd.f32 0.0, %v1890
        %1892 = vmatprep.mubr.bf16.mxu0 %v1072
        %1893 = vmatmul.mubr.bf16.gmra.mxu0 %v1071
        %v1894 = vpop.f32.mrf.mxu0
        %v1895 = vadd.f32 0.0, %v1894
        %v1896 = vpop.f32.mrf.mxu0
        %v1897 = vadd.f32 0.0, %v1896
        %v1898 = vpop.f32.mrf.mxu0
        %v1899 = vadd.f32 0.0, %v1898
        %v1900 = vpop.f32.mrf.mxu0
        %v1901 = vadd.f32 0.0, %v1900
        %1902 = vmatprep.mubr.bf16.mxu0 %v1075
        %1903 = vmatmul.mubr.bf16.gmra.mxu0 %v1074
        %v1904 = vpop.f32.mrf.mxu0
        %v1905 = vadd.f32 0.0, %v1904
        %v1906 = vpop.f32.mrf.mxu0
        %v1907 = vadd.f32 0.0, %v1906
        %v1908 = vpop.f32.mrf.mxu0
        %v1909 = vadd.f32 0.0, %v1908
        %v1910 = vpop.f32.mrf.mxu0
        %v1911 = vadd.f32 0.0, %v1910
        %1912 = vmatprep.mubr.bf16.mxu0 %v1078
        %1913 = vmatmul.mubr.bf16.gmra.mxu0 %v1077
        %v1914 = vpop.f32.mrf.mxu0
        %v1915 = vadd.f32 0.0, %v1914
        %v1916 = vpop.f32.mrf.mxu0
        %v1917 = vadd.f32 0.0, %v1916
        %v1918 = vpop.f32.mrf.mxu0
        %v1919 = vadd.f32 0.0, %v1918
        %v1920 = vpop.f32.mrf.mxu0
        %v1921 = vadd.f32 0.0, %v1920
        %1922 = vdwg.mxu0
        %1923 = vmatprep.subr.bf16.mxu0 %v1487
        %1924 = vmatpush1.bf16.msra.mxu0 %v1486
        %1925 = vmatprep.subr.bf16.mxu0 %v1483
        %1926 = vmatpush1.bf16.msra.mxu0 %v1482
        %1927 = vmatprep.subr.bf16.mxu0 %v1479
        %1928 = vmatpush1.bf16.msra.mxu0 %v1478
        %1929 = vmatprep.subr.bf16.mxu0 %v1475
        %1930 = vmatpush1.bf16.msra.mxu0 %v1474
        %1931 = vmatprep.subr.bf16.mxu0 %v1471
        %1932 = vmatpush1.bf16.msra.mxu0 %v1470
        %1933 = vmatprep.subr.bf16.mxu0 %v1467
        %1934 = vmatpush1.bf16.msra.mxu0 %v1466
        %1935 = vmatprep.subr.bf16.mxu0 %v1463
        %1936 = vmatpush1.bf16.msra.mxu0 %v1462
        %1937 = vmatprep.subr.bf16.mxu0 %v1459
        %1938 = vmatpush1.bf16.msra.mxu0 %v1458
        %1939 = vmatprep.subr.bf16.mxu0 0
        %1940 = vmatpush2.bf16.msra.mxu0 0
        %1941 = vmatprep.subr.bf16.mxu0 0
        %1942 = vmatpush2.bf16.msra.mxu0 0
        %1943 = vmatprep.subr.bf16.mxu0 0
        %1944 = vmatpush2.bf16.msra.mxu0 0
        %1945 = vmatprep.subr.bf16.mxu0 0
        %1946 = vmatpush2.bf16.msra.mxu0 0
        %1947 = vmatprep.subr.bf16.mxu0 0
        %1948 = vmatpush2.bf16.msra.mxu0 0
        %1949 = vmatprep.subr.bf16.mxu0 0
        %1950 = vmatpush2.bf16.msra.mxu0 0
        %1951 = vmatprep.subr.bf16.mxu0 0
        %1952 = vmatpush2.bf16.msra.mxu0 0
        %1953 = vmatprep.subr.bf16.mxu0 0
        %1954 = vmatpush2.bf16.msra.mxu0 0
        %1955 = vmatprep.mubr.bf16.mxu0 0
        %1956 = vmatmul.mubr.bf16.gmra.mxu0 %v1058
        %v1957 = vpop.f32.mrf.mxu0
        %v1958 = vadd.f32 %v1845, %v1957
        %v1959 = vpop.f32.mrf.mxu0
        %v1960 = vadd.f32 %v1847, %v1959
        %v1961 = vpop.f32.mrf.mxu0
        %v1962 = vadd.f32 %v1849, %v1961
        %v1963 = vpop.f32.mrf.mxu0
        %v1964 = vadd.f32 %v1851, %v1963
        %1965 = vmatprep.mubr.bf16.mxu0 0
        %1966 = vmatmul.mubr.bf16.gmra.mxu0 %v1061
        %v1967 = vpop.f32.mrf.mxu0
        %v1968 = vadd.f32 %v1855, %v1967
        %v1969 = vpop.f32.mrf.mxu0
        %v1970 = vadd.f32 %v1857, %v1969
        %v1971 = vpop.f32.mrf.mxu0
        %v1972 = vadd.f32 %v1859, %v1971
        %v1973 = vpop.f32.mrf.mxu0
        %v1974 = vadd.f32 %v1861, %v1973
        %1975 = vmatprep.mubr.bf16.mxu0 0
        %1976 = vmatmul.mubr.bf16.gmra.mxu0 %v1064
        %v1977 = vpop.f32.mrf.mxu0
        %v1978 = vadd.f32 %v1865, %v1977
        %v1979 = vpop.f32.mrf.mxu0
        %v1980 = vadd.f32 %v1867, %v1979
        %v1981 = vpop.f32.mrf.mxu0
        %v1982 = vadd.f32 %v1869, %v1981
        %v1983 = vpop.f32.mrf.mxu0
        %v1984 = vadd.f32 %v1871, %v1983
        %1985 = vmatprep.mubr.bf16.mxu0 0
        %1986 = vmatmul.mubr.bf16.gmra.mxu0 %v1067
        %v1987 = vpop.f32.mrf.mxu0
        %v1988 = vadd.f32 %v1875, %v1987
        %v1989 = vpop.f32.mrf.mxu0
        %v1990 = vadd.f32 %v1877, %v1989
        %v1991 = vpop.f32.mrf.mxu0
        %v1992 = vadd.f32 %v1879, %v1991
        %v1993 = vpop.f32.mrf.mxu0
        %v1994 = vadd.f32 %v1881, %v1993
        %1995 = vmatprep.mubr.bf16.mxu0 0
        %1996 = vmatmul.mubr.bf16.gmra.mxu0 %v1070
        %v1997 = vpop.f32.mrf.mxu0
        %v1998 = vadd.f32 %v1885, %v1997
        %v1999 = vpop.f32.mrf.mxu0
        %v2000 = vadd.f32 %v1887, %v1999
        %v2001 = vpop.f32.mrf.mxu0
        %v2002 = vadd.f32 %v1889, %v2001
        %v2003 = vpop.f32.mrf.mxu0
        %v2004 = vadd.f32 %v1891, %v2003
        %2005 = vmatprep.mubr.bf16.mxu0 0
        %2006 = vmatmul.mubr.bf16.gmra.mxu0 %v1073
        %v2007 = vpop.f32.mrf.mxu0
        %v2008 = vadd.f32 %v1895, %v2007
        %v2009 = vpop.f32.mrf.mxu0
        %v2010 = vadd.f32 %v1897, %v2009
        %v2011 = vpop.f32.mrf.mxu0
        %v2012 = vadd.f32 %v1899, %v2011
        %v2013 = vpop.f32.mrf.mxu0
        %v2014 = vadd.f32 %v1901, %v2013
        %2015 = vmatprep.mubr.bf16.mxu0 0
        %2016 = vmatmul.mubr.bf16.gmra.mxu0 %v1076
        %v2017 = vpop.f32.mrf.mxu0
        %v2018 = vadd.f32 %v1905, %v2017
        %v2019 = vpop.f32.mrf.mxu0
        %v2020 = vadd.f32 %v1907, %v2019
        %v2021 = vpop.f32.mrf.mxu0
        %v2022 = vadd.f32 %v1909, %v2021
        %v2023 = vpop.f32.mrf.mxu0
        %v2024 = vadd.f32 %v1911, %v2023
        %2025 = vmatprep.mubr.bf16.mxu0 0
        %2026 = vmatmul.mubr.bf16.gmra.mxu0 %v1079
        %v2027 = vpop.f32.mrf.mxu0
        %v2028 = vadd.f32 %v1915, %v2027
        %v2029 = vpop.f32.mrf.mxu0
        %v2030 = vadd.f32 %v1917, %v2029
        %v2031 = vpop.f32.mrf.mxu0
        %v2032 = vadd.f32 %v1919, %v2031
        %v2033 = vpop.f32.mrf.mxu0
        %v2034 = vadd.f32 %v1921, %v2033
        %2035 = vdwg.mxu0
        %v2036 = vld [vmem:[%s708] sm:$0xff]
        %v2037 = vld [vmem:[%s708 + $0x8] sm:$0xff]
        %v2038 = vld [vmem:[%s708 + $0x10] sm:$0xff]
        %v2039 = vld [vmem:[%s708 + $0x18] sm:$0xff]
        %v2040 = vld [vmem:[%s708 + $0x20] sm:$0xff]
        %v2041 = vld [vmem:[%s708 + $0x28] sm:$0xff]
        %v2042 = vld [vmem:[%s708 + $0x30] sm:$0xff]
        %v2043 = vld [vmem:[%s708 + $0x38] sm:$0xff]
        %v2044 = vld [vmem:[%s708 + $0x40] sm:$0xff]
        %v2045 = vld [vmem:[%s708 + $0x48] sm:$0xff]
        %v2046 = vld [vmem:[%s708 + $0x50] sm:$0xff]
        %v2047 = vld [vmem:[%s708 + $0x58] sm:$0xff]
        %v2048 = vld [vmem:[%s708 + $0x60] sm:$0xff]
        %v2049 = vld [vmem:[%s708 + $0x68] sm:$0xff]
        %v2050 = vld [vmem:[%s708 + $0x70] sm:$0xff]
        %v2051 = vld [vmem:[%s708 + $0x78] sm:$0xff]
        %v2052 = vld [vmem:[%s708 + $0x80] sm:$0xff]
        %v2053 = vld [vmem:[%s708 + $0x88] sm:$0xff]
        %v2054 = vld [vmem:[%s708 + $0x90] sm:$0xff]
        %v2055 = vld [vmem:[%s708 + $0x98] sm:$0xff]
        %v2056 = vld [vmem:[%s708 + $0xa0] sm:$0xff]
        %v2057 = vld [vmem:[%s708 + $0xa8] sm:$0xff]
        %v2058 = vld [vmem:[%s708 + $0xb0] sm:$0xff]
        %v2059 = vld [vmem:[%s708 + $0xb8] sm:$0xff]
        %v2060 = vld [vmem:[%s708 + $0xc0] sm:$0xff]
        %v2061 = vld [vmem:[%s708 + $0xc8] sm:$0xff]
        %v2062 = vld [vmem:[%s708 + $0xd0] sm:$0xff]
        %v2063 = vld [vmem:[%s708 + $0xd8] sm:$0xff]
        %v2064 = vld [vmem:[%s708 + $0xe0] sm:$0xff]
        %v2065 = vld [vmem:[%s708 + $0xe8] sm:$0xff]
        %v2066 = vld [vmem:[%s708 + $0xf0] sm:$0xff]
        %v2067 = vld [vmem:[%s708 + $0xf8] sm:$0xff]
        %v2068 = vld [vmem:[%s708 + $0x100] sm:$0xff]
        %v2069 = vld [vmem:[%s708 + $0x108] sm:$0xff]
        %v2070 = vld [vmem:[%s708 + $0x110] sm:$0xff]
        %v2071 = vld [vmem:[%s708 + $0x118] sm:$0xff]
        %v2072 = vld [vmem:[%s708 + $0x120] sm:$0xff]
        %v2073 = vld [vmem:[%s708 + $0x128] sm:$0xff]
        %v2074 = vld [vmem:[%s708 + $0x130] sm:$0xff]
        %v2075 = vld [vmem:[%s708 + $0x138] sm:$0xff]
        %v2076 = vld [vmem:[%s708 + $0x140] sm:$0xff]
        %v2077 = vld [vmem:[%s708 + $0x148] sm:$0xff]
        %v2078 = vld [vmem:[%s708 + $0x150] sm:$0xff]
        %v2079 = vld [vmem:[%s708 + $0x158] sm:$0xff]
        %v2080 = vld [vmem:[%s708 + $0x160] sm:$0xff]
        %v2081 = vld [vmem:[%s708 + $0x168] sm:$0xff]
        %v2082 = vld [vmem:[%s708 + $0x170] sm:$0xff]
        %v2083 = vld [vmem:[%s708 + $0x178] sm:$0xff]
        %v2084 = vld [vmem:[%s708 + $0x180] sm:$0xff]
        %v2085 = vld [vmem:[%s708 + $0x188] sm:$0xff]
        %v2086 = vld [vmem:[%s708 + $0x190] sm:$0xff]
        %v2087 = vld [vmem:[%s708 + $0x198] sm:$0xff]
        %v2088 = vld [vmem:[%s708 + $0x1a0] sm:$0xff]
        %v2089 = vld [vmem:[%s708 + $0x1a8] sm:$0xff]
        %v2090 = vld [vmem:[%s708 + $0x1b0] sm:$0xff]
        %v2091 = vld [vmem:[%s708 + $0x1b8] sm:$0xff]
        %v2092 = vld [vmem:[%s708 + $0x1c0] sm:$0xff]
        %v2093 = vld [vmem:[%s708 + $0x1c8] sm:$0xff]
        %v2094 = vld [vmem:[%s708 + $0x1d0] sm:$0xff]
        %v2095 = vld [vmem:[%s708 + $0x1d8] sm:$0xff]
        %v2096 = vld [vmem:[%s708 + $0x1e0] sm:$0xff]
        %v2097 = vld [vmem:[%s708 + $0x1e8] sm:$0xff]
        %v2098 = vld [vmem:[%s708 + $0x1f0] sm:$0xff]
        %v2099 = vld [vmem:[%s708 + $0x1f8] sm:$0xff]
        %v2100 = vld [vmem:[%s708 + $0x200] sm:$0xff]
        %v2101 = vld [vmem:[%s708 + $0x208] sm:$0xff]
        %v2102 = vld [vmem:[%s708 + $0x210] sm:$0xff]
        %v2103 = vld [vmem:[%s708 + $0x218] sm:$0xff]
        %v2104 = vld [vmem:[%s708 + $0x220] sm:$0xff]
        %v2105 = vld [vmem:[%s708 + $0x228] sm:$0xff]
        %v2106 = vld [vmem:[%s708 + $0x230] sm:$0xff]
        %v2107 = vld [vmem:[%s708 + $0x238] sm:$0xff]
        %v2108 = vld [vmem:[%s708 + $0x240] sm:$0xff]
        %v2109 = vld [vmem:[%s708 + $0x248] sm:$0xff]
        %v2110 = vld [vmem:[%s708 + $0x250] sm:$0xff]
        %v2111 = vld [vmem:[%s708 + $0x258] sm:$0xff]
        %v2112 = vld [vmem:[%s708 + $0x260] sm:$0xff]
        %v2113 = vld [vmem:[%s708 + $0x268] sm:$0xff]
        %v2114 = vld [vmem:[%s708 + $0x270] sm:$0xff]
        %v2115 = vld [vmem:[%s708 + $0x278] sm:$0xff]
        %v2116 = vld [vmem:[%s708 + $0x280] sm:$0xff]
        %v2117 = vld [vmem:[%s708 + $0x288] sm:$0xff]
        %v2118 = vld [vmem:[%s708 + $0x290] sm:$0xff]
        %v2119 = vld [vmem:[%s708 + $0x298] sm:$0xff]
        %v2120 = vld [vmem:[%s708 + $0x2a0] sm:$0xff]
        %v2121 = vld [vmem:[%s708 + $0x2a8] sm:$0xff]
        %v2122 = vld [vmem:[%s708 + $0x2b0] sm:$0xff]
        %v2123 = vld [vmem:[%s708 + $0x2b8] sm:$0xff]
        %v2124 = vld [vmem:[%s708 + $0x2c0] sm:$0xff]
        %v2125 = vld [vmem:[%s708 + $0x2c8] sm:$0xff]
        %v2126 = vld [vmem:[%s708 + $0x2d0] sm:$0xff]
        %v2127 = vld [vmem:[%s708 + $0x2d8] sm:$0xff]
        %v2128 = vld [vmem:[%s708 + $0x2e0] sm:$0xff]
        %v2129 = vld [vmem:[%s708 + $0x2e8] sm:$0xff]
        %v2130 = vld [vmem:[%s708 + $0x2f0] sm:$0xff]
        %v2131 = vld [vmem:[%s708 + $0x2f8] sm:$0xff]
        %v2228 = vunpack.c.l.b16 %v2036
        %v2229 = vunpack.c.h.b16 %v2036
        %v2230 = vunpack.c.l.b16 %v2037
        %v2231 = vunpack.c.h.b16 %v2037
        %v2232 = vunpack.c.l.b16 %v2038
        %v2233 = vunpack.c.h.b16 %v2038
        %v2234 = vunpack.c.l.b16 %v2039
        %v2235 = vunpack.c.h.b16 %v2039
        %v2236 = vunpack.c.l.b16 %v2040
        %v2237 = vunpack.c.h.b16 %v2040
        %v2238 = vunpack.c.l.b16 %v2041
        %v2239 = vunpack.c.h.b16 %v2041
        %v2240 = vunpack.c.l.b16 %v2042
        %v2241 = vunpack.c.h.b16 %v2042
        %v2242 = vunpack.c.l.b16 %v2043
        %v2243 = vunpack.c.h.b16 %v2043
        %v2244 = vunpack.c.l.b16 %v2044
        %v2245 = vunpack.c.h.b16 %v2044
        %v2246 = vunpack.c.l.b16 %v2045
        %v2247 = vunpack.c.h.b16 %v2045
        %v2248 = vunpack.c.l.b16 %v2046
        %v2249 = vunpack.c.h.b16 %v2046
        %v2250 = vunpack.c.l.b16 %v2047
        %v2251 = vunpack.c.h.b16 %v2047
        %v2252 = vunpack.c.l.b16 %v2048
        %v2253 = vunpack.c.h.b16 %v2048
        %v2254 = vunpack.c.l.b16 %v2049
        %v2255 = vunpack.c.h.b16 %v2049
        %v2256 = vunpack.c.l.b16 %v2050
        %v2257 = vunpack.c.h.b16 %v2050
        %v2258 = vunpack.c.l.b16 %v2051
        %v2259 = vunpack.c.h.b16 %v2051
        %v2260 = vunpack.c.l.b16 %v2052
        %v2261 = vunpack.c.h.b16 %v2052
        %v2262 = vunpack.c.l.b16 %v2053
        %v2263 = vunpack.c.h.b16 %v2053
        %v2264 = vunpack.c.l.b16 %v2054
        %v2265 = vunpack.c.h.b16 %v2054
        %v2266 = vunpack.c.l.b16 %v2055
        %v2267 = vunpack.c.h.b16 %v2055
        %v2268 = vunpack.c.l.b16 %v2056
        %v2269 = vunpack.c.h.b16 %v2056
        %v2270 = vunpack.c.l.b16 %v2057
        %v2271 = vunpack.c.h.b16 %v2057
        %v2272 = vunpack.c.l.b16 %v2058
        %v2273 = vunpack.c.h.b16 %v2058
        %v2274 = vunpack.c.l.b16 %v2059
        %v2275 = vunpack.c.h.b16 %v2059
        %v2276 = vunpack.c.l.b16 %v2060
        %v2277 = vunpack.c.h.b16 %v2060
        %v2278 = vunpack.c.l.b16 %v2061
        %v2279 = vunpack.c.h.b16 %v2061
        %v2280 = vunpack.c.l.b16 %v2062
        %v2281 = vunpack.c.h.b16 %v2062
        %v2282 = vunpack.c.l.b16 %v2063
        %v2283 = vunpack.c.h.b16 %v2063
        %v2284 = vunpack.c.l.b16 %v2064
        %v2285 = vunpack.c.h.b16 %v2064
        %v2286 = vunpack.c.l.b16 %v2065
        %v2287 = vunpack.c.h.b16 %v2065
        %v2288 = vunpack.c.l.b16 %v2066
        %v2289 = vunpack.c.h.b16 %v2066
        %v2290 = vunpack.c.l.b16 %v2067
        %v2291 = vunpack.c.h.b16 %v2067
        %v2292 = vunpack.c.l.b16 %v2068
        %v2293 = vunpack.c.h.b16 %v2068
        %v2294 = vunpack.c.l.b16 %v2069
        %v2295 = vunpack.c.h.b16 %v2069
        %v2296 = vunpack.c.l.b16 %v2070
        %v2297 = vunpack.c.h.b16 %v2070
        %v2298 = vunpack.c.l.b16 %v2071
        %v2299 = vunpack.c.h.b16 %v2071
        %v2300 = vunpack.c.l.b16 %v2072
        %v2301 = vunpack.c.h.b16 %v2072
        %v2302 = vunpack.c.l.b16 %v2073
        %v2303 = vunpack.c.h.b16 %v2073
        %v2304 = vunpack.c.l.b16 %v2074
        %v2305 = vunpack.c.h.b16 %v2074
        %v2306 = vunpack.c.l.b16 %v2075
        %v2307 = vunpack.c.h.b16 %v2075
        %v2308 = vunpack.c.l.b16 %v2076
        %v2309 = vunpack.c.h.b16 %v2076
        %v2310 = vunpack.c.l.b16 %v2077
        %v2311 = vunpack.c.h.b16 %v2077
        %v2312 = vunpack.c.l.b16 %v2078
        %v2313 = vunpack.c.h.b16 %v2078
        %v2314 = vunpack.c.l.b16 %v2079
        %v2315 = vunpack.c.h.b16 %v2079
        %v2316 = vunpack.c.l.b16 %v2080
        %v2317 = vunpack.c.h.b16 %v2080
        %v2318 = vunpack.c.l.b16 %v2081
        %v2319 = vunpack.c.h.b16 %v2081
        %v2320 = vunpack.c.l.b16 %v2082
        %v2321 = vunpack.c.h.b16 %v2082
        %v2322 = vunpack.c.l.b16 %v2083
        %v2323 = vunpack.c.h.b16 %v2083
        %v2324 = vunpack.c.l.b16 %v2084
        %v2325 = vunpack.c.h.b16 %v2084
        %v2326 = vunpack.c.l.b16 %v2085
        %v2327 = vunpack.c.h.b16 %v2085
        %v2328 = vunpack.c.l.b16 %v2086
        %v2329 = vunpack.c.h.b16 %v2086
        %v2330 = vunpack.c.l.b16 %v2087
        %v2331 = vunpack.c.h.b16 %v2087
        %v2332 = vunpack.c.l.b16 %v2088
        %v2333 = vunpack.c.h.b16 %v2088
        %v2334 = vunpack.c.l.b16 %v2089
        %v2335 = vunpack.c.h.b16 %v2089
        %v2336 = vunpack.c.l.b16 %v2090
        %v2337 = vunpack.c.h.b16 %v2090
        %v2338 = vunpack.c.l.b16 %v2091
        %v2339 = vunpack.c.h.b16 %v2091
        %v2340 = vunpack.c.l.b16 %v2092
        %v2341 = vunpack.c.h.b16 %v2092
        %v2342 = vunpack.c.l.b16 %v2093
        %v2343 = vunpack.c.h.b16 %v2093
        %v2344 = vunpack.c.l.b16 %v2094
        %v2345 = vunpack.c.h.b16 %v2094
        %v2346 = vunpack.c.l.b16 %v2095
        %v2347 = vunpack.c.h.b16 %v2095
        %v2348 = vunpack.c.l.b16 %v2096
        %v2349 = vunpack.c.h.b16 %v2096
        %v2350 = vunpack.c.l.b16 %v2097
        %v2351 = vunpack.c.h.b16 %v2097
        %v2352 = vunpack.c.l.b16 %v2098
        %v2353 = vunpack.c.h.b16 %v2098
        %v2354 = vunpack.c.l.b16 %v2099
        %v2355 = vunpack.c.h.b16 %v2099
        %v2356 = vunpack.c.l.b16 %v2100
        %v2357 = vunpack.c.h.b16 %v2100
        %v2358 = vunpack.c.l.b16 %v2101
        %v2359 = vunpack.c.h.b16 %v2101
        %v2360 = vunpack.c.l.b16 %v2102
        %v2361 = vunpack.c.h.b16 %v2102
        %v2362 = vunpack.c.l.b16 %v2103
        %v2363 = vunpack.c.h.b16 %v2103
        %v2364 = vunpack.c.l.b16 %v2104
        %v2365 = vunpack.c.h.b16 %v2104
        %v2366 = vunpack.c.l.b16 %v2105
        %v2367 = vunpack.c.h.b16 %v2105
        %v2368 = vunpack.c.l.b16 %v2106
        %v2369 = vunpack.c.h.b16 %v2106
        %v2370 = vunpack.c.l.b16 %v2107
        %v2371 = vunpack.c.h.b16 %v2107
        %v2372 = vunpack.c.l.b16 %v2108
        %v2373 = vunpack.c.h.b16 %v2108
        %v2374 = vunpack.c.l.b16 %v2109
        %v2375 = vunpack.c.h.b16 %v2109
        %v2376 = vunpack.c.l.b16 %v2110
        %v2377 = vunpack.c.h.b16 %v2110
        %v2378 = vunpack.c.l.b16 %v2111
        %v2379 = vunpack.c.h.b16 %v2111
        %v2380 = vunpack.c.l.b16 %v2112
        %v2381 = vunpack.c.h.b16 %v2112
        %v2382 = vunpack.c.l.b16 %v2113
        %v2383 = vunpack.c.h.b16 %v2113
        %v2384 = vunpack.c.l.b16 %v2114
        %v2385 = vunpack.c.h.b16 %v2114
        %v2386 = vunpack.c.l.b16 %v2115
        %v2387 = vunpack.c.h.b16 %v2115
        %v2388 = vunpack.c.l.b16 %v2116
        %v2389 = vunpack.c.h.b16 %v2116
        %v2390 = vunpack.c.l.b16 %v2117
        %v2391 = vunpack.c.h.b16 %v2117
        %v2392 = vunpack.c.l.b16 %v2118
        %v2393 = vunpack.c.h.b16 %v2118
        %v2394 = vunpack.c.l.b16 %v2119
        %v2395 = vunpack.c.h.b16 %v2119
        %v2396 = vunpack.c.l.b16 %v2120
        %v2397 = vunpack.c.h.b16 %v2120
        %v2398 = vunpack.c.l.b16 %v2121
        %v2399 = vunpack.c.h.b16 %v2121
        %v2400 = vunpack.c.l.b16 %v2122
        %v2401 = vunpack.c.h.b16 %v2122
        %v2402 = vunpack.c.l.b16 %v2123
        %v2403 = vunpack.c.h.b16 %v2123
        %v2404 = vunpack.c.l.b16 %v2124
        %v2405 = vunpack.c.h.b16 %v2124
        %v2406 = vunpack.c.l.b16 %v2125
        %v2407 = vunpack.c.h.b16 %v2125
        %v2408 = vunpack.c.l.b16 %v2126
        %v2409 = vunpack.c.h.b16 %v2126
        %v2410 = vunpack.c.l.b16 %v2127
        %v2411 = vunpack.c.h.b16 %v2127
        %v2412 = vunpack.c.l.b16 %v2128
        %v2413 = vunpack.c.h.b16 %v2128
        %v2414 = vunpack.c.l.b16 %v2129
        %v2415 = vunpack.c.h.b16 %v2129
        %v2416 = vunpack.c.l.b16 %v2130
        %v2417 = vunpack.c.h.b16 %v2130
        %v2418 = vunpack.c.l.b16 %v2131
        %v2419 = vunpack.c.h.b16 %v2131
        %v2420 = vpack.c.b16 %v2232, %v2228
        %v2421 = vpack.c.b16 %v2233, %v2229
        %v2422 = vpack.c.b16 %v2234, %v2230
        %v2423 = vpack.c.b16 %v2235, %v2231
        %v2424 = vpack.c.b16 %v2240, %v2236
        %v2425 = vpack.c.b16 %v2241, %v2237
        %v2426 = vpack.c.b16 %v2242, %v2238
        %v2427 = vpack.c.b16 %v2243, %v2239
        %v2428 = vpack.c.b16 %v2248, %v2244
        %v2429 = vpack.c.b16 %v2249, %v2245
        %v2430 = vpack.c.b16 %v2250, %v2246
        %v2431 = vpack.c.b16 %v2251, %v2247
        %v2432 = vpack.c.b16 %v2256, %v2252
        %v2433 = vpack.c.b16 %v2257, %v2253
        %v2434 = vpack.c.b16 %v2258, %v2254
        %v2435 = vpack.c.b16 %v2259, %v2255
        %v2436 = vpack.c.b16 %v2264, %v2260
        %v2437 = vpack.c.b16 %v2265, %v2261
        %v2438 = vpack.c.b16 %v2266, %v2262
        %v2439 = vpack.c.b16 %v2267, %v2263
        %v2440 = vpack.c.b16 %v2272, %v2268
        %v2441 = vpack.c.b16 %v2273, %v2269
        %v2442 = vpack.c.b16 %v2274, %v2270
        %v2443 = vpack.c.b16 %v2275, %v2271
        %v2444 = vpack.c.b16 %v2280, %v2276
        %v2445 = vpack.c.b16 %v2281, %v2277
        %v2446 = vpack.c.b16 %v2282, %v2278
        %v2447 = vpack.c.b16 %v2283, %v2279
        %v2448 = vpack.c.b16 %v2288, %v2284
        %v2449 = vpack.c.b16 %v2289, %v2285
        %v2450 = vpack.c.b16 %v2290, %v2286
        %v2451 = vpack.c.b16 %v2291, %v2287
        %v2452 = vpack.c.b16 %v2296, %v2292
        %v2453 = vpack.c.b16 %v2297, %v2293
        %v2454 = vpack.c.b16 %v2298, %v2294
        %v2455 = vpack.c.b16 %v2299, %v2295
        %v2456 = vpack.c.b16 %v2304, %v2300
        %v2457 = vpack.c.b16 %v2305, %v2301
        %v2458 = vpack.c.b16 %v2306, %v2302
        %v2459 = vpack.c.b16 %v2307, %v2303
        %v2460 = vpack.c.b16 %v2312, %v2308
        %v2461 = vpack.c.b16 %v2313, %v2309
        %v2462 = vpack.c.b16 %v2314, %v2310
        %v2463 = vpack.c.b16 %v2315, %v2311
        %v2464 = vpack.c.b16 %v2320, %v2316
        %v2465 = vpack.c.b16 %v2321, %v2317
        %v2466 = vpack.c.b16 %v2322, %v2318
        %v2467 = vpack.c.b16 %v2323, %v2319
        %v2468 = vpack.c.b16 %v2328, %v2324
        %v2469 = vpack.c.b16 %v2329, %v2325
        %v2470 = vpack.c.b16 %v2330, %v2326
        %v2471 = vpack.c.b16 %v2331, %v2327
        %v2472 = vpack.c.b16 %v2336, %v2332
        %v2473 = vpack.c.b16 %v2337, %v2333
        %v2474 = vpack.c.b16 %v2338, %v2334
        %v2475 = vpack.c.b16 %v2339, %v2335
        %v2476 = vpack.c.b16 %v2344, %v2340
        %v2477 = vpack.c.b16 %v2345, %v2341
        %v2478 = vpack.c.b16 %v2346, %v2342
        %v2479 = vpack.c.b16 %v2347, %v2343
        %v2480 = vpack.c.b16 %v2352, %v2348
        %v2481 = vpack.c.b16 %v2353, %v2349
        %v2482 = vpack.c.b16 %v2354, %v2350
        %v2483 = vpack.c.b16 %v2355, %v2351
        %v2484 = vpack.c.b16 %v2360, %v2356
        %v2485 = vpack.c.b16 %v2361, %v2357
        %v2486 = vpack.c.b16 %v2362, %v2358
        %v2487 = vpack.c.b16 %v2363, %v2359
        %v2488 = vpack.c.b16 %v2368, %v2364
        %v2489 = vpack.c.b16 %v2369, %v2365
        %v2490 = vpack.c.b16 %v2370, %v2366
        %v2491 = vpack.c.b16 %v2371, %v2367
        %v2492 = vpack.c.b16 %v2376, %v2372
        %v2493 = vpack.c.b16 %v2377, %v2373
        %v2494 = vpack.c.b16 %v2378, %v2374
        %v2495 = vpack.c.b16 %v2379, %v2375
        %v2496 = vpack.c.b16 %v2384, %v2380
        %v2497 = vpack.c.b16 %v2385, %v2381
        %v2498 = vpack.c.b16 %v2386, %v2382
        %v2499 = vpack.c.b16 %v2387, %v2383
        %v2500 = vpack.c.b16 %v2392, %v2388
        %v2501 = vpack.c.b16 %v2393, %v2389
        %v2502 = vpack.c.b16 %v2394, %v2390
        %v2503 = vpack.c.b16 %v2395, %v2391
        %v2504 = vpack.c.b16 %v2400, %v2396
        %v2505 = vpack.c.b16 %v2401, %v2397
        %v2506 = vpack.c.b16 %v2402, %v2398
        %v2507 = vpack.c.b16 %v2403, %v2399
        %v2508 = vpack.c.b16 %v2408, %v2404
        %v2509 = vpack.c.b16 %v2409, %v2405
        %v2510 = vpack.c.b16 %v2410, %v2406
        %v2511 = vpack.c.b16 %v2411, %v2407
        %v2512 = vpack.c.b16 %v2416, %v2412
        %v2513 = vpack.c.b16 %v2417, %v2413
        %v2514 = vpack.c.b16 %v2418, %v2414
        %v2515 = vpack.c.b16 %v2419, %v2415
        %2612 = vmatprep.subr.bf16.mxu0 %v2449
        %2613 = vmatpush1.bf16.msra.mxu0 %v2448
        %2614 = vmatprep.subr.bf16.mxu0 %v2445
        %2615 = vmatpush1.bf16.msra.mxu0 %v2444
        %2616 = vmatprep.subr.bf16.mxu0 %v2441
        %2617 = vmatpush1.bf16.msra.mxu0 %v2440
        %2618 = vmatprep.subr.bf16.mxu0 %v2437
        %2619 = vmatpush1.bf16.msra.mxu0 %v2436
        %2620 = vmatprep.subr.bf16.mxu0 %v2433
        %2621 = vmatpush1.bf16.msra.mxu0 %v2432
        %2622 = vmatprep.subr.bf16.mxu0 %v2429
        %2623 = vmatpush1.bf16.msra.mxu0 %v2428
        %2624 = vmatprep.subr.bf16.mxu0 %v2425
        %2625 = vmatpush1.bf16.msra.mxu0 %v2424
        %2626 = vmatprep.subr.bf16.mxu0 %v2421
        %2627 = vmatpush1.bf16.msra.mxu0 %v2420
        %2628 = vmatprep.subr.bf16.mxu0 %v2481
        %2629 = vmatpush2.bf16.msra.mxu0 %v2480
        %2630 = vmatprep.subr.bf16.mxu0 %v2477
        %2631 = vmatpush2.bf16.msra.mxu0 %v2476
        %2632 = vmatprep.subr.bf16.mxu0 %v2473
        %2633 = vmatpush2.bf16.msra.mxu0 %v2472
        %2634 = vmatprep.subr.bf16.mxu0 %v2469
        %2635 = vmatpush2.bf16.msra.mxu0 %v2468
        %2636 = vmatprep.subr.bf16.mxu0 %v2465
        %2637 = vmatpush2.bf16.msra.mxu0 %v2464
        %2638 = vmatprep.subr.bf16.mxu0 %v2461
        %2639 = vmatpush2.bf16.msra.mxu0 %v2460
        %2640 = vmatprep.subr.bf16.mxu0 %v2457
        %2641 = vmatpush2.bf16.msra.mxu0 %v2456
        %2642 = vmatprep.subr.bf16.mxu0 %v2453
        %2643 = vmatpush2.bf16.msra.mxu0 %v2452
        %2644 = vmatprep.mubr.bf16.mxu0 %v1057
        %2645 = vmatmul.mubr.bf16.gmra.mxu0 %v1056
        %v2646 = vpop.f32.mrf.mxu0
        %v2647 = vadd.f32 0.0, %v2646
        %v2648 = vpop.f32.mrf.mxu0
        %v2649 = vadd.f32 0.0, %v2648
        %v2650 = vpop.f32.mrf.mxu0
        %v2651 = vadd.f32 0.0, %v2650
        %v2652 = vpop.f32.mrf.mxu0
        %v2653 = vadd.f32 0.0, %v2652
        %2654 = vmatprep.mubr.bf16.mxu0 %v1060
        %2655 = vmatmul.mubr.bf16.gmra.mxu0 %v1059
        %v2656 = vpop.f32.mrf.mxu0
        %v2657 = vadd.f32 0.0, %v2656
        %v2658 = vpop.f32.mrf.mxu0
        %v2659 = vadd.f32 0.0, %v2658
        %v2660 = vpop.f32.mrf.mxu0
        %v2661 = vadd.f32 0.0, %v2660
        %v2662 = vpop.f32.mrf.mxu0
        %v2663 = vadd.f32 0.0, %v2662
        %2664 = vmatprep.mubr.bf16.mxu0 %v1063
        %2665 = vmatmul.mubr.bf16.gmra.mxu0 %v1062
        %v2666 = vpop.f32.mrf.mxu0
        %v2667 = vadd.f32 0.0, %v2666
        %v2668 = vpop.f32.mrf.mxu0
        %v2669 = vadd.f32 0.0, %v2668
        %v2670 = vpop.f32.mrf.mxu0
        %v2671 = vadd.f32 0.0, %v2670
        %v2672 = vpop.f32.mrf.mxu0
        %v2673 = vadd.f32 0.0, %v2672
        %2674 = vmatprep.mubr.bf16.mxu0 %v1066
        %2675 = vmatmul.mubr.bf16.gmra.mxu0 %v1065
        %v2676 = vpop.f32.mrf.mxu0
        %v2677 = vadd.f32 0.0, %v2676
        %v2678 = vpop.f32.mrf.mxu0
        %v2679 = vadd.f32 0.0, %v2678
        %v2680 = vpop.f32.mrf.mxu0
        %v2681 = vadd.f32 0.0, %v2680
        %v2682 = vpop.f32.mrf.mxu0
        %v2683 = vadd.f32 0.0, %v2682
        %2684 = vmatprep.mubr.bf16.mxu0 %v1069
        %2685 = vmatmul.mubr.bf16.gmra.mxu0 %v1068
        %v2686 = vpop.f32.mrf.mxu0
        %v2687 = vadd.f32 0.0, %v2686
        %v2688 = vpop.f32.mrf.mxu0
        %v2689 = vadd.f32 0.0, %v2688
        %v2690 = vpop.f32.mrf.mxu0
        %v2691 = vadd.f32 0.0, %v2690
        %v2692 = vpop.f32.mrf.mxu0
        %v2693 = vadd.f32 0.0, %v2692
        %2694 = vmatprep.mubr.bf16.mxu0 %v1072
        %2695 = vmatmul.mubr.bf16.gmra.mxu0 %v1071
        %v2696 = vpop.f32.mrf.mxu0
        %v2697 = vadd.f32 0.0, %v2696
        %v2698 = vpop.f32.mrf.mxu0
        %v2699 = vadd.f32 0.0, %v2698
        %v2700 = vpop.f32.mrf.mxu0
        %v2701 = vadd.f32 0.0, %v2700
        %v2702 = vpop.f32.mrf.mxu0
        %v2703 = vadd.f32 0.0, %v2702
        %2704 = vmatprep.mubr.bf16.mxu0 %v1075
        %2705 = vmatmul.mubr.bf16.gmra.mxu0 %v1074
        %v2706 = vpop.f32.mrf.mxu0
        %v2707 = vadd.f32 0.0, %v2706
        %v2708 = vpop.f32.mrf.mxu0
        %v2709 = vadd.f32 0.0, %v2708
        %v2710 = vpop.f32.mrf.mxu0
        %v2711 = vadd.f32 0.0, %v2710
        %v2712 = vpop.f32.mrf.mxu0
        %v2713 = vadd.f32 0.0, %v2712
        %2714 = vmatprep.mubr.bf16.mxu0 %v1078
        %2715 = vmatmul.mubr.bf16.gmra.mxu0 %v1077
        %v2716 = vpop.f32.mrf.mxu0
        %v2717 = vadd.f32 0.0, %v2716
        %v2718 = vpop.f32.mrf.mxu0
        %v2719 = vadd.f32 0.0, %v2718
        %v2720 = vpop.f32.mrf.mxu0
        %v2721 = vadd.f32 0.0, %v2720
        %v2722 = vpop.f32.mrf.mxu0
        %v2723 = vadd.f32 0.0, %v2722
        %2724 = vdwg.mxu0
        %2725 = vmatprep.subr.bf16.mxu0 %v2513
        %2726 = vmatpush1.bf16.msra.mxu0 %v2512
        %2727 = vmatprep.subr.bf16.mxu0 %v2509
        %2728 = vmatpush1.bf16.msra.mxu0 %v2508
        %2729 = vmatprep.subr.bf16.mxu0 %v2505
        %2730 = vmatpush1.bf16.msra.mxu0 %v2504
        %2731 = vmatprep.subr.bf16.mxu0 %v2501
        %2732 = vmatpush1.bf16.msra.mxu0 %v2500
        %2733 = vmatprep.subr.bf16.mxu0 %v2497
        %2734 = vmatpush1.bf16.msra.mxu0 %v2496
        %2735 = vmatprep.subr.bf16.mxu0 %v2493
        %2736 = vmatpush1.bf16.msra.mxu0 %v2492
        %2737 = vmatprep.subr.bf16.mxu0 %v2489
        %2738 = vmatpush1.bf16.msra.mxu0 %v2488
        %2739 = vmatprep.subr.bf16.mxu0 %v2485
        %2740 = vmatpush1.bf16.msra.mxu0 %v2484
        %2741 = vmatprep.subr.bf16.mxu0 0
        %2742 = vmatpush2.bf16.msra.mxu0 0
        %2743 = vmatprep.subr.bf16.mxu0 0
        %2744 = vmatpush2.bf16.msra.mxu0 0
        %2745 = vmatprep.subr.bf16.mxu0 0
        %2746 = vmatpush2.bf16.msra.mxu0 0
        %2747 = vmatprep.subr.bf16.mxu0 0
        %2748 = vmatpush2.bf16.msra.mxu0 0
        %2749 = vmatprep.subr.bf16.mxu0 0
        %2750 = vmatpush2.bf16.msra.mxu0 0
        %2751 = vmatprep.subr.bf16.mxu0 0
        %2752 = vmatpush2.bf16.msra.mxu0 0
        %2753 = vmatprep.subr.bf16.mxu0 0
        %2754 = vmatpush2.bf16.msra.mxu0 0
        %2755 = vmatprep.subr.bf16.mxu0 0
        %2756 = vmatpush2.bf16.msra.mxu0 0
        %2757 = vmatprep.mubr.bf16.mxu0 0
        %2758 = vmatmul.mubr.bf16.gmra.mxu0 %v1058
        %v2759 = vpop.f32.mrf.mxu0
        %v2760 = vadd.f32 %v2647, %v2759
        %v2761 = vpop.f32.mrf.mxu0
        %v2762 = vadd.f32 %v2649, %v2761
        %v2763 = vpop.f32.mrf.mxu0
        %v2764 = vadd.f32 %v2651, %v2763
        %v2765 = vpop.f32.mrf.mxu0
        %v2766 = vadd.f32 %v2653, %v2765
        %2767 = vmatprep.mubr.bf16.mxu0 0
        %2768 = vmatmul.mubr.bf16.gmra.mxu0 %v1061
        %v2769 = vpop.f32.mrf.mxu0
        %v2770 = vadd.f32 %v2657, %v2769
        %v2771 = vpop.f32.mrf.mxu0
        %v2772 = vadd.f32 %v2659, %v2771
        %v2773 = vpop.f32.mrf.mxu0
        %v2774 = vadd.f32 %v2661, %v2773
        %v2775 = vpop.f32.mrf.mxu0
        %v2776 = vadd.f32 %v2663, %v2775
        %2777 = vmatprep.mubr.bf16.mxu0 0
        %2778 = vmatmul.mubr.bf16.gmra.mxu0 %v1064
        %v2779 = vpop.f32.mrf.mxu0
        %v2780 = vadd.f32 %v2667, %v2779
        %v2781 = vpop.f32.mrf.mxu0
        %v2782 = vadd.f32 %v2669, %v2781
        %v2783 = vpop.f32.mrf.mxu0
        %v2784 = vadd.f32 %v2671, %v2783
        %v2785 = vpop.f32.mrf.mxu0
        %v2786 = vadd.f32 %v2673, %v2785
        %2787 = vmatprep.mubr.bf16.mxu0 0
        %2788 = vmatmul.mubr.bf16.gmra.mxu0 %v1067
        %v2789 = vpop.f32.mrf.mxu0
        %v2790 = vadd.f32 %v2677, %v2789
        %v2791 = vpop.f32.mrf.mxu0
        %v2792 = vadd.f32 %v2679, %v2791
        %v2793 = vpop.f32.mrf.mxu0
        %v2794 = vadd.f32 %v2681, %v2793
        %v2795 = vpop.f32.mrf.mxu0
        %v2796 = vadd.f32 %v2683, %v2795
        %2797 = vmatprep.mubr.bf16.mxu0 0
        %2798 = vmatmul.mubr.bf16.gmra.mxu0 %v1070
        %v2799 = vpop.f32.mrf.mxu0
        %v2800 = vadd.f32 %v2687, %v2799
        %v2801 = vpop.f32.mrf.mxu0
        %v2802 = vadd.f32 %v2689, %v2801
        %v2803 = vpop.f32.mrf.mxu0
        %v2804 = vadd.f32 %v2691, %v2803
        %v2805 = vpop.f32.mrf.mxu0
        %v2806 = vadd.f32 %v2693, %v2805
        %2807 = vmatprep.mubr.bf16.mxu0 0
        %2808 = vmatmul.mubr.bf16.gmra.mxu0 %v1073
        %v2809 = vpop.f32.mrf.mxu0
        %v2810 = vadd.f32 %v2697, %v2809
        %v2811 = vpop.f32.mrf.mxu0
        %v2812 = vadd.f32 %v2699, %v2811
        %v2813 = vpop.f32.mrf.mxu0
        %v2814 = vadd.f32 %v2701, %v2813
        %v2815 = vpop.f32.mrf.mxu0
        %v2816 = vadd.f32 %v2703, %v2815
        %2817 = vmatprep.mubr.bf16.mxu0 0
        %2818 = vmatmul.mubr.bf16.gmra.mxu0 %v1076
        %v2819 = vpop.f32.mrf.mxu0
        %v2820 = vadd.f32 %v2707, %v2819
        %v2821 = vpop.f32.mrf.mxu0
        %v2822 = vadd.f32 %v2709, %v2821
        %v2823 = vpop.f32.mrf.mxu0
        %v2824 = vadd.f32 %v2711, %v2823
        %v2825 = vpop.f32.mrf.mxu0
        %v2826 = vadd.f32 %v2713, %v2825
        %2827 = vmatprep.mubr.bf16.mxu0 0
        %2828 = vmatmul.mubr.bf16.gmra.mxu0 %v1079
        %v2829 = vpop.f32.mrf.mxu0
        %v2830 = vadd.f32 %v2717, %v2829
        %v2831 = vpop.f32.mrf.mxu0
        %v2832 = vadd.f32 %v2719, %v2831
        %v2833 = vpop.f32.mrf.mxu0
        %v2834 = vadd.f32 %v2721, %v2833
        %v2835 = vpop.f32.mrf.mxu0
        %v2836 = vadd.f32 %v2723, %v2835
        %2837 = vdwg.mxu0
        %2838 = vmatprep.subr.bf16.mxu0 %v2451
        %2839 = vmatpush1.bf16.msra.mxu0 %v2450
        %2840 = vmatprep.subr.bf16.mxu0 %v2447
        %2841 = vmatpush1.bf16.msra.mxu0 %v2446
        %2842 = vmatprep.subr.bf16.mxu0 %v2443
        %2843 = vmatpush1.bf16.msra.mxu0 %v2442
        %2844 = vmatprep.subr.bf16.mxu0 %v2439
        %2845 = vmatpush1.bf16.msra.mxu0 %v2438
        %2846 = vmatprep.subr.bf16.mxu0 %v2435
        %2847 = vmatpush1.bf16.msra.mxu0 %v2434
        %2848 = vmatprep.subr.bf16.mxu0 %v2431
        %2849 = vmatpush1.bf16.msra.mxu0 %v2430
        %2850 = vmatprep.subr.bf16.mxu0 %v2427
        %2851 = vmatpush1.bf16.msra.mxu0 %v2426
        %2852 = vmatprep.subr.bf16.mxu0 %v2423
        %2853 = vmatpush1.bf16.msra.mxu0 %v2422
        %2854 = vmatprep.subr.bf16.mxu0 %v2483
        %2855 = vmatpush2.bf16.msra.mxu0 %v2482
        %2856 = vmatprep.subr.bf16.mxu0 %v2479
        %2857 = vmatpush2.bf16.msra.mxu0 %v2478
        %2858 = vmatprep.subr.bf16.mxu0 %v2475
        %2859 = vmatpush2.bf16.msra.mxu0 %v2474
        %2860 = vmatprep.subr.bf16.mxu0 %v2471
        %2861 = vmatpush2.bf16.msra.mxu0 %v2470
        %2862 = vmatprep.subr.bf16.mxu0 %v2467
        %2863 = vmatpush2.bf16.msra.mxu0 %v2466
        %2864 = vmatprep.subr.bf16.mxu0 %v2463
        %2865 = vmatpush2.bf16.msra.mxu0 %v2462
        %2866 = vmatprep.subr.bf16.mxu0 %v2459
        %2867 = vmatpush2.bf16.msra.mxu0 %v2458
        %2868 = vmatprep.subr.bf16.mxu0 %v2455
        %2869 = vmatpush2.bf16.msra.mxu0 %v2454
        %2870 = vmatprep.mubr.bf16.mxu0 %v1057
        %2871 = vmatmul.mubr.bf16.gmra.mxu0 %v1056
        %v2872 = vpop.f32.mrf.mxu0
        %v2873 = vadd.f32 0.0, %v2872
        %v2874 = vpop.f32.mrf.mxu0
        %v2875 = vadd.f32 0.0, %v2874
        %v2876 = vpop.f32.mrf.mxu0
        %v2877 = vadd.f32 0.0, %v2876
        %v2878 = vpop.f32.mrf.mxu0
        %v2879 = vadd.f32 0.0, %v2878
        %2880 = vmatprep.mubr.bf16.mxu0 %v1060
        %2881 = vmatmul.mubr.bf16.gmra.mxu0 %v1059
        %v2882 = vpop.f32.mrf.mxu0
        %v2883 = vadd.f32 0.0, %v2882
        %v2884 = vpop.f32.mrf.mxu0
        %v2885 = vadd.f32 0.0, %v2884
        %v2886 = vpop.f32.mrf.mxu0
        %v2887 = vadd.f32 0.0, %v2886
        %v2888 = vpop.f32.mrf.mxu0
        %v2889 = vadd.f32 0.0, %v2888
        %2890 = vmatprep.mubr.bf16.mxu0 %v1063
        %2891 = vmatmul.mubr.bf16.gmra.mxu0 %v1062
        %v2892 = vpop.f32.mrf.mxu0
        %v2893 = vadd.f32 0.0, %v2892
        %v2894 = vpop.f32.mrf.mxu0
        %v2895 = vadd.f32 0.0, %v2894
        %v2896 = vpop.f32.mrf.mxu0
        %v2897 = vadd.f32 0.0, %v2896
        %v2898 = vpop.f32.mrf.mxu0
        %v2899 = vadd.f32 0.0, %v2898
        %2900 = vmatprep.mubr.bf16.mxu0 %v1066
        %2901 = vmatmul.mubr.bf16.gmra.mxu0 %v1065
        %v2902 = vpop.f32.mrf.mxu0
        %v2903 = vadd.f32 0.0, %v2902
        %v2904 = vpop.f32.mrf.mxu0
        %v2905 = vadd.f32 0.0, %v2904
        %v2906 = vpop.f32.mrf.mxu0
        %v2907 = vadd.f32 0.0, %v2906
        %v2908 = vpop.f32.mrf.mxu0
        %v2909 = vadd.f32 0.0, %v2908
        %2910 = vmatprep.mubr.bf16.mxu0 %v1069
        %2911 = vmatmul.mubr.bf16.gmra.mxu0 %v1068
        %v2912 = vpop.f32.mrf.mxu0
        %v2913 = vadd.f32 0.0, %v2912
        %v2914 = vpop.f32.mrf.mxu0
        %v2915 = vadd.f32 0.0, %v2914
        %v2916 = vpop.f32.mrf.mxu0
        %v2917 = vadd.f32 0.0, %v2916
        %v2918 = vpop.f32.mrf.mxu0
        %v2919 = vadd.f32 0.0, %v2918
        %2920 = vmatprep.mubr.bf16.mxu0 %v1072
        %2921 = vmatmul.mubr.bf16.gmra.mxu0 %v1071
        %v2922 = vpop.f32.mrf.mxu0
        %v2923 = vadd.f32 0.0, %v2922
        %v2924 = vpop.f32.mrf.mxu0
        %v2925 = vadd.f32 0.0, %v2924
        %v2926 = vpop.f32.mrf.mxu0
        %v2927 = vadd.f32 0.0, %v2926
        %v2928 = vpop.f32.mrf.mxu0
        %v2929 = vadd.f32 0.0, %v2928
        %2930 = vmatprep.mubr.bf16.mxu0 %v1075
        %2931 = vmatmul.mubr.bf16.gmra.mxu0 %v1074
        %v2932 = vpop.f32.mrf.mxu0
        %v2933 = vadd.f32 0.0, %v2932
        %v2934 = vpop.f32.mrf.mxu0
        %v2935 = vadd.f32 0.0, %v2934
        %v2936 = vpop.f32.mrf.mxu0
        %v2937 = vadd.f32 0.0, %v2936
        %v2938 = vpop.f32.mrf.mxu0
        %v2939 = vadd.f32 0.0, %v2938
        %2940 = vmatprep.mubr.bf16.mxu0 %v1078
        %2941 = vmatmul.mubr.bf16.gmra.mxu0 %v1077
        %v2942 = vpop.f32.mrf.mxu0
        %v2943 = vadd.f32 0.0, %v2942
        %v2944 = vpop.f32.mrf.mxu0
        %v2945 = vadd.f32 0.0, %v2944
        %v2946 = vpop.f32.mrf.mxu0
        %v2947 = vadd.f32 0.0, %v2946
        %v2948 = vpop.f32.mrf.mxu0
        %v2949 = vadd.f32 0.0, %v2948
        %2950 = vdwg.mxu0
        %2951 = vmatprep.subr.bf16.mxu0 %v2515
        %2952 = vmatpush1.bf16.msra.mxu0 %v2514
        %2953 = vmatprep.subr.bf16.mxu0 %v2511
        %2954 = vmatpush1.bf16.msra.mxu0 %v2510
        %2955 = vmatprep.subr.bf16.mxu0 %v2507
        %2956 = vmatpush1.bf16.msra.mxu0 %v2506
        %2957 = vmatprep.subr.bf16.mxu0 %v2503
        %2958 = vmatpush1.bf16.msra.mxu0 %v2502
        %2959 = vmatprep.subr.bf16.mxu0 %v2499
        %2960 = vmatpush1.bf16.msra.mxu0 %v2498
        %2961 = vmatprep.subr.bf16.mxu0 %v2495
        %2962 = vmatpush1.bf16.msra.mxu0 %v2494
        %2963 = vmatprep.subr.bf16.mxu0 %v2491
        %2964 = vmatpush1.bf16.msra.mxu0 %v2490
        %2965 = vmatprep.subr.bf16.mxu0 %v2487
        %2966 = vmatpush1.bf16.msra.mxu0 %v2486
        %2967 = vmatprep.subr.bf16.mxu0 0
        %2968 = vmatpush2.bf16.msra.mxu0 0
        %2969 = vmatprep.subr.bf16.mxu0 0
        %2970 = vmatpush2.bf16.msra.mxu0 0
        %2971 = vmatprep.subr.bf16.mxu0 0
        %2972 = vmatpush2.bf16.msra.mxu0 0
        %2973 = vmatprep.subr.bf16.mxu0 0
        %2974 = vmatpush2.bf16.msra.mxu0 0
        %2975 = vmatprep.subr.bf16.mxu0 0
        %2976 = vmatpush2.bf16.msra.mxu0 0
        %2977 = vmatprep.subr.bf16.mxu0 0
        %2978 = vmatpush2.bf16.msra.mxu0 0
        %2979 = vmatprep.subr.bf16.mxu0 0
        %2980 = vmatpush2.bf16.msra.mxu0 0
        %2981 = vmatprep.subr.bf16.mxu0 0
        %2982 = vmatpush2.bf16.msra.mxu0 0
        %2983 = vmatprep.mubr.bf16.mxu0 0
        %2984 = vmatmul.mubr.bf16.gmra.mxu0 %v1058
        %v2985 = vpop.f32.mrf.mxu0
        %v2986 = vadd.f32 %v2873, %v2985
        %v2987 = vpop.f32.mrf.mxu0
        %v2988 = vadd.f32 %v2875, %v2987
        %v2989 = vpop.f32.mrf.mxu0
        %v2990 = vadd.f32 %v2877, %v2989
        %v2991 = vpop.f32.mrf.mxu0
        %v2992 = vadd.f32 %v2879, %v2991
        %2993 = vmatprep.mubr.bf16.mxu0 0
        %2994 = vmatmul.mubr.bf16.gmra.mxu0 %v1061
        %v2995 = vpop.f32.mrf.mxu0
        %v2996 = vadd.f32 %v2883, %v2995
        %v2997 = vpop.f32.mrf.mxu0
        %v2998 = vadd.f32 %v2885, %v2997
        %v2999 = vpop.f32.mrf.mxu0
        %v3000 = vadd.f32 %v2887, %v2999
        %v3001 = vpop.f32.mrf.mxu0
        %v3002 = vadd.f32 %v2889, %v3001
        %3003 = vmatprep.mubr.bf16.mxu0 0
        %3004 = vmatmul.mubr.bf16.gmra.mxu0 %v1064
        %v3005 = vpop.f32.mrf.mxu0
        %v3006 = vadd.f32 %v2893, %v3005
        %v3007 = vpop.f32.mrf.mxu0
        %v3008 = vadd.f32 %v2895, %v3007
        %v3009 = vpop.f32.mrf.mxu0
        %v3010 = vadd.f32 %v2897, %v3009
        %v3011 = vpop.f32.mrf.mxu0
        %v3012 = vadd.f32 %v2899, %v3011
        %3013 = vmatprep.mubr.bf16.mxu0 0
        %3014 = vmatmul.mubr.bf16.gmra.mxu0 %v1067
        %v3015 = vpop.f32.mrf.mxu0
        %v3016 = vadd.f32 %v2903, %v3015
        %v3017 = vpop.f32.mrf.mxu0
        %v3018 = vadd.f32 %v2905, %v3017
        %v3019 = vpop.f32.mrf.mxu0
        %v3020 = vadd.f32 %v2907, %v3019
        %v3021 = vpop.f32.mrf.mxu0
        %v3022 = vadd.f32 %v2909, %v3021
        %3023 = vmatprep.mubr.bf16.mxu0 0
        %3024 = vmatmul.mubr.bf16.gmra.mxu0 %v1070
        %v3025 = vpop.f32.mrf.mxu0
        %v3026 = vadd.f32 %v2913, %v3025
        %v3027 = vpop.f32.mrf.mxu0
        %v3028 = vadd.f32 %v2915, %v3027
        %v3029 = vpop.f32.mrf.mxu0
        %v3030 = vadd.f32 %v2917, %v3029
        %v3031 = vpop.f32.mrf.mxu0
        %v3032 = vadd.f32 %v2919, %v3031
        %3033 = vmatprep.mubr.bf16.mxu0 0
        %3034 = vmatmul.mubr.bf16.gmra.mxu0 %v1073
        %v3035 = vpop.f32.mrf.mxu0
        %v3036 = vadd.f32 %v2923, %v3035
        %v3037 = vpop.f32.mrf.mxu0
        %v3038 = vadd.f32 %v2925, %v3037
        %v3039 = vpop.f32.mrf.mxu0
        %v3040 = vadd.f32 %v2927, %v3039
        %v3041 = vpop.f32.mrf.mxu0
        %v3042 = vadd.f32 %v2929, %v3041
        %3043 = vmatprep.mubr.bf16.mxu0 0
        %3044 = vmatmul.mubr.bf16.gmra.mxu0 %v1076
        %v3045 = vpop.f32.mrf.mxu0
        %v3046 = vadd.f32 %v2933, %v3045
        %v3047 = vpop.f32.mrf.mxu0
        %v3048 = vadd.f32 %v2935, %v3047
        %v3049 = vpop.f32.mrf.mxu0
        %v3050 = vadd.f32 %v2937, %v3049
        %v3051 = vpop.f32.mrf.mxu0
        %v3052 = vadd.f32 %v2939, %v3051
        %3053 = vmatprep.mubr.bf16.mxu0 0
        %3054 = vmatmul.mubr.bf16.gmra.mxu0 %v1079
        %v3055 = vpop.f32.mrf.mxu0
        %v3056 = vadd.f32 %v2943, %v3055
        %v3057 = vpop.f32.mrf.mxu0
        %v3058 = vadd.f32 %v2945, %v3057
        %v3059 = vpop.f32.mrf.mxu0
        %v3060 = vadd.f32 %v2947, %v3059
        %v3061 = vpop.f32.mrf.mxu0
        %v3062 = vadd.f32 %v2949, %v3061
        %3063 = vdwg.mxu0
        %v3064 = vxor.u32 %v1732, 2147483648
        %v3065 = vxor.u32 %v1734, 2147483648
        %v3066 = vxor.u32 %v1958, 2147483648
        %v3067 = vxor.u32 %v1960, 2147483648
        %v3068 = vxor.u32 %v1736, 2147483648
        %v3069 = vxor.u32 %v1738, 2147483648
        %v3070 = vxor.u32 %v1962, 2147483648
        %v3071 = vxor.u32 %v1964, 2147483648
        %v3072 = vxor.u32 %v1742, 2147483648
        %v3073 = vxor.u32 %v1744, 2147483648
        %v3074 = vxor.u32 %v1968, 2147483648
        %v3075 = vxor.u32 %v1970, 2147483648
        %v3076 = vxor.u32 %v1746, 2147483648
        %v3077 = vxor.u32 %v1748, 2147483648
        %v3078 = vxor.u32 %v1972, 2147483648
        %v3079 = vxor.u32 %v1974, 2147483648
        %v3080 = vxor.u32 %v1752, 2147483648
        %v3081 = vxor.u32 %v1754, 2147483648
        %v3082 = vxor.u32 %v1978, 2147483648
        %v3083 = vxor.u32 %v1980, 2147483648
        %v3084 = vxor.u32 %v1756, 2147483648
        %v3085 = vxor.u32 %v1758, 2147483648
        %v3086 = vxor.u32 %v1982, 2147483648
        %v3087 = vxor.u32 %v1984, 2147483648
        %v3088 = vxor.u32 %v1762, 2147483648
        %v3089 = vxor.u32 %v1764, 2147483648
        %v3090 = vxor.u32 %v1988, 2147483648
        %v3091 = vxor.u32 %v1990, 2147483648
        %v3092 = vxor.u32 %v1766, 2147483648
        %v3093 = vxor.u32 %v1768, 2147483648
        %v3094 = vxor.u32 %v1992, 2147483648
        %v3095 = vxor.u32 %v1994, 2147483648
        %v3096 = vxor.u32 %v1772, 2147483648
        %v3097 = vxor.u32 %v1774, 2147483648
        %v3098 = vxor.u32 %v1998, 2147483648
        %v3099 = vxor.u32 %v2000, 2147483648
        %v3100 = vxor.u32 %v1776, 2147483648
        %v3101 = vxor.u32 %v1778, 2147483648
        %v3102 = vxor.u32 %v2002, 2147483648
        %v3103 = vxor.u32 %v2004, 2147483648
        %v3104 = vxor.u32 %v1782, 2147483648
        %v3105 = vxor.u32 %v1784, 2147483648
        %v3106 = vxor.u32 %v2008, 2147483648
        %v3107 = vxor.u32 %v2010, 2147483648
        %v3108 = vxor.u32 %v1786, 2147483648
        %v3109 = vxor.u32 %v1788, 2147483648
        %v3110 = vxor.u32 %v2012, 2147483648
        %v3111 = vxor.u32 %v2014, 2147483648
        %v3112 = vxor.u32 %v1792, 2147483648
        %v3113 = vxor.u32 %v1794, 2147483648
        %v3114 = vxor.u32 %v2018, 2147483648
        %v3115 = vxor.u32 %v2020, 2147483648
        %v3116 = vxor.u32 %v1796, 2147483648
        %v3117 = vxor.u32 %v1798, 2147483648
        %v3118 = vxor.u32 %v2022, 2147483648
        %v3119 = vxor.u32 %v2024, 2147483648
        %v3120 = vxor.u32 %v1802, 2147483648
        %v3121 = vxor.u32 %v1804, 2147483648
        %v3122 = vxor.u32 %v2028, 2147483648
        %v3123 = vxor.u32 %v2030, 2147483648
        %v3124 = vxor.u32 %v1806, 2147483648
        %v3125 = vxor.u32 %v1808, 2147483648
        %v3126 = vxor.u32 %v2032, 2147483648
        %v3127 = vxor.u32 %v2034, 2147483648
        %v3128 = vmul.f32 %v3064, 1.442695
        %v3129 = vpow.pop %v3128
        %v3130 = vmul.f32 %v3065, 1.442695
        %v3131 = vpow.pop %v3130
        %v3132 = vmul.f32 %v3066, 1.442695
        %v3133 = vpow.pop %v3132
        %v3134 = vmul.f32 %v3067, 1.442695
        %v3135 = vpow.pop %v3134
        %v3136 = vmul.f32 %v3068, 1.442695
        %v3137 = vpow.pop %v3136
        %v3138 = vmul.f32 %v3069, 1.442695
        %v3139 = vpow.pop %v3138
        %v3140 = vmul.f32 %v3070, 1.442695
        %v3141 = vpow.pop %v3140
        %v3142 = vmul.f32 %v3071, 1.442695
        %v3143 = vpow.pop %v3142
        %v3144 = vmul.f32 %v3072, 1.442695
        %v3145 = vpow.pop %v3144
        %v3146 = vmul.f32 %v3073, 1.442695
        %v3147 = vpow.pop %v3146
        %v3148 = vmul.f32 %v3074, 1.442695
        %v3149 = vpow.pop %v3148
        %v3150 = vmul.f32 %v3075, 1.442695
        %v3151 = vpow.pop %v3150
        %v3152 = vmul.f32 %v3076, 1.442695
        %v3153 = vpow.pop %v3152
        %v3154 = vmul.f32 %v3077, 1.442695
        %v3155 = vpow.pop %v3154
        %v3156 = vmul.f32 %v3078, 1.442695
        %v3157 = vpow.pop %v3156
        %v3158 = vmul.f32 %v3079, 1.442695
        %v3159 = vpow.pop %v3158
        %v3160 = vmul.f32 %v3080, 1.442695
        %v3161 = vpow.pop %v3160
        %v3162 = vmul.f32 %v3081, 1.442695
        %v3163 = vpow.pop %v3162
        %v3164 = vmul.f32 %v3082, 1.442695
        %v3165 = vpow.pop %v3164
        %v3166 = vmul.f32 %v3083, 1.442695
        %v3167 = vpow.pop %v3166
        %v3168 = vmul.f32 %v3084, 1.442695
        %v3169 = vpow.pop %v3168
        %v3170 = vmul.f32 %v3085, 1.442695
        %v3171 = vpow.pop %v3170
        %v3172 = vmul.f32 %v3086, 1.442695
        %v3173 = vpow.pop %v3172
        %v3174 = vmul.f32 %v3087, 1.442695
        %v3175 = vpow.pop %v3174
        %v3176 = vmul.f32 %v3088, 1.442695
        %v3177 = vpow.pop %v3176
        %v3178 = vmul.f32 %v3089, 1.442695
        %v3179 = vpow.pop %v3178
        %v3180 = vmul.f32 %v3090, 1.442695
        %v3181 = vpow.pop %v3180
        %v3182 = vmul.f32 %v3091, 1.442695
        %v3183 = vpow.pop %v3182
        %v3184 = vmul.f32 %v3092, 1.442695
        %v3185 = vpow.pop %v3184
        %v3186 = vmul.f32 %v3093, 1.442695
        %v3187 = vpow.pop %v3186
        %v3188 = vmul.f32 %v3094, 1.442695
        %v3189 = vpow.pop %v3188
        %v3190 = vmul.f32 %v3095, 1.442695
        %v3191 = vpow.pop %v3190
        %v3192 = vmul.f32 %v3096, 1.442695
        %v3193 = vpow.pop %v3192
        %v3194 = vmul.f32 %v3097, 1.442695
        %v3195 = vpow.pop %v3194
        %v3196 = vmul.f32 %v3098, 1.442695
        %v3197 = vpow.pop %v3196
        %v3198 = vmul.f32 %v3099, 1.442695
        %v3199 = vpow.pop %v3198
        %v3200 = vmul.f32 %v3100, 1.442695
        %v3201 = vpow.pop %v3200
        %v3202 = vmul.f32 %v3101, 1.442695
        %v3203 = vpow.pop %v3202
        %v3204 = vmul.f32 %v3102, 1.442695
        %v3205 = vpow.pop %v3204
        %v3206 = vmul.f32 %v3103, 1.442695
        %v3207 = vpow.pop %v3206
        %v3208 = vmul.f32 %v3104, 1.442695
        %v3209 = vpow.pop %v3208
        %v3210 = vmul.f32 %v3105, 1.442695
        %v3211 = vpow.pop %v3210
        %v3212 = vmul.f32 %v3106, 1.442695
        %v3213 = vpow.pop %v3212
        %v3214 = vmul.f32 %v3107, 1.442695
        %v3215 = vpow.pop %v3214
        %v3216 = vmul.f32 %v3108, 1.442695
        %v3217 = vpow.pop %v3216
        %v3218 = vmul.f32 %v3109, 1.442695
        %v3219 = vpow.pop %v3218
        %v3220 = vmul.f32 %v3110, 1.442695
        %v3221 = vpow.pop %v3220
        %v3222 = vmul.f32 %v3111, 1.442695
        %v3223 = vpow.pop %v3222
        %v3224 = vmul.f32 %v3112, 1.442695
        %v3225 = vpow.pop %v3224
        %v3226 = vmul.f32 %v3113, 1.442695
        %v3227 = vpow.pop %v3226
        %v3228 = vmul.f32 %v3114, 1.442695
        %v3229 = vpow.pop %v3228
        %v3230 = vmul.f32 %v3115, 1.442695
        %v3231 = vpow.pop %v3230
        %v3232 = vmul.f32 %v3116, 1.442695
        %v3233 = vpow.pop %v3232
        %v3234 = vmul.f32 %v3117, 1.442695
        %v3235 = vpow.pop %v3234
        %v3236 = vmul.f32 %v3118, 1.442695
        %v3237 = vpow.pop %v3236
        %v3238 = vmul.f32 %v3119, 1.442695
        %v3239 = vpow.pop %v3238
        %v3240 = vmul.f32 %v3120, 1.442695
        %v3241 = vpow.pop %v3240
        %v3242 = vmul.f32 %v3121, 1.442695
        %v3243 = vpow.pop %v3242
        %v3244 = vmul.f32 %v3122, 1.442695
        %v3245 = vpow.pop %v3244
        %v3246 = vmul.f32 %v3123, 1.442695
        %v3247 = vpow.pop %v3246
        %v3248 = vmul.f32 %v3124, 1.442695
        %v3249 = vpow.pop %v3248
        %v3250 = vmul.f32 %v3125, 1.442695
        %v3251 = vpow.pop %v3250
        %v3252 = vmul.f32 %v3126, 1.442695
        %v3253 = vpow.pop %v3252
        %v3254 = vmul.f32 %v3127, 1.442695
        %v3255 = vpow.pop %v3254
        %v3256 = vadd.f32 %v3129, 1.0
        %v3257 = vadd.f32 %v3131, 1.0
        %v3258 = vadd.f32 %v3133, 1.0
        %v3259 = vadd.f32 %v3135, 1.0
        %v3260 = vadd.f32 %v3137, 1.0
        %v3261 = vadd.f32 %v3139, 1.0
        %v3262 = vadd.f32 %v3141, 1.0
        %v3263 = vadd.f32 %v3143, 1.0
        %v3264 = vadd.f32 %v3145, 1.0
        %v3265 = vadd.f32 %v3147, 1.0
        %v3266 = vadd.f32 %v3149, 1.0
        %v3267 = vadd.f32 %v3151, 1.0
        %v3268 = vadd.f32 %v3153, 1.0
        %v3269 = vadd.f32 %v3155, 1.0
        %v3270 = vadd.f32 %v3157, 1.0
        %v3271 = vadd.f32 %v3159, 1.0
        %v3272 = vadd.f32 %v3161, 1.0
        %v3273 = vadd.f32 %v3163, 1.0
        %v3274 = vadd.f32 %v3165, 1.0
        %v3275 = vadd.f32 %v3167, 1.0
        %v3276 = vadd.f32 %v3169, 1.0
        %v3277 = vadd.f32 %v3171, 1.0
        %v3278 = vadd.f32 %v3173, 1.0
        %v3279 = vadd.f32 %v3175, 1.0
        %v3280 = vadd.f32 %v3177, 1.0
        %v3281 = vadd.f32 %v3179, 1.0
        %v3282 = vadd.f32 %v3181, 1.0
        %v3283 = vadd.f32 %v3183, 1.0
        %v3284 = vadd.f32 %v3185, 1.0
        %v3285 = vadd.f32 %v3187, 1.0
        %v3286 = vadd.f32 %v3189, 1.0
        %v3287 = vadd.f32 %v3191, 1.0
        %v3288 = vadd.f32 %v3193, 1.0
        %v3289 = vadd.f32 %v3195, 1.0
        %v3290 = vadd.f32 %v3197, 1.0
        %v3291 = vadd.f32 %v3199, 1.0
        %v3292 = vadd.f32 %v3201, 1.0
        %v3293 = vadd.f32 %v3203, 1.0
        %v3294 = vadd.f32 %v3205, 1.0
        %v3295 = vadd.f32 %v3207, 1.0
        %v3296 = vadd.f32 %v3209, 1.0
        %v3297 = vadd.f32 %v3211, 1.0
        %v3298 = vadd.f32 %v3213, 1.0
        %v3299 = vadd.f32 %v3215, 1.0
        %v3300 = vadd.f32 %v3217, 1.0
        %v3301 = vadd.f32 %v3219, 1.0
        %v3302 = vadd.f32 %v3221, 1.0
        %v3303 = vadd.f32 %v3223, 1.0
        %v3304 = vadd.f32 %v3225, 1.0
        %v3305 = vadd.f32 %v3227, 1.0
        %v3306 = vadd.f32 %v3229, 1.0
        %v3307 = vadd.f32 %v3231, 1.0
        %v3308 = vadd.f32 %v3233, 1.0
        %v3309 = vadd.f32 %v3235, 1.0
        %v3310 = vadd.f32 %v3237, 1.0
        %v3311 = vadd.f32 %v3239, 1.0
        %v3312 = vadd.f32 %v3241, 1.0
        %v3313 = vadd.f32 %v3243, 1.0
        %v3314 = vadd.f32 %v3245, 1.0
        %v3315 = vadd.f32 %v3247, 1.0
        %v3316 = vadd.f32 %v3249, 1.0
        %v3317 = vadd.f32 %v3251, 1.0
        %v3318 = vadd.f32 %v3253, 1.0
        %v3319 = vadd.f32 %v3255, 1.0
        %v3320 = vrcp.pop %v3256
        %v3321 = vmul.f32 1.0, %v3320
        %v3322 = vrcp.pop %v3257
        %v3323 = vmul.f32 1.0, %v3322
        %v3324 = vrcp.pop %v3258
        %v3325 = vmul.f32 1.0, %v3324
        %v3326 = vrcp.pop %v3259
        %v3327 = vmul.f32 1.0, %v3326
        %v3328 = vrcp.pop %v3260
        %v3329 = vmul.f32 1.0, %v3328
        %v3330 = vrcp.pop %v3261
        %v3331 = vmul.f32 1.0, %v3330
        %v3332 = vrcp.pop %v3262
        %v3333 = vmul.f32 1.0, %v3332
        %v3334 = vrcp.pop %v3263
        %v3335 = vmul.f32 1.0, %v3334
        %v3336 = vrcp.pop %v3264
        %v3337 = vmul.f32 1.0, %v3336
        %v3338 = vrcp.pop %v3265
        %v3339 = vmul.f32 1.0, %v3338
        %v3340 = vrcp.pop %v3266
        %v3341 = vmul.f32 1.0, %v3340
        %v3342 = vrcp.pop %v3267
        %v3343 = vmul.f32 1.0, %v3342
        %v3344 = vrcp.pop %v3268
        %v3345 = vmul.f32 1.0, %v3344
        %v3346 = vrcp.pop %v3269
        %v3347 = vmul.f32 1.0, %v3346
        %v3348 = vrcp.pop %v3270
        %v3349 = vmul.f32 1.0, %v3348
        %v3350 = vrcp.pop %v3271
        %v3351 = vmul.f32 1.0, %v3350
        %v3352 = vrcp.pop %v3272
        %v3353 = vmul.f32 1.0, %v3352
        %v3354 = vrcp.pop %v3273
        %v3355 = vmul.f32 1.0, %v3354
        %v3356 = vrcp.pop %v3274
        %v3357 = vmul.f32 1.0, %v3356
        %v3358 = vrcp.pop %v3275
        %v3359 = vmul.f32 1.0, %v3358
        %v3360 = vrcp.pop %v3276
        %v3361 = vmul.f32 1.0, %v3360
        %v3362 = vrcp.pop %v3277
        %v3363 = vmul.f32 1.0, %v3362
        %v3364 = vrcp.pop %v3278
        %v3365 = vmul.f32 1.0, %v3364
        %v3366 = vrcp.pop %v3279
        %v3367 = vmul.f32 1.0, %v3366
        %v3368 = vrcp.pop %v3280
        %v3369 = vmul.f32 1.0, %v3368
        %v3370 = vrcp.pop %v3281
        %v3371 = vmul.f32 1.0, %v3370
        %v3372 = vrcp.pop %v3282
        %v3373 = vmul.f32 1.0, %v3372
        %v3374 = vrcp.pop %v3283
        %v3375 = vmul.f32 1.0, %v3374
        %v3376 = vrcp.pop %v3284
        %v3377 = vmul.f32 1.0, %v3376
        %v3378 = vrcp.pop %v3285
        %v3379 = vmul.f32 1.0, %v3378
        %v3380 = vrcp.pop %v3286
        %v3381 = vmul.f32 1.0, %v3380
        %v3382 = vrcp.pop %v3287
        %v3383 = vmul.f32 1.0, %v3382
        %v3384 = vrcp.pop %v3288
        %v3385 = vmul.f32 1.0, %v3384
        %v3386 = vrcp.pop %v3289
        %v3387 = vmul.f32 1.0, %v3386
        %v3388 = vrcp.pop %v3290
        %v3389 = vmul.f32 1.0, %v3388
        %v3390 = vrcp.pop %v3291
        %v3391 = vmul.f32 1.0, %v3390
        %v3392 = vrcp.pop %v3292
        %v3393 = vmul.f32 1.0, %v3392
        %v3394 = vrcp.pop %v3293
        %v3395 = vmul.f32 1.0, %v3394
        %v3396 = vrcp.pop %v3294
        %v3397 = vmul.f32 1.0, %v3396
        %v3398 = vrcp.pop %v3295
        %v3399 = vmul.f32 1.0, %v3398
        %v3400 = vrcp.pop %v3296
        %v3401 = vmul.f32 1.0, %v3400
        %v3402 = vrcp.pop %v3297
        %v3403 = vmul.f32 1.0, %v3402
        %v3404 = vrcp.pop %v3298
        %v3405 = vmul.f32 1.0, %v3404
        %v3406 = vrcp.pop %v3299
        %v3407 = vmul.f32 1.0, %v3406
        %v3408 = vrcp.pop %v3300
        %v3409 = vmul.f32 1.0, %v3408
        %v3410 = vrcp.pop %v3301
        %v3411 = vmul.f32 1.0, %v3410
        %v3412 = vrcp.pop %v3302
        %v3413 = vmul.f32 1.0, %v3412
        %v3414 = vrcp.pop %v3303
        %v3415 = vmul.f32 1.0, %v3414
        %v3416 = vrcp.pop %v3304
        %v3417 = vmul.f32 1.0, %v3416
        %v3418 = vrcp.pop %v3305
        %v3419 = vmul.f32 1.0, %v3418
        %v3420 = vrcp.pop %v3306
        %v3421 = vmul.f32 1.0, %v3420
        %v3422 = vrcp.pop %v3307
        %v3423 = vmul.f32 1.0, %v3422
        %v3424 = vrcp.pop %v3308
        %v3425 = vmul.f32 1.0, %v3424
        %v3426 = vrcp.pop %v3309
        %v3427 = vmul.f32 1.0, %v3426
        %v3428 = vrcp.pop %v3310
        %v3429 = vmul.f32 1.0, %v3428
        %v3430 = vrcp.pop %v3311
        %v3431 = vmul.f32 1.0, %v3430
        %v3432 = vrcp.pop %v3312
        %v3433 = vmul.f32 1.0, %v3432
        %v3434 = vrcp.pop %v3313
        %v3435 = vmul.f32 1.0, %v3434
        %v3436 = vrcp.pop %v3314
        %v3437 = vmul.f32 1.0, %v3436
        %v3438 = vrcp.pop %v3315
        %v3439 = vmul.f32 1.0, %v3438
        %v3440 = vrcp.pop %v3316
        %v3441 = vmul.f32 1.0, %v3440
        %v3442 = vrcp.pop %v3317
        %v3443 = vmul.f32 1.0, %v3442
        %v3444 = vrcp.pop %v3318
        %v3445 = vmul.f32 1.0, %v3444
        %v3446 = vrcp.pop %v3319
        %v3447 = vmul.f32 1.0, %v3446
        %v3448 = vmul.f32 %v1732, %v3321
        %v3449 = vmul.f32 %v1734, %v3323
        %v3450 = vmul.f32 %v1958, %v3325
        %v3451 = vmul.f32 %v1960, %v3327
        %v3452 = vmul.f32 %v1736, %v3329
        %v3453 = vmul.f32 %v1738, %v3331
        %v3454 = vmul.f32 %v1962, %v3333
        %v3455 = vmul.f32 %v1964, %v3335
        %v3456 = vmul.f32 %v1742, %v3337
        %v3457 = vmul.f32 %v1744, %v3339
        %v3458 = vmul.f32 %v1968, %v3341
        %v3459 = vmul.f32 %v1970, %v3343
        %v3460 = vmul.f32 %v1746, %v3345
        %v3461 = vmul.f32 %v1748, %v3347
        %v3462 = vmul.f32 %v1972, %v3349
        %v3463 = vmul.f32 %v1974, %v3351
        %v3464 = vmul.f32 %v1752, %v3353
        %v3465 = vmul.f32 %v1754, %v3355
        %v3466 = vmul.f32 %v1978, %v3357
        %v3467 = vmul.f32 %v1980, %v3359
        %v3468 = vmul.f32 %v1756, %v3361
        %v3469 = vmul.f32 %v1758, %v3363
        %v3470 = vmul.f32 %v1982, %v3365
        %v3471 = vmul.f32 %v1984, %v3367
        %v3472 = vmul.f32 %v1762, %v3369
        %v3473 = vmul.f32 %v1764, %v3371
        %v3474 = vmul.f32 %v1988, %v3373
        %v3475 = vmul.f32 %v1990, %v3375
        %v3476 = vmul.f32 %v1766, %v3377
        %v3477 = vmul.f32 %v1768, %v3379
        %v3478 = vmul.f32 %v1992, %v3381
        %v3479 = vmul.f32 %v1994, %v3383
        %v3480 = vmul.f32 %v1772, %v3385
        %v3481 = vmul.f32 %v1774, %v3387
        %v3482 = vmul.f32 %v1998, %v3389
        %v3483 = vmul.f32 %v2000, %v3391
        %v3484 = vmul.f32 %v1776, %v3393
        %v3485 = vmul.f32 %v1778, %v3395
        %v3486 = vmul.f32 %v2002, %v3397
        %v3487 = vmul.f32 %v2004, %v3399
        %v3488 = vmul.f32 %v1782, %v3401
        %v3489 = vmul.f32 %v1784, %v3403
        %v3490 = vmul.f32 %v2008, %v3405
        %v3491 = vmul.f32 %v2010, %v3407
        %v3492 = vmul.f32 %v1786, %v3409
        %v3493 = vmul.f32 %v1788, %v3411
        %v3494 = vmul.f32 %v2012, %v3413
        %v3495 = vmul.f32 %v2014, %v3415
        %v3496 = vmul.f32 %v1792, %v3417
        %v3497 = vmul.f32 %v1794, %v3419
        %v3498 = vmul.f32 %v2018, %v3421
        %v3499 = vmul.f32 %v2020, %v3423
        %v3500 = vmul.f32 %v1796, %v3425
        %v3501 = vmul.f32 %v1798, %v3427
        %v3502 = vmul.f32 %v2022, %v3429
        %v3503 = vmul.f32 %v2024, %v3431
        %v3504 = vmul.f32 %v1802, %v3433
        %v3505 = vmul.f32 %v1804, %v3435
        %v3506 = vmul.f32 %v2028, %v3437
        %v3507 = vmul.f32 %v2030, %v3439
        %v3508 = vmul.f32 %v1806, %v3441
        %v3509 = vmul.f32 %v1808, %v3443
        %v3510 = vmul.f32 %v2032, %v3445
        %v3511 = vmul.f32 %v2034, %v3447
        %v3512 = vmul.f32 %v3448, %v2760
        %v3513 = vmul.f32 %v3449, %v2762
        %v3514 = vmul.f32 %v3450, %v2986
        %v3515 = vmul.f32 %v3451, %v2988
        %v3516 = vmul.f32 %v3452, %v2764
        %v3517 = vmul.f32 %v3453, %v2766
        %v3518 = vmul.f32 %v3454, %v2990
        %v3519 = vmul.f32 %v3455, %v2992
        %v3520 = vmul.f32 %v3456, %v2770
        %v3521 = vmul.f32 %v3457, %v2772
        %v3522 = vmul.f32 %v3458, %v2996
        %v3523 = vmul.f32 %v3459, %v2998
        %v3524 = vmul.f32 %v3460, %v2774
        %v3525 = vmul.f32 %v3461, %v2776
        %v3526 = vmul.f32 %v3462, %v3000
        %v3527 = vmul.f32 %v3463, %v3002
        %v3528 = vmul.f32 %v3464, %v2780
        %v3529 = vmul.f32 %v3465, %v2782
        %v3530 = vmul.f32 %v3466, %v3006
        %v3531 = vmul.f32 %v3467, %v3008
        %v3532 = vmul.f32 %v3468, %v2784
        %v3533 = vmul.f32 %v3469, %v2786
        %v3534 = vmul.f32 %v3470, %v3010
        %v3535 = vmul.f32 %v3471, %v3012
        %v3536 = vmul.f32 %v3472, %v2790
        %v3537 = vmul.f32 %v3473, %v2792
        %v3538 = vmul.f32 %v3474, %v3016
        %v3539 = vmul.f32 %v3475, %v3018
        %v3540 = vmul.f32 %v3476, %v2794
        %v3541 = vmul.f32 %v3477, %v2796
        %v3542 = vmul.f32 %v3478, %v3020
        %v3543 = vmul.f32 %v3479, %v3022
        %v3544 = vmul.f32 %v3480, %v2800
        %v3545 = vmul.f32 %v3481, %v2802
        %v3546 = vmul.f32 %v3482, %v3026
        %v3547 = vmul.f32 %v3483, %v3028
        %v3548 = vmul.f32 %v3484, %v2804
        %v3549 = vmul.f32 %v3485, %v2806
        %v3550 = vmul.f32 %v3486, %v3030
        %v3551 = vmul.f32 %v3487, %v3032
        %v3552 = vmul.f32 %v3488, %v2810
        %v3553 = vmul.f32 %v3489, %v2812
        %v3554 = vmul.f32 %v3490, %v3036
        %v3555 = vmul.f32 %v3491, %v3038
        %v3556 = vmul.f32 %v3492, %v2814
        %v3557 = vmul.f32 %v3493, %v2816
        %v3558 = vmul.f32 %v3494, %v3040
        %v3559 = vmul.f32 %v3495, %v3042
        %v3560 = vmul.f32 %v3496, %v2820
        %v3561 = vmul.f32 %v3497, %v2822
        %v3562 = vmul.f32 %v3498, %v3046
        %v3563 = vmul.f32 %v3499, %v3048
        %v3564 = vmul.f32 %v3500, %v2824
        %v3565 = vmul.f32 %v3501, %v2826
        %v3566 = vmul.f32 %v3502, %v3050
        %v3567 = vmul.f32 %v3503, %v3052
        %v3568 = vmul.f32 %v3504, %v2830
        %v3569 = vmul.f32 %v3505, %v2832
        %v3570 = vmul.f32 %v3506, %v3056
        %v3571 = vmul.f32 %v3507, %v3058
        %v3572 = vmul.f32 %v3508, %v2834
        %v3573 = vmul.f32 %v3509, %v2836
        %v3574 = vmul.f32 %v3510, %v3060
        %v3575 = vmul.f32 %v3511, %v3062
        %v3576 = vpack.c.bf16 %v3516, %v3512
        %v3577 = vpack.c.bf16 %v3517, %v3513
        %v3578 = vpack.c.bf16 %v3518, %v3514
        %v3579 = vpack.c.bf16 %v3519, %v3515
        %v3580 = vpack.c.bf16 %v3524, %v3520
        %v3581 = vpack.c.bf16 %v3525, %v3521
        %v3582 = vpack.c.bf16 %v3526, %v3522
        %v3583 = vpack.c.bf16 %v3527, %v3523
        %v3584 = vpack.c.bf16 %v3532, %v3528
        %v3585 = vpack.c.bf16 %v3533, %v3529
        %v3586 = vpack.c.bf16 %v3534, %v3530
        %v3587 = vpack.c.bf16 %v3535, %v3531
        %v3588 = vpack.c.bf16 %v3540, %v3536
        %v3589 = vpack.c.bf16 %v3541, %v3537
        %v3590 = vpack.c.bf16 %v3542, %v3538
        %v3591 = vpack.c.bf16 %v3543, %v3539
        %v3592 = vpack.c.bf16 %v3548, %v3544
        %v3593 = vpack.c.bf16 %v3549, %v3545
        %v3594 = vpack.c.bf16 %v3550, %v3546
        %v3595 = vpack.c.bf16 %v3551, %v3547
        %v3596 = vpack.c.bf16 %v3556, %v3552
        %v3597 = vpack.c.bf16 %v3557, %v3553
        %v3598 = vpack.c.bf16 %v3558, %v3554
        %v3599 = vpack.c.bf16 %v3559, %v3555
        %v3600 = vpack.c.bf16 %v3564, %v3560
        %v3601 = vpack.c.bf16 %v3565, %v3561
        %v3602 = vpack.c.bf16 %v3566, %v3562
        %v3603 = vpack.c.bf16 %v3567, %v3563
        %v3604 = vpack.c.bf16 %v3572, %v3568
        %v3605 = vpack.c.bf16 %v3573, %v3569
        %v3606 = vpack.c.bf16 %v3574, %v3570
        %v3607 = vpack.c.bf16 %v3575, %v3571
        %v3608 = vld [vmem:[%s780] sm:$0xff]
        %v3609 = vld [vmem:[%s780 + $0x8] sm:$0xf]
        %v3610 = vld [vmem:[%s780 + $0xc] sm:$0xff]
        %v3611 = vld [vmem:[%s780 + $0x14] sm:$0xf]
        %v3612 = vld [vmem:[%s780 + $0x18] sm:$0xff]
        %v3613 = vld [vmem:[%s780 + $0x20] sm:$0xf]
        %v3614 = vld [vmem:[%s780 + $0x24] sm:$0xff]
        %v3615 = vld [vmem:[%s780 + $0x2c] sm:$0xf]
        %v3616 = vld [vmem:[%s780 + $0x30] sm:$0xff]
        %v3617 = vld [vmem:[%s780 + $0x38] sm:$0xf]
        %v3618 = vld [vmem:[%s780 + $0x3c] sm:$0xff]
        %v3619 = vld [vmem:[%s780 + $0x44] sm:$0xf]
        %v3620 = vld [vmem:[%s780 + $0x48] sm:$0xff]
        %v3621 = vld [vmem:[%s780 + $0x50] sm:$0xf]
        %v3622 = vld [vmem:[%s780 + $0x54] sm:$0xff]
        %v3623 = vld [vmem:[%s780 + $0x5c] sm:$0xf]
        %v3624 = vld [vmem:[%s780 + $0x60] sm:$0xff]
        %v3625 = vld [vmem:[%s780 + $0x68] sm:$0xf]
        %v3626 = vld [vmem:[%s780 + $0x6c] sm:$0xff]
        %v3627 = vld [vmem:[%s780 + $0x74] sm:$0xf]
        %v3628 = vld [vmem:[%s780 + $0x78] sm:$0xff]
        %v3629 = vld [vmem:[%s780 + $0x80] sm:$0xf]
        %v3630 = vld [vmem:[%s780 + $0x84] sm:$0xff]
        %v3631 = vld [vmem:[%s780 + $0x8c] sm:$0xf]
        %v3632 = vld [vmem:[%s780 + $0x90] sm:$0xff]
        %v3633 = vld [vmem:[%s780 + $0x98] sm:$0xf]
        %v3634 = vld [vmem:[%s780 + $0x9c] sm:$0xff]
        %v3635 = vld [vmem:[%s780 + $0xa4] sm:$0xf]
        %v3636 = vld [vmem:[%s780 + $0xa8] sm:$0xff]
        %v3637 = vld [vmem:[%s780 + $0xb0] sm:$0xf]
        %v3638 = vld [vmem:[%s780 + $0xb4] sm:$0xff]
        %v3639 = vld [vmem:[%s780 + $0xbc] sm:$0xf]
        %v3640 = vld [vmem:[%s780 + $0xc0] sm:$0xff]
        %v3641 = vld [vmem:[%s780 + $0xc8] sm:$0xf]
        %v3642 = vld [vmem:[%s780 + $0xcc] sm:$0xff]
        %v3643 = vld [vmem:[%s780 + $0xd4] sm:$0xf]
        %v3644 = vld [vmem:[%s780 + $0xd8] sm:$0xff]
        %v3645 = vld [vmem:[%s780 + $0xe0] sm:$0xf]
        %v3646 = vld [vmem:[%s780 + $0xe4] sm:$0xff]
        %v3647 = vld [vmem:[%s780 + $0xec] sm:$0xf]
        %v3648 = vld [vmem:[%s780 + $0xf0] sm:$0xff]
        %v3649 = vld [vmem:[%s780 + $0xf8] sm:$0xf]
        %v3650 = vld [vmem:[%s780 + $0xfc] sm:$0xff]
        %v3651 = vld [vmem:[%s780 + $0x104] sm:$0xf]
        %v3652 = vld [vmem:[%s780 + $0x108] sm:$0xff]
        %v3653 = vld [vmem:[%s780 + $0x110] sm:$0xf]
        %v3654 = vld [vmem:[%s780 + $0x114] sm:$0xff]
        %v3655 = vld [vmem:[%s780 + $0x11c] sm:$0xf]
        %v3656 = vld [vmem:[%s780 + $0x120] sm:$0xff]
        %v3657 = vld [vmem:[%s780 + $0x128] sm:$0xf]
        %v3658 = vld [vmem:[%s780 + $0x12c] sm:$0xff]
        %v3659 = vld [vmem:[%s780 + $0x134] sm:$0xf]
        %v3660 = vld [vmem:[%s780 + $0x138] sm:$0xff]
        %v3661 = vld [vmem:[%s780 + $0x140] sm:$0xf]
        %v3662 = vld [vmem:[%s780 + $0x144] sm:$0xff]
        %v3663 = vld [vmem:[%s780 + $0x14c] sm:$0xf]
        %v3664 = vld [vmem:[%s780 + $0x150] sm:$0xff]
        %v3665 = vld [vmem:[%s780 + $0x158] sm:$0xf]
        %v3666 = vld [vmem:[%s780 + $0x15c] sm:$0xff]
        %v3667 = vld [vmem:[%s780 + $0x164] sm:$0xf]
        %v3668 = vld [vmem:[%s780 + $0x168] sm:$0xff]
        %v3669 = vld [vmem:[%s780 + $0x170] sm:$0xf]
        %v3670 = vld [vmem:[%s780 + $0x174] sm:$0xff]
        %v3671 = vld [vmem:[%s780 + $0x17c] sm:$0xf]
        %v3672 = vld [vmem:[%s780 + $0x180] sm:$0xff]
        %v3673 = vld [vmem:[%s780 + $0x188] sm:$0xf]
        %v3674 = vld [vmem:[%s780 + $0x18c] sm:$0xff]
        %v3675 = vld [vmem:[%s780 + $0x194] sm:$0xf]
        %v3676 = vld [vmem:[%s780 + $0x198] sm:$0xff]
        %v3677 = vld [vmem:[%s780 + $0x1a0] sm:$0xf]
        %v3678 = vld [vmem:[%s780 + $0x1a4] sm:$0xff]
        %v3679 = vld [vmem:[%s780 + $0x1ac] sm:$0xf]
        %v3680 = vld [vmem:[%s780 + $0x1b0] sm:$0xff]
        %v3681 = vld [vmem:[%s780 + $0x1b8] sm:$0xf]
        %v3682 = vld [vmem:[%s780 + $0x1bc] sm:$0xff]
        %v3683 = vld [vmem:[%s780 + $0x1c4] sm:$0xf]
        %v3684 = vld [vmem:[%s780 + $0x1c8] sm:$0xff]
        %v3685 = vld [vmem:[%s780 + $0x1d0] sm:$0xf]
        %v3686 = vld [vmem:[%s780 + $0x1d4] sm:$0xff]
        %v3687 = vld [vmem:[%s780 + $0x1dc] sm:$0xf]
        %v3688 = vld [vmem:[%s780 + $0x1e0] sm:$0xff]
        %v3689 = vld [vmem:[%s780 + $0x1e8] sm:$0xf]
        %v3690 = vld [vmem:[%s780 + $0x1ec] sm:$0xff]
        %v3691 = vld [vmem:[%s780 + $0x1f4] sm:$0xf]
        %v3692 = vld [vmem:[%s780 + $0x1f8] sm:$0xff]
        %v3693 = vld [vmem:[%s780 + $0x200] sm:$0xf]
        %v3694 = vld [vmem:[%s780 + $0x204] sm:$0xff]
        %v3695 = vld [vmem:[%s780 + $0x20c] sm:$0xf]
        %v3696 = vld [vmem:[%s780 + $0x210] sm:$0xff]
        %v3697 = vld [vmem:[%s780 + $0x218] sm:$0xf]
        %v3698 = vld [vmem:[%s780 + $0x21c] sm:$0xff]
        %v3699 = vld [vmem:[%s780 + $0x224] sm:$0xf]
        %v3700 = vld [vmem:[%s780 + $0x228] sm:$0xff]
        %v3701 = vld [vmem:[%s780 + $0x230] sm:$0xf]
        %v3702 = vld [vmem:[%s780 + $0x234] sm:$0xff]
        %v3703 = vld [vmem:[%s780 + $0x23c] sm:$0xf]
        %v3704 = vld [vmem:[%s780 + $0x240] sm:$0xff]
        %v3705 = vld [vmem:[%s780 + $0x248] sm:$0xf]
        %v3706 = vld [vmem:[%s780 + $0x24c] sm:$0xff]
        %v3707 = vld [vmem:[%s780 + $0x254] sm:$0xf]
        %v3708 = vld [vmem:[%s780 + $0x258] sm:$0xff]
        %v3709 = vld [vmem:[%s780 + $0x260] sm:$0xf]
        %v3710 = vld [vmem:[%s780 + $0x264] sm:$0xff]
        %v3711 = vld [vmem:[%s780 + $0x26c] sm:$0xf]
        %v3712 = vld [vmem:[%s780 + $0x270] sm:$0xff]
        %v3713 = vld [vmem:[%s780 + $0x278] sm:$0xf]
        %v3714 = vld [vmem:[%s780 + $0x27c] sm:$0xff]
        %v3715 = vld [vmem:[%s780 + $0x284] sm:$0xf]
        %v3716 = vld [vmem:[%s780 + $0x288] sm:$0xff]
        %v3717 = vld [vmem:[%s780 + $0x290] sm:$0xf]
        %v3718 = vld [vmem:[%s780 + $0x294] sm:$0xff]
        %v3719 = vld [vmem:[%s780 + $0x29c] sm:$0xf]
        %v3720 = vld [vmem:[%s780 + $0x2a0] sm:$0xff]
        %v3721 = vld [vmem:[%s780 + $0x2a8] sm:$0xf]
        %v3722 = vld [vmem:[%s780 + $0x2ac] sm:$0xff]
        %v3723 = vld [vmem:[%s780 + $0x2b4] sm:$0xf]
        %v3724 = vld [vmem:[%s780 + $0x2b8] sm:$0xff]
        %v3725 = vld [vmem:[%s780 + $0x2c0] sm:$0xf]
        %v3726 = vld [vmem:[%s780 + $0x2c4] sm:$0xff]
        %v3727 = vld [vmem:[%s780 + $0x2cc] sm:$0xf]
        %v3728 = vld [vmem:[%s780 + $0x2d0] sm:$0xff]
        %v3729 = vld [vmem:[%s780 + $0x2d8] sm:$0xf]
        %v3730 = vld [vmem:[%s780 + $0x2dc] sm:$0xff]
        %v3731 = vld [vmem:[%s780 + $0x2e4] sm:$0xf]
        %v3732 = vld [vmem:[%s780 + $0x2e8] sm:$0xff]
        %v3733 = vld [vmem:[%s780 + $0x2f0] sm:$0xf]
        %v3734 = vld [vmem:[%s780 + $0x2f4] sm:$0xff]
        %v3735 = vld [vmem:[%s780 + $0x2fc] sm:$0xf]
        %v3864 = vunpack.c.l.b16 %v3608
        %v3865 = vunpack.c.h.b16 %v3608
        %v3866 = vunpack.c.l.b16 %v3609
        %v3867 = vunpack.c.l.b16 %v3610
        %v3868 = vunpack.c.h.b16 %v3610
        %v3869 = vunpack.c.l.b16 %v3611
        %v3870 = vunpack.c.l.b16 %v3612
        %v3871 = vunpack.c.h.b16 %v3612
        %v3872 = vunpack.c.l.b16 %v3613
        %v3873 = vunpack.c.l.b16 %v3614
        %v3874 = vunpack.c.h.b16 %v3614
        %v3875 = vunpack.c.l.b16 %v3615
        %v3876 = vunpack.c.l.b16 %v3616
        %v3877 = vunpack.c.h.b16 %v3616
        %v3878 = vunpack.c.l.b16 %v3617
        %v3879 = vunpack.c.l.b16 %v3618
        %v3880 = vunpack.c.h.b16 %v3618
        %v3881 = vunpack.c.l.b16 %v3619
        %v3882 = vunpack.c.l.b16 %v3620
        %v3883 = vunpack.c.h.b16 %v3620
        %v3884 = vunpack.c.l.b16 %v3621
        %v3885 = vunpack.c.l.b16 %v3622
        %v3886 = vunpack.c.h.b16 %v3622
        %v3887 = vunpack.c.l.b16 %v3623
        %v3888 = vunpack.c.l.b16 %v3624
        %v3889 = vunpack.c.h.b16 %v3624
        %v3890 = vunpack.c.l.b16 %v3625
        %v3891 = vunpack.c.l.b16 %v3626
        %v3892 = vunpack.c.h.b16 %v3626
        %v3893 = vunpack.c.l.b16 %v3627
        %v3894 = vunpack.c.l.b16 %v3628
        %v3895 = vunpack.c.h.b16 %v3628
        %v3896 = vunpack.c.l.b16 %v3629
        %v3897 = vunpack.c.l.b16 %v3630
        %v3898 = vunpack.c.h.b16 %v3630
        %v3899 = vunpack.c.l.b16 %v3631
        %v3900 = vunpack.c.l.b16 %v3632
        %v3901 = vunpack.c.h.b16 %v3632
        %v3902 = vunpack.c.l.b16 %v3633
        %v3903 = vunpack.c.l.b16 %v3634
        %v3904 = vunpack.c.h.b16 %v3634
        %v3905 = vunpack.c.l.b16 %v3635
        %v3906 = vunpack.c.l.b16 %v3636
        %v3907 = vunpack.c.h.b16 %v3636
        %v3908 = vunpack.c.l.b16 %v3637
        %v3909 = vunpack.c.l.b16 %v3638
        %v3910 = vunpack.c.h.b16 %v3638
        %v3911 = vunpack.c.l.b16 %v3639
        %v3912 = vunpack.c.l.b16 %v3640
        %v3913 = vunpack.c.h.b16 %v3640
        %v3914 = vunpack.c.l.b16 %v3641
        %v3915 = vunpack.c.l.b16 %v3642
        %v3916 = vunpack.c.h.b16 %v3642
        %v3917 = vunpack.c.l.b16 %v3643
        %v3918 = vunpack.c.l.b16 %v3644
        %v3919 = vunpack.c.h.b16 %v3644
        %v3920 = vunpack.c.l.b16 %v3645
        %v3921 = vunpack.c.l.b16 %v3646
        %v3922 = vunpack.c.h.b16 %v3646
        %v3923 = vunpack.c.l.b16 %v3647
        %v3924 = vunpack.c.l.b16 %v3648
        %v3925 = vunpack.c.h.b16 %v3648
        %v3926 = vunpack.c.l.b16 %v3649
        %v3927 = vunpack.c.l.b16 %v3650
        %v3928 = vunpack.c.h.b16 %v3650
        %v3929 = vunpack.c.l.b16 %v3651
        %v3930 = vunpack.c.l.b16 %v3652
        %v3931 = vunpack.c.h.b16 %v3652
        %v3932 = vunpack.c.l.b16 %v3653
        %v3933 = vunpack.c.l.b16 %v3654
        %v3934 = vunpack.c.h.b16 %v3654
        %v3935 = vunpack.c.l.b16 %v3655
        %v3936 = vunpack.c.l.b16 %v3656
        %v3937 = vunpack.c.h.b16 %v3656
        %v3938 = vunpack.c.l.b16 %v3657
        %v3939 = vunpack.c.l.b16 %v3658
        %v3940 = vunpack.c.h.b16 %v3658
        %v3941 = vunpack.c.l.b16 %v3659
        %v3942 = vunpack.c.l.b16 %v3660
        %v3943 = vunpack.c.h.b16 %v3660
        %v3944 = vunpack.c.l.b16 %v3661
        %v3945 = vunpack.c.l.b16 %v3662
        %v3946 = vunpack.c.h.b16 %v3662
        %v3947 = vunpack.c.l.b16 %v3663
        %v3948 = vunpack.c.l.b16 %v3664
        %v3949 = vunpack.c.h.b16 %v3664
        %v3950 = vunpack.c.l.b16 %v3665
        %v3951 = vunpack.c.l.b16 %v3666
        %v3952 = vunpack.c.h.b16 %v3666
        %v3953 = vunpack.c.l.b16 %v3667
        %v3954 = vunpack.c.l.b16 %v3668
        %v3955 = vunpack.c.h.b16 %v3668
        %v3956 = vunpack.c.l.b16 %v3669
        %v3957 = vunpack.c.l.b16 %v3670
        %v3958 = vunpack.c.h.b16 %v3670
        %v3959 = vunpack.c.l.b16 %v3671
        %v3960 = vunpack.c.l.b16 %v3672
        %v3961 = vunpack.c.h.b16 %v3672
        %v3962 = vunpack.c.l.b16 %v3673
        %v3963 = vunpack.c.l.b16 %v3674
        %v3964 = vunpack.c.h.b16 %v3674
        %v3965 = vunpack.c.l.b16 %v3675
        %v3966 = vunpack.c.l.b16 %v3676
        %v3967 = vunpack.c.h.b16 %v3676
        %v3968 = vunpack.c.l.b16 %v3677
        %v3969 = vunpack.c.l.b16 %v3678
        %v3970 = vunpack.c.h.b16 %v3678
        %v3971 = vunpack.c.l.b16 %v3679
        %v3972 = vunpack.c.l.b16 %v3680
        %v3973 = vunpack.c.h.b16 %v3680
        %v3974 = vunpack.c.l.b16 %v3681
        %v3975 = vunpack.c.l.b16 %v3682
        %v3976 = vunpack.c.h.b16 %v3682
        %v3977 = vunpack.c.l.b16 %v3683
        %v3978 = vunpack.c.l.b16 %v3684
        %v3979 = vunpack.c.h.b16 %v3684
        %v3980 = vunpack.c.l.b16 %v3685
        %v3981 = vunpack.c.l.b16 %v3686
        %v3982 = vunpack.c.h.b16 %v3686
        %v3983 = vunpack.c.l.b16 %v3687
        %v3984 = vunpack.c.l.b16 %v3688
        %v3985 = vunpack.c.h.b16 %v3688
        %v3986 = vunpack.c.l.b16 %v3689
        %v3987 = vunpack.c.l.b16 %v3690
        %v3988 = vunpack.c.h.b16 %v3690
        %v3989 = vunpack.c.l.b16 %v3691
        %v3990 = vunpack.c.l.b16 %v3692
        %v3991 = vunpack.c.h.b16 %v3692
        %v3992 = vunpack.c.l.b16 %v3693
        %v3993 = vunpack.c.l.b16 %v3694
        %v3994 = vunpack.c.h.b16 %v3694
        %v3995 = vunpack.c.l.b16 %v3695
        %v3996 = vunpack.c.l.b16 %v3696
        %v3997 = vunpack.c.h.b16 %v3696
        %v3998 = vunpack.c.l.b16 %v3697
        %v3999 = vunpack.c.l.b16 %v3698
        %v4000 = vunpack.c.h.b16 %v3698
        %v4001 = vunpack.c.l.b16 %v3699
        %v4002 = vunpack.c.l.b16 %v3700
        %v4003 = vunpack.c.h.b16 %v3700
        %v4004 = vunpack.c.l.b16 %v3701
        %v4005 = vunpack.c.l.b16 %v3702
        %v4006 = vunpack.c.h.b16 %v3702
        %v4007 = vunpack.c.l.b16 %v3703
        %v4008 = vunpack.c.l.b16 %v3704
        %v4009 = vunpack.c.h.b16 %v3704
        %v4010 = vunpack.c.l.b16 %v3705
        %v4011 = vunpack.c.l.b16 %v3706
        %v4012 = vunpack.c.h.b16 %v3706
        %v4013 = vunpack.c.l.b16 %v3707
        %v4014 = vunpack.c.l.b16 %v3708
        %v4015 = vunpack.c.h.b16 %v3708
        %v4016 = vunpack.c.l.b16 %v3709
        %v4017 = vunpack.c.l.b16 %v3710
        %v4018 = vunpack.c.h.b16 %v3710
        %v4019 = vunpack.c.l.b16 %v3711
        %v4020 = vunpack.c.l.b16 %v3712
        %v4021 = vunpack.c.h.b16 %v3712
        %v4022 = vunpack.c.l.b16 %v3713
        %v4023 = vunpack.c.l.b16 %v3714
        %v4024 = vunpack.c.h.b16 %v3714
        %v4025 = vunpack.c.l.b16 %v3715
        %v4026 = vunpack.c.l.b16 %v3716
        %v4027 = vunpack.c.h.b16 %v3716
        %v4028 = vunpack.c.l.b16 %v3717
        %v4029 = vunpack.c.l.b16 %v3718
        %v4030 = vunpack.c.h.b16 %v3718
        %v4031 = vunpack.c.l.b16 %v3719
        %v4032 = vunpack.c.l.b16 %v3720
        %v4033 = vunpack.c.h.b16 %v3720
        %v4034 = vunpack.c.l.b16 %v3721
        %v4035 = vunpack.c.l.b16 %v3722
        %v4036 = vunpack.c.h.b16 %v3722
        %v4037 = vunpack.c.l.b16 %v3723
        %v4038 = vunpack.c.l.b16 %v3724
        %v4039 = vunpack.c.h.b16 %v3724
        %v4040 = vunpack.c.l.b16 %v3725
        %v4041 = vunpack.c.l.b16 %v3726
        %v4042 = vunpack.c.h.b16 %v3726
        %v4043 = vunpack.c.l.b16 %v3727
        %v4044 = vunpack.c.l.b16 %v3728
        %v4045 = vunpack.c.h.b16 %v3728
        %v4046 = vunpack.c.l.b16 %v3729
        %v4047 = vunpack.c.l.b16 %v3730
        %v4048 = vunpack.c.h.b16 %v3730
        %v4049 = vunpack.c.l.b16 %v3731
        %v4050 = vunpack.c.l.b16 %v3732
        %v4051 = vunpack.c.h.b16 %v3732
        %v4052 = vunpack.c.l.b16 %v3733
        %v4053 = vunpack.c.l.b16 %v3734
        %v4054 = vunpack.c.h.b16 %v3734
        %v4055 = vunpack.c.l.b16 %v3735
        %v4056 = vpack.c.b16 %v3867, %v3864
        %v4057 = vpack.c.b16 %v3868, %v3865
        %v4058 = vpack.c.b16 %v3869, %v3866
        %v4059 = vpack.c.b16 %v3873, %v3870
        %v4060 = vpack.c.b16 %v3874, %v3871
        %v4061 = vpack.c.b16 %v3875, %v3872
        %v4062 = vpack.c.b16 %v3879, %v3876
        %v4063 = vpack.c.b16 %v3880, %v3877
        %v4064 = vpack.c.b16 %v3881, %v3878
        %v4065 = vpack.c.b16 %v3885, %v3882
        %v4066 = vpack.c.b16 %v3886, %v3883
        %v4067 = vpack.c.b16 %v3887, %v3884
        %v4068 = vpack.c.b16 %v3891, %v3888
        %v4069 = vpack.c.b16 %v3892, %v3889
        %v4070 = vpack.c.b16 %v3893, %v3890
        %v4071 = vpack.c.b16 %v3897, %v3894
        %v4072 = vpack.c.b16 %v3898, %v3895
        %v4073 = vpack.c.b16 %v3899, %v3896
        %v4074 = vpack.c.b16 %v3903, %v3900
        %v4075 = vpack.c.b16 %v3904, %v3901
        %v4076 = vpack.c.b16 %v3905, %v3902
        %v4077 = vpack.c.b16 %v3909, %v3906
        %v4078 = vpack.c.b16 %v3910, %v3907
        %v4079 = vpack.c.b16 %v3911, %v3908
        %v4080 = vpack.c.b16 %v3915, %v3912
        %v4081 = vpack.c.b16 %v3916, %v3913
        %v4082 = vpack.c.b16 %v3917, %v3914
        %v4083 = vpack.c.b16 %v3921, %v3918
        %v4084 = vpack.c.b16 %v3922, %v3919
        %v4085 = vpack.c.b16 %v3923, %v3920
        %v4086 = vpack.c.b16 %v3927, %v3924
        %v4087 = vpack.c.b16 %v3928, %v3925
        %v4088 = vpack.c.b16 %v3929, %v3926
        %v4089 = vpack.c.b16 %v3933, %v3930
        %v4090 = vpack.c.b16 %v3934, %v3931
        %v4091 = vpack.c.b16 %v3935, %v3932
        %v4092 = vpack.c.b16 %v3939, %v3936
        %v4093 = vpack.c.b16 %v3940, %v3937
        %v4094 = vpack.c.b16 %v3941, %v3938
        %v4095 = vpack.c.b16 %v3945, %v3942
        %v4096 = vpack.c.b16 %v3946, %v3943
        %v4097 = vpack.c.b16 %v3947, %v3944
        %v4098 = vpack.c.b16 %v3951, %v3948
        %v4099 = vpack.c.b16 %v3952, %v3949
        %v4100 = vpack.c.b16 %v3953, %v3950
        %v4101 = vpack.c.b16 %v3957, %v3954
        %v4102 = vpack.c.b16 %v3958, %v3955
        %v4103 = vpack.c.b16 %v3959, %v3956
        %v4104 = vpack.c.b16 %v3963, %v3960
        %v4105 = vpack.c.b16 %v3964, %v3961
        %v4106 = vpack.c.b16 %v3965, %v3962
        %v4107 = vpack.c.b16 %v3969, %v3966
        %v4108 = vpack.c.b16 %v3970, %v3967
        %v4109 = vpack.c.b16 %v3971, %v3968
        %v4110 = vpack.c.b16 %v3975, %v3972
        %v4111 = vpack.c.b16 %v3976, %v3973
        %v4112 = vpack.c.b16 %v3977, %v3974
        %v4113 = vpack.c.b16 %v3981, %v3978
        %v4114 = vpack.c.b16 %v3982, %v3979
        %v4115 = vpack.c.b16 %v3983, %v3980
        %v4116 = vpack.c.b16 %v3987, %v3984
        %v4117 = vpack.c.b16 %v3988, %v3985
        %v4118 = vpack.c.b16 %v3989, %v3986
        %v4119 = vpack.c.b16 %v3993, %v3990
        %v4120 = vpack.c.b16 %v3994, %v3991
        %v4121 = vpack.c.b16 %v3995, %v3992
        %v4122 = vpack.c.b16 %v3999, %v3996
        %v4123 = vpack.c.b16 %v4000, %v3997
        %v4124 = vpack.c.b16 %v4001, %v3998
        %v4125 = vpack.c.b16 %v4005, %v4002
        %v4126 = vpack.c.b16 %v4006, %v4003
        %v4127 = vpack.c.b16 %v4007, %v4004
        %v4128 = vpack.c.b16 %v4011, %v4008
        %v4129 = vpack.c.b16 %v4012, %v4009
        %v4130 = vpack.c.b16 %v4013, %v4010
        %v4131 = vpack.c.b16 %v4017, %v4014
        %v4132 = vpack.c.b16 %v4018, %v4015
        %v4133 = vpack.c.b16 %v4019, %v4016
        %v4134 = vpack.c.b16 %v4023, %v4020
        %v4135 = vpack.c.b16 %v4024, %v4021
        %v4136 = vpack.c.b16 %v4025, %v4022
        %v4137 = vpack.c.b16 %v4029, %v4026
        %v4138 = vpack.c.b16 %v4030, %v4027
        %v4139 = vpack.c.b16 %v4031, %v4028
        %v4140 = vpack.c.b16 %v4035, %v4032
        %v4141 = vpack.c.b16 %v4036, %v4033
        %v4142 = vpack.c.b16 %v4037, %v4034
        %v4143 = vpack.c.b16 %v4041, %v4038
        %v4144 = vpack.c.b16 %v4042, %v4039
        %v4145 = vpack.c.b16 %v4043, %v4040
        %v4146 = vpack.c.b16 %v4047, %v4044
        %v4147 = vpack.c.b16 %v4048, %v4045
        %v4148 = vpack.c.b16 %v4049, %v4046
        %v4149 = vpack.c.b16 %v4053, %v4050
        %v4150 = vpack.c.b16 %v4054, %v4051
        %v4151 = vpack.c.b16 %v4055, %v4052
        %4248 = vmatprep.subr.bf16.mxu0 %v4078
        %4249 = vmatpush1.bf16.msra.mxu0 %v4077
        %4250 = vmatprep.subr.bf16.mxu0 %v4075
        %4251 = vmatpush1.bf16.msra.mxu0 %v4074
        %4252 = vmatprep.subr.bf16.mxu0 %v4072
        %4253 = vmatpush1.bf16.msra.mxu0 %v4071
        %4254 = vmatprep.subr.bf16.mxu0 %v4069
        %4255 = vmatpush1.bf16.msra.mxu0 %v4068
        %4256 = vmatprep.subr.bf16.mxu0 %v4066
        %4257 = vmatpush1.bf16.msra.mxu0 %v4065
        %4258 = vmatprep.subr.bf16.mxu0 %v4063
        %4259 = vmatpush1.bf16.msra.mxu0 %v4062
        %4260 = vmatprep.subr.bf16.mxu0 %v4060
        %4261 = vmatpush1.bf16.msra.mxu0 %v4059
        %4262 = vmatprep.subr.bf16.mxu0 %v4057
        %4263 = vmatpush1.bf16.msra.mxu0 %v4056
        %4264 = vmatprep.subr.bf16.mxu0 %v4102
        %4265 = vmatpush2.bf16.msra.mxu0 %v4101
        %4266 = vmatprep.subr.bf16.mxu0 %v4099
        %4267 = vmatpush2.bf16.msra.mxu0 %v4098
        %4268 = vmatprep.subr.bf16.mxu0 %v4096
        %4269 = vmatpush2.bf16.msra.mxu0 %v4095
        %4270 = vmatprep.subr.bf16.mxu0 %v4093
        %4271 = vmatpush2.bf16.msra.mxu0 %v4092
        %4272 = vmatprep.subr.bf16.mxu0 %v4090
        %4273 = vmatpush2.bf16.msra.mxu0 %v4089
        %4274 = vmatprep.subr.bf16.mxu0 %v4087
        %4275 = vmatpush2.bf16.msra.mxu0 %v4086
        %4276 = vmatprep.subr.bf16.mxu0 %v4084
        %4277 = vmatpush2.bf16.msra.mxu0 %v4083
        %4278 = vmatprep.subr.bf16.mxu0 %v4081
        %4279 = vmatpush2.bf16.msra.mxu0 %v4080
        %4280 = vmatprep.mubr.bf16.mxu0 %v3577
        %4281 = vmatmul.mubr.bf16.gmra.mxu0 %v3576
        %v4282 = vpop.f32.mrf.mxu0
        %v4283 = vadd.f32 0.0, %v4282
        %v4284 = vpop.f32.mrf.mxu0
        %v4285 = vadd.f32 0.0, %v4284
        %v4286 = vpop.f32.mrf.mxu0
        %v4287 = vadd.f32 0.0, %v4286
        %v4288 = vpop.f32.mrf.mxu0
        %v4289 = vadd.f32 0.0, %v4288
        %4290 = vmatprep.mubr.bf16.mxu0 %v3581
        %4291 = vmatmul.mubr.bf16.gmra.mxu0 %v3580
        %v4292 = vpop.f32.mrf.mxu0
        %v4293 = vadd.f32 0.0, %v4292
        %v4294 = vpop.f32.mrf.mxu0
        %v4295 = vadd.f32 0.0, %v4294
        %v4296 = vpop.f32.mrf.mxu0
        %v4297 = vadd.f32 0.0, %v4296
        %v4298 = vpop.f32.mrf.mxu0
        %v4299 = vadd.f32 0.0, %v4298
        %4300 = vmatprep.mubr.bf16.mxu0 %v3585
        %4301 = vmatmul.mubr.bf16.gmra.mxu0 %v3584
        %v4302 = vpop.f32.mrf.mxu0
        %v4303 = vadd.f32 0.0, %v4302
        %v4304 = vpop.f32.mrf.mxu0
        %v4305 = vadd.f32 0.0, %v4304
        %v4306 = vpop.f32.mrf.mxu0
        %v4307 = vadd.f32 0.0, %v4306
        %v4308 = vpop.f32.mrf.mxu0
        %v4309 = vadd.f32 0.0, %v4308
        %4310 = vmatprep.mubr.bf16.mxu0 %v3589
        %4311 = vmatmul.mubr.bf16.gmra.mxu0 %v3588
        %v4312 = vpop.f32.mrf.mxu0
        %v4313 = vadd.f32 0.0, %v4312
        %v4314 = vpop.f32.mrf.mxu0
        %v4315 = vadd.f32 0.0, %v4314
        %v4316 = vpop.f32.mrf.mxu0
        %v4317 = vadd.f32 0.0, %v4316
        %v4318 = vpop.f32.mrf.mxu0
        %v4319 = vadd.f32 0.0, %v4318
        %4320 = vmatprep.mubr.bf16.mxu0 %v3593
        %4321 = vmatmul.mubr.bf16.gmra.mxu0 %v3592
        %v4322 = vpop.f32.mrf.mxu0
        %v4323 = vadd.f32 0.0, %v4322
        %v4324 = vpop.f32.mrf.mxu0
        %v4325 = vadd.f32 0.0, %v4324
        %v4326 = vpop.f32.mrf.mxu0
        %v4327 = vadd.f32 0.0, %v4326
        %v4328 = vpop.f32.mrf.mxu0
        %v4329 = vadd.f32 0.0, %v4328
        %4330 = vmatprep.mubr.bf16.mxu0 %v3597
        %4331 = vmatmul.mubr.bf16.gmra.mxu0 %v3596
        %v4332 = vpop.f32.mrf.mxu0
        %v4333 = vadd.f32 0.0, %v4332
        %v4334 = vpop.f32.mrf.mxu0
        %v4335 = vadd.f32 0.0, %v4334
        %v4336 = vpop.f32.mrf.mxu0
        %v4337 = vadd.f32 0.0, %v4336
        %v4338 = vpop.f32.mrf.mxu0
        %v4339 = vadd.f32 0.0, %v4338
        %4340 = vmatprep.mubr.bf16.mxu0 %v3601
        %4341 = vmatmul.mubr.bf16.gmra.mxu0 %v3600
        %v4342 = vpop.f32.mrf.mxu0
        %v4343 = vadd.f32 0.0, %v4342
        %v4344 = vpop.f32.mrf.mxu0
        %v4345 = vadd.f32 0.0, %v4344
        %v4346 = vpop.f32.mrf.mxu0
        %v4347 = vadd.f32 0.0, %v4346
        %v4348 = vpop.f32.mrf.mxu0
        %v4349 = vadd.f32 0.0, %v4348
        %4350 = vmatprep.mubr.bf16.mxu0 %v3605
        %4351 = vmatmul.mubr.bf16.gmra.mxu0 %v3604
        %v4352 = vpop.f32.mrf.mxu0
        %v4353 = vadd.f32 0.0, %v4352
        %v4354 = vpop.f32.mrf.mxu0
        %v4355 = vadd.f32 0.0, %v4354
        %v4356 = vpop.f32.mrf.mxu0
        %v4357 = vadd.f32 0.0, %v4356
        %v4358 = vpop.f32.mrf.mxu0
        %v4359 = vadd.f32 0.0, %v4358
        %4360 = vdwg.mxu0
        %4361 = vmatprep.subr.bf16.mxu0 %v4126
        %4362 = vmatpush1.bf16.msra.mxu0 %v4125
        %4363 = vmatprep.subr.bf16.mxu0 %v4123
        %4364 = vmatpush1.bf16.msra.mxu0 %v4122
        %4365 = vmatprep.subr.bf16.mxu0 %v4120
        %4366 = vmatpush1.bf16.msra.mxu0 %v4119
        %4367 = vmatprep.subr.bf16.mxu0 %v4117
        %4368 = vmatpush1.bf16.msra.mxu0 %v4116
        %4369 = vmatprep.subr.bf16.mxu0 %v4114
        %4370 = vmatpush1.bf16.msra.mxu0 %v4113
        %4371 = vmatprep.subr.bf16.mxu0 %v4111
        %4372 = vmatpush1.bf16.msra.mxu0 %v4110
        %4373 = vmatprep.subr.bf16.mxu0 %v4108
        %4374 = vmatpush1.bf16.msra.mxu0 %v4107
        %4375 = vmatprep.subr.bf16.mxu0 %v4105
        %4376 = vmatpush1.bf16.msra.mxu0 %v4104
        %4377 = vmatprep.subr.bf16.mxu0 %v4150
        %4378 = vmatpush2.bf16.msra.mxu0 %v4149
        %4379 = vmatprep.subr.bf16.mxu0 %v4147
        %4380 = vmatpush2.bf16.msra.mxu0 %v4146
        %4381 = vmatprep.subr.bf16.mxu0 %v4144
        %4382 = vmatpush2.bf16.msra.mxu0 %v4143
        %4383 = vmatprep.subr.bf16.mxu0 %v4141
        %4384 = vmatpush2.bf16.msra.mxu0 %v4140
        %4385 = vmatprep.subr.bf16.mxu0 %v4138
        %4386 = vmatpush2.bf16.msra.mxu0 %v4137
        %4387 = vmatprep.subr.bf16.mxu0 %v4135
        %4388 = vmatpush2.bf16.msra.mxu0 %v4134
        %4389 = vmatprep.subr.bf16.mxu0 %v4132
        %4390 = vmatpush2.bf16.msra.mxu0 %v4131
        %4391 = vmatprep.subr.bf16.mxu0 %v4129
        %4392 = vmatpush2.bf16.msra.mxu0 %v4128
        %4393 = vmatprep.mubr.bf16.mxu0 %v3579
        %4394 = vmatmul.mubr.bf16.gmra.mxu0 %v3578
        %v4395 = vpop.f32.mrf.mxu0
        %v4396 = vadd.f32 %v4283, %v4395
        %v4397 = vpop.f32.mrf.mxu0
        %v4398 = vadd.f32 %v4285, %v4397
        %v4399 = vpop.f32.mrf.mxu0
        %v4400 = vadd.f32 %v4287, %v4399
        %v4401 = vpop.f32.mrf.mxu0
        %v4402 = vadd.f32 %v4289, %v4401
        %4403 = vmatprep.mubr.bf16.mxu0 %v3583
        %4404 = vmatmul.mubr.bf16.gmra.mxu0 %v3582
        %v4405 = vpop.f32.mrf.mxu0
        %v4406 = vadd.f32 %v4293, %v4405
        %v4407 = vpop.f32.mrf.mxu0
        %v4408 = vadd.f32 %v4295, %v4407
        %v4409 = vpop.f32.mrf.mxu0
        %v4410 = vadd.f32 %v4297, %v4409
        %v4411 = vpop.f32.mrf.mxu0
        %v4412 = vadd.f32 %v4299, %v4411
        %4413 = vmatprep.mubr.bf16.mxu0 %v3587
        %4414 = vmatmul.mubr.bf16.gmra.mxu0 %v3586
        %v4415 = vpop.f32.mrf.mxu0
        %v4416 = vadd.f32 %v4303, %v4415
        %v4417 = vpop.f32.mrf.mxu0
        %v4418 = vadd.f32 %v4305, %v4417
        %v4419 = vpop.f32.mrf.mxu0
        %v4420 = vadd.f32 %v4307, %v4419
        %v4421 = vpop.f32.mrf.mxu0
        %v4422 = vadd.f32 %v4309, %v4421
        %4423 = vmatprep.mubr.bf16.mxu0 %v3591
        %4424 = vmatmul.mubr.bf16.gmra.mxu0 %v3590
        %v4425 = vpop.f32.mrf.mxu0
        %v4426 = vadd.f32 %v4313, %v4425
        %v4427 = vpop.f32.mrf.mxu0
        %v4428 = vadd.f32 %v4315, %v4427
        %v4429 = vpop.f32.mrf.mxu0
        %v4430 = vadd.f32 %v4317, %v4429
        %v4431 = vpop.f32.mrf.mxu0
        %v4432 = vadd.f32 %v4319, %v4431
        %4433 = vmatprep.mubr.bf16.mxu0 %v3595
        %4434 = vmatmul.mubr.bf16.gmra.mxu0 %v3594
        %v4435 = vpop.f32.mrf.mxu0
        %v4436 = vadd.f32 %v4323, %v4435
        %v4437 = vpop.f32.mrf.mxu0
        %v4438 = vadd.f32 %v4325, %v4437
        %v4439 = vpop.f32.mrf.mxu0
        %v4440 = vadd.f32 %v4327, %v4439
        %v4441 = vpop.f32.mrf.mxu0
        %v4442 = vadd.f32 %v4329, %v4441
        %4443 = vmatprep.mubr.bf16.mxu0 %v3599
        %4444 = vmatmul.mubr.bf16.gmra.mxu0 %v3598
        %v4445 = vpop.f32.mrf.mxu0
        %v4446 = vadd.f32 %v4333, %v4445
        %v4447 = vpop.f32.mrf.mxu0
        %v4448 = vadd.f32 %v4335, %v4447
        %v4449 = vpop.f32.mrf.mxu0
        %v4450 = vadd.f32 %v4337, %v4449
        %v4451 = vpop.f32.mrf.mxu0
        %v4452 = vadd.f32 %v4339, %v4451
        %4453 = vmatprep.mubr.bf16.mxu0 %v3603
        %4454 = vmatmul.mubr.bf16.gmra.mxu0 %v3602
        %v4455 = vpop.f32.mrf.mxu0
        %v4456 = vadd.f32 %v4343, %v4455
        %v4457 = vpop.f32.mrf.mxu0
        %v4458 = vadd.f32 %v4345, %v4457
        %v4459 = vpop.f32.mrf.mxu0
        %v4460 = vadd.f32 %v4347, %v4459
        %v4461 = vpop.f32.mrf.mxu0
        %v4462 = vadd.f32 %v4349, %v4461
        %4463 = vmatprep.mubr.bf16.mxu0 %v3607
        %4464 = vmatmul.mubr.bf16.gmra.mxu0 %v3606
        %v4465 = vpop.f32.mrf.mxu0
        %v4466 = vadd.f32 %v4353, %v4465
        %v4467 = vpop.f32.mrf.mxu0
        %v4468 = vadd.f32 %v4355, %v4467
        %v4469 = vpop.f32.mrf.mxu0
        %v4470 = vadd.f32 %v4357, %v4469
        %v4471 = vpop.f32.mrf.mxu0
        %v4472 = vadd.f32 %v4359, %v4471
        %4473 = vdwg.mxu0
        %4474 = vmatprep.subr.bf16.mxu0 0
        %4475 = vmatpush1.bf16.msra.mxu0 %v4079
        %4476 = vmatprep.subr.bf16.mxu0 0
        %4477 = vmatpush1.bf16.msra.mxu0 %v4076
        %4478 = vmatprep.subr.bf16.mxu0 0
        %4479 = vmatpush1.bf16.msra.mxu0 %v4073
        %4480 = vmatprep.subr.bf16.mxu0 0
        %4481 = vmatpush1.bf16.msra.mxu0 %v4070
        %4482 = vmatprep.subr.bf16.mxu0 0
        %4483 = vmatpush1.bf16.msra.mxu0 %v4067
        %4484 = vmatprep.subr.bf16.mxu0 0
        %4485 = vmatpush1.bf16.msra.mxu0 %v4064
        %4486 = vmatprep.subr.bf16.mxu0 0
        %4487 = vmatpush1.bf16.msra.mxu0 %v4061
        %4488 = vmatprep.subr.bf16.mxu0 0
        %4489 = vmatpush1.bf16.msra.mxu0 %v4058
        %4490 = vmatprep.subr.bf16.mxu0 0
        %4491 = vmatpush2.bf16.msra.mxu0 %v4103
        %4492 = vmatprep.subr.bf16.mxu0 0
        %4493 = vmatpush2.bf16.msra.mxu0 %v4100
        %4494 = vmatprep.subr.bf16.mxu0 0
        %4495 = vmatpush2.bf16.msra.mxu0 %v4097
        %4496 = vmatprep.subr.bf16.mxu0 0
        %4497 = vmatpush2.bf16.msra.mxu0 %v4094
        %4498 = vmatprep.subr.bf16.mxu0 0
        %4499 = vmatpush2.bf16.msra.mxu0 %v4091
        %4500 = vmatprep.subr.bf16.mxu0 0
        %4501 = vmatpush2.bf16.msra.mxu0 %v4088
        %4502 = vmatprep.subr.bf16.mxu0 0
        %4503 = vmatpush2.bf16.msra.mxu0 %v4085
        %4504 = vmatprep.subr.bf16.mxu0 0
        %4505 = vmatpush2.bf16.msra.mxu0 %v4082
        %4506 = vmatprep.mubr.bf16.mxu0 %v3577
        %4507 = vmatmul.mubr.bf16.gmra.mxu0 %v3576
        %v4508 = vpop.f32.mrf.mxu0
        %v4509 = vadd.f32 0.0, %v4508
        %v4510 = vpop.f32.mrf.mxu0
        %v4511 = vpop.f32.mrf.mxu0
        %v4512 = vadd.f32 0.0, %v4511
        %v4513 = vpop.f32.mrf.mxu0
        %4514 = vmatprep.mubr.bf16.mxu0 %v3581
        %4515 = vmatmul.mubr.bf16.gmra.mxu0 %v3580
        %v4516 = vpop.f32.mrf.mxu0
        %v4517 = vadd.f32 0.0, %v4516
        %v4518 = vpop.f32.mrf.mxu0
        %v4519 = vpop.f32.mrf.mxu0
        %v4520 = vadd.f32 0.0, %v4519
        %v4521 = vpop.f32.mrf.mxu0
        %4522 = vmatprep.mubr.bf16.mxu0 %v3585
        %4523 = vmatmul.mubr.bf16.gmra.mxu0 %v3584
        %v4524 = vpop.f32.mrf.mxu0
        %v4525 = vadd.f32 0.0, %v4524
        %v4526 = vpop.f32.mrf.mxu0
        %v4527 = vpop.f32.mrf.mxu0
        %v4528 = vadd.f32 0.0, %v4527
        %v4529 = vpop.f32.mrf.mxu0
        %4530 = vmatprep.mubr.bf16.mxu0 %v3589
        %4531 = vmatmul.mubr.bf16.gmra.mxu0 %v3588
        %v4532 = vpop.f32.mrf.mxu0
        %v4533 = vadd.f32 0.0, %v4532
        %v4534 = vpop.f32.mrf.mxu0
        %v4535 = vpop.f32.mrf.mxu0
        %v4536 = vadd.f32 0.0, %v4535
        %v4537 = vpop.f32.mrf.mxu0
        %4538 = vmatprep.mubr.bf16.mxu0 %v3593
        %4539 = vmatmul.mubr.bf16.gmra.mxu0 %v3592
        %v4540 = vpop.f32.mrf.mxu0
        %v4541 = vadd.f32 0.0, %v4540
        %v4542 = vpop.f32.mrf.mxu0
        %v4543 = vpop.f32.mrf.mxu0
        %v4544 = vadd.f32 0.0, %v4543
        %v4545 = vpop.f32.mrf.mxu0
        %4546 = vmatprep.mubr.bf16.mxu0 %v3597
        %4547 = vmatmul.mubr.bf16.gmra.mxu0 %v3596
        %v4548 = vpop.f32.mrf.mxu0
        %v4549 = vadd.f32 0.0, %v4548
        %v4550 = vpop.f32.mrf.mxu0
        %v4551 = vpop.f32.mrf.mxu0
        %v4552 = vadd.f32 0.0, %v4551
        %v4553 = vpop.f32.mrf.mxu0
        %4554 = vmatprep.mubr.bf16.mxu0 %v3601
        %4555 = vmatmul.mubr.bf16.gmra.mxu0 %v3600
        %v4556 = vpop.f32.mrf.mxu0
        %v4557 = vadd.f32 0.0, %v4556
        %v4558 = vpop.f32.mrf.mxu0
        %v4559 = vpop.f32.mrf.mxu0
        %v4560 = vadd.f32 0.0, %v4559
        %v4561 = vpop.f32.mrf.mxu0
        %4562 = vmatprep.mubr.bf16.mxu0 %v3605
        %4563 = vmatmul.mubr.bf16.gmra.mxu0 %v3604
        %v4564 = vpop.f32.mrf.mxu0
        %v4565 = vadd.f32 0.0, %v4564
        %v4566 = vpop.f32.mrf.mxu0
        %v4567 = vpop.f32.mrf.mxu0
        %v4568 = vadd.f32 0.0, %v4567
        %v4569 = vpop.f32.mrf.mxu0
        %4570 = vdwg.mxu0
        %4571 = vmatprep.subr.bf16.mxu0 0
        %4572 = vmatpush1.bf16.msra.mxu0 %v4127
        %4573 = vmatprep.subr.bf16.mxu0 0
        %4574 = vmatpush1.bf16.msra.mxu0 %v4124
        %4575 = vmatprep.subr.bf16.mxu0 0
        %4576 = vmatpush1.bf16.msra.mxu0 %v4121
        %4577 = vmatprep.subr.bf16.mxu0 0
        %4578 = vmatpush1.bf16.msra.mxu0 %v4118
        %4579 = vmatprep.subr.bf16.mxu0 0
        %4580 = vmatpush1.bf16.msra.mxu0 %v4115
        %4581 = vmatprep.subr.bf16.mxu0 0
        %4582 = vmatpush1.bf16.msra.mxu0 %v4112
        %4583 = vmatprep.subr.bf16.mxu0 0
        %4584 = vmatpush1.bf16.msra.mxu0 %v4109
        %4585 = vmatprep.subr.bf16.mxu0 0
        %4586 = vmatpush1.bf16.msra.mxu0 %v4106
        %4587 = vmatprep.subr.bf16.mxu0 0
        %4588 = vmatpush2.bf16.msra.mxu0 %v4151
        %4589 = vmatprep.subr.bf16.mxu0 0
        %4590 = vmatpush2.bf16.msra.mxu0 %v4148
        %4591 = vmatprep.subr.bf16.mxu0 0
        %4592 = vmatpush2.bf16.msra.mxu0 %v4145
        %4593 = vmatprep.subr.bf16.mxu0 0
        %4594 = vmatpush2.bf16.msra.mxu0 %v4142
        %4595 = vmatprep.subr.bf16.mxu0 0
        %4596 = vmatpush2.bf16.msra.mxu0 %v4139
        %4597 = vmatprep.subr.bf16.mxu0 0
        %4598 = vmatpush2.bf16.msra.mxu0 %v4136
        %4599 = vmatprep.subr.bf16.mxu0 0
        %4600 = vmatpush2.bf16.msra.mxu0 %v4133
        %4601 = vmatprep.subr.bf16.mxu0 0
        %4602 = vmatpush2.bf16.msra.mxu0 %v4130
        %4603 = vmatprep.mubr.bf16.mxu0 %v3579
        %4604 = vmatmul.mubr.bf16.gmra.mxu0 %v3578
        %v4605 = vpop.f32.mrf.mxu0
        %v4606 = vadd.f32 %v4509, %v4605
        %v4607 = vpop.f32.mrf.mxu0
        %v4608 = vpop.f32.mrf.mxu0
        %v4609 = vadd.f32 %v4512, %v4608
        %v4610 = vpop.f32.mrf.mxu0
        %4611 = vmatprep.mubr.bf16.mxu0 %v3583
        %4612 = vmatmul.mubr.bf16.gmra.mxu0 %v3582
        %v4613 = vpop.f32.mrf.mxu0
        %v4614 = vadd.f32 %v4517, %v4613
        %v4615 = vpop.f32.mrf.mxu0
        %v4616 = vpop.f32.mrf.mxu0
        %v4617 = vadd.f32 %v4520, %v4616
        %v4618 = vpop.f32.mrf.mxu0
        %4619 = vmatprep.mubr.bf16.mxu0 %v3587
        %4620 = vmatmul.mubr.bf16.gmra.mxu0 %v3586
        %v4621 = vpop.f32.mrf.mxu0
        %v4622 = vadd.f32 %v4525, %v4621
        %v4623 = vpop.f32.mrf.mxu0
        %v4624 = vpop.f32.mrf.mxu0
        %v4625 = vadd.f32 %v4528, %v4624
        %v4626 = vpop.f32.mrf.mxu0
        %4627 = vmatprep.mubr.bf16.mxu0 %v3591
        %4628 = vmatmul.mubr.bf16.gmra.mxu0 %v3590
        %v4629 = vpop.f32.mrf.mxu0
        %v4630 = vadd.f32 %v4533, %v4629
        %v4631 = vpop.f32.mrf.mxu0
        %v4632 = vpop.f32.mrf.mxu0
        %v4633 = vadd.f32 %v4536, %v4632
        %v4634 = vpop.f32.mrf.mxu0
        %4635 = vmatprep.mubr.bf16.mxu0 %v3595
        %4636 = vmatmul.mubr.bf16.gmra.mxu0 %v3594
        %v4637 = vpop.f32.mrf.mxu0
        %v4638 = vadd.f32 %v4541, %v4637
        %v4639 = vpop.f32.mrf.mxu0
        %v4640 = vpop.f32.mrf.mxu0
        %v4641 = vadd.f32 %v4544, %v4640
        %v4642 = vpop.f32.mrf.mxu0
        %4643 = vmatprep.mubr.bf16.mxu0 %v3599
        %4644 = vmatmul.mubr.bf16.gmra.mxu0 %v3598
        %v4645 = vpop.f32.mrf.mxu0
        %v4646 = vadd.f32 %v4549, %v4645
        %v4647 = vpop.f32.mrf.mxu0
        %v4648 = vpop.f32.mrf.mxu0
        %v4649 = vadd.f32 %v4552, %v4648
        %v4650 = vpop.f32.mrf.mxu0
        %4651 = vmatprep.mubr.bf16.mxu0 %v3603
        %4652 = vmatmul.mubr.bf16.gmra.mxu0 %v3602
        %v4653 = vpop.f32.mrf.mxu0
        %v4654 = vadd.f32 %v4557, %v4653
        %v4655 = vpop.f32.mrf.mxu0
        %v4656 = vpop.f32.mrf.mxu0
        %v4657 = vadd.f32 %v4560, %v4656
        %v4658 = vpop.f32.mrf.mxu0
        %4659 = vmatprep.mubr.bf16.mxu0 %v3607
        %4660 = vmatmul.mubr.bf16.gmra.mxu0 %v3606
        %v4661 = vpop.f32.mrf.mxu0
        %v4662 = vadd.f32 %v4565, %v4661
        %v4663 = vpop.f32.mrf.mxu0
        %v4664 = vpop.f32.mrf.mxu0
        %v4665 = vadd.f32 %v4568, %v4664
        %v4666 = vpop.f32.mrf.mxu0
        %4667 = vdwg.mxu0
        %v4668 = vld [vmem:[#allocation2] sm:$0xff]
        %v4669 = vld [vmem:[#allocation2 + $0x8] sm:$0xff]
        %v4670 = vld [vmem:[#allocation2 + $0x10] sm:$0xff]
        %v4671 = vld [vmem:[#allocation2 + $0x18] sm:$0xff]
        %v4672 = vld [vmem:[#allocation2 + $0x20] sm:$0xff]
        %v4673 = vld [vmem:[#allocation2 + $0x28] sm:$0xff]
        %v4674 = vld [vmem:[#allocation2 + $0x30] sm:$0xff]
        %v4675 = vld [vmem:[#allocation2 + $0x38] sm:$0xff]
        %v4676 = vld [vmem:[#allocation2 + $0x40] sm:$0xff]
        %v4677 = vld [vmem:[#allocation2 + $0x48] sm:$0xff]
        %v4678 = vld [vmem:[#allocation2 + $0x50] sm:$0xff]
        %v4679 = vld [vmem:[#allocation2 + $0x58] sm:$0xff]
        %v4680 = vld [vmem:[#allocation2 + $0x60] sm:$0xff]
        %v4681 = vld [vmem:[#allocation2 + $0x68] sm:$0xff]
        %v4682 = vld [vmem:[#allocation2 + $0x70] sm:$0xff]
        %v4683 = vld [vmem:[#allocation2 + $0x78] sm:$0xff]
        %v4684 = vld [vmem:[#allocation2 + $0x80] sm:$0xff]
        %v4685 = vld [vmem:[#allocation2 + $0x88] sm:$0xff]
        %v4686 = vld [vmem:[#allocation2 + $0x90] sm:$0xff]
        %v4687 = vld [vmem:[#allocation2 + $0x98] sm:$0xff]
        %v4688 = vld [vmem:[#allocation2 + $0xa0] sm:$0xff]
        %v4689 = vld [vmem:[#allocation2 + $0xa8] sm:$0xff]
        %v4690 = vld [vmem:[#allocation2 + $0xb0] sm:$0xff]
        %v4691 = vld [vmem:[#allocation2 + $0xb8] sm:$0xff]
        %v4692 = vld [vmem:[#allocation2 + $0xc0] sm:$0xff]
        %v4693 = vld [vmem:[#allocation2 + $0xc8] sm:$0xff]
        %v4694 = vld [vmem:[#allocation2 + $0xd0] sm:$0xff]
        %v4695 = vld [vmem:[#allocation2 + $0xd8] sm:$0xff]
        %v4696 = vld [vmem:[#allocation2 + $0xe0] sm:$0xff]
        %v4697 = vld [vmem:[#allocation2 + $0xe8] sm:$0xff]
        %v4698 = vld [vmem:[#allocation2 + $0xf0] sm:$0xff]
        %v4699 = vld [vmem:[#allocation2 + $0xf8] sm:$0xff]
        %v4700 = vld [vmem:[#allocation2 + $0x100] sm:$0xff]
        %v4701 = vld [vmem:[#allocation2 + $0x108] sm:$0xff]
        %v4702 = vld [vmem:[#allocation2 + $0x110] sm:$0xff]
        %v4703 = vld [vmem:[#allocation2 + $0x118] sm:$0xff]
        %v4704 = vld [vmem:[#allocation2 + $0x120] sm:$0xff]
        %v4705 = vld [vmem:[#allocation2 + $0x128] sm:$0xff]
        %v4706 = vld [vmem:[#allocation2 + $0x130] sm:$0xff]
        %v4707 = vld [vmem:[#allocation2 + $0x138] sm:$0xff]
        %v4708 = vld [vmem:[#allocation2 + $0x140] sm:$0xff]
        %v4709 = vld [vmem:[#allocation2 + $0x148] sm:$0xff]
        %v4710 = vld [vmem:[#allocation2 + $0x150] sm:$0xff]
        %v4711 = vld [vmem:[#allocation2 + $0x158] sm:$0xff]
        %v4712 = vld [vmem:[#allocation2 + $0x160] sm:$0xff]
        %v4713 = vld [vmem:[#allocation2 + $0x168] sm:$0xff]
        %v4714 = vld [vmem:[#allocation2 + $0x170] sm:$0xff]
        %v4715 = vld [vmem:[#allocation2 + $0x178] sm:$0xff]
        %v4716 = vld [vmem:[%s790] sm:$0xff]
        %v4717 = vld [vmem:[%s790 + $0x8] sm:$0xff]
        %v4718 = vld [vmem:[%s790 + $0x10] sm:$0xff]
        %v4719 = vld [vmem:[%s790 + $0x18] sm:$0xff]
        %v4720 = vld [vmem:[%s790 + $0x20] sm:$0xff]
        %v4721 = vld [vmem:[%s790 + $0x28] sm:$0xff]
        %v4722 = vld [vmem:[%s790 + $0x30] sm:$0xff]
        %v4723 = vld [vmem:[%s790 + $0x38] sm:$0xff]
        %v4724 = vld [vmem:[%s790 + $0x40] sm:$0xff]
        %v4725 = vld [vmem:[%s790 + $0x48] sm:$0xff]
        %v4726 = vld [vmem:[%s790 + $0x50] sm:$0xff]
        %v4727 = vld [vmem:[%s790 + $0x58] sm:$0xff]
        %v4728 = vld [vmem:[%s790 + $0x60] sm:$0xff]
        %v4729 = vld [vmem:[%s790 + $0x68] sm:$0xff]
        %v4730 = vld [vmem:[%s790 + $0x70] sm:$0xff]
        %v4731 = vld [vmem:[%s790 + $0x78] sm:$0xff]
        %4733 = vset.pattern.permute.xlu0 0
        %4734 = vperm.xlu0 %4733, %v4716
        %v4735 = vpop.permute.xlu0 %4734
        %4738 = vset.pattern.permute.xlu0 0
        %4739 = vperm.xlu0 %4738, %v4717
        %v4740 = vpop.permute.xlu0 %4739
        %4743 = vset.pattern.permute.xlu0 0
        %4744 = vperm.xlu0 %4743, %v4718
        %v4745 = vpop.permute.xlu0 %4744
        %4748 = vset.pattern.permute.xlu0 0
        %4749 = vperm.xlu0 %4748, %v4719
        %v4750 = vpop.permute.xlu0 %4749
        %4753 = vset.pattern.permute.xlu0 0
        %4754 = vperm.xlu0 %4753, %v4720
        %v4755 = vpop.permute.xlu0 %4754
        %4758 = vset.pattern.permute.xlu0 0
        %4759 = vperm.xlu0 %4758, %v4721
        %v4760 = vpop.permute.xlu0 %4759
        %4763 = vset.pattern.permute.xlu0 0
        %4764 = vperm.xlu0 %4763, %v4722
        %v4765 = vpop.permute.xlu0 %4764
        %4768 = vset.pattern.permute.xlu0 0
        %4769 = vperm.xlu0 %4768, %v4723
        %v4770 = vpop.permute.xlu0 %4769
        %4773 = vset.pattern.permute.xlu0 0
        %4774 = vperm.xlu0 %4773, %v4724
        %v4775 = vpop.permute.xlu0 %4774
        %4778 = vset.pattern.permute.xlu0 0
        %4779 = vperm.xlu0 %4778, %v4725
        %v4780 = vpop.permute.xlu0 %4779
        %4783 = vset.pattern.permute.xlu0 0
        %4784 = vperm.xlu0 %4783, %v4726
        %v4785 = vpop.permute.xlu0 %4784
        %4788 = vset.pattern.permute.xlu0 0
        %4789 = vperm.xlu0 %4788, %v4727
        %v4790 = vpop.permute.xlu0 %4789
        %4793 = vset.pattern.permute.xlu0 0
        %4794 = vperm.xlu0 %4793, %v4728
        %v4795 = vpop.permute.xlu0 %4794
        %4798 = vset.pattern.permute.xlu0 0
        %4799 = vperm.xlu0 %4798, %v4729
        %v4800 = vpop.permute.xlu0 %4799
        %4803 = vset.pattern.permute.xlu0 0
        %4804 = vperm.xlu0 %4803, %v4730
        %v4805 = vpop.permute.xlu0 %4804
        %4808 = vset.pattern.permute.xlu0 0
        %4809 = vperm.xlu0 %4808, %v4731
        %v4810 = vpop.permute.xlu0 %4809
        %v4812 = vmul.f32 %v4735, %v4396
        %v4813 = vmul.f32 %v4735, %v4398
        %v4814 = vmul.f32 %v4735, %v4606
        %v4815 = vmul.f32 %v4740, %v4400
        %v4816 = vmul.f32 %v4740, %v4402
        %v4817 = vmul.f32 %v4740, %v4609
        %v4818 = vmul.f32 %v4745, %v4406
        %v4819 = vmul.f32 %v4745, %v4408
        %v4820 = vmul.f32 %v4745, %v4614
        %v4821 = vmul.f32 %v4750, %v4410
        %v4822 = vmul.f32 %v4750, %v4412
        %v4823 = vmul.f32 %v4750, %v4617
        %v4824 = vmul.f32 %v4755, %v4416
        %v4825 = vmul.f32 %v4755, %v4418
        %v4826 = vmul.f32 %v4755, %v4622
        %v4827 = vmul.f32 %v4760, %v4420
        %v4828 = vmul.f32 %v4760, %v4422
        %v4829 = vmul.f32 %v4760, %v4625
        %v4830 = vmul.f32 %v4765, %v4426
        %v4831 = vmul.f32 %v4765, %v4428
        %v4832 = vmul.f32 %v4765, %v4630
        %v4833 = vmul.f32 %v4770, %v4430
        %v4834 = vmul.f32 %v4770, %v4432
        %v4835 = vmul.f32 %v4770, %v4633
        %v4836 = vmul.f32 %v4775, %v4436
        %v4837 = vmul.f32 %v4775, %v4438
        %v4838 = vmul.f32 %v4775, %v4638
        %v4839 = vmul.f32 %v4780, %v4440
        %v4840 = vmul.f32 %v4780, %v4442
        %v4841 = vmul.f32 %v4780, %v4641
        %v4842 = vmul.f32 %v4785, %v4446
        %v4843 = vmul.f32 %v4785, %v4448
        %v4844 = vmul.f32 %v4785, %v4646
        %v4845 = vmul.f32 %v4790, %v4450
        %v4846 = vmul.f32 %v4790, %v4452
        %v4847 = vmul.f32 %v4790, %v4649
        %v4848 = vmul.f32 %v4795, %v4456
        %v4849 = vmul.f32 %v4795, %v4458
        %v4850 = vmul.f32 %v4795, %v4654
        %v4851 = vmul.f32 %v4800, %v4460
        %v4852 = vmul.f32 %v4800, %v4462
        %v4853 = vmul.f32 %v4800, %v4657
        %v4854 = vmul.f32 %v4805, %v4466
        %v4855 = vmul.f32 %v4805, %v4468
        %v4856 = vmul.f32 %v4805, %v4662
        %v4857 = vmul.f32 %v4810, %v4470
        %v4858 = vmul.f32 %v4810, %v4472
        %v4859 = vmul.f32 %v4810, %v4665
        %v4860 = vadd.f32 %v4668, %v4812
        %v4861 = vadd.f32 %v4669, %v4813
        %v4862 = vadd.f32 %v4670, %v4814
        %v4863 = vadd.f32 %v4671, %v4815
        %v4864 = vadd.f32 %v4672, %v4816
        %v4865 = vadd.f32 %v4673, %v4817
        %v4866 = vadd.f32 %v4674, %v4818
        %v4867 = vadd.f32 %v4675, %v4819
        %v4868 = vadd.f32 %v4676, %v4820
        %v4869 = vadd.f32 %v4677, %v4821
        %v4870 = vadd.f32 %v4678, %v4822
        %v4871 = vadd.f32 %v4679, %v4823
        %v4872 = vadd.f32 %v4680, %v4824
        %v4873 = vadd.f32 %v4681, %v4825
        %v4874 = vadd.f32 %v4682, %v4826
        %v4875 = vadd.f32 %v4683, %v4827
        %v4876 = vadd.f32 %v4684, %v4828
        %v4877 = vadd.f32 %v4685, %v4829
        %v4878 = vadd.f32 %v4686, %v4830
        %v4879 = vadd.f32 %v4687, %v4831
        %v4880 = vadd.f32 %v4688, %v4832
        %v4881 = vadd.f32 %v4689, %v4833
        %v4882 = vadd.f32 %v4690, %v4834
        %v4883 = vadd.f32 %v4691, %v4835
        %v4884 = vadd.f32 %v4692, %v4836
        %v4885 = vadd.f32 %v4693, %v4837
        %v4886 = vadd.f32 %v4694, %v4838
        %v4887 = vadd.f32 %v4695, %v4839
        %v4888 = vadd.f32 %v4696, %v4840
        %v4889 = vadd.f32 %v4697, %v4841
        %v4890 = vadd.f32 %v4698, %v4842
        %v4891 = vadd.f32 %v4699, %v4843
        %v4892 = vadd.f32 %v4700, %v4844
        %v4893 = vadd.f32 %v4701, %v4845
        %v4894 = vadd.f32 %v4702, %v4846
        %v4895 = vadd.f32 %v4703, %v4847
        %v4896 = vadd.f32 %v4704, %v4848
        %v4897 = vadd.f32 %v4705, %v4849
        %v4898 = vadd.f32 %v4706, %v4850
        %v4899 = vadd.f32 %v4707, %v4851
        %v4900 = vadd.f32 %v4708, %v4852
        %v4901 = vadd.f32 %v4709, %v4853
        %v4902 = vadd.f32 %v4710, %v4854
        %v4903 = vadd.f32 %v4711, %v4855
        %v4904 = vadd.f32 %v4712, %v4856
        %v4905 = vadd.f32 %v4713, %v4857
        %v4906 = vadd.f32 %v4714, %v4858
        %v4907 = vadd.f32 %v4715, %v4859
        %4908 = vst [vmem:[#allocation2] sm:$0xff] %v4860
        %4909 = vst [vmem:[#allocation2 + $0x8] sm:$0xff] %v4861
        %4910 = vst [vmem:[#allocation2 + $0x10] sm:$0xff] %v4862
        %4911 = vst [vmem:[#allocation2 + $0x18] sm:$0xff] %v4863
        %4912 = vst [vmem:[#allocation2 + $0x20] sm:$0xff] %v4864
        %4913 = vst [vmem:[#allocation2 + $0x28] sm:$0xff] %v4865
        %4914 = vst [vmem:[#allocation2 + $0x30] sm:$0xff] %v4866
        %4915 = vst [vmem:[#allocation2 + $0x38] sm:$0xff] %v4867
        %4916 = vst [vmem:[#allocation2 + $0x40] sm:$0xff] %v4868
        %4917 = vst [vmem:[#allocation2 + $0x48] sm:$0xff] %v4869
        %4918 = vst [vmem:[#allocation2 + $0x50] sm:$0xff] %v4870
        %4919 = vst [vmem:[#allocation2 + $0x58] sm:$0xff] %v4871
        %4920 = vst [vmem:[#allocation2 + $0x60] sm:$0xff] %v4872
        %4921 = vst [vmem:[#allocation2 + $0x68] sm:$0xff] %v4873
        %4922 = vst [vmem:[#allocation2 + $0x70] sm:$0xff] %v4874
        %4923 = vst [vmem:[#allocation2 + $0x78] sm:$0xff] %v4875
        %4924 = vst [vmem:[#allocation2 + $0x80] sm:$0xff] %v4876
        %4925 = vst [vmem:[#allocation2 + $0x88] sm:$0xff] %v4877
        %4926 = vst [vmem:[#allocation2 + $0x90] sm:$0xff] %v4878
        %4927 = vst [vmem:[#allocation2 + $0x98] sm:$0xff] %v4879
        %4928 = vst [vmem:[#allocation2 + $0xa0] sm:$0xff] %v4880
        %4929 = vst [vmem:[#allocation2 + $0xa8] sm:$0xff] %v4881
        %4930 = vst [vmem:[#allocation2 + $0xb0] sm:$0xff] %v4882
        %4931 = vst [vmem:[#allocation2 + $0xb8] sm:$0xff] %v4883
        %4932 = vst [vmem:[#allocation2 + $0xc0] sm:$0xff] %v4884
        %4933 = vst [vmem:[#allocation2 + $0xc8] sm:$0xff] %v4885
        %4934 = vst [vmem:[#allocation2 + $0xd0] sm:$0xff] %v4886
        %4935 = vst [vmem:[#allocation2 + $0xd8] sm:$0xff] %v4887
        %4936 = vst [vmem:[#allocation2 + $0xe0] sm:$0xff] %v4888
        %4937 = vst [vmem:[#allocation2 + $0xe8] sm:$0xff] %v4889
        %4938 = vst [vmem:[#allocation2 + $0xf0] sm:$0xff] %v4890
        %4939 = vst [vmem:[#allocation2 + $0xf8] sm:$0xff] %v4891
        %4940 = vst [vmem:[#allocation2 + $0x100] sm:$0xff] %v4892
        %4941 = vst [vmem:[#allocation2 + $0x108] sm:$0xff] %v4893
        %4942 = vst [vmem:[#allocation2 + $0x110] sm:$0xff] %v4894
        %4943 = vst [vmem:[#allocation2 + $0x118] sm:$0xff] %v4895
        %4944 = vst [vmem:[#allocation2 + $0x120] sm:$0xff] %v4896
        %4945 = vst [vmem:[#allocation2 + $0x128] sm:$0xff] %v4897
        %4946 = vst [vmem:[#allocation2 + $0x130] sm:$0xff] %v4898
        %4947 = vst [vmem:[#allocation2 + $0x138] sm:$0xff] %v4899
        %4948 = vst [vmem:[#allocation2 + $0x140] sm:$0xff] %v4900
        %4949 = vst [vmem:[#allocation2 + $0x148] sm:$0xff] %v4901
        %4950 = vst [vmem:[#allocation2 + $0x150] sm:$0xff] %v4902
        %4951 = vst [vmem:[#allocation2 + $0x158] sm:$0xff] %v4903
        %4952 = vst [vmem:[#allocation2 + $0x160] sm:$0xff] %v4904
        %4953 = vst [vmem:[#allocation2 + $0x168] sm:$0xff] %v4905
        %4954 = vst [vmem:[#allocation2 + $0x170] sm:$0xff] %v4906
        %4955 = vst [vmem:[#allocation2 + $0x178] sm:$0xff] %v4907
        %p4956 = scmp.eq.s32.totalorder %s25, 4
        %p4957 = scmp.eq.s32.totalorder %s26, 1
        %p4958 = pnand %p4956, %p4957
        %p4959 = pneg %p4958
        // Predicated region
        $region91: #{moe_layer_forward.1} parent=77 // pred_check
          _
        $region92: #{moe_layer_forward.1} parent=77 // pred_check_branch
          %4961 = sbr.rel (%p4958) target = $region94
        $region93: #{moe_layer_forward.1} parent=77 // pred_region
          %v4962 = vld [vmem:[#allocation2] sm:$0xff]
          %v4963 = vld [vmem:[#allocation2 + $0x8] sm:$0xff]
          %v4964 = vld [vmem:[#allocation2 + $0x10] sm:$0xff]
          %v4965 = vld [vmem:[#allocation2 + $0x18] sm:$0xff]
          %v4966 = vld [vmem:[#allocation2 + $0x20] sm:$0xff]
          %v4967 = vld [vmem:[#allocation2 + $0x28] sm:$0xff]
          %v4968 = vld [vmem:[#allocation2 + $0x30] sm:$0xff]
          %v4969 = vld [vmem:[#allocation2 + $0x38] sm:$0xff]
          %v4970 = vld [vmem:[#allocation2 + $0x40] sm:$0xff]
          %v4971 = vld [vmem:[#allocation2 + $0x48] sm:$0xff]
          %v4972 = vld [vmem:[#allocation2 + $0x50] sm:$0xff]
          %v4973 = vld [vmem:[#allocation2 + $0x58] sm:$0xff]
          %v4974 = vld [vmem:[#allocation2 + $0x60] sm:$0xff]
          %v4975 = vld [vmem:[#allocation2 + $0x68] sm:$0xff]
          %v4976 = vld [vmem:[#allocation2 + $0x70] sm:$0xff]
          %v4977 = vld [vmem:[#allocation2 + $0x78] sm:$0xff]
          %v4978 = vld [vmem:[#allocation2 + $0x80] sm:$0xff]
          %v4979 = vld [vmem:[#allocation2 + $0x88] sm:$0xff]
          %v4980 = vld [vmem:[#allocation2 + $0x90] sm:$0xff]
          %v4981 = vld [vmem:[#allocation2 + $0x98] sm:$0xff]
          %v4982 = vld [vmem:[#allocation2 + $0xa0] sm:$0xff]
          %v4983 = vld [vmem:[#allocation2 + $0xa8] sm:$0xff]
          %v4984 = vld [vmem:[#allocation2 + $0xb0] sm:$0xff]
          %v4985 = vld [vmem:[#allocation2 + $0xb8] sm:$0xff]
          %v4986 = vld [vmem:[#allocation2 + $0xc0] sm:$0xff]
          %v4987 = vld [vmem:[#allocation2 + $0xc8] sm:$0xff]
          %v4988 = vld [vmem:[#allocation2 + $0xd0] sm:$0xff]
          %v4989 = vld [vmem:[#allocation2 + $0xd8] sm:$0xff]
          %v4990 = vld [vmem:[#allocation2 + $0xe0] sm:$0xff]
          %v4991 = vld [vmem:[#allocation2 + $0xe8] sm:$0xff]
          %v4992 = vld [vmem:[#allocation2 + $0xf0] sm:$0xff]
          %v4993 = vld [vmem:[#allocation2 + $0xf8] sm:$0xff]
          %v4994 = vld [vmem:[#allocation2 + $0x100] sm:$0xff]
          %v4995 = vld [vmem:[#allocation2 + $0x108] sm:$0xff]
          %v4996 = vld [vmem:[#allocation2 + $0x110] sm:$0xff]
          %v4997 = vld [vmem:[#allocation2 + $0x118] sm:$0xff]
          %v4998 = vld [vmem:[#allocation2 + $0x120] sm:$0xff]
          %v4999 = vld [vmem:[#allocation2 + $0x128] sm:$0xff]
          %v5000 = vld [vmem:[#allocation2 + $0x130] sm:$0xff]
          %v5001 = vld [vmem:[#allocation2 + $0x138] sm:$0xff]
          %v5002 = vld [vmem:[#allocation2 + $0x140] sm:$0xff]
          %v5003 = vld [vmem:[#allocation2 + $0x148] sm:$0xff]
          %v5004 = vld [vmem:[#allocation2 + $0x150] sm:$0xff]
          %v5005 = vld [vmem:[#allocation2 + $0x158] sm:$0xff]
          %v5006 = vld [vmem:[#allocation2 + $0x160] sm:$0xff]
          %v5007 = vld [vmem:[#allocation2 + $0x168] sm:$0xff]
          %v5008 = vld [vmem:[#allocation2 + $0x170] sm:$0xff]
          %v5009 = vld [vmem:[#allocation2 + $0x178] sm:$0xff]
          %v5010 = vpack.c.bf16 %v4965, %v4962
          %v5011 = vpack.c.bf16 %v4966, %v4963
          %v5012 = vpack.c.bf16 %v4967, %v4964
          %v5013 = vpack.c.bf16 %v4971, %v4968
          %v5014 = vpack.c.bf16 %v4972, %v4969
          %v5015 = vpack.c.bf16 %v4973, %v4970
          %v5016 = vpack.c.bf16 %v4977, %v4974
          %v5017 = vpack.c.bf16 %v4978, %v4975
          %v5018 = vpack.c.bf16 %v4979, %v4976
          %v5019 = vpack.c.bf16 %v4983, %v4980
          %v5020 = vpack.c.bf16 %v4984, %v4981
          %v5021 = vpack.c.bf16 %v4985, %v4982
          %v5022 = vpack.c.bf16 %v4989, %v4986
          %v5023 = vpack.c.bf16 %v4990, %v4987
          %v5024 = vpack.c.bf16 %v4991, %v4988
          %v5025 = vpack.c.bf16 %v4995, %v4992
          %v5026 = vpack.c.bf16 %v4996, %v4993
          %v5027 = vpack.c.bf16 %v4997, %v4994
          %v5028 = vpack.c.bf16 %v5001, %v4998
          %v5029 = vpack.c.bf16 %v5002, %v4999
          %v5030 = vpack.c.bf16 %v5003, %v5000
          %v5031 = vpack.c.bf16 %v5007, %v5004
          %v5032 = vpack.c.bf16 %v5008, %v5005
          %v5033 = vpack.c.bf16 %v5009, %v5006
          %v5058 = vunpack.c.l.b16 %v5010
          %v5059 = vunpack.c.l.b16 %v5011
          %v5060 = vunpack.c.l.b16 %v5012
          %v5061 = vunpack.c.h.b16 %v5010
          %v5062 = vunpack.c.h.b16 %v5011
          %v5063 = vunpack.c.h.b16 %v5012
          %v5064 = vunpack.c.l.b16 %v5013
          %v5065 = vunpack.c.l.b16 %v5014
          %v5066 = vunpack.c.l.b16 %v5015
          %v5067 = vunpack.c.h.b16 %v5013
          %v5068 = vunpack.c.h.b16 %v5014
          %v5069 = vunpack.c.h.b16 %v5015
          %v5070 = vunpack.c.l.b16 %v5016
          %v5071 = vunpack.c.l.b16 %v5017
          %v5072 = vunpack.c.l.b16 %v5018
          %v5073 = vunpack.c.h.b16 %v5016
          %v5074 = vunpack.c.h.b16 %v5017
          %v5075 = vunpack.c.h.b16 %v5018
          %v5076 = vunpack.c.l.b16 %v5019
          %v5077 = vunpack.c.l.b16 %v5020
          %v5078 = vunpack.c.l.b16 %v5021
          %v5079 = vunpack.c.h.b16 %v5019
          %v5080 = vunpack.c.h.b16 %v5020
          %v5081 = vunpack.c.h.b16 %v5021
          %v5082 = vunpack.c.l.b16 %v5022
          %v5083 = vunpack.c.l.b16 %v5023
          %v5084 = vunpack.c.l.b16 %v5024
          %v5085 = vunpack.c.h.b16 %v5022
          %v5086 = vunpack.c.h.b16 %v5023
          %v5087 = vunpack.c.h.b16 %v5024
          %v5088 = vunpack.c.l.b16 %v5025
          %v5089 = vunpack.c.l.b16 %v5026
          %v5090 = vunpack.c.l.b16 %v5027
          %v5091 = vunpack.c.h.b16 %v5025
          %v5092 = vunpack.c.h.b16 %v5026
          %v5093 = vunpack.c.h.b16 %v5027
          %v5094 = vunpack.c.l.b16 %v5028
          %v5095 = vunpack.c.l.b16 %v5029
          %v5096 = vunpack.c.l.b16 %v5030
          %v5097 = vunpack.c.h.b16 %v5028
          %v5098 = vunpack.c.h.b16 %v5029
          %v5099 = vunpack.c.h.b16 %v5030
          %v5100 = vunpack.c.l.b16 %v5031
          %v5101 = vunpack.c.l.b16 %v5032
          %v5102 = vunpack.c.l.b16 %v5033
          %v5103 = vunpack.c.h.b16 %v5031
          %v5104 = vunpack.c.h.b16 %v5032
          %v5105 = vunpack.c.h.b16 %v5033
          %v5106 = vpack.c.b16 %v5059, %v5058
          %v5107 = vpack.c.b16 %v5060, %v5060
          %v5108 = vpack.c.b16 %v5062, %v5061
          %v5109 = vpack.c.b16 %v5063, %v5063
          %v5110 = vpack.c.b16 %v5065, %v5064
          %v5111 = vpack.c.b16 %v5066, %v5066
          %v5112 = vpack.c.b16 %v5068, %v5067
          %v5113 = vpack.c.b16 %v5069, %v5069
          %v5114 = vpack.c.b16 %v5071, %v5070
          %v5115 = vpack.c.b16 %v5072, %v5072
          %v5116 = vpack.c.b16 %v5074, %v5073
          %v5117 = vpack.c.b16 %v5075, %v5075
          %v5118 = vpack.c.b16 %v5077, %v5076
          %v5119 = vpack.c.b16 %v5078, %v5078
          %v5120 = vpack.c.b16 %v5080, %v5079
          %v5121 = vpack.c.b16 %v5081, %v5081
          %v5122 = vpack.c.b16 %v5083, %v5082
          %v5123 = vpack.c.b16 %v5084, %v5084
          %v5124 = vpack.c.b16 %v5086, %v5085
          %v5125 = vpack.c.b16 %v5087, %v5087
          %v5126 = vpack.c.b16 %v5089, %v5088
          %v5127 = vpack.c.b16 %v5090, %v5090
          %v5128 = vpack.c.b16 %v5092, %v5091
          %v5129 = vpack.c.b16 %v5093, %v5093
          %v5130 = vpack.c.b16 %v5095, %v5094
          %v5131 = vpack.c.b16 %v5096, %v5096
          %v5132 = vpack.c.b16 %v5098, %v5097
          %v5133 = vpack.c.b16 %v5099, %v5099
          %v5134 = vpack.c.b16 %v5101, %v5100
          %v5135 = vpack.c.b16 %v5102, %v5102
          %v5136 = vpack.c.b16 %v5104, %v5103
          %v5137 = vpack.c.b16 %v5105, %v5105
          %5170 = vst [vmem:[%s761] sm:$0xff] %v5106
          %5171 = vst [vmem:[%s761 + $0x8] sm:$0xf] %v5107
          %5172 = vst [vmem:[%s761 + $0xc] sm:$0xff] %v5108
          %5173 = vst [vmem:[%s761 + $0x14] sm:$0xf] %v5109
          %5174 = vst [vmem:[%s761 + $0x18] sm:$0xff] %v5110
          %5175 = vst [vmem:[%s761 + $0x20] sm:$0xf] %v5111
          %5176 = vst [vmem:[%s761 + $0x24] sm:$0xff] %v5112
          %5177 = vst [vmem:[%s761 + $0x2c] sm:$0xf] %v5113
          %5178 = vst [vmem:[%s761 + $0x30] sm:$0xff] %v5114
          %5179 = vst [vmem:[%s761 + $0x38] sm:$0xf] %v5115
          %5180 = vst [vmem:[%s761 + $0x3c] sm:$0xff] %v5116
          %5181 = vst [vmem:[%s761 + $0x44] sm:$0xf] %v5117
          %5182 = vst [vmem:[%s761 + $0x48] sm:$0xff] %v5118
          %5183 = vst [vmem:[%s761 + $0x50] sm:$0xf] %v5119
          %5184 = vst [vmem:[%s761 + $0x54] sm:$0xff] %v5120
          %5185 = vst [vmem:[%s761 + $0x5c] sm:$0xf] %v5121
          %5186 = vst [vmem:[%s761 + $0x60] sm:$0xff] %v5122
          %5187 = vst [vmem:[%s761 + $0x68] sm:$0xf] %v5123
          %5188 = vst [vmem:[%s761 + $0x6c] sm:$0xff] %v5124
          %5189 = vst [vmem:[%s761 + $0x74] sm:$0xf] %v5125
          %5190 = vst [vmem:[%s761 + $0x78] sm:$0xff] %v5126
          %5191 = vst [vmem:[%s761 + $0x80] sm:$0xf] %v5127
          %5192 = vst [vmem:[%s761 + $0x84] sm:$0xff] %v5128
          %5193 = vst [vmem:[%s761 + $0x8c] sm:$0xf] %v5129
          %5194 = vst [vmem:[%s761 + $0x90] sm:$0xff] %v5130
          %5195 = vst [vmem:[%s761 + $0x98] sm:$0xf] %v5131
          %5196 = vst [vmem:[%s761 + $0x9c] sm:$0xff] %v5132
          %5197 = vst [vmem:[%s761 + $0xa4] sm:$0xf] %v5133
          %5198 = vst [vmem:[%s761 + $0xa8] sm:$0xff] %v5134
          %5199 = vst [vmem:[%s761 + $0xb0] sm:$0xf] %v5135
          %5200 = vst [vmem:[%s761 + $0xb4] sm:$0xff] %v5136
          %5201 = vst [vmem:[%s761 + $0xbc] sm:$0xf] %v5137
        $region94: #{moe_layer_forward.1} parent=77 // pred_fallthru
          _
        %s5202 = sand.u32 %s184, 1
        %s5203 = scalar_lea.sflag [#allocation6], %s5202
        %s5204 = sand.u32 %s184, 1
        %s5205 = smul.addr %s5204, 192
        %s5206 = scalar_lea.vmem [#allocation5], %s5205
        // Predicated region
        $region95: #{moe_layer_forward.1} parent=77 // pred_check
          %p5207 = pneg %p194
        $region96: #{moe_layer_forward.1} parent=77 // pred_check_branch
          %5209 = sbr.rel (%p5207) target = $region98
        $region97: #{moe_layer_forward.1} parent=77 // pred_region
          %s5210 = smul.u32 16, %s24
          %s5212 = ssub.s32 3072, 3072
          %5213 = vsyncadd %s5203, %s5212
          %s5214 = smul.addr %s5210, 3
          %s5215 = smul.addr %s5214, 64
          %s5216 = scalar_lea.hbm %s5, %s5215
          %s5217 = sshll.u32 %s5206, 4
          %s5218 = int_to_ptr.vmem [resolvable:$true] %s5217
          %5223 = dma.vmem_to_hbm [thread:$0]  %s5218, 3072, %s5216, %s5203, 192, 192, 12
        $region98: #{moe_layer_forward.1} parent=77 // pred_fallthru
          _
      $region78: #{moe_layer_forward.1} parent=5 // pred_fallthru
        _
      %p5224 = scmp.le.s32.totalorder 2, %s14
      // Predicated region
      $region99: #{moe_layer_forward.1} parent=5 // pred_check
        %p5225 = pneg %p5224
      $region100: #{moe_layer_forward.1} parent=5 // pred_check_branch
        %5227 = sbr.rel (%p5225) target = $region102
      $region101: #{moe_layer_forward.1} parent=5 // pred_region
        %s5228 = ssub.s32 %s14, 2
        // Predicated region
        $region103: #{moe_layer_forward.1} parent=101 // pred_check
          %p5229 = pneg %p200
        $region104: #{moe_layer_forward.1} parent=101 // pred_check_branch
          %5231 = sbr.rel (%p5229) target = $region106
        $region105: #{moe_layer_forward.1} parent=101 // pred_region
          %s5232 = sand.u32 %s185, 1
          %s5233 = scalar_lea.sflag [#allocation6], %s5232
          %s5234 = sand.u32 %s185, 1
          %s5235 = smul.addr %s5234, 192
          %s5236 = scalar_lea.vmem [#allocation5], %s5235
          %5237 = dma.done %s5233, 3072
        $region106: #{moe_layer_forward.1} parent=101 // pred_fallthru
          _
      $region102: #{moe_layer_forward.1} parent=5 // pred_fallthru
        _
    $region6: #{moe_layer_forward.1} parent=1 // loop_footer
      %s18 = sadd.s32 1, %s14
    $region7: #{moe_layer_forward.1} parent=1 // loop_footer_branch
      %13 = sbr.rel target = $region3
    $region8: #{moe_layer_forward.1} parent=1 // loop_exit
      _
    %5238 = vsyncpa [#allocation6], 1
    %s5239 = scalar_lea.sflag [#allocation6], 1
    %5240 = vsyncpa %s5239, 1

</llo_original>
